<compile_context>
chip_gen: v5e
topology: v5e:2x2
jax: 0.10.0
libtpu: 0.0.40
codegen_flags: <defaults>
</compile_context>

<pallas_src>
import functools

import jax
import jax.numpy as jnp
from jax import lax
from jax.experimental import pallas as pl
from jax.experimental.pallas import tpu as pltpu

KS = 3  # conv kernel size (3x3x3)


def _round_up(x, m):
    return (x + m - 1) // m * m


def _vmem_limit_bytes():
    """Per-chip scoped-VMEM budget (64 MiB physical on v7x, 128 MiB v5e/v6e)."""
    try:
        cap = pltpu.get_tpu_info().vmem_capacity_bytes
        return int(min(cap * 3 // 4, 96 * 1024 * 1024))
    except Exception:  # pragma: no cover - conservative fallback
        return 32 * 1024 * 1024


# ---------------------------------------------------------------------------
# Fused RDB kernel: all dense layers + 1x1 conv + residual for one batch elem.
# ---------------------------------------------------------------------------
def _rdb_kernel(mask_ref, x_ref, *refs, n_layers, Hp, Wp):
    # mask_ref : (1, P)  f32 0/1 mask of interior (non-halo, non-pad) columns
    # x_ref    : (1, c0, P)  input in padded-stride flattened layout (halos = 0)
    # refs     : (w_slab_0..L-1, w_1x1, o_ref, feat_scratch)
    #   w_slab_i : (3, G, 9*cin_pad_i)  K ordered (kh, kw, ci_pad) per kd plane
    #   w_1x1    : (c0, c_all_pad)
    #   o_ref    : (1, c0, P)   padded-stride output (cropped in the wrapper)
    #   feat     : VMEM (c_all_pad, P) f32 scratch holding the growing feature
    #              map in PyTorch channel order: [x | out_0 | out_1 | ...]
    w_refs = refs[:n_layers]
    w1_ref = refs[n_layers]
    o_ref = refs[n_layers + 1]
    feat = refs[n_layers + 2]

    P = mask_ref.shape[1]
    c0 = x_ref.shape[1]
    mask = mask_ref[...]                       # (1, P)
    x_blk = x_ref[0]                           # (c0, P), halos already zero

    # Zero-init the scratch: channel-pad rows and not-yet-written layer rows
    # must be exactly zero (their weight columns are zero-padded too).
    feat[...] = jnp.zeros_like(feat)
    feat[0:c0, :] = x_blk.astype(feat.dtype)

    c_cur = c0
    for i in range(n_layers):
        growth = w_refs[i].shape[1]
        cin_pad = w_refs[i].shape[2] // (KS * KS)
        xin = feat[0:cin_pad, :]               # (cin_pad, P); extra rows are 0

        # 3x3x3 conv as 3 accumulated GEMMs (one per kd plane).  Tap (kd,kh,kw)
        # reads feat[:, p + delta]; lane-roll wraparound can never reach an
        # interior output column because max(interior p) + max(delta) == P_raw-1,
        # and halo/pad columns are re-zeroed by `mask` before the store below.
        acc = jnp.zeros((growth, P), jnp.float32)
        for kd in range(KS):
            blocks = []
            for kh in range(KS):
                for kw in range(KS):
                    delta = (kd - 1) * Hp * Wp + (kh - 1) * Wp + (kw - 1)
                    shift = (-delta) % P
                    blocks.append(xin if shift == 0
                                  else pltpu.roll(xin, shift, axis=1))
            rhs = jnp.concatenate(blocks, axis=0)         # (9*cin_pad, P)
            acc = acc + jnp.dot(w_refs[i][kd], rhs,
                                preferred_element_type=jnp.float32)

        out_i = jnp.maximum(acc, 0.0) * mask              # ReLU + halo re-zero
        feat[c_cur:c_cur + growth, :] = out_i.astype(feat.dtype)
        c_cur += growth

    # 1x1 conv over all accumulated channels + residual add (lane-dense store).
    res = jnp.dot(w1_ref[...], feat[...], preferred_element_type=jnp.float32)
    res = res + x_blk.astype(jnp.float32)
    o_ref[...] = res[None].astype(o_ref.dtype)


# ---------------------------------------------------------------------------
# Wrapper: layout prep (one-time), pallas_call, final crop.
# ---------------------------------------------------------------------------
def rdb_forward(x, dense_weights, conv1x1_weight):
    """RDB forward.  x: (N, C0, D, H, W); dense_weights[i]: (G, C_i, 3, 3, 3);
       conv1x1_weight: (C0, C_all, 1, 1, 1).  All NCDHW, like PyTorch."""
    N, c0, D, H, W = x.shape
    L = len(dense_weights)
    G = dense_weights[0].shape[0]
    c_all = c0 + L * G
    c_all_pad = _round_up(c_all, 8)

    Dp, Hp, Wp = D + 2, H + 2, W + 2
    p_raw = Dp * Hp * Wp
    P = _round_up(p_raw, 128)                  # lane-dense, unmasked vregs
    assert P >= p_raw

    # One-time zero-halo pad + lane pad; spatial flattened onto the lane axis.
    xp = jnp.pad(x, ((0, 0), (0, 0), (1, 1), (1, 1), (1, 1)))
    xp = xp.reshape(N, c0, p_raw)
    if P != p_raw:
        xp = jnp.pad(xp, ((0, 0), (0, 0), (0, P - p_raw)))

    # 0/1 mask of interior (non-halo) columns in the padded-stride layout.
    d_i = jnp.arange(Dp)[:, None, None]
    h_i = jnp.arange(Hp)[None, :, None]
    w_i = jnp.arange(Wp)[None, None, :]
    interior = ((d_i >= 1) & (d_i <= D) & (h_i >= 1) & (h_i <= H) &
                (w_i >= 1) & (w_i <= W))
    mask = interior.reshape(1, p_raw).astype(jnp.float32)
    if P != p_raw:
        mask = jnp.pad(mask, ((0, 0), (0, P - p_raw)))

    # Dense-layer weights as (3[kd], G, 9*cin_pad) slabs, K ordered (kh,kw,ci).
    slabs = []
    for wd in dense_weights:
        g_i, c_in = wd.shape[0], wd.shape[1]
        cin_pad = _round_up(c_in, 8)           # sublane-aligned tap blocks
        w2 = jnp.transpose(wd, (2, 0, 3, 4, 1))            # (kd, G, kh, kw, ci)
        w2 = jnp.pad(w2, ((0, 0), (0, 0), (0, 0), (0, 0), (0, cin_pad - c_in)))
        slabs.append(w2.reshape(KS, g_i, KS * KS * cin_pad))

    w1 = conv1x1_weight.reshape(c0, c_all)
    w1 = jnp.pad(w1, ((0, 0), (0, c_all_pad - c_all)))

    kernel = functools.partial(_rdb_kernel, n_layers=L, Hp=Hp, Wp=Wp)

    out = pl.pallas_call(
        kernel,
        out_shape=jax.ShapeDtypeStruct((N, c0, P), x.dtype),
        grid=(N,),
        in_specs=[
            pl.BlockSpec((1, P), lambda n: (0, 0)),                 # mask
            pl.BlockSpec((1, c0, P), lambda n: (n, 0, 0)),          # x
            *[pl.BlockSpec(s.shape, lambda n: (0, 0, 0)) for s in slabs],
            pl.BlockSpec(w1.shape, lambda n: (0, 0)),               # 1x1 weight
        ],
        out_specs=pl.BlockSpec((1, c0, P), lambda n: (n, 0, 0)),
        scratch_shapes=[pltpu.VMEM((c_all_pad, P), jnp.float32)],
        compiler_params=pltpu.CompilerParams(
            dimension_semantics=("parallel",),
            vmem_limit_bytes=_vmem_limit_bytes()),
    )(mask, xp, *slabs, w1)

    # Single crop back to dense NCDHW (done once, outside the kernel).
    out = out[:, :, :p_raw].reshape(N, c0, Dp, Hp, Wp)
    return out[:, :, 1:1 + D, 1:1 + H, 1:1 + W]


if __name__ == "__main__":
    # Small RDB: batch=2, nChannels=4, nDenselayer=3, growthRate=8, spatial 8^3
    N, C0, G, L = 2, 4, 8, 3
    D = H = W = 8

    key = jax.random.PRNGKey(0)
    keys = jax.random.split(key, L + 2)
    x = jax.random.normal(keys[0], (N, C0, D, H, W), dtype=jnp.float32)

    dense_ws = []
    c = C0
    for i in range(L):
        dense_ws.append(
            0.1 * jax.random.normal(keys[1 + i], (G, c, KS, KS, KS), jnp.float32))
        c += G
    w_1x1 = 0.1 * jax.random.normal(keys[L + 1], (C0, c, 1, 1, 1), jnp.float32)

    fwd = jax.jit(rdb_forward)
    out = jax.block_until_ready(fwd(x, tuple(dense_ws), w_1x1))
    assert out.shape == x.shape

    # Reference with XLA convs (same semantics as the PyTorch module).
    feat = x
    for wd in dense_ws:
        conv = lax.conv_general_dilated(
            feat, wd, (1, 1, 1), ((1, 1), (1, 1), (1, 1)),
            dimension_numbers=("NCDHW", "OIDHW", "NCDHW"))
        feat = jnp.concatenate([feat, jnp.maximum(conv, 0.0)], axis=1)
    ref = lax.conv_general_dilated(
        feat, w_1x1, (1, 1, 1), ((0, 0), (0, 0), (0, 0)),
        dimension_numbers=("NCDHW", "OIDHW", "NCDHW")) + x
    assert jnp.allclose(out, ref, atol=2e-3, rtol=2e-3), "mismatch vs reference"

    print("KERNEL_OK")
</pallas_src>

<mosaic_0001>
module attributes {stable_mosaic.version = 11 : i64} {
  func.func @_rdb_kernel(%arg0: i32, %arg1: memref<1x1024xf32, #tpu.memory_space<vmem>>, %arg2: memref<1x4x1024xf32, #tpu.memory_space<vmem>>, %arg3: memref<3x8x72xf32, #tpu.memory_space<vmem>>, %arg4: memref<3x8x144xf32, #tpu.memory_space<vmem>>, %arg5: memref<3x8x216xf32, #tpu.memory_space<vmem>>, %arg6: memref<4x32xf32, #tpu.memory_space<vmem>>, %arg7: memref<1x4x1024xf32, #tpu.memory_space<vmem>>, %arg8: memref<32x1024xf32, #tpu.memory_space<vmem>>) attributes {dimension_semantics = [#tpu.dimension_semantics<parallel>], iteration_bounds = array<i64: 2>, scalar_prefetch = 0 : i64, scratch_operands = 1 : i64, tpu.core_type = #tpu.core_type<tc>, window_params = [{pipeline_mode = #tpu.pipeline_mode<synchronous>, transform_indices = @transform_0, window_bounds = array<i64: 1, 1024>}, {transform_indices = @transform_1, window_bounds = array<i64: 1, 4, 1024>}, {pipeline_mode = #tpu.pipeline_mode<synchronous>, transform_indices = @transform_2, window_bounds = array<i64: 3, 8, 72>}, {pipeline_mode = #tpu.pipeline_mode<synchronous>, transform_indices = @transform_3, window_bounds = array<i64: 3, 8, 144>}, {pipeline_mode = #tpu.pipeline_mode<synchronous>, transform_indices = @transform_4, window_bounds = array<i64: 3, 8, 216>}, {pipeline_mode = #tpu.pipeline_mode<synchronous>, transform_indices = @transform_5, window_bounds = array<i64: 4, 32>}, {transform_indices = @transform_6, window_bounds = array<i64: 1, 4, 1024>}]} {
    %c0 = arith.constant 0 : index
    %c0_0 = arith.constant 0 : index
    %0 = vector.load %arg1[%c0, %c0_0] : memref<1x1024xf32, #tpu.memory_space<vmem>>, vector<1x1024xf32>
    %c0_1 = arith.constant 0 : index
    %c0_2 = arith.constant 0 : index
    %c0_3 = arith.constant 0 : index
    %1 = vector.load %arg2[%c0_1, %c0_2, %c0_3] : memref<1x4x1024xf32, #tpu.memory_space<vmem>>, vector<1x4x1024xf32>
    %2 = vector.shape_cast %1 : vector<1x4x1024xf32> to vector<4x1024xf32>
    %cst = arith.constant 0.000000e+00 : f32
    %3 = vector.broadcast %cst : f32 to vector<32x1024xf32>
    %c0_4 = arith.constant 0 : index
    %c0_5 = arith.constant 0 : index
    %4 = vector.load %arg8[%c0_4, %c0_5] : memref<32x1024xf32, #tpu.memory_space<vmem>>, vector<32x1024xf32>
    tpu.vector_store %arg8[%c0_4, %c0_5], %3 {strides = array<i32>} : memref<32x1024xf32, #tpu.memory_space<vmem>>, vector<32x1024xf32>,
    %c0_6 = arith.constant 0 : index
    %c0_7 = arith.constant 0 : index
    %5 = vector.load %arg8[%c0_6, %c0_7] : memref<32x1024xf32, #tpu.memory_space<vmem>>, vector<4x1024xf32>
    tpu.vector_store %arg8[%c0_6, %c0_7], %2 {strides = array<i32>} : memref<32x1024xf32, #tpu.memory_space<vmem>>, vector<4x1024xf32>,
    %c0_8 = arith.constant 0 : index
    %c0_9 = arith.constant 0 : index
    %6 = vector.load %arg8[%c0_8, %c0_9] : memref<32x1024xf32, #tpu.memory_space<vmem>>, vector<8x1024xf32>
    %cst_10 = arith.constant 0.000000e+00 : f32
    %7 = vector.broadcast %cst_10 : f32 to vector<8x1024xf32>
    %c111_i32 = arith.constant 111 : i32
    %8 = tpu.dynamic_rotate %6 by %c111_i32 dim 1 : vector<8x1024xf32>, i32 -> vector<8x1024xf32>
    %c110_i32 = arith.constant 110 : i32
    %9 = tpu.dynamic_rotate %6 by %c110_i32 dim 1 : vector<8x1024xf32>, i32 -> vector<8x1024xf32>
    %c109_i32 = arith.constant 109 : i32
    %10 = tpu.dynamic_rotate %6 by %c109_i32 dim 1 : vector<8x1024xf32>, i32 -> vector<8x1024xf32>
    %c101_i32 = arith.constant 101 : i32
    %11 = tpu.dynamic_rotate %6 by %c101_i32 dim 1 : vector<8x1024xf32>, i32 -> vector<8x1024xf32>
    %c100_i32 = arith.constant 100 : i32
    %12 = tpu.dynamic_rotate %6 by %c100_i32 dim 1 : vector<8x1024xf32>, i32 -> vector<8x1024xf32>
    %c99_i32 = arith.constant 99 : i32
    %13 = tpu.dynamic_rotate %6 by %c99_i32 dim 1 : vector<8x1024xf32>, i32 -> vector<8x1024xf32>
    %c91_i32 = arith.constant 91 : i32
    %14 = tpu.dynamic_rotate %6 by %c91_i32 dim 1 : vector<8x1024xf32>, i32 -> vector<8x1024xf32>
    %c90_i32 = arith.constant 90 : i32
    %15 = tpu.dynamic_rotate %6 by %c90_i32 dim 1 : vector<8x1024xf32>, i32 -> vector<8x1024xf32>
    %c89_i32 = arith.constant 89 : i32
    %16 = tpu.dynamic_rotate %6 by %c89_i32 dim 1 : vector<8x1024xf32>, i32 -> vector<8x1024xf32>
    %17 = tpu.concatenate %8, %9, %10, %11, %12, %13, %14, %15, %16 in 0 : vector<8x1024xf32>, vector<8x1024xf32>, vector<8x1024xf32>, vector<8x1024xf32>, vector<8x1024xf32>, vector<8x1024xf32>, vector<8x1024xf32>, vector<8x1024xf32>, vector<8x1024xf32> -> vector<72x1024xf32>
    %c0_11 = arith.constant 0 : index
    %c0_12 = arith.constant 0 : index
    %c0_13 = arith.constant 0 : index
    %18 = vector.load %arg3[%c0_11, %c0_12, %c0_13] : memref<3x8x72xf32, #tpu.memory_space<vmem>>, vector<1x8x72xf32>
    %19 = vector.shape_cast %18 : vector<1x8x72xf32> to vector<8x72xf32>
    %cst_14 = arith.constant dense<0.000000e+00> : vector<8x1024xf32>
    %20 = tpu.matmul %19, %17, %cst_14 {dimension_numbers = #tpu.dot_dimension_numbers<[1], [0], [0], [1], [0, 0, 1, 1], [], []>} : vector<8x72xf32>, vector<72x1024xf32>, vector<8x1024xf32> -> vector<8x1024xf32>
    %21 = arith.addf %7, %20 : vector<8x1024xf32>
    %c11_i32 = arith.constant 11 : i32
    %22 = tpu.dynamic_rotate %6 by %c11_i32 dim 1 : vector<8x1024xf32>, i32 -> vector<8x1024xf32>
    %c10_i32 = arith.constant 10 : i32
    %23 = tpu.dynamic_rotate %6 by %c10_i32 dim 1 : vector<8x1024xf32>, i32 -> vector<8x1024xf32>
    %c9_i32 = arith.constant 9 : i32
    %24 = tpu.dynamic_rotate %6 by %c9_i32 dim 1 : vector<8x1024xf32>, i32 -> vector<8x1024xf32>
    %c1_i32 = arith.constant 1 : i32
    %25 = tpu.dynamic_rotate %6 by %c1_i32 dim 1 : vector<8x1024xf32>, i32 -> vector<8x1024xf32>
    %c1023_i32 = arith.constant 1023 : i32
    %26 = tpu.dynamic_rotate %6 by %c1023_i32 dim 1 : vector<8x1024xf32>, i32 -> vector<8x1024xf32>
    %c1015_i32 = arith.constant 1015 : i32
    %27 = tpu.dynamic_rotate %6 by %c1015_i32 dim 1 : vector<8x1024xf32>, i32 -> vector<8x1024xf32>
    %c1014_i32 = arith.constant 1014 : i32
    %28 = tpu.dynamic_rotate %6 by %c1014_i32 dim 1 : vector<8x1024xf32>, i32 -> vector<8x1024xf32>
    %c1013_i32 = arith.constant 1013 : i32
    %29 = tpu.dynamic_rotate %6 by %c1013_i32 dim 1 : vector<8x1024xf32>, i32 -> vector<8x1024xf32>
    %30 = tpu.concatenate %22, %23, %24, %25, %6, %26, %27, %28, %29 in 0 : vector<8x1024xf32>, vector<8x1024xf32>, vector<8x1024xf32>, vector<8x1024xf32>, vector<8x1024xf32>, vector<8x1024xf32>, vector<8x1024xf32>, vector<8x1024xf32>, vector<8x1024xf32> -> vector<72x1024xf32>
    %c1 = arith.constant 1 : index
    %c0_15 = arith.constant 0 : index
    %c0_16 = arith.constant 0 : index
    %31 = vector.load %arg3[%c1, %c0_15, %c0_16] : memref<3x8x72xf32, #tpu.memory_space<vmem>>, vector<1x8x72xf32>
    %32 = vector.shape_cast %31 : vector<1x8x72xf32> to vector<8x72xf32>
    %cst_17 = arith.constant dense<0.000000e+00> : vector<8x1024xf32>
    %33 = tpu.matmul %32, %30, %cst_17 {dimension_numbers = #tpu.dot_dimension_numbers<[1], [0], [0], [1], [0, 0, 1, 1], [], []>} : vector<8x72xf32>, vector<72x1024xf32>, vector<8x1024xf32> -> vector<8x1024xf32>
    %34 = arith.addf %21, %33 : vector<8x1024xf32>
    %c935_i32 = arith.constant 935 : i32
    %35 = tpu.dynamic_rotate %6 by %c935_i32 dim 1 : vector<8x1024xf32>, i32 -> vector<8x1024xf32>
    %c934_i32 = arith.constant 934 : i32
    %36 = tpu.dynamic_rotate %6 by %c934_i32 dim 1 : vector<8x1024xf32>, i32 -> vector<8x1024xf32>
    %c933_i32 = arith.constant 933 : i32
    %37 = tpu.dynamic_rotate %6 by %c933_i32 dim 1 : vector<8x1024xf32>, i32 -> vector<8x1024xf32>
    %c925_i32 = arith.constant 925 : i32
    %38 = tpu.dynamic_rotate %6 by %c925_i32 dim 1 : vector<8x1024xf32>, i32 -> vector<8x1024xf32>
    %c924_i32 = arith.constant 924 : i32
    %39 = tpu.dynamic_rotate %6 by %c924_i32 dim 1 : vector<8x1024xf32>, i32 -> vector<8x1024xf32>
    %c923_i32 = arith.constant 923 : i32
    %40 = tpu.dynamic_rotate %6 by %c923_i32 dim 1 : vector<8x1024xf32>, i32 -> vector<8x1024xf32>
    %c915_i32 = arith.constant 915 : i32
    %41 = tpu.dynamic_rotate %6 by %c915_i32 dim 1 : vector<8x1024xf32>, i32 -> vector<8x1024xf32>
    %c914_i32 = arith.constant 914 : i32
    %42 = tpu.dynamic_rotate %6 by %c914_i32 dim 1 : vector<8x1024xf32>, i32 -> vector<8x1024xf32>
    %c913_i32 = arith.constant 913 : i32
    %43 = tpu.dynamic_rotate %6 by %c913_i32 dim 1 : vector<8x1024xf32>, i32 -> vector<8x1024xf32>
    %44 = tpu.concatenate %35, %36, %37, %38, %39, %40, %41, %42, %43 in 0 : vector<8x1024xf32>, vector<8x1024xf32>, vector<8x1024xf32>, vector<8x1024xf32>, vector<8x1024xf32>, vector<8x1024xf32>, vector<8x1024xf32>, vector<8x1024xf32>, vector<8x1024xf32> -> vector<72x1024xf32>
    %c2 = arith.constant 2 : index
    %c0_18 = arith.constant 0 : index
    %c0_19 = arith.constant 0 : index
    %45 = vector.load %arg3[%c2, %c0_18, %c0_19] : memref<3x8x72xf32, #tpu.memory_space<vmem>>, vector<1x8x72xf32>
    %46 = vector.shape_cast %45 : vector<1x8x72xf32> to vector<8x72xf32>
    %cst_20 = arith.constant dense<0.000000e+00> : vector<8x1024xf32>
    %47 = tpu.matmul %46, %44, %cst_20 {dimension_numbers = #tpu.dot_dimension_numbers<[1], [0], [0], [1], [0, 0, 1, 1], [], []>} : vector<8x72xf32>, vector<72x1024xf32>, vector<8x1024xf32> -> vector<8x1024xf32>
    %48 = arith.addf %34, %47 : vector<8x1024xf32>
    %cst_21 = arith.constant 0.000000e+00 : f32
    %49 = vector.broadcast %cst_21 : f32 to vector<8x1024xf32>
    %50 = arith.maximumf %48, %49 : vector<8x1024xf32>
    %51 = vector.broadcast %0 : vector<1x1024xf32> to vector<8x1024xf32>
    %52 = arith.mulf %50, %51 : vector<8x1024xf32>
    %c4 = arith.constant 4 : index
    %c0_22 = arith.constant 0 : index
    %53 = vector.load %arg8[%c4, %c0_22] : memref<32x1024xf32, #tpu.memory_space<vmem>>, vector<8x1024xf32>
    tpu.vector_store %arg8[%c4, %c0_22], %52 {strides = array<i32>} : memref<32x1024xf32, #tpu.memory_space<vmem>>, vector<8x1024xf32>,
    %c0_23 = arith.constant 0 : index
    %c0_24 = arith.constant 0 : index
    %54 = vector.load %arg8[%c0_23, %c0_24] : memref<32x1024xf32, #tpu.memory_space<vmem>>, vector<16x1024xf32>
    %cst_25 = arith.constant 0.000000e+00 : f32
    %55 = vector.broadcast %cst_25 : f32 to vector<8x1024xf32>
    %c111_i32_26 = arith.constant 111 : i32
    %56 = tpu.dynamic_rotate %54 by %c111_i32_26 dim 1 : vector<16x1024xf32>, i32 -> vector<16x1024xf32>
    %c110_i32_27 = arith.constant 110 : i32
    %57 = tpu.dynamic_rotate %54 by %c110_i32_27 dim 1 : vector<16x1024xf32>, i32 -> vector<16x1024xf32>
    %c109_i32_28 = arith.constant 109 : i32
    %58 = tpu.dynamic_rotate %54 by %c109_i32_28 dim 1 : vector<16x1024xf32>, i32 -> vector<16x1024xf32>
    %c101_i32_29 = arith.constant 101 : i32
    %59 = tpu.dynamic_rotate %54 by %c101_i32_29 dim 1 : vector<16x1024xf32>, i32 -> vector<16x1024xf32>
    %c100_i32_30 = arith.constant 100 : i32
    %60 = tpu.dynamic_rotate %54 by %c100_i32_30 dim 1 : vector<16x1024xf32>, i32 -> vector<16x1024xf32>
    %c99_i32_31 = arith.constant 99 : i32
    %61 = tpu.dynamic_rotate %54 by %c99_i32_31 dim 1 : vector<16x1024xf32>, i32 -> vector<16x1024xf32>
    %c91_i32_32 = arith.constant 91 : i32
    %62 = tpu.dynamic_rotate %54 by %c91_i32_32 dim 1 : vector<16x1024xf32>, i32 -> vector<16x1024xf32>
    %c90_i32_33 = arith.constant 90 : i32
    %63 = tpu.dynamic_rotate %54 by %c90_i32_33 dim 1 : vector<16x1024xf32>, i32 -> vector<16x1024xf32>
    %c89_i32_34 = arith.constant 89 : i32
    %64 = tpu.dynamic_rotate %54 by %c89_i32_34 dim 1 : vector<16x1024xf32>, i32 -> vector<16x1024xf32>
    %65 = tpu.concatenate %56, %57, %58, %59, %60, %61, %62, %63, %64 in 0 : vector<16x1024xf32>, vector<16x1024xf32>, vector<16x1024xf32>, vector<16x1024xf32>, vector<16x1024xf32>, vector<16x1024xf32>, vector<16x1024xf32>, vector<16x1024xf32>, vector<16x1024xf32> -> vector<144x1024xf32>
    %c0_35 = arith.constant 0 : index
    %c0_36 = arith.constant 0 : index
    %c0_37 = arith.constant 0 : index
    %66 = vector.load %arg4[%c0_35, %c0_36, %c0_37] : memref<3x8x144xf32, #tpu.memory_space<vmem>>, vector<1x8x144xf32>
    %67 = vector.shape_cast %66 : vector<1x8x144xf32> to vector<8x144xf32>
    %cst_38 = arith.constant dense<0.000000e+00> : vector<8x1024xf32>
    %68 = tpu.matmul %67, %65, %cst_38 {dimension_numbers = #tpu.dot_dimension_numbers<[1], [0], [0], [1], [0, 0, 1, 1], [], []>} : vector<8x144xf32>, vector<144x1024xf32>, vector<8x1024xf32> -> vector<8x1024xf32>
    %69 = arith.addf %55, %68 : vector<8x1024xf32>
    %c11_i32_39 = arith.constant 11 : i32
    %70 = tpu.dynamic_rotate %54 by %c11_i32_39 dim 1 : vector<16x1024xf32>, i32 -> vector<16x1024xf32>
    %c10_i32_40 = arith.constant 10 : i32
    %71 = tpu.dynamic_rotate %54 by %c10_i32_40 dim 1 : vector<16x1024xf32>, i32 -> vector<16x1024xf32>
    %c9_i32_41 = arith.constant 9 : i32
    %72 = tpu.dynamic_rotate %54 by %c9_i32_41 dim 1 : vector<16x1024xf32>, i32 -> vector<16x1024xf32>
    %c1_i32_42 = arith.constant 1 : i32
    %73 = tpu.dynamic_rotate %54 by %c1_i32_42 dim 1 : vector<16x1024xf32>, i32 -> vector<16x1024xf32>
    %c1023_i32_43 = arith.constant 1023 : i32
    %74 = tpu.dynamic_rotate %54 by %c1023_i32_43 dim 1 : vector<16x1024xf32>, i32 -> vector<16x1024xf32>
    %c1015_i32_44 = arith.constant 1015 : i32
    %75 = tpu.dynamic_rotate %54 by %c1015_i32_44 dim 1 : vector<16x1024xf32>, i32 -> vector<16x1024xf32>
    %c1014_i32_45 = arith.constant 1014 : i32
    %76 = tpu.dynamic_rotate %54 by %c1014_i32_45 dim 1 : vector<16x1024xf32>, i32 -> vector<16x1024xf32>
    %c1013_i32_46 = arith.constant 1013 : i32
    %77 = tpu.dynamic_rotate %54 by %c1013_i32_46 dim 1 : vector<16x1024xf32>, i32 -> vector<16x1024xf32>
    %78 = tpu.concatenate %70, %71, %72, %73, %54, %74, %75, %76, %77 in 0 : vector<16x1024xf32>, vector<16x1024xf32>, vector<16x1024xf32>, vector<16x1024xf32>, vector<16x1024xf32>, vector<16x1024xf32>, vector<16x1024xf32>, vector<16x1024xf32>, vector<16x1024xf32> -> vector<144x1024xf32>
    %c1_47 = arith.constant 1 : index
    %c0_48 = arith.constant 0 : index
    %c0_49 = arith.constant 0 : index
    %79 = vector.load %arg4[%c1_47, %c0_48, %c0_49] : memref<3x8x144xf32, #tpu.memory_space<vmem>>, vector<1x8x144xf32>
    %80 = vector.shape_cast %79 : vector<1x8x144xf32> to vector<8x144xf32>
    %cst_50 = arith.constant dense<0.000000e+00> : vector<8x1024xf32>
    %81 = tpu.matmul %80, %78, %cst_50 {dimension_numbers = #tpu.dot_dimension_numbers<[1], [0], [0], [1], [0, 0, 1, 1], [], []>} : vector<8x144xf32>, vector<144x1024xf32>, vector<8x1024xf32> -> vector<8x1024xf32>
    %82 = arith.addf %69, %81 : vector<8x1024xf32>
    %c935_i32_51 = arith.constant 935 : i32
    %83 = tpu.dynamic_rotate %54 by %c935_i32_51 dim 1 : vector<16x1024xf32>, i32 -> vector<16x1024xf32>
    %c934_i32_52 = arith.constant 934 : i32
    %84 = tpu.dynamic_rotate %54 by %c934_i32_52 dim 1 : vector<16x1024xf32>, i32 -> vector<16x1024xf32>
    %c933_i32_53 = arith.constant 933 : i32
    %85 = tpu.dynamic_rotate %54 by %c933_i32_53 dim 1 : vector<16x1024xf32>, i32 -> vector<16x1024xf32>
    %c925_i32_54 = arith.constant 925 : i32
    %86 = tpu.dynamic_rotate %54 by %c925_i32_54 dim 1 : vector<16x1024xf32>, i32 -> vector<16x1024xf32>
    %c924_i32_55 = arith.constant 924 : i32
    %87 = tpu.dynamic_rotate %54 by %c924_i32_55 dim 1 : vector<16x1024xf32>, i32 -> vector<16x1024xf32>
    %c923_i32_56 = arith.constant 923 : i32
    %88 = tpu.dynamic_rotate %54 by %c923_i32_56 dim 1 : vector<16x1024xf32>, i32 -> vector<16x1024xf32>
    %c915_i32_57 = arith.constant 915 : i32
    %89 = tpu.dynamic_rotate %54 by %c915_i32_57 dim 1 : vector<16x1024xf32>, i32 -> vector<16x1024xf32>
    %c914_i32_58 = arith.constant 914 : i32
    %90 = tpu.dynamic_rotate %54 by %c914_i32_58 dim 1 : vector<16x1024xf32>, i32 -> vector<16x1024xf32>
    %c913_i32_59 = arith.constant 913 : i32
    %91 = tpu.dynamic_rotate %54 by %c913_i32_59 dim 1 : vector<16x1024xf32>, i32 -> vector<16x1024xf32>
    %92 = tpu.concatenate %83, %84, %85, %86, %87, %88, %89, %90, %91 in 0 : vector<16x1024xf32>, vector<16x1024xf32>, vector<16x1024xf32>, vector<16x1024xf32>, vector<16x1024xf32>, vector<16x1024xf32>, vector<16x1024xf32>, vector<16x1024xf32>, vector<16x1024xf32> -> vector<144x1024xf32>
    %c2_60 = arith.constant 2 : index
    %c0_61 = arith.constant 0 : index
    %c0_62 = arith.constant 0 : index
    %93 = vector.load %arg4[%c2_60, %c0_61, %c0_62] : memref<3x8x144xf32, #tpu.memory_space<vmem>>, vector<1x8x144xf32>
    %94 = vector.shape_cast %93 : vector<1x8x144xf32> to vector<8x144xf32>
    %cst_63 = arith.constant dense<0.000000e+00> : vector<8x1024xf32>
    %95 = tpu.matmul %94, %92, %cst_63 {dimension_numbers = #tpu.dot_dimension_numbers<[1], [0], [0], [1], [0, 0, 1, 1], [], []>} : vector<8x144xf32>, vector<144x1024xf32>, vector<8x1024xf32> -> vector<8x1024xf32>
    %96 = arith.addf %82, %95 : vector<8x1024xf32>
    %cst_64 = arith.constant 0.000000e+00 : f32
    %97 = vector.broadcast %cst_64 : f32 to vector<8x1024xf32>
    %98 = arith.maximumf %96, %97 : vector<8x1024xf32>
    %99 = vector.broadcast %0 : vector<1x1024xf32> to vector<8x1024xf32>
    %100 = arith.mulf %98, %99 : vector<8x1024xf32>
    %c12 = arith.constant 12 : index
    %c0_65 = arith.constant 0 : index
    %101 = vector.load %arg8[%c12, %c0_65] : memref<32x1024xf32, #tpu.memory_space<vmem>>, vector<8x1024xf32>
    tpu.vector_store %arg8[%c12, %c0_65], %100 {strides = array<i32>} : memref<32x1024xf32, #tpu.memory_space<vmem>>, vector<8x1024xf32>,
    %c0_66 = arith.constant 0 : index
    %c0_67 = arith.constant 0 : index
    %102 = vector.load %arg8[%c0_66, %c0_67] : memref<32x1024xf32, #tpu.memory_space<vmem>>, vector<24x1024xf32>
    %cst_68 = arith.constant 0.000000e+00 : f32
    %103 = vector.broadcast %cst_68 : f32 to vector<8x1024xf32>
    %c111_i32_69 = arith.constant 111 : i32
    %104 = tpu.dynamic_rotate %102 by %c111_i32_69 dim 1 : vector<24x1024xf32>, i32 -> vector<24x1024xf32>
    %c110_i32_70 = arith.constant 110 : i32
    %105 = tpu.dynamic_rotate %102 by %c110_i32_70 dim 1 : vector<24x1024xf32>, i32 -> vector<24x1024xf32>
    %c109_i32_71 = arith.constant 109 : i32
    %106 = tpu.dynamic_rotate %102 by %c109_i32_71 dim 1 : vector<24x1024xf32>, i32 -> vector<24x1024xf32>
    %c101_i32_72 = arith.constant 101 : i32
    %107 = tpu.dynamic_rotate %102 by %c101_i32_72 dim 1 : vector<24x1024xf32>, i32 -> vector<24x1024xf32>
    %c100_i32_73 = arith.constant 100 : i32
    %108 = tpu.dynamic_rotate %102 by %c100_i32_73 dim 1 : vector<24x1024xf32>, i32 -> vector<24x1024xf32>
    %c99_i32_74 = arith.constant 99 : i32
    %109 = tpu.dynamic_rotate %102 by %c99_i32_74 dim 1 : vector<24x1024xf32>, i32 -> vector<24x1024xf32>
    %c91_i32_75 = arith.constant 91 : i32
    %110 = tpu.dynamic_rotate %102 by %c91_i32_75 dim 1 : vector<24x1024xf32>, i32 -> vector<24x1024xf32>
    %c90_i32_76 = arith.constant 90 : i32
    %111 = tpu.dynamic_rotate %102 by %c90_i32_76 dim 1 : vector<24x1024xf32>, i32 -> vector<24x1024xf32>
    %c89_i32_77 = arith.constant 89 : i32
    %112 = tpu.dynamic_rotate %102 by %c89_i32_77 dim 1 : vector<24x1024xf32>, i32 -> vector<24x1024xf32>
    %113 = tpu.concatenate %104, %105, %106, %107, %108, %109, %110, %111, %112 in 0 : vector<24x1024xf32>, vector<24x1024xf32>, vector<24x1024xf32>, vector<24x1024xf32>, vector<24x1024xf32>, vector<24x1024xf32>, vector<24x1024xf32>, vector<24x1024xf32>, vector<24x1024xf32> -> vector<216x1024xf32>
    %c0_78 = arith.constant 0 : index
    %c0_79 = arith.constant 0 : index
    %c0_80 = arith.constant 0 : index
    %114 = vector.load %arg5[%c0_78, %c0_79, %c0_80] : memref<3x8x216xf32, #tpu.memory_space<vmem>>, vector<1x8x216xf32>
    %115 = vector.shape_cast %114 : vector<1x8x216xf32> to vector<8x216xf32>
    %cst_81 = arith.constant dense<0.000000e+00> : vector<8x1024xf32>
    %116 = tpu.matmul %115, %113, %cst_81 {dimension_numbers = #tpu.dot_dimension_numbers<[1], [0], [0], [1], [0, 0, 1, 1], [], []>} : vector<8x216xf32>, vector<216x1024xf32>, vector<8x1024xf32> -> vector<8x1024xf32>
    %117 = arith.addf %103, %116 : vector<8x1024xf32>
    %c11_i32_82 = arith.constant 11 : i32
    %118 = tpu.dynamic_rotate %102 by %c11_i32_82 dim 1 : vector<24x1024xf32>, i32 -> vector<24x1024xf32>
    %c10_i32_83 = arith.constant 10 : i32
    %119 = tpu.dynamic_rotate %102 by %c10_i32_83 dim 1 : vector<24x1024xf32>, i32 -> vector<24x1024xf32>
    %c9_i32_84 = arith.constant 9 : i32
    %120 = tpu.dynamic_rotate %102 by %c9_i32_84 dim 1 : vector<24x1024xf32>, i32 -> vector<24x1024xf32>
    %c1_i32_85 = arith.constant 1 : i32
    %121 = tpu.dynamic_rotate %102 by %c1_i32_85 dim 1 : vector<24x1024xf32>, i32 -> vector<24x1024xf32>
    %c1023_i32_86 = arith.constant 1023 : i32
    %122 = tpu.dynamic_rotate %102 by %c1023_i32_86 dim 1 : vector<24x1024xf32>, i32 -> vector<24x1024xf32>
    %c1015_i32_87 = arith.constant 1015 : i32
    %123 = tpu.dynamic_rotate %102 by %c1015_i32_87 dim 1 : vector<24x1024xf32>, i32 -> vector<24x1024xf32>
    %c1014_i32_88 = arith.constant 1014 : i32
    %124 = tpu.dynamic_rotate %102 by %c1014_i32_88 dim 1 : vector<24x1024xf32>, i32 -> vector<24x1024xf32>
    %c1013_i32_89 = arith.constant 1013 : i32
    %125 = tpu.dynamic_rotate %102 by %c1013_i32_89 dim 1 : vector<24x1024xf32>, i32 -> vector<24x1024xf32>
    %126 = tpu.concatenate %118, %119, %120, %121, %102, %122, %123, %124, %125 in 0 : vector<24x1024xf32>, vector<24x1024xf32>, vector<24x1024xf32>, vector<24x1024xf32>, vector<24x1024xf32>, vector<24x1024xf32>, vector<24x1024xf32>, vector<24x1024xf32>, vector<24x1024xf32> -> vector<216x1024xf32>
    %c1_90 = arith.constant 1 : index
    %c0_91 = arith.constant 0 : index
    %c0_92 = arith.constant 0 : index
    %127 = vector.load %arg5[%c1_90, %c0_91, %c0_92] : memref<3x8x216xf32, #tpu.memory_space<vmem>>, vector<1x8x216xf32>
    %128 = vector.shape_cast %127 : vector<1x8x216xf32> to vector<8x216xf32>
    %cst_93 = arith.constant dense<0.000000e+00> : vector<8x1024xf32>
    %129 = tpu.matmul %128, %126, %cst_93 {dimension_numbers = #tpu.dot_dimension_numbers<[1], [0], [0], [1], [0, 0, 1, 1], [], []>} : vector<8x216xf32>, vector<216x1024xf32>, vector<8x1024xf32> -> vector<8x1024xf32>
    %130 = arith.addf %117, %129 : vector<8x1024xf32>
    %c935_i32_94 = arith.constant 935 : i32
    %131 = tpu.dynamic_rotate %102 by %c935_i32_94 dim 1 : vector<24x1024xf32>, i32 -> vector<24x1024xf32>
    %c934_i32_95 = arith.constant 934 : i32
    %132 = tpu.dynamic_rotate %102 by %c934_i32_95 dim 1 : vector<24x1024xf32>, i32 -> vector<24x1024xf32>
    %c933_i32_96 = arith.constant 933 : i32
    %133 = tpu.dynamic_rotate %102 by %c933_i32_96 dim 1 : vector<24x1024xf32>, i32 -> vector<24x1024xf32>
    %c925_i32_97 = arith.constant 925 : i32
    %134 = tpu.dynamic_rotate %102 by %c925_i32_97 dim 1 : vector<24x1024xf32>, i32 -> vector<24x1024xf32>
    %c924_i32_98 = arith.constant 924 : i32
    %135 = tpu.dynamic_rotate %102 by %c924_i32_98 dim 1 : vector<24x1024xf32>, i32 -> vector<24x1024xf32>
    %c923_i32_99 = arith.constant 923 : i32
    %136 = tpu.dynamic_rotate %102 by %c923_i32_99 dim 1 : vector<24x1024xf32>, i32 -> vector<24x1024xf32>
    %c915_i32_100 = arith.constant 915 : i32
    %137 = tpu.dynamic_rotate %102 by %c915_i32_100 dim 1 : vector<24x1024xf32>, i32 -> vector<24x1024xf32>
    %c914_i32_101 = arith.constant 914 : i32
    %138 = tpu.dynamic_rotate %102 by %c914_i32_101 dim 1 : vector<24x1024xf32>, i32 -> vector<24x1024xf32>
    %c913_i32_102 = arith.constant 913 : i32
    %139 = tpu.dynamic_rotate %102 by %c913_i32_102 dim 1 : vector<24x1024xf32>, i32 -> vector<24x1024xf32>
    %140 = tpu.concatenate %131, %132, %133, %134, %135, %136, %137, %138, %139 in 0 : vector<24x1024xf32>, vector<24x1024xf32>, vector<24x1024xf32>, vector<24x1024xf32>, vector<24x1024xf32>, vector<24x1024xf32>, vector<24x1024xf32>, vector<24x1024xf32>, vector<24x1024xf32> -> vector<216x1024xf32>
    %c2_103 = arith.constant 2 : index
    %c0_104 = arith.constant 0 : index
    %c0_105 = arith.constant 0 : index
    %141 = vector.load %arg5[%c2_103, %c0_104, %c0_105] : memref<3x8x216xf32, #tpu.memory_space<vmem>>, vector<1x8x216xf32>
    %142 = vector.shape_cast %141 : vector<1x8x216xf32> to vector<8x216xf32>
    %cst_106 = arith.constant dense<0.000000e+00> : vector<8x1024xf32>
    %143 = tpu.matmul %142, %140, %cst_106 {dimension_numbers = #tpu.dot_dimension_numbers<[1], [0], [0], [1], [0, 0, 1, 1], [], []>} : vector<8x216xf32>, vector<216x1024xf32>, vector<8x1024xf32> -> vector<8x1024xf32>
    %144 = arith.addf %130, %143 : vector<8x1024xf32>
    %cst_107 = arith.constant 0.000000e+00 : f32
    %145 = vector.broadcast %cst_107 : f32 to vector<8x1024xf32>
    %146 = arith.maximumf %144, %145 : vector<8x1024xf32>
    %147 = vector.broadcast %0 : vector<1x1024xf32> to vector<8x1024xf32>
    %148 = arith.mulf %146, %147 : vector<8x1024xf32>
    %c20 = arith.constant 20 : index
    %c0_108 = arith.constant 0 : index
    %149 = vector.load %arg8[%c20, %c0_108] : memref<32x1024xf32, #tpu.memory_space<vmem>>, vector<8x1024xf32>
    tpu.vector_store %arg8[%c20, %c0_108], %148 {strides = array<i32>} : memref<32x1024xf32, #tpu.memory_space<vmem>>, vector<8x1024xf32>,
    %c0_109 = arith.constant 0 : index
    %c0_110 = arith.constant 0 : index
    %150 = vector.load %arg6[%c0_109, %c0_110] : memref<4x32xf32, #tpu.memory_space<vmem>>, vector<4x32xf32>
    %c0_111 = arith.constant 0 : index
    %c0_112 = arith.constant 0 : index
    %151 = vector.load %arg8[%c0_111, %c0_112] : memref<32x1024xf32, #tpu.memory_space<vmem>>, vector<32x1024xf32>
    %cst_113 = arith.constant dense<0.000000e+00> : vector<4x1024xf32>
    %152 = tpu.matmul %150, %151, %cst_113 {dimension_numbers = #tpu.dot_dimension_numbers<[1], [0], [0], [1], [0, 0, 1, 1], [], []>} : vector<4x32xf32>, vector<32x1024xf32>, vector<4x1024xf32> -> vector<4x1024xf32>
    %153 = arith.addf %152, %2 : vector<4x1024xf32>
    %154 = vector.shape_cast %153 : vector<4x1024xf32> to vector<1x4x1024xf32>
    %c0_114 = arith.constant 0 : index
    %c0_115 = arith.constant 0 : index
    %c0_116 = arith.constant 0 : index
    %155 = vector.load %arg7[%c0_114, %c0_115, %c0_116] : memref<1x4x1024xf32, #tpu.memory_space<vmem>>, vector<1x4x1024xf32>
    tpu.vector_store %arg7[%c0_114, %c0_115, %c0_116], %154 {strides = array<i32>} : memref<1x4x1024xf32, #tpu.memory_space<vmem>>, vector<1x4x1024xf32>,
    return
  }
  func.func @transform_0(%arg0: i32) -> (i32, i32) {
    %c0_i32 = arith.constant 0 : i32
    %c0_i32_0 = arith.constant 0 : i32
    %c0_i32_1 = arith.constant 0 : i32
    return %c0_i32, %c0_i32_0 : i32, i32
  }
  func.func @transform_1(%arg0: i32) -> (i32, i32, i32) {
    %c0_i32 = arith.constant 0 : i32
    %c0_i32_0 = arith.constant 0 : i32
    %c0_i32_1 = arith.constant 0 : i32
    return %arg0, %c0_i32, %c0_i32_0 : i32, i32, i32
  }
  func.func @transform_2(%arg0: i32) -> (i32, i32, i32) {
    %c0_i32 = arith.constant 0 : i32
    %c0_i32_0 = arith.constant 0 : i32
    %c0_i32_1 = arith.constant 0 : i32
    %c0_i32_2 = arith.constant 0 : i32
    return %c0_i32, %c0_i32_0, %c0_i32_1 : i32, i32, i32
  }
  func.func @transform_3(%arg0: i32) -> (i32, i32, i32) {
    %c0_i32 = arith.constant 0 : i32
    %c0_i32_0 = arith.constant 0 : i32
    %c0_i32_1 = arith.constant 0 : i32
    %c0_i32_2 = arith.constant 0 : i32
    return %c0_i32, %c0_i32_0, %c0_i32_1 : i32, i32, i32
  }
  func.func @transform_4(%arg0: i32) -> (i32, i32, i32) {
    %c0_i32 = arith.constant 0 : i32
    %c0_i32_0 = arith.constant 0 : i32
    %c0_i32_1 = arith.constant 0 : i32
    %c0_i32_2 = arith.constant 0 : i32
    return %c0_i32, %c0_i32_0, %c0_i32_1 : i32, i32, i32
  }
  func.func @transform_5(%arg0: i32) -> (i32, i32) {
    %c0_i32 = arith.constant 0 : i32
    %c0_i32_0 = arith.constant 0 : i32
    %c0_i32_1 = arith.constant 0 : i32
    return %c0_i32, %c0_i32_0 : i32, i32
  }
  func.func @transform_6(%arg0: i32) -> (i32, i32, i32) {
    %c0_i32 = arith.constant 0 : i32
    %c0_i32_0 = arith.constant 0 : i32
    %c0_i32_1 = arith.constant 0 : i32
    return %arg0, %c0_i32, %c0_i32_0 : i32, i32, i32
  }
}

</mosaic_0001>

<llo_original>
// kernel: rdb_forward.1
$region0: #{rdb_forward.1}
  #allocation0 [shape = 'u32[]', space=smem, size = 0x4, offset = 0x4, fixed_abs, tag = 'smem constant byte address 0x4 - core index']
  #allocation1 [shape = 'u32[72,128]{1,0:T(1,128)}', space=vmem, size = 0x9000, scoped, tag = 'internal scratch']
  #allocation2 [shape = 'f32[32,1024]{1,0:T(8,128)}', space=vmem, size = 0x20000, scoped, tag = 'scratch operand']
  %s0 = inlined_call_operand.vmem [shape: f32[1,1024], index: 0, kind: input, shape index: {}]
  %s1 = inlined_call_operand.vmem [shape: f32[2,4,1024], index: 1, kind: input, shape index: {}]
  %s2 = inlined_call_operand.vmem [shape: f32[3,8,72], index: 2, kind: input, shape index: {}]
  %s3 = inlined_call_operand.vmem [shape: f32[3,8,144], index: 3, kind: input, shape index: {}]
  %s4 = inlined_call_operand.vmem [shape: f32[3,8,216], index: 4, kind: input, shape index: {}]
  %s5 = inlined_call_operand.vmem [shape: f32[4,32], index: 5, kind: input, shape index: {}]
  %s6 = inlined_call_operand.vmem [shape: f32[2,4,1024], index: 6, kind: output, shape index: {}]
  %s7 = sld [smem:[#allocation0]]
  $region57: #{rdb_forward.1} parent=0
    _
  %s9 = ssub.s32 1, %s7
  %s10 = scalar_select 0, %s9, %s7
  loop: start=0, step=1, limit=4
  $region2: #{rdb_forward.1} parent=0 // loop_pre_header
    _
  $region3: #{rdb_forward.1} parent=0 // loop_header
    %s12 = sphi 0, %s16
    %p13 = scmp.ge.s32.totalorder %s12, 4
    %s20 = sphi 0, %s20
    %s22 = sphi 0, %s20
    %s23 = sphi 0, %s22
    %s37 = sphi 0, %s23
    %s43 = sphi 0, %s45
    %s46 = sphi 0, %s43
    %s47 = sphi 0, %s46
    %s63 = sphi 0, %s47
    %s67 = sphi 0, %s67
    %s69 = sphi 0, %s67
    %s70 = sphi 0, %s69
    %s84 = sphi 0, %s70
    %s88 = sphi 0, %s88
    %s90 = sphi 0, %s88
    %s91 = sphi 0, %s90
    %s105 = sphi 0, %s91
    %s109 = sphi 0, %s109
    %s111 = sphi 0, %s109
    %s112 = sphi 0, %s111
    %s126 = sphi 0, %s112
    %s130 = sphi 0, %s130
    %s132 = sphi 0, %s130
    %s133 = sphi 0, %s132
    %s147 = sphi 0, %s133
    %s153 = sphi 0, %s155
    %s156 = sphi 0, %s153
    %s157 = sphi 0, %s156
    %s173 = sphi 0, %s157
  $region4: #{rdb_forward.1} parent=0 // loop_header_branch
    %15 = sbr.rel (%p13) target = $region8
  $region5: #{rdb_forward.1} parent=0 // loop_body
    %s17 = ssub.s32 %s12, 1
    %s18 = ssub.s32 %s12, 2
    %s19 = sadd.s32 %s12, 1
    %s21 = sadd.s32 %s20, 1
    %p24 = scmp.eq.s32.totalorder %s12, 1
    %p25 = scmp.ne.s32.totalorder %s20, %s22
    %p26 = scmp.eq.s32.totalorder %s12, 0
    %p27 = por %p25, %p26
    %p28 = scmp.ne.s32.totalorder %s20, %s22
    %p29 = scmp.eq.s32.totalorder %s17, 1
    %p30 = por %p28, %p29
    %p31 = scmp.ne.s32.totalorder %s22, %s23
    %p32 = scmp.eq.s32.totalorder %s17, 0
    %p33 = por %p31, %p32
    %p34 = scmp.ne.s32.totalorder %s22, %s23
    %p35 = scmp.eq.s32.totalorder %s18, 1
    %p36 = por %p34, %p35
    %p38 = scmp.ne.s32.totalorder %s23, %s37
    %p39 = scmp.eq.s32.totalorder %s18, 0
    %p40 = por %p38, %p39
    %s41 = ssub.s32 %s12, %s19
    %p42 = scmp.eq.s32.totalorder %s41, 0
    %s44 = sadd.s32 %s43, 1
    %s45 = scalar_select %p42, %s43, %s44
    %p48 = pneg %p42
    %p49 = scmp.eq.s32.totalorder %s12, 1
    %p50 = por %p48, %p49
    %p51 = scmp.ne.s32.totalorder %s43, %s46
    %p52 = scmp.eq.s32.totalorder %s12, 0
    %p53 = por %p51, %p52
    %p54 = scmp.ne.s32.totalorder %s43, %s46
    %p55 = scmp.eq.s32.totalorder %s17, 1
    %p56 = por %p54, %p55
    %p57 = scmp.ne.s32.totalorder %s46, %s47
    %p58 = scmp.eq.s32.totalorder %s17, 0
    %p59 = por %p57, %p58
    %p60 = scmp.ne.s32.totalorder %s46, %s47
    %p61 = scmp.eq.s32.totalorder %s18, 1
    %p62 = por %p60, %p61
    %p64 = scmp.ne.s32.totalorder %s47, %s63
    %p65 = scmp.eq.s32.totalorder %s18, 0
    %p66 = por %p64, %p65
    %s68 = sadd.s32 %s67, 1
    %p71 = scmp.eq.s32.totalorder %s12, 1
    %p72 = scmp.ne.s32.totalorder %s67, %s69
    %p73 = scmp.eq.s32.totalorder %s12, 0
    %p74 = por %p72, %p73
    %p75 = scmp.ne.s32.totalorder %s67, %s69
    %p76 = scmp.eq.s32.totalorder %s17, 1
    %p77 = por %p75, %p76
    %p78 = scmp.ne.s32.totalorder %s69, %s70
    %p79 = scmp.eq.s32.totalorder %s17, 0
    %p80 = por %p78, %p79
    %p81 = scmp.ne.s32.totalorder %s69, %s70
    %p82 = scmp.eq.s32.totalorder %s18, 1
    %p83 = por %p81, %p82
    %p85 = scmp.ne.s32.totalorder %s70, %s84
    %p86 = scmp.eq.s32.totalorder %s18, 0
    %p87 = por %p85, %p86
    %s89 = sadd.s32 %s88, 1
    %p92 = scmp.eq.s32.totalorder %s12, 1
    %p93 = scmp.ne.s32.totalorder %s88, %s90
    %p94 = scmp.eq.s32.totalorder %s12, 0
    %p95 = por %p93, %p94
    %p96 = scmp.ne.s32.totalorder %s88, %s90
    %p97 = scmp.eq.s32.totalorder %s17, 1
    %p98 = por %p96, %p97
    %p99 = scmp.ne.s32.totalorder %s90, %s91
    %p100 = scmp.eq.s32.totalorder %s17, 0
    %p101 = por %p99, %p100
    %p102 = scmp.ne.s32.totalorder %s90, %s91
    %p103 = scmp.eq.s32.totalorder %s18, 1
    %p104 = por %p102, %p103
    %p106 = scmp.ne.s32.totalorder %s91, %s105
    %p107 = scmp.eq.s32.totalorder %s18, 0
    %p108 = por %p106, %p107
    %s110 = sadd.s32 %s109, 1
    %p113 = scmp.eq.s32.totalorder %s12, 1
    %p114 = scmp.ne.s32.totalorder %s109, %s111
    %p115 = scmp.eq.s32.totalorder %s12, 0
    %p116 = por %p114, %p115
    %p117 = scmp.ne.s32.totalorder %s109, %s111
    %p118 = scmp.eq.s32.totalorder %s17, 1
    %p119 = por %p117, %p118
    %p120 = scmp.ne.s32.totalorder %s111, %s112
    %p121 = scmp.eq.s32.totalorder %s17, 0
    %p122 = por %p120, %p121
    %p123 = scmp.ne.s32.totalorder %s111, %s112
    %p124 = scmp.eq.s32.totalorder %s18, 1
    %p125 = por %p123, %p124
    %p127 = scmp.ne.s32.totalorder %s112, %s126
    %p128 = scmp.eq.s32.totalorder %s18, 0
    %p129 = por %p127, %p128
    %s131 = sadd.s32 %s130, 1
    %p134 = scmp.eq.s32.totalorder %s12, 1
    %p135 = scmp.ne.s32.totalorder %s130, %s132
    %p136 = scmp.eq.s32.totalorder %s12, 0
    %p137 = por %p135, %p136
    %p138 = scmp.ne.s32.totalorder %s130, %s132
    %p139 = scmp.eq.s32.totalorder %s17, 1
    %p140 = por %p138, %p139
    %p141 = scmp.ne.s32.totalorder %s132, %s133
    %p142 = scmp.eq.s32.totalorder %s17, 0
    %p143 = por %p141, %p142
    %p144 = scmp.ne.s32.totalorder %s132, %s133
    %p145 = scmp.eq.s32.totalorder %s18, 1
    %p146 = por %p144, %p145
    %p148 = scmp.ne.s32.totalorder %s133, %s147
    %p149 = scmp.eq.s32.totalorder %s18, 0
    %p150 = por %p148, %p149
    %s151 = ssub.s32 %s12, %s19
    %p152 = scmp.eq.s32.totalorder %s151, 0
    %s154 = sadd.s32 %s153, 1
    %s155 = scalar_select %p152, %s153, %s154
    %p158 = pneg %p152
    %p159 = scmp.eq.s32.totalorder %s12, 1
    %p160 = por %p158, %p159
    %p161 = scmp.ne.s32.totalorder %s153, %s156
    %p162 = scmp.eq.s32.totalorder %s12, 0
    %p163 = por %p161, %p162
    %p164 = scmp.ne.s32.totalorder %s153, %s156
    %p165 = scmp.eq.s32.totalorder %s17, 1
    %p166 = por %p164, %p165
    %p167 = scmp.ne.s32.totalorder %s156, %s157
    %p168 = scmp.eq.s32.totalorder %s17, 0
    %p169 = por %p167, %p168
    %p170 = scmp.ne.s32.totalorder %s156, %s157
    %p171 = scmp.eq.s32.totalorder %s18, 1
    %p172 = por %p170, %p171
    %p174 = scmp.ne.s32.totalorder %s157, %s173
    %p175 = scmp.eq.s32.totalorder %s18, 0
    %p176 = por %p174, %p175
    %p177 = scmp.le.s32.totalorder 1, %s12
    %p178 = scmp.lt.s32.totalorder %s12, 3
    %p179 = pnand %p177, %p178
    %p180 = pneg %p179
    // Predicated region
    $region9: #{rdb_forward.1} parent=5 // pred_check
      _
    $region10: #{rdb_forward.1} parent=5 // pred_check_branch
      %182 = sbr.rel (%p179) target = $region12
    $region11: #{rdb_forward.1} parent=5 // pred_region
      %s183 = ssub.s32 %s12, 1
      // Predicated region
      $region13: #{rdb_forward.1} parent=11 // pred_check
        %p184 = pneg %p33
      $region14: #{rdb_forward.1} parent=11 // pred_check_branch
        %186 = sbr.rel (%p184) target = $region16
      $region15: #{rdb_forward.1} parent=11 // pred_region
        _
      $region16: #{rdb_forward.1} parent=11 // pred_fallthru
        _
      // Predicated region
      $region17: #{rdb_forward.1} parent=11 // pred_check
        %p187 = pneg %p80
      $region18: #{rdb_forward.1} parent=11 // pred_check_branch
        %189 = sbr.rel (%p187) target = $region20
      $region19: #{rdb_forward.1} parent=11 // pred_region
        _
      $region20: #{rdb_forward.1} parent=11 // pred_fallthru
        _
      // Predicated region
      $region21: #{rdb_forward.1} parent=11 // pred_check
        %p190 = pneg %p101
      $region22: #{rdb_forward.1} parent=11 // pred_check_branch
        %192 = sbr.rel (%p190) target = $region24
      $region23: #{rdb_forward.1} parent=11 // pred_region
        _
      $region24: #{rdb_forward.1} parent=11 // pred_fallthru
        _
      // Predicated region
      $region25: #{rdb_forward.1} parent=11 // pred_check
        %p193 = pneg %p122
      $region26: #{rdb_forward.1} parent=11 // pred_check_branch
        %195 = sbr.rel (%p193) target = $region28
      $region27: #{rdb_forward.1} parent=11 // pred_region
        _
      $region28: #{rdb_forward.1} parent=11 // pred_fallthru
        _
      // Predicated region
      $region29: #{rdb_forward.1} parent=11 // pred_check
        %p196 = pneg %p143
      $region30: #{rdb_forward.1} parent=11 // pred_check_branch
        %198 = sbr.rel (%p196) target = $region32
      $region31: #{rdb_forward.1} parent=11 // pred_region
        _
      $region32: #{rdb_forward.1} parent=11 // pred_fallthru
        _
    $region12: #{rdb_forward.1} parent=5 // pred_fallthru
      _
    %p199 = scmp.lt.s32.totalorder %s12, 2
    // Predicated region
    $region33: #{rdb_forward.1} parent=5 // pred_check
      %p200 = pneg %p199
    $region34: #{rdb_forward.1} parent=5 // pred_check_branch
      %202 = sbr.rel (%p200) target = $region36
    $region35: #{rdb_forward.1} parent=5 // pred_region
      // Predicated region
      $region37: #{rdb_forward.1} parent=35 // pred_check
        %p203 = pneg %p53
      $region38: #{rdb_forward.1} parent=35 // pred_check_branch
        %205 = sbr.rel (%p203) target = $region40
      $region39: #{rdb_forward.1} parent=35 // pred_region
        %p206 = scmp.lt.s32.totalorder %s12, 1
        %s207 = scalar_select %p206, %s12, 1
        %s208 = smul.addr %s207, 8
        %s209 = smul.addr %s208, 4
        %s210 = scalar_lea.vmem %s1, %s209
      $region40: #{rdb_forward.1} parent=35 // pred_fallthru
        _
    $region36: #{rdb_forward.1} parent=5 // pred_fallthru
      _
    %p211 = scmp.le.s32.totalorder 1, %s12
    %p212 = scmp.lt.s32.totalorder %s12, 3
    %p213 = pnand %p211, %p212
    %p214 = pneg %p213
    // Predicated region
    $region41: #{rdb_forward.1} parent=5 // pred_check
      _
    $region42: #{rdb_forward.1} parent=5 // pred_check_branch
      %216 = sbr.rel (%p213) target = $region44
    $region43: #{rdb_forward.1} parent=5 // pred_region
      %s217 = ssub.s32 %s12, 1
      %p218 = pneg %p33
      %p219 = pneg %p30
      %p220 = scmp.lt.s32.totalorder %s17, 1
      %s221 = scalar_select %p220, %s17, 1
      %s222 = smul.addr %s221, 8
      %s223 = smul.addr %s222, 4
      %s224 = scalar_lea.vmem %s1, %s223
      %p225 = pneg %p59
      %p226 = pneg %p56
      %p227 = pneg %p80
      %p228 = pneg %p77
      %p229 = pneg %p101
      %p230 = pneg %p98
      %p231 = pneg %p122
      %p232 = pneg %p119
      %p233 = pneg %p143
      %p234 = pneg %p140
      %p235 = pneg %p169
      %p236 = pneg %p166
      %p237 = scmp.lt.s32.totalorder %s17, 1
      %s238 = scalar_select %p237, %s17, 1
      %s239 = smul.addr %s238, 8
      %s240 = smul.addr %s239, 4
      %s241 = scalar_lea.vmem %s6, %s240
      %p242 = scmp.lt.s32.totalorder %s17, 1
      %s243 = scalar_select %p242, %s17, 1
      %s244 = smul.addr %s243, 8
      %s245 = smul.addr %s244, 4
      %s246 = scalar_lea.vmem %s1, %s245
      %p247 = scmp.lt.s32.totalorder %s17, 1
      %s248 = scalar_select %p247, %s17, 1
      %s249 = smul.addr %s248, 8
      %s250 = smul.addr %s249, 4
      %s251 = scalar_lea.vmem %s6, %s250
      %v252 = vld [vmem:[%s0] sm:$0xff]
      %v253 = vld [vmem:[%s246] sm:$0xff]
      %v254 = vld [vmem:[%s246 + $0x8] sm:$0xff]
      %v255 = vld [vmem:[%s246 + $0x10] sm:$0xff]
      %v256 = vld [vmem:[%s246 + $0x18] sm:$0xff]
      %257 = vst [vmem:[#allocation2] sm:$0xff] 0.0
      %258 = vst [vmem:[#allocation2 + $0x8] sm:$0xff] 0.0
      %259 = vst [vmem:[#allocation2 + $0x10] sm:$0xff] 0.0
      %260 = vst [vmem:[#allocation2 + $0x18] sm:$0xff] 0.0
      %261 = vst [vmem:[#allocation2 + $0x20] sm:$0xff] 0.0
      %262 = vst [vmem:[#allocation2 + $0x28] sm:$0xff] 0.0
      %263 = vst [vmem:[#allocation2 + $0x30] sm:$0xff] 0.0
      %264 = vst [vmem:[#allocation2 + $0x38] sm:$0xff] 0.0
      %265 = vst [vmem:[#allocation2 + $0x40] sm:$0xff] 0.0
      %266 = vst [vmem:[#allocation2 + $0x48] sm:$0xff] 0.0
      %267 = vst [vmem:[#allocation2 + $0x50] sm:$0xff] 0.0
      %268 = vst [vmem:[#allocation2 + $0x58] sm:$0xff] 0.0
      %269 = vst [vmem:[#allocation2 + $0x60] sm:$0xff] 0.0
      %270 = vst [vmem:[#allocation2 + $0x68] sm:$0xff] 0.0
      %271 = vst [vmem:[#allocation2 + $0x70] sm:$0xff] 0.0
      %272 = vst [vmem:[#allocation2 + $0x78] sm:$0xff] 0.0
      %273 = vst [vmem:[#allocation2 + $0x80] sm:$0xff] 0.0
      %274 = vst [vmem:[#allocation2 + $0x88] sm:$0xff] 0.0
      %275 = vst [vmem:[#allocation2 + $0x90] sm:$0xff] 0.0
      %276 = vst [vmem:[#allocation2 + $0x98] sm:$0xff] 0.0
      %277 = vst [vmem:[#allocation2 + $0xa0] sm:$0xff] 0.0
      %278 = vst [vmem:[#allocation2 + $0xa8] sm:$0xff] 0.0
      %279 = vst [vmem:[#allocation2 + $0xb0] sm:$0xff] 0.0
      %280 = vst [vmem:[#allocation2 + $0xb8] sm:$0xff] 0.0
      %281 = vst [vmem:[#allocation2 + $0xc0] sm:$0xff] 0.0
      %282 = vst [vmem:[#allocation2 + $0xc8] sm:$0xff] 0.0
      %283 = vst [vmem:[#allocation2 + $0xd0] sm:$0xff] 0.0
      %284 = vst [vmem:[#allocation2 + $0xd8] sm:$0xff] 0.0
      %285 = vst [vmem:[#allocation2 + $0xe0] sm:$0xff] 0.0
      %286 = vst [vmem:[#allocation2 + $0xe8] sm:$0xff] 0.0
      %287 = vst [vmem:[#allocation2 + $0xf0] sm:$0xff] 0.0
      %288 = vst [vmem:[#allocation2 + $0xf8] sm:$0xff] 0.0
      %293 = vst [vmem:[#allocation1] ss:$2 sm:$0xff] %v253
      %s294 = scalar_lea.vmem [#allocation1], 16
      %295 = vst [vmem:[%s294] ss:$2 sm:$0xff] %v254
      %s296 = scalar_lea.vmem [#allocation1], 32
      %297 = vst [vmem:[%s296] ss:$2 sm:$0xff] %v255
      %s298 = scalar_lea.vmem [#allocation1], 48
      %299 = vst [vmem:[%s298] ss:$2 sm:$0xff] %v256
      %v300 = vld.sshfl [vmem:[#allocation1] sm:$0xff pattern:$0x75316420]
      %v301 = vld.sshfl [vmem:[#allocation1 + $0x8] sm:$0xff pattern:$0x75316420]
      %v302 = vld.sshfl [vmem:[#allocation1 + $0x10] sm:$0xff pattern:$0x75316420]
      %v303 = vld.sshfl [vmem:[#allocation1 + $0x18] sm:$0xff pattern:$0x75316420]
      %v304 = vld.sshfl [vmem:[#allocation1 + $0x20] sm:$0xff pattern:$0x75316420]
      %v305 = vld.sshfl [vmem:[#allocation1 + $0x28] sm:$0xff pattern:$0x75316420]
      %v306 = vld.sshfl [vmem:[#allocation1 + $0x30] sm:$0xff pattern:$0x75316420]
      %v307 = vld.sshfl [vmem:[#allocation1 + $0x38] sm:$0xff pattern:$0x75316420]
      %316 = vst [vmem:[#allocation2] sm:$0xf] %v300
      %317 = vst [vmem:[#allocation2 + $0x8] sm:$0xf] %v301
      %318 = vst [vmem:[#allocation2 + $0x10] sm:$0xf] %v302
      %319 = vst [vmem:[#allocation2 + $0x18] sm:$0xf] %v303
      %320 = vst [vmem:[#allocation2 + $0x20] sm:$0xf] %v304
      %321 = vst [vmem:[#allocation2 + $0x28] sm:$0xf] %v305
      %322 = vst [vmem:[#allocation2 + $0x30] sm:$0xf] %v306
      %323 = vst [vmem:[#allocation2 + $0x38] sm:$0xf] %v307
      %v324 = vld [vmem:[#allocation2] sm:$0xff]
      %v325 = vld [vmem:[#allocation2 + $0x8] sm:$0xff]
      %v326 = vld [vmem:[#allocation2 + $0x10] sm:$0xff]
      %v327 = vld [vmem:[#allocation2 + $0x18] sm:$0xff]
      %v328 = vld [vmem:[#allocation2 + $0x20] sm:$0xff]
      %v329 = vld [vmem:[#allocation2 + $0x28] sm:$0xff]
      %v330 = vld [vmem:[#allocation2 + $0x30] sm:$0xff]
      %v331 = vld [vmem:[#allocation2 + $0x38] sm:$0xff]
      %332 = vrot.lane.b32.xlu0 %v324, 111
      %v333 = vpop.permute.xlu0 %332
      %334 = vrot.lane.b32.xlu0 %v325, 111
      %v335 = vpop.permute.xlu0 %334
      %336 = vrot.lane.b32.xlu0 %v326, 111
      %v337 = vpop.permute.xlu0 %336
      %338 = vrot.lane.b32.xlu0 %v327, 111
      %v339 = vpop.permute.xlu0 %338
      %340 = vrot.lane.b32.xlu0 %v328, 111
      %v341 = vpop.permute.xlu0 %340
      %342 = vrot.lane.b32.xlu0 %v329, 111
      %v343 = vpop.permute.xlu0 %342
      %344 = vrot.lane.b32.xlu0 %v330, 111
      %v345 = vpop.permute.xlu0 %344
      %346 = vrot.lane.b32.xlu0 %v331, 111
      %v347 = vpop.permute.xlu0 %346
      %v348 = vlaneseq
      %v349 = vand.u32 %v348, 127
      %vm350 = vcmp.lt.s32.totalorder %v349, 111
      %v351 = vsel %vm350, %v345, %v347
      %v352 = vsel %vm350, %v343, %v345
      %v353 = vsel %vm350, %v341, %v343
      %v354 = vsel %vm350, %v339, %v341
      %v355 = vsel %vm350, %v337, %v339
      %v356 = vsel %vm350, %v335, %v337
      %v357 = vsel %vm350, %v333, %v335
      %v358 = vsel %vm350, %v347, %v333
      %359 = vrot.lane.b32.xlu0 %v324, 110
      %v360 = vpop.permute.xlu0 %359
      %361 = vrot.lane.b32.xlu0 %v325, 110
      %v362 = vpop.permute.xlu0 %361
      %363 = vrot.lane.b32.xlu0 %v326, 110
      %v364 = vpop.permute.xlu0 %363
      %365 = vrot.lane.b32.xlu0 %v327, 110
      %v366 = vpop.permute.xlu0 %365
      %367 = vrot.lane.b32.xlu0 %v328, 110
      %v368 = vpop.permute.xlu0 %367
      %369 = vrot.lane.b32.xlu0 %v329, 110
      %v370 = vpop.permute.xlu0 %369
      %371 = vrot.lane.b32.xlu0 %v330, 110
      %v372 = vpop.permute.xlu0 %371
      %373 = vrot.lane.b32.xlu0 %v331, 110
      %v374 = vpop.permute.xlu0 %373
      %vm375 = vcmp.lt.s32.totalorder %v349, 110
      %v376 = vsel %vm375, %v372, %v374
      %v377 = vsel %vm375, %v370, %v372
      %v378 = vsel %vm375, %v368, %v370
      %v379 = vsel %vm375, %v366, %v368
      %v380 = vsel %vm375, %v364, %v366
      %v381 = vsel %vm375, %v362, %v364
      %v382 = vsel %vm375, %v360, %v362
      %v383 = vsel %vm375, %v374, %v360
      %384 = vrot.lane.b32.xlu0 %v324, 109
      %v385 = vpop.permute.xlu0 %384
      %386 = vrot.lane.b32.xlu0 %v325, 109
      %v387 = vpop.permute.xlu0 %386
      %388 = vrot.lane.b32.xlu0 %v326, 109
      %v389 = vpop.permute.xlu0 %388
      %390 = vrot.lane.b32.xlu0 %v327, 109
      %v391 = vpop.permute.xlu0 %390
      %392 = vrot.lane.b32.xlu0 %v328, 109
      %v393 = vpop.permute.xlu0 %392
      %394 = vrot.lane.b32.xlu0 %v329, 109
      %v395 = vpop.permute.xlu0 %394
      %396 = vrot.lane.b32.xlu0 %v330, 109
      %v397 = vpop.permute.xlu0 %396
      %398 = vrot.lane.b32.xlu0 %v331, 109
      %v399 = vpop.permute.xlu0 %398
      %vm400 = vcmp.lt.s32.totalorder %v349, 109
      %v401 = vsel %vm400, %v397, %v399
      %v402 = vsel %vm400, %v395, %v397
      %v403 = vsel %vm400, %v393, %v395
      %v404 = vsel %vm400, %v391, %v393
      %v405 = vsel %vm400, %v389, %v391
      %v406 = vsel %vm400, %v387, %v389
      %v407 = vsel %vm400, %v385, %v387
      %v408 = vsel %vm400, %v399, %v385
      %409 = vrot.lane.b32.xlu0 %v324, 101
      %v410 = vpop.permute.xlu0 %409
      %411 = vrot.lane.b32.xlu0 %v325, 101
      %v412 = vpop.permute.xlu0 %411
      %413 = vrot.lane.b32.xlu0 %v326, 101
      %v414 = vpop.permute.xlu0 %413
      %415 = vrot.lane.b32.xlu0 %v327, 101
      %v416 = vpop.permute.xlu0 %415
      %417 = vrot.lane.b32.xlu0 %v328, 101
      %v418 = vpop.permute.xlu0 %417
      %419 = vrot.lane.b32.xlu0 %v329, 101
      %v420 = vpop.permute.xlu0 %419
      %421 = vrot.lane.b32.xlu0 %v330, 101
      %v422 = vpop.permute.xlu0 %421
      %423 = vrot.lane.b32.xlu0 %v331, 101
      %v424 = vpop.permute.xlu0 %423
      %vm425 = vcmp.lt.s32.totalorder %v349, 101
      %v426 = vsel %vm425, %v422, %v424
      %v427 = vsel %vm425, %v420, %v422
      %v428 = vsel %vm425, %v418, %v420
      %v429 = vsel %vm425, %v416, %v418
      %v430 = vsel %vm425, %v414, %v416
      %v431 = vsel %vm425, %v412, %v414
      %v432 = vsel %vm425, %v410, %v412
      %v433 = vsel %vm425, %v424, %v410
      %434 = vrot.lane.b32.xlu0 %v324, 100
      %v435 = vpop.permute.xlu0 %434
      %436 = vrot.lane.b32.xlu0 %v325, 100
      %v437 = vpop.permute.xlu0 %436
      %438 = vrot.lane.b32.xlu0 %v326, 100
      %v439 = vpop.permute.xlu0 %438
      %440 = vrot.lane.b32.xlu0 %v327, 100
      %v441 = vpop.permute.xlu0 %440
      %442 = vrot.lane.b32.xlu0 %v328, 100
      %v443 = vpop.permute.xlu0 %442
      %444 = vrot.lane.b32.xlu0 %v329, 100
      %v445 = vpop.permute.xlu0 %444
      %446 = vrot.lane.b32.xlu0 %v330, 100
      %v447 = vpop.permute.xlu0 %446
      %448 = vrot.lane.b32.xlu0 %v331, 100
      %v449 = vpop.permute.xlu0 %448
      %vm450 = vcmp.lt.s32.totalorder %v349, 100
      %v451 = vsel %vm450, %v447, %v449
      %v452 = vsel %vm450, %v445, %v447
      %v453 = vsel %vm450, %v443, %v445
      %v454 = vsel %vm450, %v441, %v443
      %v455 = vsel %vm450, %v439, %v441
      %v456 = vsel %vm450, %v437, %v439
      %v457 = vsel %vm450, %v435, %v437
      %v458 = vsel %vm450, %v449, %v435
      %459 = vrot.lane.b32.xlu0 %v324, 99
      %v460 = vpop.permute.xlu0 %459
      %461 = vrot.lane.b32.xlu0 %v325, 99
      %v462 = vpop.permute.xlu0 %461
      %463 = vrot.lane.b32.xlu0 %v326, 99
      %v464 = vpop.permute.xlu0 %463
      %465 = vrot.lane.b32.xlu0 %v327, 99
      %v466 = vpop.permute.xlu0 %465
      %467 = vrot.lane.b32.xlu0 %v328, 99
      %v468 = vpop.permute.xlu0 %467
      %469 = vrot.lane.b32.xlu0 %v329, 99
      %v470 = vpop.permute.xlu0 %469
      %471 = vrot.lane.b32.xlu0 %v330, 99
      %v472 = vpop.permute.xlu0 %471
      %473 = vrot.lane.b32.xlu0 %v331, 99
      %v474 = vpop.permute.xlu0 %473
      %vm475 = vcmp.lt.s32.totalorder %v349, 99
      %v476 = vsel %vm475, %v472, %v474
      %v477 = vsel %vm475, %v470, %v472
      %v478 = vsel %vm475, %v468, %v470
      %v479 = vsel %vm475, %v466, %v468
      %v480 = vsel %vm475, %v464, %v466
      %v481 = vsel %vm475, %v462, %v464
      %v482 = vsel %vm475, %v460, %v462
      %v483 = vsel %vm475, %v474, %v460
      %484 = vrot.lane.b32.xlu0 %v324, 91
      %v485 = vpop.permute.xlu0 %484
      %486 = vrot.lane.b32.xlu0 %v325, 91
      %v487 = vpop.permute.xlu0 %486
      %488 = vrot.lane.b32.xlu0 %v326, 91
      %v489 = vpop.permute.xlu0 %488
      %490 = vrot.lane.b32.xlu0 %v327, 91
      %v491 = vpop.permute.xlu0 %490
      %492 = vrot.lane.b32.xlu0 %v328, 91
      %v493 = vpop.permute.xlu0 %492
      %494 = vrot.lane.b32.xlu0 %v329, 91
      %v495 = vpop.permute.xlu0 %494
      %496 = vrot.lane.b32.xlu0 %v330, 91
      %v497 = vpop.permute.xlu0 %496
      %498 = vrot.lane.b32.xlu0 %v331, 91
      %v499 = vpop.permute.xlu0 %498
      %vm500 = vcmp.lt.s32.totalorder %v349, 91
      %v501 = vsel %vm500, %v497, %v499
      %v502 = vsel %vm500, %v495, %v497
      %v503 = vsel %vm500, %v493, %v495
      %v504 = vsel %vm500, %v491, %v493
      %v505 = vsel %vm500, %v489, %v491
      %v506 = vsel %vm500, %v487, %v489
      %v507 = vsel %vm500, %v485, %v487
      %v508 = vsel %vm500, %v499, %v485
      %509 = vrot.lane.b32.xlu0 %v324, 90
      %v510 = vpop.permute.xlu0 %509
      %511 = vrot.lane.b32.xlu0 %v325, 90
      %v512 = vpop.permute.xlu0 %511
      %513 = vrot.lane.b32.xlu0 %v326, 90
      %v514 = vpop.permute.xlu0 %513
      %515 = vrot.lane.b32.xlu0 %v327, 90
      %v516 = vpop.permute.xlu0 %515
      %517 = vrot.lane.b32.xlu0 %v328, 90
      %v518 = vpop.permute.xlu0 %517
      %519 = vrot.lane.b32.xlu0 %v329, 90
      %v520 = vpop.permute.xlu0 %519
      %521 = vrot.lane.b32.xlu0 %v330, 90
      %v522 = vpop.permute.xlu0 %521
      %523 = vrot.lane.b32.xlu0 %v331, 90
      %v524 = vpop.permute.xlu0 %523
      %vm525 = vcmp.lt.s32.totalorder %v349, 90
      %v526 = vsel %vm525, %v522, %v524
      %v527 = vsel %vm525, %v520, %v522
      %v528 = vsel %vm525, %v518, %v520
      %v529 = vsel %vm525, %v516, %v518
      %v530 = vsel %vm525, %v514, %v516
      %v531 = vsel %vm525, %v512, %v514
      %v532 = vsel %vm525, %v510, %v512
      %v533 = vsel %vm525, %v524, %v510
      %534 = vrot.lane.b32.xlu0 %v324, 89
      %v535 = vpop.permute.xlu0 %534
      %536 = vrot.lane.b32.xlu0 %v325, 89
      %v537 = vpop.permute.xlu0 %536
      %538 = vrot.lane.b32.xlu0 %v326, 89
      %v539 = vpop.permute.xlu0 %538
      %540 = vrot.lane.b32.xlu0 %v327, 89
      %v541 = vpop.permute.xlu0 %540
      %542 = vrot.lane.b32.xlu0 %v328, 89
      %v543 = vpop.permute.xlu0 %542
      %544 = vrot.lane.b32.xlu0 %v329, 89
      %v545 = vpop.permute.xlu0 %544
      %546 = vrot.lane.b32.xlu0 %v330, 89
      %v547 = vpop.permute.xlu0 %546
      %548 = vrot.lane.b32.xlu0 %v331, 89
      %v549 = vpop.permute.xlu0 %548
      %vm550 = vcmp.lt.s32.totalorder %v349, 89
      %v551 = vsel %vm550, %v547, %v549
      %v552 = vsel %vm550, %v545, %v547
      %v553 = vsel %vm550, %v543, %v545
      %v554 = vsel %vm550, %v541, %v543
      %v555 = vsel %vm550, %v539, %v541
      %v556 = vsel %vm550, %v537, %v539
      %v557 = vsel %vm550, %v535, %v537
      %v558 = vsel %vm550, %v549, %v535
      %v559 = vld [vmem:[%s2] sm:$0xff]
      %560 = vrot.lane.b32.xlu0 %v324, 11
      %v561 = vpop.permute.xlu0 %560
      %562 = vrot.lane.b32.xlu0 %v325, 11
      %v563 = vpop.permute.xlu0 %562
      %564 = vrot.lane.b32.xlu0 %v326, 11
      %v565 = vpop.permute.xlu0 %564
      %566 = vrot.lane.b32.xlu0 %v327, 11
      %v567 = vpop.permute.xlu0 %566
      %568 = vrot.lane.b32.xlu0 %v328, 11
      %v569 = vpop.permute.xlu0 %568
      %570 = vrot.lane.b32.xlu0 %v329, 11
      %v571 = vpop.permute.xlu0 %570
      %572 = vrot.lane.b32.xlu0 %v330, 11
      %v573 = vpop.permute.xlu0 %572
      %574 = vrot.lane.b32.xlu0 %v331, 11
      %v575 = vpop.permute.xlu0 %574
      %vm576 = vcmp.lt.s32.totalorder %v349, 11
      %v577 = vsel %vm576, %v573, %v575
      %v578 = vsel %vm576, %v571, %v573
      %v579 = vsel %vm576, %v569, %v571
      %v580 = vsel %vm576, %v567, %v569
      %v581 = vsel %vm576, %v565, %v567
      %v582 = vsel %vm576, %v563, %v565
      %v583 = vsel %vm576, %v561, %v563
      %v584 = vsel %vm576, %v575, %v561
      %585 = vrot.lane.b32.xlu0 %v324, 10
      %v586 = vpop.permute.xlu0 %585
      %587 = vrot.lane.b32.xlu0 %v325, 10
      %v588 = vpop.permute.xlu0 %587
      %589 = vrot.lane.b32.xlu0 %v326, 10
      %v590 = vpop.permute.xlu0 %589
      %591 = vrot.lane.b32.xlu0 %v327, 10
      %v592 = vpop.permute.xlu0 %591
      %593 = vrot.lane.b32.xlu0 %v328, 10
      %v594 = vpop.permute.xlu0 %593
      %595 = vrot.lane.b32.xlu0 %v329, 10
      %v596 = vpop.permute.xlu0 %595
      %597 = vrot.lane.b32.xlu0 %v330, 10
      %v598 = vpop.permute.xlu0 %597
      %599 = vrot.lane.b32.xlu0 %v331, 10
      %v600 = vpop.permute.xlu0 %599
      %vm601 = vcmp.lt.s32.totalorder %v349, 10
      %v602 = vsel %vm601, %v598, %v600
      %v603 = vsel %vm601, %v596, %v598
      %v604 = vsel %vm601, %v594, %v596
      %v605 = vsel %vm601, %v592, %v594
      %v606 = vsel %vm601, %v590, %v592
      %v607 = vsel %vm601, %v588, %v590
      %v608 = vsel %vm601, %v586, %v588
      %v609 = vsel %vm601, %v600, %v586
      %610 = vrot.lane.b32.xlu0 %v324, 9
      %v611 = vpop.permute.xlu0 %610
      %612 = vrot.lane.b32.xlu0 %v325, 9
      %v613 = vpop.permute.xlu0 %612
      %614 = vrot.lane.b32.xlu0 %v326, 9
      %v615 = vpop.permute.xlu0 %614
      %616 = vrot.lane.b32.xlu0 %v327, 9
      %v617 = vpop.permute.xlu0 %616
      %618 = vrot.lane.b32.xlu0 %v328, 9
      %v619 = vpop.permute.xlu0 %618
      %620 = vrot.lane.b32.xlu0 %v329, 9
      %v621 = vpop.permute.xlu0 %620
      %622 = vrot.lane.b32.xlu0 %v330, 9
      %v623 = vpop.permute.xlu0 %622
      %624 = vrot.lane.b32.xlu0 %v331, 9
      %v625 = vpop.permute.xlu0 %624
      %vm626 = vcmp.lt.s32.totalorder %v349, 9
      %v627 = vsel %vm626, %v623, %v625
      %v628 = vsel %vm626, %v621, %v623
      %v629 = vsel %vm626, %v619, %v621
      %v630 = vsel %vm626, %v617, %v619
      %v631 = vsel %vm626, %v615, %v617
      %v632 = vsel %vm626, %v613, %v615
      %v633 = vsel %vm626, %v611, %v613
      %v634 = vsel %vm626, %v625, %v611
      %635 = vrot.lane.b32.xlu0 %v324, 1
      %v636 = vpop.permute.xlu0 %635
      %637 = vrot.lane.b32.xlu0 %v325, 1
      %v638 = vpop.permute.xlu0 %637
      %639 = vrot.lane.b32.xlu0 %v326, 1
      %v640 = vpop.permute.xlu0 %639
      %641 = vrot.lane.b32.xlu0 %v327, 1
      %v642 = vpop.permute.xlu0 %641
      %643 = vrot.lane.b32.xlu0 %v328, 1
      %v644 = vpop.permute.xlu0 %643
      %645 = vrot.lane.b32.xlu0 %v329, 1
      %v646 = vpop.permute.xlu0 %645
      %647 = vrot.lane.b32.xlu0 %v330, 1
      %v648 = vpop.permute.xlu0 %647
      %649 = vrot.lane.b32.xlu0 %v331, 1
      %v650 = vpop.permute.xlu0 %649
      %vm651 = vcmp.lt.s32.totalorder %v349, 1
      %v652 = vsel %vm651, %v648, %v650
      %v653 = vsel %vm651, %v646, %v648
      %v654 = vsel %vm651, %v644, %v646
      %v655 = vsel %vm651, %v642, %v644
      %v656 = vsel %vm651, %v640, %v642
      %v657 = vsel %vm651, %v638, %v640
      %v658 = vsel %vm651, %v636, %v638
      %v659 = vsel %vm651, %v650, %v636
      %660 = vrot.lane.b32.xlu0 %v324, 127
      %v661 = vpop.permute.xlu0 %660
      %662 = vrot.lane.b32.xlu0 %v325, 127
      %v663 = vpop.permute.xlu0 %662
      %664 = vrot.lane.b32.xlu0 %v326, 127
      %v665 = vpop.permute.xlu0 %664
      %666 = vrot.lane.b32.xlu0 %v327, 127
      %v667 = vpop.permute.xlu0 %666
      %668 = vrot.lane.b32.xlu0 %v328, 127
      %v669 = vpop.permute.xlu0 %668
      %670 = vrot.lane.b32.xlu0 %v329, 127
      %v671 = vpop.permute.xlu0 %670
      %672 = vrot.lane.b32.xlu0 %v330, 127
      %v673 = vpop.permute.xlu0 %672
      %674 = vrot.lane.b32.xlu0 %v331, 127
      %v675 = vpop.permute.xlu0 %674
      %vm676 = vcmp.lt.s32.totalorder %v349, 127
      %v677 = vsel %vm676, %v673, %v675
      %v678 = vsel %vm676, %v671, %v673
      %v679 = vsel %vm676, %v669, %v671
      %v680 = vsel %vm676, %v667, %v669
      %v681 = vsel %vm676, %v665, %v667
      %v682 = vsel %vm676, %v663, %v665
      %v683 = vsel %vm676, %v661, %v663
      %v684 = vsel %vm676, %v675, %v661
      %685 = vrot.lane.b32.xlu0 %v324, 119
      %v686 = vpop.permute.xlu0 %685
      %687 = vrot.lane.b32.xlu0 %v325, 119
      %v688 = vpop.permute.xlu0 %687
      %689 = vrot.lane.b32.xlu0 %v326, 119
      %v690 = vpop.permute.xlu0 %689
      %691 = vrot.lane.b32.xlu0 %v327, 119
      %v692 = vpop.permute.xlu0 %691
      %693 = vrot.lane.b32.xlu0 %v328, 119
      %v694 = vpop.permute.xlu0 %693
      %695 = vrot.lane.b32.xlu0 %v329, 119
      %v696 = vpop.permute.xlu0 %695
      %697 = vrot.lane.b32.xlu0 %v330, 119
      %v698 = vpop.permute.xlu0 %697
      %699 = vrot.lane.b32.xlu0 %v331, 119
      %v700 = vpop.permute.xlu0 %699
      %vm701 = vcmp.lt.s32.totalorder %v349, 119
      %v702 = vsel %vm701, %v698, %v700
      %v703 = vsel %vm701, %v696, %v698
      %v704 = vsel %vm701, %v694, %v696
      %v705 = vsel %vm701, %v692, %v694
      %v706 = vsel %vm701, %v690, %v692
      %v707 = vsel %vm701, %v688, %v690
      %v708 = vsel %vm701, %v686, %v688
      %v709 = vsel %vm701, %v700, %v686
      %710 = vrot.lane.b32.xlu0 %v324, 118
      %v711 = vpop.permute.xlu0 %710
      %712 = vrot.lane.b32.xlu0 %v325, 118
      %v713 = vpop.permute.xlu0 %712
      %714 = vrot.lane.b32.xlu0 %v326, 118
      %v715 = vpop.permute.xlu0 %714
      %716 = vrot.lane.b32.xlu0 %v327, 118
      %v717 = vpop.permute.xlu0 %716
      %718 = vrot.lane.b32.xlu0 %v328, 118
      %v719 = vpop.permute.xlu0 %718
      %720 = vrot.lane.b32.xlu0 %v329, 118
      %v721 = vpop.permute.xlu0 %720
      %722 = vrot.lane.b32.xlu0 %v330, 118
      %v723 = vpop.permute.xlu0 %722
      %724 = vrot.lane.b32.xlu0 %v331, 118
      %v725 = vpop.permute.xlu0 %724
      %vm726 = vcmp.lt.s32.totalorder %v349, 118
      %v727 = vsel %vm726, %v723, %v725
      %v728 = vsel %vm726, %v721, %v723
      %v729 = vsel %vm726, %v719, %v721
      %v730 = vsel %vm726, %v717, %v719
      %v731 = vsel %vm726, %v715, %v717
      %v732 = vsel %vm726, %v713, %v715
      %v733 = vsel %vm726, %v711, %v713
      %v734 = vsel %vm726, %v725, %v711
      %735 = vrot.lane.b32.xlu0 %v324, 117
      %v736 = vpop.permute.xlu0 %735
      %737 = vrot.lane.b32.xlu0 %v325, 117
      %v738 = vpop.permute.xlu0 %737
      %739 = vrot.lane.b32.xlu0 %v326, 117
      %v740 = vpop.permute.xlu0 %739
      %741 = vrot.lane.b32.xlu0 %v327, 117
      %v742 = vpop.permute.xlu0 %741
      %743 = vrot.lane.b32.xlu0 %v328, 117
      %v744 = vpop.permute.xlu0 %743
      %745 = vrot.lane.b32.xlu0 %v329, 117
      %v746 = vpop.permute.xlu0 %745
      %747 = vrot.lane.b32.xlu0 %v330, 117
      %v748 = vpop.permute.xlu0 %747
      %749 = vrot.lane.b32.xlu0 %v331, 117
      %v750 = vpop.permute.xlu0 %749
      %vm751 = vcmp.lt.s32.totalorder %v349, 117
      %v752 = vsel %vm751, %v748, %v750
      %v753 = vsel %vm751, %v746, %v748
      %v754 = vsel %vm751, %v744, %v746
      %v755 = vsel %vm751, %v742, %v744
      %v756 = vsel %vm751, %v740, %v742
      %v757 = vsel %vm751, %v738, %v740
      %v758 = vsel %vm751, %v736, %v738
      %v759 = vsel %vm751, %v750, %v736
      %s760 = scalar_lea.vmem %s2, 8
      %v761 = vld [vmem:[%s760] sm:$0xff]
      %vm762 = vcmask 588800
      %v764 = vsel %vm762, %v761, 0
      %766 = vmatpush.msra.mxu0 0.0
      %767 = vmatpush.msra.mxu0 0.0
      %768 = vmatpush.msra.mxu0 0.0
      %769 = vmatpush.msra.mxu0 0.0
      %770 = vmatpush.msra.mxu0 0.0
      %771 = vmatpush.msra.mxu0 0.0
      %772 = vmatpush.msra.mxu0 0.0
      %773 = vmatpush.msra.mxu0 %v758
      %774 = vmatpush.msra.mxu0 %v733
      %775 = vmatpush.msra.mxu0 %v708
      %776 = vmatpush.msra.mxu0 %v683
      %777 = vmatpush.msra.mxu0 %v324
      %778 = vmatpush.msra.mxu0 %v659
      %779 = vmatpush.msra.mxu0 %v634
      %780 = vmatpush.msra.mxu0 %v609
      %781 = vmatpush.msra.mxu0 %v584
      %782 = vmatmul.f32.gmra.mxu0 %v764
      %v783 = vpop.f32.mrf.mxu0
      %v784 = vadd.f32 0.0, %v783
      %785 = vdwg.mxu0
      %786 = vmatpush.msra.mxu0 0.0
      %787 = vmatpush.msra.mxu0 0.0
      %788 = vmatpush.msra.mxu0 0.0
      %789 = vmatpush.msra.mxu0 0.0
      %790 = vmatpush.msra.mxu0 0.0
      %791 = vmatpush.msra.mxu0 0.0
      %792 = vmatpush.msra.mxu0 0.0
      %793 = vmatpush.msra.mxu0 %v757
      %794 = vmatpush.msra.mxu0 %v732
      %795 = vmatpush.msra.mxu0 %v707
      %796 = vmatpush.msra.mxu0 %v682
      %797 = vmatpush.msra.mxu0 %v325
      %798 = vmatpush.msra.mxu0 %v658
      %799 = vmatpush.msra.mxu0 %v633
      %800 = vmatpush.msra.mxu0 %v608
      %801 = vmatpush.msra.mxu0 %v583
      %802 = vmatmul.f32.gmra.mxu0 %v764
      %v803 = vpop.f32.mrf.mxu0
      %v804 = vadd.f32 0.0, %v803
      %805 = vdwg.mxu0
      %806 = vmatpush.msra.mxu0 0.0
      %807 = vmatpush.msra.mxu0 0.0
      %808 = vmatpush.msra.mxu0 0.0
      %809 = vmatpush.msra.mxu0 0.0
      %810 = vmatpush.msra.mxu0 0.0
      %811 = vmatpush.msra.mxu0 0.0
      %812 = vmatpush.msra.mxu0 0.0
      %813 = vmatpush.msra.mxu0 %v756
      %814 = vmatpush.msra.mxu0 %v731
      %815 = vmatpush.msra.mxu0 %v706
      %816 = vmatpush.msra.mxu0 %v681
      %817 = vmatpush.msra.mxu0 %v326
      %818 = vmatpush.msra.mxu0 %v657
      %819 = vmatpush.msra.mxu0 %v632
      %820 = vmatpush.msra.mxu0 %v607
      %821 = vmatpush.msra.mxu0 %v582
      %822 = vmatmul.f32.gmra.mxu0 %v764
      %v823 = vpop.f32.mrf.mxu0
      %v824 = vadd.f32 0.0, %v823
      %825 = vdwg.mxu0
      %826 = vmatpush.msra.mxu0 0.0
      %827 = vmatpush.msra.mxu0 0.0
      %828 = vmatpush.msra.mxu0 0.0
      %829 = vmatpush.msra.mxu0 0.0
      %830 = vmatpush.msra.mxu0 0.0
      %831 = vmatpush.msra.mxu0 0.0
      %832 = vmatpush.msra.mxu0 0.0
      %833 = vmatpush.msra.mxu0 %v755
      %834 = vmatpush.msra.mxu0 %v730
      %835 = vmatpush.msra.mxu0 %v705
      %836 = vmatpush.msra.mxu0 %v680
      %837 = vmatpush.msra.mxu0 %v327
      %838 = vmatpush.msra.mxu0 %v656
      %839 = vmatpush.msra.mxu0 %v631
      %840 = vmatpush.msra.mxu0 %v606
      %841 = vmatpush.msra.mxu0 %v581
      %842 = vmatmul.f32.gmra.mxu0 %v764
      %v843 = vpop.f32.mrf.mxu0
      %v844 = vadd.f32 0.0, %v843
      %845 = vdwg.mxu0
      %846 = vmatpush.msra.mxu0 0.0
      %847 = vmatpush.msra.mxu0 0.0
      %848 = vmatpush.msra.mxu0 0.0
      %849 = vmatpush.msra.mxu0 0.0
      %850 = vmatpush.msra.mxu0 0.0
      %851 = vmatpush.msra.mxu0 0.0
      %852 = vmatpush.msra.mxu0 0.0
      %853 = vmatpush.msra.mxu0 %v754
      %854 = vmatpush.msra.mxu0 %v729
      %855 = vmatpush.msra.mxu0 %v704
      %856 = vmatpush.msra.mxu0 %v679
      %857 = vmatpush.msra.mxu0 %v328
      %858 = vmatpush.msra.mxu0 %v655
      %859 = vmatpush.msra.mxu0 %v630
      %860 = vmatpush.msra.mxu0 %v605
      %861 = vmatpush.msra.mxu0 %v580
      %862 = vmatmul.f32.gmra.mxu0 %v764
      %v863 = vpop.f32.mrf.mxu0
      %v864 = vadd.f32 0.0, %v863
      %865 = vdwg.mxu0
      %866 = vmatpush.msra.mxu0 0.0
      %867 = vmatpush.msra.mxu0 0.0
      %868 = vmatpush.msra.mxu0 0.0
      %869 = vmatpush.msra.mxu0 0.0
      %870 = vmatpush.msra.mxu0 0.0
      %871 = vmatpush.msra.mxu0 0.0
      %872 = vmatpush.msra.mxu0 0.0
      %873 = vmatpush.msra.mxu0 %v753
      %874 = vmatpush.msra.mxu0 %v728
      %875 = vmatpush.msra.mxu0 %v703
      %876 = vmatpush.msra.mxu0 %v678
      %877 = vmatpush.msra.mxu0 %v329
      %878 = vmatpush.msra.mxu0 %v654
      %879 = vmatpush.msra.mxu0 %v629
      %880 = vmatpush.msra.mxu0 %v604
      %881 = vmatpush.msra.mxu0 %v579
      %882 = vmatmul.f32.gmra.mxu0 %v764
      %v883 = vpop.f32.mrf.mxu0
      %v884 = vadd.f32 0.0, %v883
      %885 = vdwg.mxu0
      %886 = vmatpush.msra.mxu0 0.0
      %887 = vmatpush.msra.mxu0 0.0
      %888 = vmatpush.msra.mxu0 0.0
      %889 = vmatpush.msra.mxu0 0.0
      %890 = vmatpush.msra.mxu0 0.0
      %891 = vmatpush.msra.mxu0 0.0
      %892 = vmatpush.msra.mxu0 0.0
      %893 = vmatpush.msra.mxu0 %v752
      %894 = vmatpush.msra.mxu0 %v727
      %895 = vmatpush.msra.mxu0 %v702
      %896 = vmatpush.msra.mxu0 %v677
      %897 = vmatpush.msra.mxu0 %v330
      %898 = vmatpush.msra.mxu0 %v653
      %899 = vmatpush.msra.mxu0 %v628
      %900 = vmatpush.msra.mxu0 %v603
      %901 = vmatpush.msra.mxu0 %v578
      %902 = vmatmul.f32.gmra.mxu0 %v764
      %v903 = vpop.f32.mrf.mxu0
      %v904 = vadd.f32 0.0, %v903
      %905 = vdwg.mxu0
      %906 = vmatpush.msra.mxu0 0.0
      %907 = vmatpush.msra.mxu0 0.0
      %908 = vmatpush.msra.mxu0 0.0
      %909 = vmatpush.msra.mxu0 0.0
      %910 = vmatpush.msra.mxu0 0.0
      %911 = vmatpush.msra.mxu0 0.0
      %912 = vmatpush.msra.mxu0 0.0
      %913 = vmatpush.msra.mxu0 %v759
      %914 = vmatpush.msra.mxu0 %v734
      %915 = vmatpush.msra.mxu0 %v709
      %916 = vmatpush.msra.mxu0 %v684
      %917 = vmatpush.msra.mxu0 %v331
      %918 = vmatpush.msra.mxu0 %v652
      %919 = vmatpush.msra.mxu0 %v627
      %920 = vmatpush.msra.mxu0 %v602
      %921 = vmatpush.msra.mxu0 %v577
      %922 = vmatmul.f32.gmra.mxu0 %v764
      %v923 = vpop.f32.mrf.mxu0
      %v924 = vadd.f32 0.0, %v923
      %925 = vdwg.mxu0
      %v927 = vsel %vm762, %v559, 0
      %929 = vmatpush.msra.mxu0 0.0
      %930 = vmatpush.msra.mxu0 0.0
      %931 = vmatpush.msra.mxu0 0.0
      %932 = vmatpush.msra.mxu0 0.0
      %933 = vmatpush.msra.mxu0 0.0
      %934 = vmatpush.msra.mxu0 0.0
      %935 = vmatpush.msra.mxu0 0.0
      %936 = vmatpush.msra.mxu0 %v558
      %937 = vmatpush.msra.mxu0 %v533
      %938 = vmatpush.msra.mxu0 %v508
      %939 = vmatpush.msra.mxu0 %v483
      %940 = vmatpush.msra.mxu0 %v458
      %941 = vmatpush.msra.mxu0 %v433
      %942 = vmatpush.msra.mxu0 %v408
      %943 = vmatpush.msra.mxu0 %v383
      %944 = vmatpush.msra.mxu0 %v358
      %945 = vmatmul.f32.gmra.mxu0 %v927
      %v946 = vpop.f32.mrf.mxu0
      %v947 = vadd.f32 %v784, %v946
      %948 = vdwg.mxu0
      %949 = vmatpush.msra.mxu0 0.0
      %950 = vmatpush.msra.mxu0 0.0
      %951 = vmatpush.msra.mxu0 0.0
      %952 = vmatpush.msra.mxu0 0.0
      %953 = vmatpush.msra.mxu0 0.0
      %954 = vmatpush.msra.mxu0 0.0
      %955 = vmatpush.msra.mxu0 0.0
      %956 = vmatpush.msra.mxu0 %v557
      %957 = vmatpush.msra.mxu0 %v532
      %958 = vmatpush.msra.mxu0 %v507
      %959 = vmatpush.msra.mxu0 %v482
      %960 = vmatpush.msra.mxu0 %v457
      %961 = vmatpush.msra.mxu0 %v432
      %962 = vmatpush.msra.mxu0 %v407
      %963 = vmatpush.msra.mxu0 %v382
      %964 = vmatpush.msra.mxu0 %v357
      %965 = vmatmul.f32.gmra.mxu0 %v927
      %v966 = vpop.f32.mrf.mxu0
      %v967 = vadd.f32 %v804, %v966
      %968 = vdwg.mxu0
      %969 = vmatpush.msra.mxu0 0.0
      %970 = vmatpush.msra.mxu0 0.0
      %971 = vmatpush.msra.mxu0 0.0
      %972 = vmatpush.msra.mxu0 0.0
      %973 = vmatpush.msra.mxu0 0.0
      %974 = vmatpush.msra.mxu0 0.0
      %975 = vmatpush.msra.mxu0 0.0
      %976 = vmatpush.msra.mxu0 %v556
      %977 = vmatpush.msra.mxu0 %v531
      %978 = vmatpush.msra.mxu0 %v506
      %979 = vmatpush.msra.mxu0 %v481
      %980 = vmatpush.msra.mxu0 %v456
      %981 = vmatpush.msra.mxu0 %v431
      %982 = vmatpush.msra.mxu0 %v406
      %983 = vmatpush.msra.mxu0 %v381
      %984 = vmatpush.msra.mxu0 %v356
      %985 = vmatmul.f32.gmra.mxu0 %v927
      %v986 = vpop.f32.mrf.mxu0
      %v987 = vadd.f32 %v824, %v986
      %988 = vdwg.mxu0
      %989 = vmatpush.msra.mxu0 0.0
      %990 = vmatpush.msra.mxu0 0.0
      %991 = vmatpush.msra.mxu0 0.0
      %992 = vmatpush.msra.mxu0 0.0
      %993 = vmatpush.msra.mxu0 0.0
      %994 = vmatpush.msra.mxu0 0.0
      %995 = vmatpush.msra.mxu0 0.0
      %996 = vmatpush.msra.mxu0 %v555
      %997 = vmatpush.msra.mxu0 %v530
      %998 = vmatpush.msra.mxu0 %v505
      %999 = vmatpush.msra.mxu0 %v480
      %1000 = vmatpush.msra.mxu0 %v455
      %1001 = vmatpush.msra.mxu0 %v430
      %1002 = vmatpush.msra.mxu0 %v405
      %1003 = vmatpush.msra.mxu0 %v380
      %1004 = vmatpush.msra.mxu0 %v355
      %1005 = vmatmul.f32.gmra.mxu0 %v927
      %v1006 = vpop.f32.mrf.mxu0
      %v1007 = vadd.f32 %v844, %v1006
      %1008 = vdwg.mxu0
      %1009 = vmatpush.msra.mxu0 0.0
      %1010 = vmatpush.msra.mxu0 0.0
      %1011 = vmatpush.msra.mxu0 0.0
      %1012 = vmatpush.msra.mxu0 0.0
      %1013 = vmatpush.msra.mxu0 0.0
      %1014 = vmatpush.msra.mxu0 0.0
      %1015 = vmatpush.msra.mxu0 0.0
      %1016 = vmatpush.msra.mxu0 %v554
      %1017 = vmatpush.msra.mxu0 %v529
      %1018 = vmatpush.msra.mxu0 %v504
      %1019 = vmatpush.msra.mxu0 %v479
      %1020 = vmatpush.msra.mxu0 %v454
      %1021 = vmatpush.msra.mxu0 %v429
      %1022 = vmatpush.msra.mxu0 %v404
      %1023 = vmatpush.msra.mxu0 %v379
      %1024 = vmatpush.msra.mxu0 %v354
      %1025 = vmatmul.f32.gmra.mxu0 %v927
      %v1026 = vpop.f32.mrf.mxu0
      %v1027 = vadd.f32 %v864, %v1026
      %1028 = vdwg.mxu0
      %1029 = vmatpush.msra.mxu0 0.0
      %1030 = vmatpush.msra.mxu0 0.0
      %1031 = vmatpush.msra.mxu0 0.0
      %1032 = vmatpush.msra.mxu0 0.0
      %1033 = vmatpush.msra.mxu0 0.0
      %1034 = vmatpush.msra.mxu0 0.0
      %1035 = vmatpush.msra.mxu0 0.0
      %1036 = vmatpush.msra.mxu0 %v553
      %1037 = vmatpush.msra.mxu0 %v528
      %1038 = vmatpush.msra.mxu0 %v503
      %1039 = vmatpush.msra.mxu0 %v478
      %1040 = vmatpush.msra.mxu0 %v453
      %1041 = vmatpush.msra.mxu0 %v428
      %1042 = vmatpush.msra.mxu0 %v403
      %1043 = vmatpush.msra.mxu0 %v378
      %1044 = vmatpush.msra.mxu0 %v353
      %1045 = vmatmul.f32.gmra.mxu0 %v927
      %v1046 = vpop.f32.mrf.mxu0
      %v1047 = vadd.f32 %v884, %v1046
      %1048 = vdwg.mxu0
      %1049 = vmatpush.msra.mxu0 0.0
      %1050 = vmatpush.msra.mxu0 0.0
      %1051 = vmatpush.msra.mxu0 0.0
      %1052 = vmatpush.msra.mxu0 0.0
      %1053 = vmatpush.msra.mxu0 0.0
      %1054 = vmatpush.msra.mxu0 0.0
      %1055 = vmatpush.msra.mxu0 0.0
      %1056 = vmatpush.msra.mxu0 %v552
      %1057 = vmatpush.msra.mxu0 %v527
      %1058 = vmatpush.msra.mxu0 %v502
      %1059 = vmatpush.msra.mxu0 %v477
      %1060 = vmatpush.msra.mxu0 %v452
      %1061 = vmatpush.msra.mxu0 %v427
      %1062 = vmatpush.msra.mxu0 %v402
      %1063 = vmatpush.msra.mxu0 %v377
      %1064 = vmatpush.msra.mxu0 %v352
      %1065 = vmatmul.f32.gmra.mxu0 %v927
      %v1066 = vpop.f32.mrf.mxu0
      %v1067 = vadd.f32 %v904, %v1066
      %1068 = vdwg.mxu0
      %1069 = vmatpush.msra.mxu0 0.0
      %1070 = vmatpush.msra.mxu0 0.0
      %1071 = vmatpush.msra.mxu0 0.0
      %1072 = vmatpush.msra.mxu0 0.0
      %1073 = vmatpush.msra.mxu0 0.0
      %1074 = vmatpush.msra.mxu0 0.0
      %1075 = vmatpush.msra.mxu0 0.0
      %1076 = vmatpush.msra.mxu0 %v551
      %1077 = vmatpush.msra.mxu0 %v526
      %1078 = vmatpush.msra.mxu0 %v501
      %1079 = vmatpush.msra.mxu0 %v476
      %1080 = vmatpush.msra.mxu0 %v451
      %1081 = vmatpush.msra.mxu0 %v426
      %1082 = vmatpush.msra.mxu0 %v401
      %1083 = vmatpush.msra.mxu0 %v376
      %1084 = vmatpush.msra.mxu0 %v351
      %1085 = vmatmul.f32.gmra.mxu0 %v927
      %v1086 = vpop.f32.mrf.mxu0
      %v1087 = vadd.f32 %v924, %v1086
      %1088 = vdwg.mxu0
      %1089 = vrot.lane.b32.xlu0 %v324, 39
      %v1090 = vpop.permute.xlu0 %1089
      %1091 = vrot.lane.b32.xlu0 %v325, 39
      %v1092 = vpop.permute.xlu0 %1091
      %1093 = vrot.lane.b32.xlu0 %v326, 39
      %v1094 = vpop.permute.xlu0 %1093
      %1095 = vrot.lane.b32.xlu0 %v327, 39
      %v1096 = vpop.permute.xlu0 %1095
      %1097 = vrot.lane.b32.xlu0 %v328, 39
      %v1098 = vpop.permute.xlu0 %1097
      %1099 = vrot.lane.b32.xlu0 %v329, 39
      %v1100 = vpop.permute.xlu0 %1099
      %1101 = vrot.lane.b32.xlu0 %v330, 39
      %v1102 = vpop.permute.xlu0 %1101
      %1103 = vrot.lane.b32.xlu0 %v331, 39
      %v1104 = vpop.permute.xlu0 %1103
      %vm1105 = vcmp.lt.s32.totalorder %v349, 39
      %v1106 = vsel %vm1105, %v1102, %v1104
      %v1107 = vsel %vm1105, %v1100, %v1102
      %v1108 = vsel %vm1105, %v1098, %v1100
      %v1109 = vsel %vm1105, %v1096, %v1098
      %v1110 = vsel %vm1105, %v1094, %v1096
      %v1111 = vsel %vm1105, %v1092, %v1094
      %v1112 = vsel %vm1105, %v1090, %v1092
      %v1113 = vsel %vm1105, %v1104, %v1090
      %1114 = vrot.lane.b32.xlu0 %v324, 38
      %v1115 = vpop.permute.xlu0 %1114
      %1116 = vrot.lane.b32.xlu0 %v325, 38
      %v1117 = vpop.permute.xlu0 %1116
      %1118 = vrot.lane.b32.xlu0 %v326, 38
      %v1119 = vpop.permute.xlu0 %1118
      %1120 = vrot.lane.b32.xlu0 %v327, 38
      %v1121 = vpop.permute.xlu0 %1120
      %1122 = vrot.lane.b32.xlu0 %v328, 38
      %v1123 = vpop.permute.xlu0 %1122
      %1124 = vrot.lane.b32.xlu0 %v329, 38
      %v1125 = vpop.permute.xlu0 %1124
      %1126 = vrot.lane.b32.xlu0 %v330, 38
      %v1127 = vpop.permute.xlu0 %1126
      %1128 = vrot.lane.b32.xlu0 %v331, 38
      %v1129 = vpop.permute.xlu0 %1128
      %vm1130 = vcmp.lt.s32.totalorder %v349, 38
      %v1131 = vsel %vm1130, %v1127, %v1129
      %v1132 = vsel %vm1130, %v1125, %v1127
      %v1133 = vsel %vm1130, %v1123, %v1125
      %v1134 = vsel %vm1130, %v1121, %v1123
      %v1135 = vsel %vm1130, %v1119, %v1121
      %v1136 = vsel %vm1130, %v1117, %v1119
      %v1137 = vsel %vm1130, %v1115, %v1117
      %v1138 = vsel %vm1130, %v1129, %v1115
      %1139 = vrot.lane.b32.xlu0 %v324, 37
      %v1140 = vpop.permute.xlu0 %1139
      %1141 = vrot.lane.b32.xlu0 %v325, 37
      %v1142 = vpop.permute.xlu0 %1141
      %1143 = vrot.lane.b32.xlu0 %v326, 37
      %v1144 = vpop.permute.xlu0 %1143
      %1145 = vrot.lane.b32.xlu0 %v327, 37
      %v1146 = vpop.permute.xlu0 %1145
      %1147 = vrot.lane.b32.xlu0 %v328, 37
      %v1148 = vpop.permute.xlu0 %1147
      %1149 = vrot.lane.b32.xlu0 %v329, 37
      %v1150 = vpop.permute.xlu0 %1149
      %1151 = vrot.lane.b32.xlu0 %v330, 37
      %v1152 = vpop.permute.xlu0 %1151
      %1153 = vrot.lane.b32.xlu0 %v331, 37
      %v1154 = vpop.permute.xlu0 %1153
      %vm1155 = vcmp.lt.s32.totalorder %v349, 37
      %v1156 = vsel %vm1155, %v1152, %v1154
      %v1157 = vsel %vm1155, %v1150, %v1152
      %v1158 = vsel %vm1155, %v1148, %v1150
      %v1159 = vsel %vm1155, %v1146, %v1148
      %v1160 = vsel %vm1155, %v1144, %v1146
      %v1161 = vsel %vm1155, %v1142, %v1144
      %v1162 = vsel %vm1155, %v1140, %v1142
      %v1163 = vsel %vm1155, %v1154, %v1140
      %1164 = vrot.lane.b32.xlu0 %v324, 29
      %v1165 = vpop.permute.xlu0 %1164
      %1166 = vrot.lane.b32.xlu0 %v325, 29
      %v1167 = vpop.permute.xlu0 %1166
      %1168 = vrot.lane.b32.xlu0 %v326, 29
      %v1169 = vpop.permute.xlu0 %1168
      %1170 = vrot.lane.b32.xlu0 %v327, 29
      %v1171 = vpop.permute.xlu0 %1170
      %1172 = vrot.lane.b32.xlu0 %v328, 29
      %v1173 = vpop.permute.xlu0 %1172
      %1174 = vrot.lane.b32.xlu0 %v329, 29
      %v1175 = vpop.permute.xlu0 %1174
      %1176 = vrot.lane.b32.xlu0 %v330, 29
      %v1177 = vpop.permute.xlu0 %1176
      %1178 = vrot.lane.b32.xlu0 %v331, 29
      %v1179 = vpop.permute.xlu0 %1178
      %vm1180 = vcmp.lt.s32.totalorder %v349, 29
      %v1181 = vsel %vm1180, %v1177, %v1179
      %v1182 = vsel %vm1180, %v1175, %v1177
      %v1183 = vsel %vm1180, %v1173, %v1175
      %v1184 = vsel %vm1180, %v1171, %v1173
      %v1185 = vsel %vm1180, %v1169, %v1171
      %v1186 = vsel %vm1180, %v1167, %v1169
      %v1187 = vsel %vm1180, %v1165, %v1167
      %v1188 = vsel %vm1180, %v1179, %v1165
      %1189 = vrot.lane.b32.xlu0 %v324, 28
      %v1190 = vpop.permute.xlu0 %1189
      %1191 = vrot.lane.b32.xlu0 %v325, 28
      %v1192 = vpop.permute.xlu0 %1191
      %1193 = vrot.lane.b32.xlu0 %v326, 28
      %v1194 = vpop.permute.xlu0 %1193
      %1195 = vrot.lane.b32.xlu0 %v327, 28
      %v1196 = vpop.permute.xlu0 %1195
      %1197 = vrot.lane.b32.xlu0 %v328, 28
      %v1198 = vpop.permute.xlu0 %1197
      %1199 = vrot.lane.b32.xlu0 %v329, 28
      %v1200 = vpop.permute.xlu0 %1199
      %1201 = vrot.lane.b32.xlu0 %v330, 28
      %v1202 = vpop.permute.xlu0 %1201
      %1203 = vrot.lane.b32.xlu0 %v331, 28
      %v1204 = vpop.permute.xlu0 %1203
      %vm1205 = vcmp.lt.s32.totalorder %v349, 28
      %v1206 = vsel %vm1205, %v1202, %v1204
      %v1207 = vsel %vm1205, %v1200, %v1202
      %v1208 = vsel %vm1205, %v1198, %v1200
      %v1209 = vsel %vm1205, %v1196, %v1198
      %v1210 = vsel %vm1205, %v1194, %v1196
      %v1211 = vsel %vm1205, %v1192, %v1194
      %v1212 = vsel %vm1205, %v1190, %v1192
      %v1213 = vsel %vm1205, %v1204, %v1190
      %1214 = vrot.lane.b32.xlu0 %v324, 27
      %v1215 = vpop.permute.xlu0 %1214
      %1216 = vrot.lane.b32.xlu0 %v325, 27
      %v1217 = vpop.permute.xlu0 %1216
      %1218 = vrot.lane.b32.xlu0 %v326, 27
      %v1219 = vpop.permute.xlu0 %1218
      %1220 = vrot.lane.b32.xlu0 %v327, 27
      %v1221 = vpop.permute.xlu0 %1220
      %1222 = vrot.lane.b32.xlu0 %v328, 27
      %v1223 = vpop.permute.xlu0 %1222
      %1224 = vrot.lane.b32.xlu0 %v329, 27
      %v1225 = vpop.permute.xlu0 %1224
      %1226 = vrot.lane.b32.xlu0 %v330, 27
      %v1227 = vpop.permute.xlu0 %1226
      %1228 = vrot.lane.b32.xlu0 %v331, 27
      %v1229 = vpop.permute.xlu0 %1228
      %vm1230 = vcmp.lt.s32.totalorder %v349, 27
      %v1231 = vsel %vm1230, %v1227, %v1229
      %v1232 = vsel %vm1230, %v1225, %v1227
      %v1233 = vsel %vm1230, %v1223, %v1225
      %v1234 = vsel %vm1230, %v1221, %v1223
      %v1235 = vsel %vm1230, %v1219, %v1221
      %v1236 = vsel %vm1230, %v1217, %v1219
      %v1237 = vsel %vm1230, %v1215, %v1217
      %v1238 = vsel %vm1230, %v1229, %v1215
      %1239 = vrot.lane.b32.xlu0 %v324, 19
      %v1240 = vpop.permute.xlu0 %1239
      %1241 = vrot.lane.b32.xlu0 %v325, 19
      %v1242 = vpop.permute.xlu0 %1241
      %1243 = vrot.lane.b32.xlu0 %v326, 19
      %v1244 = vpop.permute.xlu0 %1243
      %1245 = vrot.lane.b32.xlu0 %v327, 19
      %v1246 = vpop.permute.xlu0 %1245
      %1247 = vrot.lane.b32.xlu0 %v328, 19
      %v1248 = vpop.permute.xlu0 %1247
      %1249 = vrot.lane.b32.xlu0 %v329, 19
      %v1250 = vpop.permute.xlu0 %1249
      %1251 = vrot.lane.b32.xlu0 %v330, 19
      %v1252 = vpop.permute.xlu0 %1251
      %1253 = vrot.lane.b32.xlu0 %v331, 19
      %v1254 = vpop.permute.xlu0 %1253
      %vm1255 = vcmp.lt.s32.totalorder %v349, 19
      %v1256 = vsel %vm1255, %v1252, %v1254
      %v1257 = vsel %vm1255, %v1250, %v1252
      %v1258 = vsel %vm1255, %v1248, %v1250
      %v1259 = vsel %vm1255, %v1246, %v1248
      %v1260 = vsel %vm1255, %v1244, %v1246
      %v1261 = vsel %vm1255, %v1242, %v1244
      %v1262 = vsel %vm1255, %v1240, %v1242
      %v1263 = vsel %vm1255, %v1254, %v1240
      %1264 = vrot.lane.b32.xlu0 %v324, 18
      %v1265 = vpop.permute.xlu0 %1264
      %1266 = vrot.lane.b32.xlu0 %v325, 18
      %v1267 = vpop.permute.xlu0 %1266
      %1268 = vrot.lane.b32.xlu0 %v326, 18
      %v1269 = vpop.permute.xlu0 %1268
      %1270 = vrot.lane.b32.xlu0 %v327, 18
      %v1271 = vpop.permute.xlu0 %1270
      %1272 = vrot.lane.b32.xlu0 %v328, 18
      %v1273 = vpop.permute.xlu0 %1272
      %1274 = vrot.lane.b32.xlu0 %v329, 18
      %v1275 = vpop.permute.xlu0 %1274
      %1276 = vrot.lane.b32.xlu0 %v330, 18
      %v1277 = vpop.permute.xlu0 %1276
      %1278 = vrot.lane.b32.xlu0 %v331, 18
      %v1279 = vpop.permute.xlu0 %1278
      %vm1280 = vcmp.lt.s32.totalorder %v349, 18
      %v1281 = vsel %vm1280, %v1277, %v1279
      %v1282 = vsel %vm1280, %v1275, %v1277
      %v1283 = vsel %vm1280, %v1273, %v1275
      %v1284 = vsel %vm1280, %v1271, %v1273
      %v1285 = vsel %vm1280, %v1269, %v1271
      %v1286 = vsel %vm1280, %v1267, %v1269
      %v1287 = vsel %vm1280, %v1265, %v1267
      %v1288 = vsel %vm1280, %v1279, %v1265
      %1289 = vrot.lane.b32.xlu0 %v324, 17
      %v1290 = vpop.permute.xlu0 %1289
      %1291 = vrot.lane.b32.xlu0 %v325, 17
      %v1292 = vpop.permute.xlu0 %1291
      %1293 = vrot.lane.b32.xlu0 %v326, 17
      %v1294 = vpop.permute.xlu0 %1293
      %1295 = vrot.lane.b32.xlu0 %v327, 17
      %v1296 = vpop.permute.xlu0 %1295
      %1297 = vrot.lane.b32.xlu0 %v328, 17
      %v1298 = vpop.permute.xlu0 %1297
      %1299 = vrot.lane.b32.xlu0 %v329, 17
      %v1300 = vpop.permute.xlu0 %1299
      %1301 = vrot.lane.b32.xlu0 %v330, 17
      %v1302 = vpop.permute.xlu0 %1301
      %1303 = vrot.lane.b32.xlu0 %v331, 17
      %v1304 = vpop.permute.xlu0 %1303
      %vm1305 = vcmp.lt.s32.totalorder %v349, 17
      %v1306 = vsel %vm1305, %v1302, %v1304
      %v1307 = vsel %vm1305, %v1300, %v1302
      %v1308 = vsel %vm1305, %v1298, %v1300
      %v1309 = vsel %vm1305, %v1296, %v1298
      %v1310 = vsel %vm1305, %v1294, %v1296
      %v1311 = vsel %vm1305, %v1292, %v1294
      %v1312 = vsel %vm1305, %v1290, %v1292
      %v1313 = vsel %vm1305, %v1304, %v1290
      %s1314 = scalar_lea.vmem %s2, 16
      %v1315 = vld [vmem:[%s1314] sm:$0xff]
      %v1317 = vsel %vm762, %v1315, 0
      %1319 = vmatpush.msra.mxu0 0.0
      %1320 = vmatpush.msra.mxu0 0.0
      %1321 = vmatpush.msra.mxu0 0.0
      %1322 = vmatpush.msra.mxu0 0.0
      %1323 = vmatpush.msra.mxu0 0.0
      %1324 = vmatpush.msra.mxu0 0.0
      %1325 = vmatpush.msra.mxu0 0.0
      %1326 = vmatpush.msra.mxu0 %v1312
      %1327 = vmatpush.msra.mxu0 %v1287
      %1328 = vmatpush.msra.mxu0 %v1262
      %1329 = vmatpush.msra.mxu0 %v1237
      %1330 = vmatpush.msra.mxu0 %v1212
      %1331 = vmatpush.msra.mxu0 %v1187
      %1332 = vmatpush.msra.mxu0 %v1162
      %1333 = vmatpush.msra.mxu0 %v1137
      %1334 = vmatpush.msra.mxu0 %v1112
      %1335 = vmatmul.f32.gmra.mxu0 %v1317
      %v1336 = vpop.f32.mrf.mxu0
      %v1337 = vadd.f32 0.0, %v1336
      %1338 = vdwg.mxu0
      %1339 = vmatpush.msra.mxu0 0.0
      %1340 = vmatpush.msra.mxu0 0.0
      %1341 = vmatpush.msra.mxu0 0.0
      %1342 = vmatpush.msra.mxu0 0.0
      %1343 = vmatpush.msra.mxu0 0.0
      %1344 = vmatpush.msra.mxu0 0.0
      %1345 = vmatpush.msra.mxu0 0.0
      %1346 = vmatpush.msra.mxu0 %v1311
      %1347 = vmatpush.msra.mxu0 %v1286
      %1348 = vmatpush.msra.mxu0 %v1261
      %1349 = vmatpush.msra.mxu0 %v1236
      %1350 = vmatpush.msra.mxu0 %v1211
      %1351 = vmatpush.msra.mxu0 %v1186
      %1352 = vmatpush.msra.mxu0 %v1161
      %1353 = vmatpush.msra.mxu0 %v1136
      %1354 = vmatpush.msra.mxu0 %v1111
      %1355 = vmatmul.f32.gmra.mxu0 %v1317
      %v1356 = vpop.f32.mrf.mxu0
      %v1357 = vadd.f32 0.0, %v1356
      %1358 = vdwg.mxu0
      %1359 = vmatpush.msra.mxu0 0.0
      %1360 = vmatpush.msra.mxu0 0.0
      %1361 = vmatpush.msra.mxu0 0.0
      %1362 = vmatpush.msra.mxu0 0.0
      %1363 = vmatpush.msra.mxu0 0.0
      %1364 = vmatpush.msra.mxu0 0.0
      %1365 = vmatpush.msra.mxu0 0.0
      %1366 = vmatpush.msra.mxu0 %v1310
      %1367 = vmatpush.msra.mxu0 %v1285
      %1368 = vmatpush.msra.mxu0 %v1260
      %1369 = vmatpush.msra.mxu0 %v1235
      %1370 = vmatpush.msra.mxu0 %v1210
      %1371 = vmatpush.msra.mxu0 %v1185
      %1372 = vmatpush.msra.mxu0 %v1160
      %1373 = vmatpush.msra.mxu0 %v1135
      %1374 = vmatpush.msra.mxu0 %v1110
      %1375 = vmatmul.f32.gmra.mxu0 %v1317
      %v1376 = vpop.f32.mrf.mxu0
      %v1377 = vadd.f32 0.0, %v1376
      %1378 = vdwg.mxu0
      %1379 = vmatpush.msra.mxu0 0.0
      %1380 = vmatpush.msra.mxu0 0.0
      %1381 = vmatpush.msra.mxu0 0.0
      %1382 = vmatpush.msra.mxu0 0.0
      %1383 = vmatpush.msra.mxu0 0.0
      %1384 = vmatpush.msra.mxu0 0.0
      %1385 = vmatpush.msra.mxu0 0.0
      %1386 = vmatpush.msra.mxu0 %v1309
      %1387 = vmatpush.msra.mxu0 %v1284
      %1388 = vmatpush.msra.mxu0 %v1259
      %1389 = vmatpush.msra.mxu0 %v1234
      %1390 = vmatpush.msra.mxu0 %v1209
      %1391 = vmatpush.msra.mxu0 %v1184
      %1392 = vmatpush.msra.mxu0 %v1159
      %1393 = vmatpush.msra.mxu0 %v1134
      %1394 = vmatpush.msra.mxu0 %v1109
      %1395 = vmatmul.f32.gmra.mxu0 %v1317
      %v1396 = vpop.f32.mrf.mxu0
      %v1397 = vadd.f32 0.0, %v1396
      %1398 = vdwg.mxu0
      %1399 = vmatpush.msra.mxu0 0.0
      %1400 = vmatpush.msra.mxu0 0.0
      %1401 = vmatpush.msra.mxu0 0.0
      %1402 = vmatpush.msra.mxu0 0.0
      %1403 = vmatpush.msra.mxu0 0.0
      %1404 = vmatpush.msra.mxu0 0.0
      %1405 = vmatpush.msra.mxu0 0.0
      %1406 = vmatpush.msra.mxu0 %v1308
      %1407 = vmatpush.msra.mxu0 %v1283
      %1408 = vmatpush.msra.mxu0 %v1258
      %1409 = vmatpush.msra.mxu0 %v1233
      %1410 = vmatpush.msra.mxu0 %v1208
      %1411 = vmatpush.msra.mxu0 %v1183
      %1412 = vmatpush.msra.mxu0 %v1158
      %1413 = vmatpush.msra.mxu0 %v1133
      %1414 = vmatpush.msra.mxu0 %v1108
      %1415 = vmatmul.f32.gmra.mxu0 %v1317
      %v1416 = vpop.f32.mrf.mxu0
      %v1417 = vadd.f32 0.0, %v1416
      %1418 = vdwg.mxu0
      %1419 = vmatpush.msra.mxu0 0.0
      %1420 = vmatpush.msra.mxu0 0.0
      %1421 = vmatpush.msra.mxu0 0.0
      %1422 = vmatpush.msra.mxu0 0.0
      %1423 = vmatpush.msra.mxu0 0.0
      %1424 = vmatpush.msra.mxu0 0.0
      %1425 = vmatpush.msra.mxu0 0.0
      %1426 = vmatpush.msra.mxu0 %v1307
      %1427 = vmatpush.msra.mxu0 %v1282
      %1428 = vmatpush.msra.mxu0 %v1257
      %1429 = vmatpush.msra.mxu0 %v1232
      %1430 = vmatpush.msra.mxu0 %v1207
      %1431 = vmatpush.msra.mxu0 %v1182
      %1432 = vmatpush.msra.mxu0 %v1157
      %1433 = vmatpush.msra.mxu0 %v1132
      %1434 = vmatpush.msra.mxu0 %v1107
      %1435 = vmatmul.f32.gmra.mxu0 %v1317
      %v1436 = vpop.f32.mrf.mxu0
      %v1437 = vadd.f32 0.0, %v1436
      %1438 = vdwg.mxu0
      %1439 = vmatpush.msra.mxu0 0.0
      %1440 = vmatpush.msra.mxu0 0.0
      %1441 = vmatpush.msra.mxu0 0.0
      %1442 = vmatpush.msra.mxu0 0.0
      %1443 = vmatpush.msra.mxu0 0.0
      %1444 = vmatpush.msra.mxu0 0.0
      %1445 = vmatpush.msra.mxu0 0.0
      %1446 = vmatpush.msra.mxu0 %v1306
      %1447 = vmatpush.msra.mxu0 %v1281
      %1448 = vmatpush.msra.mxu0 %v1256
      %1449 = vmatpush.msra.mxu0 %v1231
      %1450 = vmatpush.msra.mxu0 %v1206
      %1451 = vmatpush.msra.mxu0 %v1181
      %1452 = vmatpush.msra.mxu0 %v1156
      %1453 = vmatpush.msra.mxu0 %v1131
      %1454 = vmatpush.msra.mxu0 %v1106
      %1455 = vmatmul.f32.gmra.mxu0 %v1317
      %v1456 = vpop.f32.mrf.mxu0
      %v1457 = vadd.f32 0.0, %v1456
      %1458 = vdwg.mxu0
      %1459 = vmatpush.msra.mxu0 0.0
      %1460 = vmatpush.msra.mxu0 0.0
      %1461 = vmatpush.msra.mxu0 0.0
      %1462 = vmatpush.msra.mxu0 0.0
      %1463 = vmatpush.msra.mxu0 0.0
      %1464 = vmatpush.msra.mxu0 0.0
      %1465 = vmatpush.msra.mxu0 0.0
      %1466 = vmatpush.msra.mxu0 %v1313
      %1467 = vmatpush.msra.mxu0 %v1288
      %1468 = vmatpush.msra.mxu0 %v1263
      %1469 = vmatpush.msra.mxu0 %v1238
      %1470 = vmatpush.msra.mxu0 %v1213
      %1471 = vmatpush.msra.mxu0 %v1188
      %1472 = vmatpush.msra.mxu0 %v1163
      %1473 = vmatpush.msra.mxu0 %v1138
      %1474 = vmatpush.msra.mxu0 %v1113
      %1475 = vmatmul.f32.gmra.mxu0 %v1317
      %v1476 = vpop.f32.mrf.mxu0
      %v1477 = vadd.f32 0.0, %v1476
      %1478 = vdwg.mxu0
      %v1479 = vadd.f32 %v947, %v1337
      %v1480 = vadd.f32 %v967, %v1357
      %v1481 = vadd.f32 %v987, %v1377
      %v1482 = vadd.f32 %v1007, %v1397
      %v1483 = vadd.f32 %v1027, %v1417
      %v1484 = vadd.f32 %v1047, %v1437
      %v1485 = vadd.f32 %v1067, %v1457
      %v1486 = vadd.f32 %v1087, %v1477
      %v1487 = vmax.f32 %v1479, 0.0
      %v1488 = vmax.f32 %v1480, 0.0
      %v1489 = vmax.f32 %v1481, 0.0
      %v1490 = vmax.f32 %v1482, 0.0
      %v1491 = vmax.f32 %v1483, 0.0
      %v1492 = vmax.f32 %v1484, 0.0
      %v1493 = vmax.f32 %v1485, 0.0
      %v1494 = vmax.f32 %v1486, 0.0
      %v1496 = vperm.slane %v252, 0
      %v1497 = vperm.slane %v252, 1
      %v1498 = vperm.slane %v252, 2
      %v1499 = vperm.slane %v252, 3
      %v1500 = vperm.slane %v252, 4
      %v1501 = vperm.slane %v252, 5
      %v1502 = vperm.slane %v252, 6
      %v1503 = vperm.slane %v252, 7
      %v1512 = vmul.f32 %v1487, %v1496
      %v1513 = vmul.f32 %v1488, %v1497
      %v1514 = vmul.f32 %v1489, %v1498
      %v1515 = vmul.f32 %v1490, %v1499
      %v1516 = vmul.f32 %v1491, %v1500
      %v1517 = vmul.f32 %v1492, %v1501
      %v1518 = vmul.f32 %v1493, %v1502
      %v1519 = vmul.f32 %v1494, %v1503
      %v1528 = vrot.slane %v1512, 4
      %v1529 = vrot.slane %v1513, 4
      %v1530 = vrot.slane %v1514, 4
      %v1531 = vrot.slane %v1515, 4
      %v1532 = vrot.slane %v1516, 4
      %v1533 = vrot.slane %v1517, 4
      %v1534 = vrot.slane %v1518, 4
      %v1535 = vrot.slane %v1519, 4
      %1544 = vst [vmem:[#allocation2] sm:$0xf0] %v1528
      %1545 = vst [vmem:[#allocation2 + $0x8] sm:$0xf0] %v1529
      %1546 = vst [vmem:[#allocation2 + $0x10] sm:$0xf0] %v1530
      %1547 = vst [vmem:[#allocation2 + $0x18] sm:$0xf0] %v1531
      %1548 = vst [vmem:[#allocation2 + $0x20] sm:$0xf0] %v1532
      %1549 = vst [vmem:[#allocation2 + $0x28] sm:$0xf0] %v1533
      %1550 = vst [vmem:[#allocation2 + $0x30] sm:$0xf0] %v1534
      %1551 = vst [vmem:[#allocation2 + $0x38] sm:$0xf0] %v1535
      %1552 = vst [vmem:[#allocation2 + $0x40] sm:$0xf] %v1528
      %1553 = vst [vmem:[#allocation2 + $0x48] sm:$0xf] %v1529
      %1554 = vst [vmem:[#allocation2 + $0x50] sm:$0xf] %v1530
      %1555 = vst [vmem:[#allocation2 + $0x58] sm:$0xf] %v1531
      %1556 = vst [vmem:[#allocation2 + $0x60] sm:$0xf] %v1532
      %1557 = vst [vmem:[#allocation2 + $0x68] sm:$0xf] %v1533
      %1558 = vst [vmem:[#allocation2 + $0x70] sm:$0xf] %v1534
      %1559 = vst [vmem:[#allocation2 + $0x78] sm:$0xf] %v1535
      %v1560 = vld [vmem:[#allocation2] sm:$0xff]
      %v1561 = vld [vmem:[#allocation2 + $0x8] sm:$0xff]
      %v1562 = vld [vmem:[#allocation2 + $0x10] sm:$0xff]
      %v1563 = vld [vmem:[#allocation2 + $0x18] sm:$0xff]
      %v1564 = vld [vmem:[#allocation2 + $0x20] sm:$0xff]
      %v1565 = vld [vmem:[#allocation2 + $0x28] sm:$0xff]
      %v1566 = vld [vmem:[#allocation2 + $0x30] sm:$0xff]
      %v1567 = vld [vmem:[#allocation2 + $0x38] sm:$0xff]
      %v1568 = vld [vmem:[#allocation2 + $0x40] sm:$0xff]
      %v1569 = vld [vmem:[#allocation2 + $0x48] sm:$0xff]
      %v1570 = vld [vmem:[#allocation2 + $0x50] sm:$0xff]
      %v1571 = vld [vmem:[#allocation2 + $0x58] sm:$0xff]
      %v1572 = vld [vmem:[#allocation2 + $0x60] sm:$0xff]
      %v1573 = vld [vmem:[#allocation2 + $0x68] sm:$0xff]
      %v1574 = vld [vmem:[#allocation2 + $0x70] sm:$0xff]
      %v1575 = vld [vmem:[#allocation2 + $0x78] sm:$0xff]
      %1576 = vrot.lane.b32.xlu0 %v1560, 111
      %v1577 = vpop.permute.xlu0 %1576
      %1578 = vrot.lane.b32.xlu0 %v1568, 111
      %v1579 = vpop.permute.xlu0 %1578
      %1580 = vrot.lane.b32.xlu0 %v1561, 111
      %v1581 = vpop.permute.xlu0 %1580
      %1582 = vrot.lane.b32.xlu0 %v1569, 111
      %v1583 = vpop.permute.xlu0 %1582
      %1584 = vrot.lane.b32.xlu0 %v1562, 111
      %v1585 = vpop.permute.xlu0 %1584
      %1586 = vrot.lane.b32.xlu0 %v1570, 111
      %v1587 = vpop.permute.xlu0 %1586
      %1588 = vrot.lane.b32.xlu0 %v1563, 111
      %v1589 = vpop.permute.xlu0 %1588
      %1590 = vrot.lane.b32.xlu0 %v1571, 111
      %v1591 = vpop.permute.xlu0 %1590
      %1592 = vrot.lane.b32.xlu0 %v1564, 111
      %v1593 = vpop.permute.xlu0 %1592
      %1594 = vrot.lane.b32.xlu0 %v1572, 111
      %v1595 = vpop.permute.xlu0 %1594
      %1596 = vrot.lane.b32.xlu0 %v1565, 111
      %v1597 = vpop.permute.xlu0 %1596
      %1598 = vrot.lane.b32.xlu0 %v1573, 111
      %v1599 = vpop.permute.xlu0 %1598
      %1600 = vrot.lane.b32.xlu0 %v1566, 111
      %v1601 = vpop.permute.xlu0 %1600
      %1602 = vrot.lane.b32.xlu0 %v1574, 111
      %v1603 = vpop.permute.xlu0 %1602
      %1604 = vrot.lane.b32.xlu0 %v1567, 111
      %v1605 = vpop.permute.xlu0 %1604
      %1606 = vrot.lane.b32.xlu0 %v1575, 111
      %v1607 = vpop.permute.xlu0 %1606
      %v1608 = vsel %vm350, %v1601, %v1605
      %v1609 = vsel %vm350, %v1603, %v1607
      %v1610 = vsel %vm350, %v1597, %v1601
      %v1611 = vsel %vm350, %v1599, %v1603
      %v1612 = vsel %vm350, %v1593, %v1597
      %v1613 = vsel %vm350, %v1595, %v1599
      %v1614 = vsel %vm350, %v1589, %v1593
      %v1615 = vsel %vm350, %v1591, %v1595
      %v1616 = vsel %vm350, %v1585, %v1589
      %v1617 = vsel %vm350, %v1587, %v1591
      %v1618 = vsel %vm350, %v1581, %v1585
      %v1619 = vsel %vm350, %v1583, %v1587
      %v1620 = vsel %vm350, %v1577, %v1581
      %v1621 = vsel %vm350, %v1579, %v1583
      %v1622 = vsel %vm350, %v1605, %v1577
      %v1623 = vsel %vm350, %v1607, %v1579
      %1624 = vrot.lane.b32.xlu0 %v1560, 110
      %v1625 = vpop.permute.xlu0 %1624
      %1626 = vrot.lane.b32.xlu0 %v1568, 110
      %v1627 = vpop.permute.xlu0 %1626
      %1628 = vrot.lane.b32.xlu0 %v1561, 110
      %v1629 = vpop.permute.xlu0 %1628
      %1630 = vrot.lane.b32.xlu0 %v1569, 110
      %v1631 = vpop.permute.xlu0 %1630
      %1632 = vrot.lane.b32.xlu0 %v1562, 110
      %v1633 = vpop.permute.xlu0 %1632
      %1634 = vrot.lane.b32.xlu0 %v1570, 110
      %v1635 = vpop.permute.xlu0 %1634
      %1636 = vrot.lane.b32.xlu0 %v1563, 110
      %v1637 = vpop.permute.xlu0 %1636
      %1638 = vrot.lane.b32.xlu0 %v1571, 110
      %v1639 = vpop.permute.xlu0 %1638
      %1640 = vrot.lane.b32.xlu0 %v1564, 110
      %v1641 = vpop.permute.xlu0 %1640
      %1642 = vrot.lane.b32.xlu0 %v1572, 110
      %v1643 = vpop.permute.xlu0 %1642
      %1644 = vrot.lane.b32.xlu0 %v1565, 110
      %v1645 = vpop.permute.xlu0 %1644
      %1646 = vrot.lane.b32.xlu0 %v1573, 110
      %v1647 = vpop.permute.xlu0 %1646
      %1648 = vrot.lane.b32.xlu0 %v1566, 110
      %v1649 = vpop.permute.xlu0 %1648
      %1650 = vrot.lane.b32.xlu0 %v1574, 110
      %v1651 = vpop.permute.xlu0 %1650
      %1652 = vrot.lane.b32.xlu0 %v1567, 110
      %v1653 = vpop.permute.xlu0 %1652
      %1654 = vrot.lane.b32.xlu0 %v1575, 110
      %v1655 = vpop.permute.xlu0 %1654
      %v1656 = vsel %vm375, %v1649, %v1653
      %v1657 = vsel %vm375, %v1651, %v1655
      %v1658 = vsel %vm375, %v1645, %v1649
      %v1659 = vsel %vm375, %v1647, %v1651
      %v1660 = vsel %vm375, %v1641, %v1645
      %v1661 = vsel %vm375, %v1643, %v1647
      %v1662 = vsel %vm375, %v1637, %v1641
      %v1663 = vsel %vm375, %v1639, %v1643
      %v1664 = vsel %vm375, %v1633, %v1637
      %v1665 = vsel %vm375, %v1635, %v1639
      %v1666 = vsel %vm375, %v1629, %v1633
      %v1667 = vsel %vm375, %v1631, %v1635
      %v1668 = vsel %vm375, %v1625, %v1629
      %v1669 = vsel %vm375, %v1627, %v1631
      %v1670 = vsel %vm375, %v1653, %v1625
      %v1671 = vsel %vm375, %v1655, %v1627
      %1672 = vrot.lane.b32.xlu0 %v1560, 109
      %v1673 = vpop.permute.xlu0 %1672
      %1674 = vrot.lane.b32.xlu0 %v1568, 109
      %v1675 = vpop.permute.xlu0 %1674
      %1676 = vrot.lane.b32.xlu0 %v1561, 109
      %v1677 = vpop.permute.xlu0 %1676
      %1678 = vrot.lane.b32.xlu0 %v1569, 109
      %v1679 = vpop.permute.xlu0 %1678
      %1680 = vrot.lane.b32.xlu0 %v1562, 109
      %v1681 = vpop.permute.xlu0 %1680
      %1682 = vrot.lane.b32.xlu0 %v1570, 109
      %v1683 = vpop.permute.xlu0 %1682
      %1684 = vrot.lane.b32.xlu0 %v1563, 109
      %v1685 = vpop.permute.xlu0 %1684
      %1686 = vrot.lane.b32.xlu0 %v1571, 109
      %v1687 = vpop.permute.xlu0 %1686
      %1688 = vrot.lane.b32.xlu0 %v1564, 109
      %v1689 = vpop.permute.xlu0 %1688
      %1690 = vrot.lane.b32.xlu0 %v1572, 109
      %v1691 = vpop.permute.xlu0 %1690
      %1692 = vrot.lane.b32.xlu0 %v1565, 109
      %v1693 = vpop.permute.xlu0 %1692
      %1694 = vrot.lane.b32.xlu0 %v1573, 109
      %v1695 = vpop.permute.xlu0 %1694
      %1696 = vrot.lane.b32.xlu0 %v1566, 109
      %v1697 = vpop.permute.xlu0 %1696
      %1698 = vrot.lane.b32.xlu0 %v1574, 109
      %v1699 = vpop.permute.xlu0 %1698
      %1700 = vrot.lane.b32.xlu0 %v1567, 109
      %v1701 = vpop.permute.xlu0 %1700
      %1702 = vrot.lane.b32.xlu0 %v1575, 109
      %v1703 = vpop.permute.xlu0 %1702
      %v1704 = vsel %vm400, %v1697, %v1701
      %v1705 = vsel %vm400, %v1699, %v1703
      %v1706 = vsel %vm400, %v1693, %v1697
      %v1707 = vsel %vm400, %v1695, %v1699
      %v1708 = vsel %vm400, %v1689, %v1693
      %v1709 = vsel %vm400, %v1691, %v1695
      %v1710 = vsel %vm400, %v1685, %v1689
      %v1711 = vsel %vm400, %v1687, %v1691
      %v1712 = vsel %vm400, %v1681, %v1685
      %v1713 = vsel %vm400, %v1683, %v1687
      %v1714 = vsel %vm400, %v1677, %v1681
      %v1715 = vsel %vm400, %v1679, %v1683
      %v1716 = vsel %vm400, %v1673, %v1677
      %v1717 = vsel %vm400, %v1675, %v1679
      %v1718 = vsel %vm400, %v1701, %v1673
      %v1719 = vsel %vm400, %v1703, %v1675
      %1720 = vrot.lane.b32.xlu0 %v1560, 101
      %v1721 = vpop.permute.xlu0 %1720
      %1722 = vrot.lane.b32.xlu0 %v1568, 101
      %v1723 = vpop.permute.xlu0 %1722
      %1724 = vrot.lane.b32.xlu0 %v1561, 101
      %v1725 = vpop.permute.xlu0 %1724
      %1726 = vrot.lane.b32.xlu0 %v1569, 101
      %v1727 = vpop.permute.xlu0 %1726
      %1728 = vrot.lane.b32.xlu0 %v1562, 101
      %v1729 = vpop.permute.xlu0 %1728
      %1730 = vrot.lane.b32.xlu0 %v1570, 101
      %v1731 = vpop.permute.xlu0 %1730
      %1732 = vrot.lane.b32.xlu0 %v1563, 101
      %v1733 = vpop.permute.xlu0 %1732
      %1734 = vrot.lane.b32.xlu0 %v1571, 101
      %v1735 = vpop.permute.xlu0 %1734
      %1736 = vrot.lane.b32.xlu0 %v1564, 101
      %v1737 = vpop.permute.xlu0 %1736
      %1738 = vrot.lane.b32.xlu0 %v1572, 101
      %v1739 = vpop.permute.xlu0 %1738
      %1740 = vrot.lane.b32.xlu0 %v1565, 101
      %v1741 = vpop.permute.xlu0 %1740
      %1742 = vrot.lane.b32.xlu0 %v1573, 101
      %v1743 = vpop.permute.xlu0 %1742
      %1744 = vrot.lane.b32.xlu0 %v1566, 101
      %v1745 = vpop.permute.xlu0 %1744
      %1746 = vrot.lane.b32.xlu0 %v1574, 101
      %v1747 = vpop.permute.xlu0 %1746
      %1748 = vrot.lane.b32.xlu0 %v1567, 101
      %v1749 = vpop.permute.xlu0 %1748
      %1750 = vrot.lane.b32.xlu0 %v1575, 101
      %v1751 = vpop.permute.xlu0 %1750
      %v1752 = vsel %vm425, %v1745, %v1749
      %v1753 = vsel %vm425, %v1747, %v1751
      %v1754 = vsel %vm425, %v1741, %v1745
      %v1755 = vsel %vm425, %v1743, %v1747
      %v1756 = vsel %vm425, %v1737, %v1741
      %v1757 = vsel %vm425, %v1739, %v1743
      %v1758 = vsel %vm425, %v1733, %v1737
      %v1759 = vsel %vm425, %v1735, %v1739
      %v1760 = vsel %vm425, %v1729, %v1733
      %v1761 = vsel %vm425, %v1731, %v1735
      %v1762 = vsel %vm425, %v1725, %v1729
      %v1763 = vsel %vm425, %v1727, %v1731
      %v1764 = vsel %vm425, %v1721, %v1725
      %v1765 = vsel %vm425, %v1723, %v1727
      %v1766 = vsel %vm425, %v1749, %v1721
      %v1767 = vsel %vm425, %v1751, %v1723
      %1768 = vrot.lane.b32.xlu0 %v1560, 100
      %v1769 = vpop.permute.xlu0 %1768
      %1770 = vrot.lane.b32.xlu0 %v1568, 100
      %v1771 = vpop.permute.xlu0 %1770
      %1772 = vrot.lane.b32.xlu0 %v1561, 100
      %v1773 = vpop.permute.xlu0 %1772
      %1774 = vrot.lane.b32.xlu0 %v1569, 100
      %v1775 = vpop.permute.xlu0 %1774
      %1776 = vrot.lane.b32.xlu0 %v1562, 100
      %v1777 = vpop.permute.xlu0 %1776
      %1778 = vrot.lane.b32.xlu0 %v1570, 100
      %v1779 = vpop.permute.xlu0 %1778
      %1780 = vrot.lane.b32.xlu0 %v1563, 100
      %v1781 = vpop.permute.xlu0 %1780
      %1782 = vrot.lane.b32.xlu0 %v1571, 100
      %v1783 = vpop.permute.xlu0 %1782
      %1784 = vrot.lane.b32.xlu0 %v1564, 100
      %v1785 = vpop.permute.xlu0 %1784
      %1786 = vrot.lane.b32.xlu0 %v1572, 100
      %v1787 = vpop.permute.xlu0 %1786
      %1788 = vrot.lane.b32.xlu0 %v1565, 100
      %v1789 = vpop.permute.xlu0 %1788
      %1790 = vrot.lane.b32.xlu0 %v1573, 100
      %v1791 = vpop.permute.xlu0 %1790
      %1792 = vrot.lane.b32.xlu0 %v1566, 100
      %v1793 = vpop.permute.xlu0 %1792
      %1794 = vrot.lane.b32.xlu0 %v1574, 100
      %v1795 = vpop.permute.xlu0 %1794
      %1796 = vrot.lane.b32.xlu0 %v1567, 100
      %v1797 = vpop.permute.xlu0 %1796
      %1798 = vrot.lane.b32.xlu0 %v1575, 100
      %v1799 = vpop.permute.xlu0 %1798
      %v1800 = vsel %vm450, %v1793, %v1797
      %v1801 = vsel %vm450, %v1795, %v1799
      %v1802 = vsel %vm450, %v1789, %v1793
      %v1803 = vsel %vm450, %v1791, %v1795
      %v1804 = vsel %vm450, %v1785, %v1789
      %v1805 = vsel %vm450, %v1787, %v1791
      %v1806 = vsel %vm450, %v1781, %v1785
      %v1807 = vsel %vm450, %v1783, %v1787
      %v1808 = vsel %vm450, %v1777, %v1781
      %v1809 = vsel %vm450, %v1779, %v1783
      %v1810 = vsel %vm450, %v1773, %v1777
      %v1811 = vsel %vm450, %v1775, %v1779
      %v1812 = vsel %vm450, %v1769, %v1773
      %v1813 = vsel %vm450, %v1771, %v1775
      %v1814 = vsel %vm450, %v1797, %v1769
      %v1815 = vsel %vm450, %v1799, %v1771
      %1816 = vrot.lane.b32.xlu0 %v1560, 99
      %v1817 = vpop.permute.xlu0 %1816
      %1818 = vrot.lane.b32.xlu0 %v1568, 99
      %v1819 = vpop.permute.xlu0 %1818
      %1820 = vrot.lane.b32.xlu0 %v1561, 99
      %v1821 = vpop.permute.xlu0 %1820
      %1822 = vrot.lane.b32.xlu0 %v1569, 99
      %v1823 = vpop.permute.xlu0 %1822
      %1824 = vrot.lane.b32.xlu0 %v1562, 99
      %v1825 = vpop.permute.xlu0 %1824
      %1826 = vrot.lane.b32.xlu0 %v1570, 99
      %v1827 = vpop.permute.xlu0 %1826
      %1828 = vrot.lane.b32.xlu0 %v1563, 99
      %v1829 = vpop.permute.xlu0 %1828
      %1830 = vrot.lane.b32.xlu0 %v1571, 99
      %v1831 = vpop.permute.xlu0 %1830
      %1832 = vrot.lane.b32.xlu0 %v1564, 99
      %v1833 = vpop.permute.xlu0 %1832
      %1834 = vrot.lane.b32.xlu0 %v1572, 99
      %v1835 = vpop.permute.xlu0 %1834
      %1836 = vrot.lane.b32.xlu0 %v1565, 99
      %v1837 = vpop.permute.xlu0 %1836
      %1838 = vrot.lane.b32.xlu0 %v1573, 99
      %v1839 = vpop.permute.xlu0 %1838
      %1840 = vrot.lane.b32.xlu0 %v1566, 99
      %v1841 = vpop.permute.xlu0 %1840
      %1842 = vrot.lane.b32.xlu0 %v1574, 99
      %v1843 = vpop.permute.xlu0 %1842
      %1844 = vrot.lane.b32.xlu0 %v1567, 99
      %v1845 = vpop.permute.xlu0 %1844
      %1846 = vrot.lane.b32.xlu0 %v1575, 99
      %v1847 = vpop.permute.xlu0 %1846
      %v1848 = vsel %vm475, %v1841, %v1845
      %v1849 = vsel %vm475, %v1843, %v1847
      %v1850 = vsel %vm475, %v1837, %v1841
      %v1851 = vsel %vm475, %v1839, %v1843
      %v1852 = vsel %vm475, %v1833, %v1837
      %v1853 = vsel %vm475, %v1835, %v1839
      %v1854 = vsel %vm475, %v1829, %v1833
      %v1855 = vsel %vm475, %v1831, %v1835
      %v1856 = vsel %vm475, %v1825, %v1829
      %v1857 = vsel %vm475, %v1827, %v1831
      %v1858 = vsel %vm475, %v1821, %v1825
      %v1859 = vsel %vm475, %v1823, %v1827
      %v1860 = vsel %vm475, %v1817, %v1821
      %v1861 = vsel %vm475, %v1819, %v1823
      %v1862 = vsel %vm475, %v1845, %v1817
      %v1863 = vsel %vm475, %v1847, %v1819
      %1864 = vrot.lane.b32.xlu0 %v1560, 91
      %v1865 = vpop.permute.xlu0 %1864
      %1866 = vrot.lane.b32.xlu0 %v1568, 91
      %v1867 = vpop.permute.xlu0 %1866
      %1868 = vrot.lane.b32.xlu0 %v1561, 91
      %v1869 = vpop.permute.xlu0 %1868
      %1870 = vrot.lane.b32.xlu0 %v1569, 91
      %v1871 = vpop.permute.xlu0 %1870
      %1872 = vrot.lane.b32.xlu0 %v1562, 91
      %v1873 = vpop.permute.xlu0 %1872
      %1874 = vrot.lane.b32.xlu0 %v1570, 91
      %v1875 = vpop.permute.xlu0 %1874
      %1876 = vrot.lane.b32.xlu0 %v1563, 91
      %v1877 = vpop.permute.xlu0 %1876
      %1878 = vrot.lane.b32.xlu0 %v1571, 91
      %v1879 = vpop.permute.xlu0 %1878
      %1880 = vrot.lane.b32.xlu0 %v1564, 91
      %v1881 = vpop.permute.xlu0 %1880
      %1882 = vrot.lane.b32.xlu0 %v1572, 91
      %v1883 = vpop.permute.xlu0 %1882
      %1884 = vrot.lane.b32.xlu0 %v1565, 91
      %v1885 = vpop.permute.xlu0 %1884
      %1886 = vrot.lane.b32.xlu0 %v1573, 91
      %v1887 = vpop.permute.xlu0 %1886
      %1888 = vrot.lane.b32.xlu0 %v1566, 91
      %v1889 = vpop.permute.xlu0 %1888
      %1890 = vrot.lane.b32.xlu0 %v1574, 91
      %v1891 = vpop.permute.xlu0 %1890
      %1892 = vrot.lane.b32.xlu0 %v1567, 91
      %v1893 = vpop.permute.xlu0 %1892
      %1894 = vrot.lane.b32.xlu0 %v1575, 91
      %v1895 = vpop.permute.xlu0 %1894
      %v1896 = vsel %vm500, %v1889, %v1893
      %v1897 = vsel %vm500, %v1891, %v1895
      %v1898 = vsel %vm500, %v1885, %v1889
      %v1899 = vsel %vm500, %v1887, %v1891
      %v1900 = vsel %vm500, %v1881, %v1885
      %v1901 = vsel %vm500, %v1883, %v1887
      %v1902 = vsel %vm500, %v1877, %v1881
      %v1903 = vsel %vm500, %v1879, %v1883
      %v1904 = vsel %vm500, %v1873, %v1877
      %v1905 = vsel %vm500, %v1875, %v1879
      %v1906 = vsel %vm500, %v1869, %v1873
      %v1907 = vsel %vm500, %v1871, %v1875
      %v1908 = vsel %vm500, %v1865, %v1869
      %v1909 = vsel %vm500, %v1867, %v1871
      %v1910 = vsel %vm500, %v1893, %v1865
      %v1911 = vsel %vm500, %v1895, %v1867
      %1912 = vrot.lane.b32.xlu0 %v1560, 90
      %v1913 = vpop.permute.xlu0 %1912
      %1914 = vrot.lane.b32.xlu0 %v1568, 90
      %v1915 = vpop.permute.xlu0 %1914
      %1916 = vrot.lane.b32.xlu0 %v1561, 90
      %v1917 = vpop.permute.xlu0 %1916
      %1918 = vrot.lane.b32.xlu0 %v1569, 90
      %v1919 = vpop.permute.xlu0 %1918
      %1920 = vrot.lane.b32.xlu0 %v1562, 90
      %v1921 = vpop.permute.xlu0 %1920
      %1922 = vrot.lane.b32.xlu0 %v1570, 90
      %v1923 = vpop.permute.xlu0 %1922
      %1924 = vrot.lane.b32.xlu0 %v1563, 90
      %v1925 = vpop.permute.xlu0 %1924
      %1926 = vrot.lane.b32.xlu0 %v1571, 90
      %v1927 = vpop.permute.xlu0 %1926
      %1928 = vrot.lane.b32.xlu0 %v1564, 90
      %v1929 = vpop.permute.xlu0 %1928
      %1930 = vrot.lane.b32.xlu0 %v1572, 90
      %v1931 = vpop.permute.xlu0 %1930
      %1932 = vrot.lane.b32.xlu0 %v1565, 90
      %v1933 = vpop.permute.xlu0 %1932
      %1934 = vrot.lane.b32.xlu0 %v1573, 90
      %v1935 = vpop.permute.xlu0 %1934
      %1936 = vrot.lane.b32.xlu0 %v1566, 90
      %v1937 = vpop.permute.xlu0 %1936
      %1938 = vrot.lane.b32.xlu0 %v1574, 90
      %v1939 = vpop.permute.xlu0 %1938
      %1940 = vrot.lane.b32.xlu0 %v1567, 90
      %v1941 = vpop.permute.xlu0 %1940
      %1942 = vrot.lane.b32.xlu0 %v1575, 90
      %v1943 = vpop.permute.xlu0 %1942
      %v1944 = vsel %vm525, %v1937, %v1941
      %v1945 = vsel %vm525, %v1939, %v1943
      %v1946 = vsel %vm525, %v1933, %v1937
      %v1947 = vsel %vm525, %v1935, %v1939
      %v1948 = vsel %vm525, %v1929, %v1933
      %v1949 = vsel %vm525, %v1931, %v1935
      %v1950 = vsel %vm525, %v1925, %v1929
      %v1951 = vsel %vm525, %v1927, %v1931
      %v1952 = vsel %vm525, %v1921, %v1925
      %v1953 = vsel %vm525, %v1923, %v1927
      %v1954 = vsel %vm525, %v1917, %v1921
      %v1955 = vsel %vm525, %v1919, %v1923
      %v1956 = vsel %vm525, %v1913, %v1917
      %v1957 = vsel %vm525, %v1915, %v1919
      %v1958 = vsel %vm525, %v1941, %v1913
      %v1959 = vsel %vm525, %v1943, %v1915
      %1960 = vrot.lane.b32.xlu0 %v1560, 89
      %v1961 = vpop.permute.xlu0 %1960
      %1962 = vrot.lane.b32.xlu0 %v1568, 89
      %v1963 = vpop.permute.xlu0 %1962
      %1964 = vrot.lane.b32.xlu0 %v1561, 89
      %v1965 = vpop.permute.xlu0 %1964
      %1966 = vrot.lane.b32.xlu0 %v1569, 89
      %v1967 = vpop.permute.xlu0 %1966
      %1968 = vrot.lane.b32.xlu0 %v1562, 89
      %v1969 = vpop.permute.xlu0 %1968
      %1970 = vrot.lane.b32.xlu0 %v1570, 89
      %v1971 = vpop.permute.xlu0 %1970
      %1972 = vrot.lane.b32.xlu0 %v1563, 89
      %v1973 = vpop.permute.xlu0 %1972
      %1974 = vrot.lane.b32.xlu0 %v1571, 89
      %v1975 = vpop.permute.xlu0 %1974
      %1976 = vrot.lane.b32.xlu0 %v1564, 89
      %v1977 = vpop.permute.xlu0 %1976
      %1978 = vrot.lane.b32.xlu0 %v1572, 89
      %v1979 = vpop.permute.xlu0 %1978
      %1980 = vrot.lane.b32.xlu0 %v1565, 89
      %v1981 = vpop.permute.xlu0 %1980
      %1982 = vrot.lane.b32.xlu0 %v1573, 89
      %v1983 = vpop.permute.xlu0 %1982
      %1984 = vrot.lane.b32.xlu0 %v1566, 89
      %v1985 = vpop.permute.xlu0 %1984
      %1986 = vrot.lane.b32.xlu0 %v1574, 89
      %v1987 = vpop.permute.xlu0 %1986
      %1988 = vrot.lane.b32.xlu0 %v1567, 89
      %v1989 = vpop.permute.xlu0 %1988
      %1990 = vrot.lane.b32.xlu0 %v1575, 89
      %v1991 = vpop.permute.xlu0 %1990
      %v1992 = vsel %vm550, %v1985, %v1989
      %v1993 = vsel %vm550, %v1987, %v1991
      %v1994 = vsel %vm550, %v1981, %v1985
      %v1995 = vsel %vm550, %v1983, %v1987
      %v1996 = vsel %vm550, %v1977, %v1981
      %v1997 = vsel %vm550, %v1979, %v1983
      %v1998 = vsel %vm550, %v1973, %v1977
      %v1999 = vsel %vm550, %v1975, %v1979
      %v2000 = vsel %vm550, %v1969, %v1973
      %v2001 = vsel %vm550, %v1971, %v1975
      %v2002 = vsel %vm550, %v1965, %v1969
      %v2003 = vsel %vm550, %v1967, %v1971
      %v2004 = vsel %vm550, %v1961, %v1965
      %v2005 = vsel %vm550, %v1963, %v1967
      %v2006 = vsel %vm550, %v1989, %v1961
      %v2007 = vsel %vm550, %v1991, %v1963
      %v2008 = vld [vmem:[%s3] sm:$0xff]
      %v2009 = vld [vmem:[%s3 + $0x8] sm:$0xff]
      %2010 = vrot.lane.b32.xlu0 %v1560, 11
      %v2011 = vpop.permute.xlu0 %2010
      %2012 = vrot.lane.b32.xlu0 %v1568, 11
      %v2013 = vpop.permute.xlu0 %2012
      %2014 = vrot.lane.b32.xlu0 %v1561, 11
      %v2015 = vpop.permute.xlu0 %2014
      %2016 = vrot.lane.b32.xlu0 %v1569, 11
      %v2017 = vpop.permute.xlu0 %2016
      %2018 = vrot.lane.b32.xlu0 %v1562, 11
      %v2019 = vpop.permute.xlu0 %2018
      %2020 = vrot.lane.b32.xlu0 %v1570, 11
      %v2021 = vpop.permute.xlu0 %2020
      %2022 = vrot.lane.b32.xlu0 %v1563, 11
      %v2023 = vpop.permute.xlu0 %2022
      %2024 = vrot.lane.b32.xlu0 %v1571, 11
      %v2025 = vpop.permute.xlu0 %2024
      %2026 = vrot.lane.b32.xlu0 %v1564, 11
      %v2027 = vpop.permute.xlu0 %2026
      %2028 = vrot.lane.b32.xlu0 %v1572, 11
      %v2029 = vpop.permute.xlu0 %2028
      %2030 = vrot.lane.b32.xlu0 %v1565, 11
      %v2031 = vpop.permute.xlu0 %2030
      %2032 = vrot.lane.b32.xlu0 %v1573, 11
      %v2033 = vpop.permute.xlu0 %2032
      %2034 = vrot.lane.b32.xlu0 %v1566, 11
      %v2035 = vpop.permute.xlu0 %2034
      %2036 = vrot.lane.b32.xlu0 %v1574, 11
      %v2037 = vpop.permute.xlu0 %2036
      %2038 = vrot.lane.b32.xlu0 %v1567, 11
      %v2039 = vpop.permute.xlu0 %2038
      %2040 = vrot.lane.b32.xlu0 %v1575, 11
      %v2041 = vpop.permute.xlu0 %2040
      %v2042 = vsel %vm576, %v2035, %v2039
      %v2043 = vsel %vm576, %v2037, %v2041
      %v2044 = vsel %vm576, %v2031, %v2035
      %v2045 = vsel %vm576, %v2033, %v2037
      %v2046 = vsel %vm576, %v2027, %v2031
      %v2047 = vsel %vm576, %v2029, %v2033
      %v2048 = vsel %vm576, %v2023, %v2027
      %v2049 = vsel %vm576, %v2025, %v2029
      %v2050 = vsel %vm576, %v2019, %v2023
      %v2051 = vsel %vm576, %v2021, %v2025
      %v2052 = vsel %vm576, %v2015, %v2019
      %v2053 = vsel %vm576, %v2017, %v2021
      %v2054 = vsel %vm576, %v2011, %v2015
      %v2055 = vsel %vm576, %v2013, %v2017
      %v2056 = vsel %vm576, %v2039, %v2011
      %v2057 = vsel %vm576, %v2041, %v2013
      %2058 = vrot.lane.b32.xlu0 %v1560, 10
      %v2059 = vpop.permute.xlu0 %2058
      %2060 = vrot.lane.b32.xlu0 %v1568, 10
      %v2061 = vpop.permute.xlu0 %2060
      %2062 = vrot.lane.b32.xlu0 %v1561, 10
      %v2063 = vpop.permute.xlu0 %2062
      %2064 = vrot.lane.b32.xlu0 %v1569, 10
      %v2065 = vpop.permute.xlu0 %2064
      %2066 = vrot.lane.b32.xlu0 %v1562, 10
      %v2067 = vpop.permute.xlu0 %2066
      %2068 = vrot.lane.b32.xlu0 %v1570, 10
      %v2069 = vpop.permute.xlu0 %2068
      %2070 = vrot.lane.b32.xlu0 %v1563, 10
      %v2071 = vpop.permute.xlu0 %2070
      %2072 = vrot.lane.b32.xlu0 %v1571, 10
      %v2073 = vpop.permute.xlu0 %2072
      %2074 = vrot.lane.b32.xlu0 %v1564, 10
      %v2075 = vpop.permute.xlu0 %2074
      %2076 = vrot.lane.b32.xlu0 %v1572, 10
      %v2077 = vpop.permute.xlu0 %2076
      %2078 = vrot.lane.b32.xlu0 %v1565, 10
      %v2079 = vpop.permute.xlu0 %2078
      %2080 = vrot.lane.b32.xlu0 %v1573, 10
      %v2081 = vpop.permute.xlu0 %2080
      %2082 = vrot.lane.b32.xlu0 %v1566, 10
      %v2083 = vpop.permute.xlu0 %2082
      %2084 = vrot.lane.b32.xlu0 %v1574, 10
      %v2085 = vpop.permute.xlu0 %2084
      %2086 = vrot.lane.b32.xlu0 %v1567, 10
      %v2087 = vpop.permute.xlu0 %2086
      %2088 = vrot.lane.b32.xlu0 %v1575, 10
      %v2089 = vpop.permute.xlu0 %2088
      %v2090 = vsel %vm601, %v2083, %v2087
      %v2091 = vsel %vm601, %v2085, %v2089
      %v2092 = vsel %vm601, %v2079, %v2083
      %v2093 = vsel %vm601, %v2081, %v2085
      %v2094 = vsel %vm601, %v2075, %v2079
      %v2095 = vsel %vm601, %v2077, %v2081
      %v2096 = vsel %vm601, %v2071, %v2075
      %v2097 = vsel %vm601, %v2073, %v2077
      %v2098 = vsel %vm601, %v2067, %v2071
      %v2099 = vsel %vm601, %v2069, %v2073
      %v2100 = vsel %vm601, %v2063, %v2067
      %v2101 = vsel %vm601, %v2065, %v2069
      %v2102 = vsel %vm601, %v2059, %v2063
      %v2103 = vsel %vm601, %v2061, %v2065
      %v2104 = vsel %vm601, %v2087, %v2059
      %v2105 = vsel %vm601, %v2089, %v2061
      %2106 = vrot.lane.b32.xlu0 %v1560, 9
      %v2107 = vpop.permute.xlu0 %2106
      %2108 = vrot.lane.b32.xlu0 %v1568, 9
      %v2109 = vpop.permute.xlu0 %2108
      %2110 = vrot.lane.b32.xlu0 %v1561, 9
      %v2111 = vpop.permute.xlu0 %2110
      %2112 = vrot.lane.b32.xlu0 %v1569, 9
      %v2113 = vpop.permute.xlu0 %2112
      %2114 = vrot.lane.b32.xlu0 %v1562, 9
      %v2115 = vpop.permute.xlu0 %2114
      %2116 = vrot.lane.b32.xlu0 %v1570, 9
      %v2117 = vpop.permute.xlu0 %2116
      %2118 = vrot.lane.b32.xlu0 %v1563, 9
      %v2119 = vpop.permute.xlu0 %2118
      %2120 = vrot.lane.b32.xlu0 %v1571, 9
      %v2121 = vpop.permute.xlu0 %2120
      %2122 = vrot.lane.b32.xlu0 %v1564, 9
      %v2123 = vpop.permute.xlu0 %2122
      %2124 = vrot.lane.b32.xlu0 %v1572, 9
      %v2125 = vpop.permute.xlu0 %2124
      %2126 = vrot.lane.b32.xlu0 %v1565, 9
      %v2127 = vpop.permute.xlu0 %2126
      %2128 = vrot.lane.b32.xlu0 %v1573, 9
      %v2129 = vpop.permute.xlu0 %2128
      %2130 = vrot.lane.b32.xlu0 %v1566, 9
      %v2131 = vpop.permute.xlu0 %2130
      %2132 = vrot.lane.b32.xlu0 %v1574, 9
      %v2133 = vpop.permute.xlu0 %2132
      %2134 = vrot.lane.b32.xlu0 %v1567, 9
      %v2135 = vpop.permute.xlu0 %2134
      %2136 = vrot.lane.b32.xlu0 %v1575, 9
      %v2137 = vpop.permute.xlu0 %2136
      %v2138 = vsel %vm626, %v2131, %v2135
      %v2139 = vsel %vm626, %v2133, %v2137
      %v2140 = vsel %vm626, %v2127, %v2131
      %v2141 = vsel %vm626, %v2129, %v2133
      %v2142 = vsel %vm626, %v2123, %v2127
      %v2143 = vsel %vm626, %v2125, %v2129
      %v2144 = vsel %vm626, %v2119, %v2123
      %v2145 = vsel %vm626, %v2121, %v2125
      %v2146 = vsel %vm626, %v2115, %v2119
      %v2147 = vsel %vm626, %v2117, %v2121
      %v2148 = vsel %vm626, %v2111, %v2115
      %v2149 = vsel %vm626, %v2113, %v2117
      %v2150 = vsel %vm626, %v2107, %v2111
      %v2151 = vsel %vm626, %v2109, %v2113
      %v2152 = vsel %vm626, %v2135, %v2107
      %v2153 = vsel %vm626, %v2137, %v2109
      %2154 = vrot.lane.b32.xlu0 %v1560, 1
      %v2155 = vpop.permute.xlu0 %2154
      %2156 = vrot.lane.b32.xlu0 %v1568, 1
      %v2157 = vpop.permute.xlu0 %2156
      %2158 = vrot.lane.b32.xlu0 %v1561, 1
      %v2159 = vpop.permute.xlu0 %2158
      %2160 = vrot.lane.b32.xlu0 %v1569, 1
      %v2161 = vpop.permute.xlu0 %2160
      %2162 = vrot.lane.b32.xlu0 %v1562, 1
      %v2163 = vpop.permute.xlu0 %2162
      %2164 = vrot.lane.b32.xlu0 %v1570, 1
      %v2165 = vpop.permute.xlu0 %2164
      %2166 = vrot.lane.b32.xlu0 %v1563, 1
      %v2167 = vpop.permute.xlu0 %2166
      %2168 = vrot.lane.b32.xlu0 %v1571, 1
      %v2169 = vpop.permute.xlu0 %2168
      %2170 = vrot.lane.b32.xlu0 %v1564, 1
      %v2171 = vpop.permute.xlu0 %2170
      %2172 = vrot.lane.b32.xlu0 %v1572, 1
      %v2173 = vpop.permute.xlu0 %2172
      %2174 = vrot.lane.b32.xlu0 %v1565, 1
      %v2175 = vpop.permute.xlu0 %2174
      %2176 = vrot.lane.b32.xlu0 %v1573, 1
      %v2177 = vpop.permute.xlu0 %2176
      %2178 = vrot.lane.b32.xlu0 %v1566, 1
      %v2179 = vpop.permute.xlu0 %2178
      %2180 = vrot.lane.b32.xlu0 %v1574, 1
      %v2181 = vpop.permute.xlu0 %2180
      %2182 = vrot.lane.b32.xlu0 %v1567, 1
      %v2183 = vpop.permute.xlu0 %2182
      %2184 = vrot.lane.b32.xlu0 %v1575, 1
      %v2185 = vpop.permute.xlu0 %2184
      %v2186 = vsel %vm651, %v2179, %v2183
      %v2187 = vsel %vm651, %v2181, %v2185
      %v2188 = vsel %vm651, %v2175, %v2179
      %v2189 = vsel %vm651, %v2177, %v2181
      %v2190 = vsel %vm651, %v2171, %v2175
      %v2191 = vsel %vm651, %v2173, %v2177
      %v2192 = vsel %vm651, %v2167, %v2171
      %v2193 = vsel %vm651, %v2169, %v2173
      %v2194 = vsel %vm651, %v2163, %v2167
      %v2195 = vsel %vm651, %v2165, %v2169
      %v2196 = vsel %vm651, %v2159, %v2163
      %v2197 = vsel %vm651, %v2161, %v2165
      %v2198 = vsel %vm651, %v2155, %v2159
      %v2199 = vsel %vm651, %v2157, %v2161
      %v2200 = vsel %vm651, %v2183, %v2155
      %v2201 = vsel %vm651, %v2185, %v2157
      %2202 = vrot.lane.b32.xlu0 %v1560, 127
      %v2203 = vpop.permute.xlu0 %2202
      %2204 = vrot.lane.b32.xlu0 %v1568, 127
      %v2205 = vpop.permute.xlu0 %2204
      %2206 = vrot.lane.b32.xlu0 %v1561, 127
      %v2207 = vpop.permute.xlu0 %2206
      %2208 = vrot.lane.b32.xlu0 %v1569, 127
      %v2209 = vpop.permute.xlu0 %2208
      %2210 = vrot.lane.b32.xlu0 %v1562, 127
      %v2211 = vpop.permute.xlu0 %2210
      %2212 = vrot.lane.b32.xlu0 %v1570, 127
      %v2213 = vpop.permute.xlu0 %2212
      %2214 = vrot.lane.b32.xlu0 %v1563, 127
      %v2215 = vpop.permute.xlu0 %2214
      %2216 = vrot.lane.b32.xlu0 %v1571, 127
      %v2217 = vpop.permute.xlu0 %2216
      %2218 = vrot.lane.b32.xlu0 %v1564, 127
      %v2219 = vpop.permute.xlu0 %2218
      %2220 = vrot.lane.b32.xlu0 %v1572, 127
      %v2221 = vpop.permute.xlu0 %2220
      %2222 = vrot.lane.b32.xlu0 %v1565, 127
      %v2223 = vpop.permute.xlu0 %2222
      %2224 = vrot.lane.b32.xlu0 %v1573, 127
      %v2225 = vpop.permute.xlu0 %2224
      %2226 = vrot.lane.b32.xlu0 %v1566, 127
      %v2227 = vpop.permute.xlu0 %2226
      %2228 = vrot.lane.b32.xlu0 %v1574, 127
      %v2229 = vpop.permute.xlu0 %2228
      %2230 = vrot.lane.b32.xlu0 %v1567, 127
      %v2231 = vpop.permute.xlu0 %2230
      %2232 = vrot.lane.b32.xlu0 %v1575, 127
      %v2233 = vpop.permute.xlu0 %2232
      %v2234 = vsel %vm676, %v2227, %v2231
      %v2235 = vsel %vm676, %v2229, %v2233
      %v2236 = vsel %vm676, %v2223, %v2227
      %v2237 = vsel %vm676, %v2225, %v2229
      %v2238 = vsel %vm676, %v2219, %v2223
      %v2239 = vsel %vm676, %v2221, %v2225
      %v2240 = vsel %vm676, %v2215, %v2219
      %v2241 = vsel %vm676, %v2217, %v2221
      %v2242 = vsel %vm676, %v2211, %v2215
      %v2243 = vsel %vm676, %v2213, %v2217
      %v2244 = vsel %vm676, %v2207, %v2211
      %v2245 = vsel %vm676, %v2209, %v2213
      %v2246 = vsel %vm676, %v2203, %v2207
      %v2247 = vsel %vm676, %v2205, %v2209
      %v2248 = vsel %vm676, %v2231, %v2203
      %v2249 = vsel %vm676, %v2233, %v2205
      %2250 = vrot.lane.b32.xlu0 %v1560, 119
      %v2251 = vpop.permute.xlu0 %2250
      %2252 = vrot.lane.b32.xlu0 %v1568, 119
      %v2253 = vpop.permute.xlu0 %2252
      %2254 = vrot.lane.b32.xlu0 %v1561, 119
      %v2255 = vpop.permute.xlu0 %2254
      %2256 = vrot.lane.b32.xlu0 %v1569, 119
      %v2257 = vpop.permute.xlu0 %2256
      %2258 = vrot.lane.b32.xlu0 %v1562, 119
      %v2259 = vpop.permute.xlu0 %2258
      %2260 = vrot.lane.b32.xlu0 %v1570, 119
      %v2261 = vpop.permute.xlu0 %2260
      %2262 = vrot.lane.b32.xlu0 %v1563, 119
      %v2263 = vpop.permute.xlu0 %2262
      %2264 = vrot.lane.b32.xlu0 %v1571, 119
      %v2265 = vpop.permute.xlu0 %2264
      %2266 = vrot.lane.b32.xlu0 %v1564, 119
      %v2267 = vpop.permute.xlu0 %2266
      %2268 = vrot.lane.b32.xlu0 %v1572, 119
      %v2269 = vpop.permute.xlu0 %2268
      %2270 = vrot.lane.b32.xlu0 %v1565, 119
      %v2271 = vpop.permute.xlu0 %2270
      %2272 = vrot.lane.b32.xlu0 %v1573, 119
      %v2273 = vpop.permute.xlu0 %2272
      %2274 = vrot.lane.b32.xlu0 %v1566, 119
      %v2275 = vpop.permute.xlu0 %2274
      %2276 = vrot.lane.b32.xlu0 %v1574, 119
      %v2277 = vpop.permute.xlu0 %2276
      %2278 = vrot.lane.b32.xlu0 %v1567, 119
      %v2279 = vpop.permute.xlu0 %2278
      %2280 = vrot.lane.b32.xlu0 %v1575, 119
      %v2281 = vpop.permute.xlu0 %2280
      %v2282 = vsel %vm701, %v2275, %v2279
      %v2283 = vsel %vm701, %v2277, %v2281
      %v2284 = vsel %vm701, %v2271, %v2275
      %v2285 = vsel %vm701, %v2273, %v2277
      %v2286 = vsel %vm701, %v2267, %v2271
      %v2287 = vsel %vm701, %v2269, %v2273
      %v2288 = vsel %vm701, %v2263, %v2267
      %v2289 = vsel %vm701, %v2265, %v2269
      %v2290 = vsel %vm701, %v2259, %v2263
      %v2291 = vsel %vm701, %v2261, %v2265
      %v2292 = vsel %vm701, %v2255, %v2259
      %v2293 = vsel %vm701, %v2257, %v2261
      %v2294 = vsel %vm701, %v2251, %v2255
      %v2295 = vsel %vm701, %v2253, %v2257
      %v2296 = vsel %vm701, %v2279, %v2251
      %v2297 = vsel %vm701, %v2281, %v2253
      %2298 = vrot.lane.b32.xlu0 %v1560, 118
      %v2299 = vpop.permute.xlu0 %2298
      %2300 = vrot.lane.b32.xlu0 %v1568, 118
      %v2301 = vpop.permute.xlu0 %2300
      %2302 = vrot.lane.b32.xlu0 %v1561, 118
      %v2303 = vpop.permute.xlu0 %2302
      %2304 = vrot.lane.b32.xlu0 %v1569, 118
      %v2305 = vpop.permute.xlu0 %2304
      %2306 = vrot.lane.b32.xlu0 %v1562, 118
      %v2307 = vpop.permute.xlu0 %2306
      %2308 = vrot.lane.b32.xlu0 %v1570, 118
      %v2309 = vpop.permute.xlu0 %2308
      %2310 = vrot.lane.b32.xlu0 %v1563, 118
      %v2311 = vpop.permute.xlu0 %2310
      %2312 = vrot.lane.b32.xlu0 %v1571, 118
      %v2313 = vpop.permute.xlu0 %2312
      %2314 = vrot.lane.b32.xlu0 %v1564, 118
      %v2315 = vpop.permute.xlu0 %2314
      %2316 = vrot.lane.b32.xlu0 %v1572, 118
      %v2317 = vpop.permute.xlu0 %2316
      %2318 = vrot.lane.b32.xlu0 %v1565, 118
      %v2319 = vpop.permute.xlu0 %2318
      %2320 = vrot.lane.b32.xlu0 %v1573, 118
      %v2321 = vpop.permute.xlu0 %2320
      %2322 = vrot.lane.b32.xlu0 %v1566, 118
      %v2323 = vpop.permute.xlu0 %2322
      %2324 = vrot.lane.b32.xlu0 %v1574, 118
      %v2325 = vpop.permute.xlu0 %2324
      %2326 = vrot.lane.b32.xlu0 %v1567, 118
      %v2327 = vpop.permute.xlu0 %2326
      %2328 = vrot.lane.b32.xlu0 %v1575, 118
      %v2329 = vpop.permute.xlu0 %2328
      %v2330 = vsel %vm726, %v2323, %v2327
      %v2331 = vsel %vm726, %v2325, %v2329
      %v2332 = vsel %vm726, %v2319, %v2323
      %v2333 = vsel %vm726, %v2321, %v2325
      %v2334 = vsel %vm726, %v2315, %v2319
      %v2335 = vsel %vm726, %v2317, %v2321
      %v2336 = vsel %vm726, %v2311, %v2315
      %v2337 = vsel %vm726, %v2313, %v2317
      %v2338 = vsel %vm726, %v2307, %v2311
      %v2339 = vsel %vm726, %v2309, %v2313
      %v2340 = vsel %vm726, %v2303, %v2307
      %v2341 = vsel %vm726, %v2305, %v2309
      %v2342 = vsel %vm726, %v2299, %v2303
      %v2343 = vsel %vm726, %v2301, %v2305
      %v2344 = vsel %vm726, %v2327, %v2299
      %v2345 = vsel %vm726, %v2329, %v2301
      %2346 = vrot.lane.b32.xlu0 %v1560, 117
      %v2347 = vpop.permute.xlu0 %2346
      %2348 = vrot.lane.b32.xlu0 %v1568, 117
      %v2349 = vpop.permute.xlu0 %2348
      %2350 = vrot.lane.b32.xlu0 %v1561, 117
      %v2351 = vpop.permute.xlu0 %2350
      %2352 = vrot.lane.b32.xlu0 %v1569, 117
      %v2353 = vpop.permute.xlu0 %2352
      %2354 = vrot.lane.b32.xlu0 %v1562, 117
      %v2355 = vpop.permute.xlu0 %2354
      %2356 = vrot.lane.b32.xlu0 %v1570, 117
      %v2357 = vpop.permute.xlu0 %2356
      %2358 = vrot.lane.b32.xlu0 %v1563, 117
      %v2359 = vpop.permute.xlu0 %2358
      %2360 = vrot.lane.b32.xlu0 %v1571, 117
      %v2361 = vpop.permute.xlu0 %2360
      %2362 = vrot.lane.b32.xlu0 %v1564, 117
      %v2363 = vpop.permute.xlu0 %2362
      %2364 = vrot.lane.b32.xlu0 %v1572, 117
      %v2365 = vpop.permute.xlu0 %2364
      %2366 = vrot.lane.b32.xlu0 %v1565, 117
      %v2367 = vpop.permute.xlu0 %2366
      %2368 = vrot.lane.b32.xlu0 %v1573, 117
      %v2369 = vpop.permute.xlu0 %2368
      %2370 = vrot.lane.b32.xlu0 %v1566, 117
      %v2371 = vpop.permute.xlu0 %2370
      %2372 = vrot.lane.b32.xlu0 %v1574, 117
      %v2373 = vpop.permute.xlu0 %2372
      %2374 = vrot.lane.b32.xlu0 %v1567, 117
      %v2375 = vpop.permute.xlu0 %2374
      %2376 = vrot.lane.b32.xlu0 %v1575, 117
      %v2377 = vpop.permute.xlu0 %2376
      %v2378 = vsel %vm751, %v2371, %v2375
      %v2379 = vsel %vm751, %v2373, %v2377
      %v2380 = vsel %vm751, %v2367, %v2371
      %v2381 = vsel %vm751, %v2369, %v2373
      %v2382 = vsel %vm751, %v2363, %v2367
      %v2383 = vsel %vm751, %v2365, %v2369
      %v2384 = vsel %vm751, %v2359, %v2363
      %v2385 = vsel %vm751, %v2361, %v2365
      %v2386 = vsel %vm751, %v2355, %v2359
      %v2387 = vsel %vm751, %v2357, %v2361
      %v2388 = vsel %vm751, %v2351, %v2355
      %v2389 = vsel %vm751, %v2353, %v2357
      %v2390 = vsel %vm751, %v2347, %v2351
      %v2391 = vsel %vm751, %v2349, %v2353
      %v2392 = vsel %vm751, %v2375, %v2347
      %v2393 = vsel %vm751, %v2377, %v2349
      %s2394 = scalar_lea.vmem %s3, 16
      %v2395 = vld [vmem:[%s2394] sm:$0xff]
      %v2396 = vld [vmem:[%s2394 + $0x8] sm:$0xff]
      %vm2397 = vcmask 130048
      %v2399 = vsel %vm2397, %v2396, 0
      %2401 = vmatpush.msra.mxu0 %v2343
      %2402 = vmatpush.msra.mxu0 %v2342
      %2403 = vmatpush.msra.mxu0 %v2295
      %2404 = vmatpush.msra.mxu0 %v2294
      %2405 = vmatpush.msra.mxu0 %v2247
      %2406 = vmatpush.msra.mxu0 %v2246
      %2407 = vmatpush.msra.mxu0 %v1568
      %2408 = vmatpush.msra.mxu0 %v1560
      %2409 = vmatpush.msra.mxu0 %v2201
      %2410 = vmatpush.msra.mxu0 %v2200
      %2411 = vmatpush.msra.mxu0 %v2153
      %2412 = vmatpush.msra.mxu0 %v2152
      %2413 = vmatpush.msra.mxu0 %v2105
      %2414 = vmatpush.msra.mxu0 %v2104
      %2415 = vmatpush.msra.mxu0 %v2057
      %2416 = vmatpush.msra.mxu0 %v2056
      %2417 = vmatmul.f32.gmra.mxu0 %v2395
      %v2418 = vpop.f32.mrf.mxu0
      %v2419 = vadd.f32 0.0, %v2418
      %2420 = vdwg.mxu0
      %2421 = vmatpush.msra.mxu0 0.0
      %2422 = vmatpush.msra.mxu0 0.0
      %2423 = vmatpush.msra.mxu0 0.0
      %2424 = vmatpush.msra.mxu0 0.0
      %2425 = vmatpush.msra.mxu0 0.0
      %2426 = vmatpush.msra.mxu0 0.0
      %2427 = vmatpush.msra.mxu0 0.0
      %2428 = vmatpush.msra.mxu0 0.0
      %2429 = vmatpush.msra.mxu0 0.0
      %2430 = vmatpush.msra.mxu0 0.0
      %2431 = vmatpush.msra.mxu0 0.0
      %2432 = vmatpush.msra.mxu0 0.0
      %2433 = vmatpush.msra.mxu0 0.0
      %2434 = vmatpush.msra.mxu0 0.0
      %2435 = vmatpush.msra.mxu0 %v2391
      %2436 = vmatpush.msra.mxu0 %v2390
      %2437 = vmatmul.f32.gmra.mxu0 %v2399
      %v2438 = vpop.f32.mrf.mxu0
      %v2439 = vadd.f32 %v2419, %v2438
      %2440 = vdwg.mxu0
      %2441 = vmatpush.msra.mxu0 %v2341
      %2442 = vmatpush.msra.mxu0 %v2340
      %2443 = vmatpush.msra.mxu0 %v2293
      %2444 = vmatpush.msra.mxu0 %v2292
      %2445 = vmatpush.msra.mxu0 %v2245
      %2446 = vmatpush.msra.mxu0 %v2244
      %2447 = vmatpush.msra.mxu0 %v1569
      %2448 = vmatpush.msra.mxu0 %v1561
      %2449 = vmatpush.msra.mxu0 %v2199
      %2450 = vmatpush.msra.mxu0 %v2198
      %2451 = vmatpush.msra.mxu0 %v2151
      %2452 = vmatpush.msra.mxu0 %v2150
      %2453 = vmatpush.msra.mxu0 %v2103
      %2454 = vmatpush.msra.mxu0 %v2102
      %2455 = vmatpush.msra.mxu0 %v2055
      %2456 = vmatpush.msra.mxu0 %v2054
      %2457 = vmatmul.f32.gmra.mxu0 %v2395
      %v2458 = vpop.f32.mrf.mxu0
      %v2459 = vadd.f32 0.0, %v2458
      %2460 = vdwg.mxu0
      %2461 = vmatpush.msra.mxu0 0.0
      %2462 = vmatpush.msra.mxu0 0.0
      %2463 = vmatpush.msra.mxu0 0.0
      %2464 = vmatpush.msra.mxu0 0.0
      %2465 = vmatpush.msra.mxu0 0.0
      %2466 = vmatpush.msra.mxu0 0.0
      %2467 = vmatpush.msra.mxu0 0.0
      %2468 = vmatpush.msra.mxu0 0.0
      %2469 = vmatpush.msra.mxu0 0.0
      %2470 = vmatpush.msra.mxu0 0.0
      %2471 = vmatpush.msra.mxu0 0.0
      %2472 = vmatpush.msra.mxu0 0.0
      %2473 = vmatpush.msra.mxu0 0.0
      %2474 = vmatpush.msra.mxu0 0.0
      %2475 = vmatpush.msra.mxu0 %v2389
      %2476 = vmatpush.msra.mxu0 %v2388
      %2477 = vmatmul.f32.gmra.mxu0 %v2399
      %v2478 = vpop.f32.mrf.mxu0
      %v2479 = vadd.f32 %v2459, %v2478
      %2480 = vdwg.mxu0
      %2481 = vmatpush.msra.mxu0 %v2339
      %2482 = vmatpush.msra.mxu0 %v2338
      %2483 = vmatpush.msra.mxu0 %v2291
      %2484 = vmatpush.msra.mxu0 %v2290
      %2485 = vmatpush.msra.mxu0 %v2243
      %2486 = vmatpush.msra.mxu0 %v2242
      %2487 = vmatpush.msra.mxu0 %v1570
      %2488 = vmatpush.msra.mxu0 %v1562
      %2489 = vmatpush.msra.mxu0 %v2197
      %2490 = vmatpush.msra.mxu0 %v2196
      %2491 = vmatpush.msra.mxu0 %v2149
      %2492 = vmatpush.msra.mxu0 %v2148
      %2493 = vmatpush.msra.mxu0 %v2101
      %2494 = vmatpush.msra.mxu0 %v2100
      %2495 = vmatpush.msra.mxu0 %v2053
      %2496 = vmatpush.msra.mxu0 %v2052
      %2497 = vmatmul.f32.gmra.mxu0 %v2395
      %v2498 = vpop.f32.mrf.mxu0
      %v2499 = vadd.f32 0.0, %v2498
      %2500 = vdwg.mxu0
      %2501 = vmatpush.msra.mxu0 0.0
      %2502 = vmatpush.msra.mxu0 0.0
      %2503 = vmatpush.msra.mxu0 0.0
      %2504 = vmatpush.msra.mxu0 0.0
      %2505 = vmatpush.msra.mxu0 0.0
      %2506 = vmatpush.msra.mxu0 0.0
      %2507 = vmatpush.msra.mxu0 0.0
      %2508 = vmatpush.msra.mxu0 0.0
      %2509 = vmatpush.msra.mxu0 0.0
      %2510 = vmatpush.msra.mxu0 0.0
      %2511 = vmatpush.msra.mxu0 0.0
      %2512 = vmatpush.msra.mxu0 0.0
      %2513 = vmatpush.msra.mxu0 0.0
      %2514 = vmatpush.msra.mxu0 0.0
      %2515 = vmatpush.msra.mxu0 %v2387
      %2516 = vmatpush.msra.mxu0 %v2386
      %2517 = vmatmul.f32.gmra.mxu0 %v2399
      %v2518 = vpop.f32.mrf.mxu0
      %v2519 = vadd.f32 %v2499, %v2518
      %2520 = vdwg.mxu0
      %2521 = vmatpush.msra.mxu0 %v2337
      %2522 = vmatpush.msra.mxu0 %v2336
      %2523 = vmatpush.msra.mxu0 %v2289
      %2524 = vmatpush.msra.mxu0 %v2288
      %2525 = vmatpush.msra.mxu0 %v2241
      %2526 = vmatpush.msra.mxu0 %v2240
      %2527 = vmatpush.msra.mxu0 %v1571
      %2528 = vmatpush.msra.mxu0 %v1563
      %2529 = vmatpush.msra.mxu0 %v2195
      %2530 = vmatpush.msra.mxu0 %v2194
      %2531 = vmatpush.msra.mxu0 %v2147
      %2532 = vmatpush.msra.mxu0 %v2146
      %2533 = vmatpush.msra.mxu0 %v2099
      %2534 = vmatpush.msra.mxu0 %v2098
      %2535 = vmatpush.msra.mxu0 %v2051
      %2536 = vmatpush.msra.mxu0 %v2050
      %2537 = vmatmul.f32.gmra.mxu0 %v2395
      %v2538 = vpop.f32.mrf.mxu0
      %v2539 = vadd.f32 0.0, %v2538
      %2540 = vdwg.mxu0
      %2541 = vmatpush.msra.mxu0 0.0
      %2542 = vmatpush.msra.mxu0 0.0
      %2543 = vmatpush.msra.mxu0 0.0
      %2544 = vmatpush.msra.mxu0 0.0
      %2545 = vmatpush.msra.mxu0 0.0
      %2546 = vmatpush.msra.mxu0 0.0
      %2547 = vmatpush.msra.mxu0 0.0
      %2548 = vmatpush.msra.mxu0 0.0
      %2549 = vmatpush.msra.mxu0 0.0
      %2550 = vmatpush.msra.mxu0 0.0
      %2551 = vmatpush.msra.mxu0 0.0
      %2552 = vmatpush.msra.mxu0 0.0
      %2553 = vmatpush.msra.mxu0 0.0
      %2554 = vmatpush.msra.mxu0 0.0
      %2555 = vmatpush.msra.mxu0 %v2385
      %2556 = vmatpush.msra.mxu0 %v2384
      %2557 = vmatmul.f32.gmra.mxu0 %v2399
      %v2558 = vpop.f32.mrf.mxu0
      %v2559 = vadd.f32 %v2539, %v2558
      %2560 = vdwg.mxu0
      %2561 = vmatpush.msra.mxu0 %v2335
      %2562 = vmatpush.msra.mxu0 %v2334
      %2563 = vmatpush.msra.mxu0 %v2287
      %2564 = vmatpush.msra.mxu0 %v2286
      %2565 = vmatpush.msra.mxu0 %v2239
      %2566 = vmatpush.msra.mxu0 %v2238
      %2567 = vmatpush.msra.mxu0 %v1572
      %2568 = vmatpush.msra.mxu0 %v1564
      %2569 = vmatpush.msra.mxu0 %v2193
      %2570 = vmatpush.msra.mxu0 %v2192
      %2571 = vmatpush.msra.mxu0 %v2145
      %2572 = vmatpush.msra.mxu0 %v2144
      %2573 = vmatpush.msra.mxu0 %v2097
      %2574 = vmatpush.msra.mxu0 %v2096
      %2575 = vmatpush.msra.mxu0 %v2049
      %2576 = vmatpush.msra.mxu0 %v2048
      %2577 = vmatmul.f32.gmra.mxu0 %v2395
      %v2578 = vpop.f32.mrf.mxu0
      %v2579 = vadd.f32 0.0, %v2578
      %2580 = vdwg.mxu0
      %2581 = vmatpush.msra.mxu0 0.0
      %2582 = vmatpush.msra.mxu0 0.0
      %2583 = vmatpush.msra.mxu0 0.0
      %2584 = vmatpush.msra.mxu0 0.0
      %2585 = vmatpush.msra.mxu0 0.0
      %2586 = vmatpush.msra.mxu0 0.0
      %2587 = vmatpush.msra.mxu0 0.0
      %2588 = vmatpush.msra.mxu0 0.0
      %2589 = vmatpush.msra.mxu0 0.0
      %2590 = vmatpush.msra.mxu0 0.0
      %2591 = vmatpush.msra.mxu0 0.0
      %2592 = vmatpush.msra.mxu0 0.0
      %2593 = vmatpush.msra.mxu0 0.0
      %2594 = vmatpush.msra.mxu0 0.0
      %2595 = vmatpush.msra.mxu0 %v2383
      %2596 = vmatpush.msra.mxu0 %v2382
      %2597 = vmatmul.f32.gmra.mxu0 %v2399
      %v2598 = vpop.f32.mrf.mxu0
      %v2599 = vadd.f32 %v2579, %v2598
      %2600 = vdwg.mxu0
      %2601 = vmatpush.msra.mxu0 %v2333
      %2602 = vmatpush.msra.mxu0 %v2332
      %2603 = vmatpush.msra.mxu0 %v2285
      %2604 = vmatpush.msra.mxu0 %v2284
      %2605 = vmatpush.msra.mxu0 %v2237
      %2606 = vmatpush.msra.mxu0 %v2236
      %2607 = vmatpush.msra.mxu0 %v1573
      %2608 = vmatpush.msra.mxu0 %v1565
      %2609 = vmatpush.msra.mxu0 %v2191
      %2610 = vmatpush.msra.mxu0 %v2190
      %2611 = vmatpush.msra.mxu0 %v2143
      %2612 = vmatpush.msra.mxu0 %v2142
      %2613 = vmatpush.msra.mxu0 %v2095
      %2614 = vmatpush.msra.mxu0 %v2094
      %2615 = vmatpush.msra.mxu0 %v2047
      %2616 = vmatpush.msra.mxu0 %v2046
      %2617 = vmatmul.f32.gmra.mxu0 %v2395
      %v2618 = vpop.f32.mrf.mxu0
      %v2619 = vadd.f32 0.0, %v2618
      %2620 = vdwg.mxu0
      %2621 = vmatpush.msra.mxu0 0.0
      %2622 = vmatpush.msra.mxu0 0.0
      %2623 = vmatpush.msra.mxu0 0.0
      %2624 = vmatpush.msra.mxu0 0.0
      %2625 = vmatpush.msra.mxu0 0.0
      %2626 = vmatpush.msra.mxu0 0.0
      %2627 = vmatpush.msra.mxu0 0.0
      %2628 = vmatpush.msra.mxu0 0.0
      %2629 = vmatpush.msra.mxu0 0.0
      %2630 = vmatpush.msra.mxu0 0.0
      %2631 = vmatpush.msra.mxu0 0.0
      %2632 = vmatpush.msra.mxu0 0.0
      %2633 = vmatpush.msra.mxu0 0.0
      %2634 = vmatpush.msra.mxu0 0.0
      %2635 = vmatpush.msra.mxu0 %v2381
      %2636 = vmatpush.msra.mxu0 %v2380
      %2637 = vmatmul.f32.gmra.mxu0 %v2399
      %v2638 = vpop.f32.mrf.mxu0
      %v2639 = vadd.f32 %v2619, %v2638
      %2640 = vdwg.mxu0
      %2641 = vmatpush.msra.mxu0 %v2331
      %2642 = vmatpush.msra.mxu0 %v2330
      %2643 = vmatpush.msra.mxu0 %v2283
      %2644 = vmatpush.msra.mxu0 %v2282
      %2645 = vmatpush.msra.mxu0 %v2235
      %2646 = vmatpush.msra.mxu0 %v2234
      %2647 = vmatpush.msra.mxu0 %v1574
      %2648 = vmatpush.msra.mxu0 %v1566
      %2649 = vmatpush.msra.mxu0 %v2189
      %2650 = vmatpush.msra.mxu0 %v2188
      %2651 = vmatpush.msra.mxu0 %v2141
      %2652 = vmatpush.msra.mxu0 %v2140
      %2653 = vmatpush.msra.mxu0 %v2093
      %2654 = vmatpush.msra.mxu0 %v2092
      %2655 = vmatpush.msra.mxu0 %v2045
      %2656 = vmatpush.msra.mxu0 %v2044
      %2657 = vmatmul.f32.gmra.mxu0 %v2395
      %v2658 = vpop.f32.mrf.mxu0
      %v2659 = vadd.f32 0.0, %v2658
      %2660 = vdwg.mxu0
      %2661 = vmatpush.msra.mxu0 0.0
      %2662 = vmatpush.msra.mxu0 0.0
      %2663 = vmatpush.msra.mxu0 0.0
      %2664 = vmatpush.msra.mxu0 0.0
      %2665 = vmatpush.msra.mxu0 0.0
      %2666 = vmatpush.msra.mxu0 0.0
      %2667 = vmatpush.msra.mxu0 0.0
      %2668 = vmatpush.msra.mxu0 0.0
      %2669 = vmatpush.msra.mxu0 0.0
      %2670 = vmatpush.msra.mxu0 0.0
      %2671 = vmatpush.msra.mxu0 0.0
      %2672 = vmatpush.msra.mxu0 0.0
      %2673 = vmatpush.msra.mxu0 0.0
      %2674 = vmatpush.msra.mxu0 0.0
      %2675 = vmatpush.msra.mxu0 %v2379
      %2676 = vmatpush.msra.mxu0 %v2378
      %2677 = vmatmul.f32.gmra.mxu0 %v2399
      %v2678 = vpop.f32.mrf.mxu0
      %v2679 = vadd.f32 %v2659, %v2678
      %2680 = vdwg.mxu0
      %2681 = vmatpush.msra.mxu0 %v2345
      %2682 = vmatpush.msra.mxu0 %v2344
      %2683 = vmatpush.msra.mxu0 %v2297
      %2684 = vmatpush.msra.mxu0 %v2296
      %2685 = vmatpush.msra.mxu0 %v2249
      %2686 = vmatpush.msra.mxu0 %v2248
      %2687 = vmatpush.msra.mxu0 %v1575
      %2688 = vmatpush.msra.mxu0 %v1567
      %2689 = vmatpush.msra.mxu0 %v2187
      %2690 = vmatpush.msra.mxu0 %v2186
      %2691 = vmatpush.msra.mxu0 %v2139
      %2692 = vmatpush.msra.mxu0 %v2138
      %2693 = vmatpush.msra.mxu0 %v2091
      %2694 = vmatpush.msra.mxu0 %v2090
      %2695 = vmatpush.msra.mxu0 %v2043
      %2696 = vmatpush.msra.mxu0 %v2042
      %2697 = vmatmul.f32.gmra.mxu0 %v2395
      %v2698 = vpop.f32.mrf.mxu0
      %v2699 = vadd.f32 0.0, %v2698
      %2700 = vdwg.mxu0
      %2701 = vmatpush.msra.mxu0 0.0
      %2702 = vmatpush.msra.mxu0 0.0
      %2703 = vmatpush.msra.mxu0 0.0
      %2704 = vmatpush.msra.mxu0 0.0
      %2705 = vmatpush.msra.mxu0 0.0
      %2706 = vmatpush.msra.mxu0 0.0
      %2707 = vmatpush.msra.mxu0 0.0
      %2708 = vmatpush.msra.mxu0 0.0
      %2709 = vmatpush.msra.mxu0 0.0
      %2710 = vmatpush.msra.mxu0 0.0
      %2711 = vmatpush.msra.mxu0 0.0
      %2712 = vmatpush.msra.mxu0 0.0
      %2713 = vmatpush.msra.mxu0 0.0
      %2714 = vmatpush.msra.mxu0 0.0
      %2715 = vmatpush.msra.mxu0 %v2393
      %2716 = vmatpush.msra.mxu0 %v2392
      %2717 = vmatmul.f32.gmra.mxu0 %v2399
      %v2718 = vpop.f32.mrf.mxu0
      %v2719 = vadd.f32 %v2699, %v2718
      %2720 = vdwg.mxu0
      %v2722 = vsel %vm2397, %v2009, 0
      %2724 = vmatpush.msra.mxu0 %v1959
      %2725 = vmatpush.msra.mxu0 %v1958
      %2726 = vmatpush.msra.mxu0 %v1911
      %2727 = vmatpush.msra.mxu0 %v1910
      %2728 = vmatpush.msra.mxu0 %v1863
      %2729 = vmatpush.msra.mxu0 %v1862
      %2730 = vmatpush.msra.mxu0 %v1815
      %2731 = vmatpush.msra.mxu0 %v1814
      %2732 = vmatpush.msra.mxu0 %v1767
      %2733 = vmatpush.msra.mxu0 %v1766
      %2734 = vmatpush.msra.mxu0 %v1719
      %2735 = vmatpush.msra.mxu0 %v1718
      %2736 = vmatpush.msra.mxu0 %v1671
      %2737 = vmatpush.msra.mxu0 %v1670
      %2738 = vmatpush.msra.mxu0 %v1623
      %2739 = vmatpush.msra.mxu0 %v1622
      %2740 = vmatmul.f32.gmra.mxu0 %v2008
      %v2741 = vpop.f32.mrf.mxu0
      %v2742 = vadd.f32 %v2439, %v2741
      %2743 = vdwg.mxu0
      %2744 = vmatpush.msra.mxu0 0.0
      %2745 = vmatpush.msra.mxu0 0.0
      %2746 = vmatpush.msra.mxu0 0.0
      %2747 = vmatpush.msra.mxu0 0.0
      %2748 = vmatpush.msra.mxu0 0.0
      %2749 = vmatpush.msra.mxu0 0.0
      %2750 = vmatpush.msra.mxu0 0.0
      %2751 = vmatpush.msra.mxu0 0.0
      %2752 = vmatpush.msra.mxu0 0.0
      %2753 = vmatpush.msra.mxu0 0.0
      %2754 = vmatpush.msra.mxu0 0.0
      %2755 = vmatpush.msra.mxu0 0.0
      %2756 = vmatpush.msra.mxu0 0.0
      %2757 = vmatpush.msra.mxu0 0.0
      %2758 = vmatpush.msra.mxu0 %v2007
      %2759 = vmatpush.msra.mxu0 %v2006
      %2760 = vmatmul.f32.gmra.mxu0 %v2722
      %v2761 = vpop.f32.mrf.mxu0
      %v2762 = vadd.f32 %v2742, %v2761
      %2763 = vdwg.mxu0
      %2764 = vmatpush.msra.mxu0 %v1957
      %2765 = vmatpush.msra.mxu0 %v1956
      %2766 = vmatpush.msra.mxu0 %v1909
      %2767 = vmatpush.msra.mxu0 %v1908
      %2768 = vmatpush.msra.mxu0 %v1861
      %2769 = vmatpush.msra.mxu0 %v1860
      %2770 = vmatpush.msra.mxu0 %v1813
      %2771 = vmatpush.msra.mxu0 %v1812
      %2772 = vmatpush.msra.mxu0 %v1765
      %2773 = vmatpush.msra.mxu0 %v1764
      %2774 = vmatpush.msra.mxu0 %v1717
      %2775 = vmatpush.msra.mxu0 %v1716
      %2776 = vmatpush.msra.mxu0 %v1669
      %2777 = vmatpush.msra.mxu0 %v1668
      %2778 = vmatpush.msra.mxu0 %v1621
      %2779 = vmatpush.msra.mxu0 %v1620
      %2780 = vmatmul.f32.gmra.mxu0 %v2008
      %v2781 = vpop.f32.mrf.mxu0
      %v2782 = vadd.f32 %v2479, %v2781
      %2783 = vdwg.mxu0
      %2784 = vmatpush.msra.mxu0 0.0
      %2785 = vmatpush.msra.mxu0 0.0
      %2786 = vmatpush.msra.mxu0 0.0
      %2787 = vmatpush.msra.mxu0 0.0
      %2788 = vmatpush.msra.mxu0 0.0
      %2789 = vmatpush.msra.mxu0 0.0
      %2790 = vmatpush.msra.mxu0 0.0
      %2791 = vmatpush.msra.mxu0 0.0
      %2792 = vmatpush.msra.mxu0 0.0
      %2793 = vmatpush.msra.mxu0 0.0
      %2794 = vmatpush.msra.mxu0 0.0
      %2795 = vmatpush.msra.mxu0 0.0
      %2796 = vmatpush.msra.mxu0 0.0
      %2797 = vmatpush.msra.mxu0 0.0
      %2798 = vmatpush.msra.mxu0 %v2005
      %2799 = vmatpush.msra.mxu0 %v2004
      %2800 = vmatmul.f32.gmra.mxu0 %v2722
      %v2801 = vpop.f32.mrf.mxu0
      %v2802 = vadd.f32 %v2782, %v2801
      %2803 = vdwg.mxu0
      %2804 = vmatpush.msra.mxu0 %v1955
      %2805 = vmatpush.msra.mxu0 %v1954
      %2806 = vmatpush.msra.mxu0 %v1907
      %2807 = vmatpush.msra.mxu0 %v1906
      %2808 = vmatpush.msra.mxu0 %v1859
      %2809 = vmatpush.msra.mxu0 %v1858
      %2810 = vmatpush.msra.mxu0 %v1811
      %2811 = vmatpush.msra.mxu0 %v1810
      %2812 = vmatpush.msra.mxu0 %v1763
      %2813 = vmatpush.msra.mxu0 %v1762
      %2814 = vmatpush.msra.mxu0 %v1715
      %2815 = vmatpush.msra.mxu0 %v1714
      %2816 = vmatpush.msra.mxu0 %v1667
      %2817 = vmatpush.msra.mxu0 %v1666
      %2818 = vmatpush.msra.mxu0 %v1619
      %2819 = vmatpush.msra.mxu0 %v1618
      %2820 = vmatmul.f32.gmra.mxu0 %v2008
      %v2821 = vpop.f32.mrf.mxu0
      %v2822 = vadd.f32 %v2519, %v2821
      %2823 = vdwg.mxu0
      %2824 = vmatpush.msra.mxu0 0.0
      %2825 = vmatpush.msra.mxu0 0.0
      %2826 = vmatpush.msra.mxu0 0.0
      %2827 = vmatpush.msra.mxu0 0.0
      %2828 = vmatpush.msra.mxu0 0.0
      %2829 = vmatpush.msra.mxu0 0.0
      %2830 = vmatpush.msra.mxu0 0.0
      %2831 = vmatpush.msra.mxu0 0.0
      %2832 = vmatpush.msra.mxu0 0.0
      %2833 = vmatpush.msra.mxu0 0.0
      %2834 = vmatpush.msra.mxu0 0.0
      %2835 = vmatpush.msra.mxu0 0.0
      %2836 = vmatpush.msra.mxu0 0.0
      %2837 = vmatpush.msra.mxu0 0.0
      %2838 = vmatpush.msra.mxu0 %v2003
      %2839 = vmatpush.msra.mxu0 %v2002
      %2840 = vmatmul.f32.gmra.mxu0 %v2722
      %v2841 = vpop.f32.mrf.mxu0
      %v2842 = vadd.f32 %v2822, %v2841
      %2843 = vdwg.mxu0
      %2844 = vmatpush.msra.mxu0 %v1953
      %2845 = vmatpush.msra.mxu0 %v1952
      %2846 = vmatpush.msra.mxu0 %v1905
      %2847 = vmatpush.msra.mxu0 %v1904
      %2848 = vmatpush.msra.mxu0 %v1857
      %2849 = vmatpush.msra.mxu0 %v1856
      %2850 = vmatpush.msra.mxu0 %v1809
      %2851 = vmatpush.msra.mxu0 %v1808
      %2852 = vmatpush.msra.mxu0 %v1761
      %2853 = vmatpush.msra.mxu0 %v1760
      %2854 = vmatpush.msra.mxu0 %v1713
      %2855 = vmatpush.msra.mxu0 %v1712
      %2856 = vmatpush.msra.mxu0 %v1665
      %2857 = vmatpush.msra.mxu0 %v1664
      %2858 = vmatpush.msra.mxu0 %v1617
      %2859 = vmatpush.msra.mxu0 %v1616
      %2860 = vmatmul.f32.gmra.mxu0 %v2008
      %v2861 = vpop.f32.mrf.mxu0
      %v2862 = vadd.f32 %v2559, %v2861
      %2863 = vdwg.mxu0
      %2864 = vmatpush.msra.mxu0 0.0
      %2865 = vmatpush.msra.mxu0 0.0
      %2866 = vmatpush.msra.mxu0 0.0
      %2867 = vmatpush.msra.mxu0 0.0
      %2868 = vmatpush.msra.mxu0 0.0
      %2869 = vmatpush.msra.mxu0 0.0
      %2870 = vmatpush.msra.mxu0 0.0
      %2871 = vmatpush.msra.mxu0 0.0
      %2872 = vmatpush.msra.mxu0 0.0
      %2873 = vmatpush.msra.mxu0 0.0
      %2874 = vmatpush.msra.mxu0 0.0
      %2875 = vmatpush.msra.mxu0 0.0
      %2876 = vmatpush.msra.mxu0 0.0
      %2877 = vmatpush.msra.mxu0 0.0
      %2878 = vmatpush.msra.mxu0 %v2001
      %2879 = vmatpush.msra.mxu0 %v2000
      %2880 = vmatmul.f32.gmra.mxu0 %v2722
      %v2881 = vpop.f32.mrf.mxu0
      %v2882 = vadd.f32 %v2862, %v2881
      %2883 = vdwg.mxu0
      %2884 = vmatpush.msra.mxu0 %v1951
      %2885 = vmatpush.msra.mxu0 %v1950
      %2886 = vmatpush.msra.mxu0 %v1903
      %2887 = vmatpush.msra.mxu0 %v1902
      %2888 = vmatpush.msra.mxu0 %v1855
      %2889 = vmatpush.msra.mxu0 %v1854
      %2890 = vmatpush.msra.mxu0 %v1807
      %2891 = vmatpush.msra.mxu0 %v1806
      %2892 = vmatpush.msra.mxu0 %v1759
      %2893 = vmatpush.msra.mxu0 %v1758
      %2894 = vmatpush.msra.mxu0 %v1711
      %2895 = vmatpush.msra.mxu0 %v1710
      %2896 = vmatpush.msra.mxu0 %v1663
      %2897 = vmatpush.msra.mxu0 %v1662
      %2898 = vmatpush.msra.mxu0 %v1615
      %2899 = vmatpush.msra.mxu0 %v1614
      %2900 = vmatmul.f32.gmra.mxu0 %v2008
      %v2901 = vpop.f32.mrf.mxu0
      %v2902 = vadd.f32 %v2599, %v2901
      %2903 = vdwg.mxu0
      %2904 = vmatpush.msra.mxu0 0.0
      %2905 = vmatpush.msra.mxu0 0.0
      %2906 = vmatpush.msra.mxu0 0.0
      %2907 = vmatpush.msra.mxu0 0.0
      %2908 = vmatpush.msra.mxu0 0.0
      %2909 = vmatpush.msra.mxu0 0.0
      %2910 = vmatpush.msra.mxu0 0.0
      %2911 = vmatpush.msra.mxu0 0.0
      %2912 = vmatpush.msra.mxu0 0.0
      %2913 = vmatpush.msra.mxu0 0.0
      %2914 = vmatpush.msra.mxu0 0.0
      %2915 = vmatpush.msra.mxu0 0.0
      %2916 = vmatpush.msra.mxu0 0.0
      %2917 = vmatpush.msra.mxu0 0.0
      %2918 = vmatpush.msra.mxu0 %v1999
      %2919 = vmatpush.msra.mxu0 %v1998
      %2920 = vmatmul.f32.gmra.mxu0 %v2722
      %v2921 = vpop.f32.mrf.mxu0
      %v2922 = vadd.f32 %v2902, %v2921
      %2923 = vdwg.mxu0
      %2924 = vmatpush.msra.mxu0 %v1949
      %2925 = vmatpush.msra.mxu0 %v1948
      %2926 = vmatpush.msra.mxu0 %v1901
      %2927 = vmatpush.msra.mxu0 %v1900
      %2928 = vmatpush.msra.mxu0 %v1853
      %2929 = vmatpush.msra.mxu0 %v1852
      %2930 = vmatpush.msra.mxu0 %v1805
      %2931 = vmatpush.msra.mxu0 %v1804
      %2932 = vmatpush.msra.mxu0 %v1757
      %2933 = vmatpush.msra.mxu0 %v1756
      %2934 = vmatpush.msra.mxu0 %v1709
      %2935 = vmatpush.msra.mxu0 %v1708
      %2936 = vmatpush.msra.mxu0 %v1661
      %2937 = vmatpush.msra.mxu0 %v1660
      %2938 = vmatpush.msra.mxu0 %v1613
      %2939 = vmatpush.msra.mxu0 %v1612
      %2940 = vmatmul.f32.gmra.mxu0 %v2008
      %v2941 = vpop.f32.mrf.mxu0
      %v2942 = vadd.f32 %v2639, %v2941
      %2943 = vdwg.mxu0
      %2944 = vmatpush.msra.mxu0 0.0
      %2945 = vmatpush.msra.mxu0 0.0
      %2946 = vmatpush.msra.mxu0 0.0
      %2947 = vmatpush.msra.mxu0 0.0
      %2948 = vmatpush.msra.mxu0 0.0
      %2949 = vmatpush.msra.mxu0 0.0
      %2950 = vmatpush.msra.mxu0 0.0
      %2951 = vmatpush.msra.mxu0 0.0
      %2952 = vmatpush.msra.mxu0 0.0
      %2953 = vmatpush.msra.mxu0 0.0
      %2954 = vmatpush.msra.mxu0 0.0
      %2955 = vmatpush.msra.mxu0 0.0
      %2956 = vmatpush.msra.mxu0 0.0
      %2957 = vmatpush.msra.mxu0 0.0
      %2958 = vmatpush.msra.mxu0 %v1997
      %2959 = vmatpush.msra.mxu0 %v1996
      %2960 = vmatmul.f32.gmra.mxu0 %v2722
      %v2961 = vpop.f32.mrf.mxu0
      %v2962 = vadd.f32 %v2942, %v2961
      %2963 = vdwg.mxu0
      %2964 = vmatpush.msra.mxu0 %v1947
      %2965 = vmatpush.msra.mxu0 %v1946
      %2966 = vmatpush.msra.mxu0 %v1899
      %2967 = vmatpush.msra.mxu0 %v1898
      %2968 = vmatpush.msra.mxu0 %v1851
      %2969 = vmatpush.msra.mxu0 %v1850
      %2970 = vmatpush.msra.mxu0 %v1803
      %2971 = vmatpush.msra.mxu0 %v1802
      %2972 = vmatpush.msra.mxu0 %v1755
      %2973 = vmatpush.msra.mxu0 %v1754
      %2974 = vmatpush.msra.mxu0 %v1707
      %2975 = vmatpush.msra.mxu0 %v1706
      %2976 = vmatpush.msra.mxu0 %v1659
      %2977 = vmatpush.msra.mxu0 %v1658
      %2978 = vmatpush.msra.mxu0 %v1611
      %2979 = vmatpush.msra.mxu0 %v1610
      %2980 = vmatmul.f32.gmra.mxu0 %v2008
      %v2981 = vpop.f32.mrf.mxu0
      %v2982 = vadd.f32 %v2679, %v2981
      %2983 = vdwg.mxu0
      %2984 = vmatpush.msra.mxu0 0.0
      %2985 = vmatpush.msra.mxu0 0.0
      %2986 = vmatpush.msra.mxu0 0.0
      %2987 = vmatpush.msra.mxu0 0.0
      %2988 = vmatpush.msra.mxu0 0.0
      %2989 = vmatpush.msra.mxu0 0.0
      %2990 = vmatpush.msra.mxu0 0.0
      %2991 = vmatpush.msra.mxu0 0.0
      %2992 = vmatpush.msra.mxu0 0.0
      %2993 = vmatpush.msra.mxu0 0.0
      %2994 = vmatpush.msra.mxu0 0.0
      %2995 = vmatpush.msra.mxu0 0.0
      %2996 = vmatpush.msra.mxu0 0.0
      %2997 = vmatpush.msra.mxu0 0.0
      %2998 = vmatpush.msra.mxu0 %v1995
      %2999 = vmatpush.msra.mxu0 %v1994
      %3000 = vmatmul.f32.gmra.mxu0 %v2722
      %v3001 = vpop.f32.mrf.mxu0
      %v3002 = vadd.f32 %v2982, %v3001
      %3003 = vdwg.mxu0
      %3004 = vmatpush.msra.mxu0 %v1945
      %3005 = vmatpush.msra.mxu0 %v1944
      %3006 = vmatpush.msra.mxu0 %v1897
      %3007 = vmatpush.msra.mxu0 %v1896
      %3008 = vmatpush.msra.mxu0 %v1849
      %3009 = vmatpush.msra.mxu0 %v1848
      %3010 = vmatpush.msra.mxu0 %v1801
      %3011 = vmatpush.msra.mxu0 %v1800
      %3012 = vmatpush.msra.mxu0 %v1753
      %3013 = vmatpush.msra.mxu0 %v1752
      %3014 = vmatpush.msra.mxu0 %v1705
      %3015 = vmatpush.msra.mxu0 %v1704
      %3016 = vmatpush.msra.mxu0 %v1657
      %3017 = vmatpush.msra.mxu0 %v1656
      %3018 = vmatpush.msra.mxu0 %v1609
      %3019 = vmatpush.msra.mxu0 %v1608
      %3020 = vmatmul.f32.gmra.mxu0 %v2008
      %v3021 = vpop.f32.mrf.mxu0
      %v3022 = vadd.f32 %v2719, %v3021
      %3023 = vdwg.mxu0
      %3024 = vmatpush.msra.mxu0 0.0
      %3025 = vmatpush.msra.mxu0 0.0
      %3026 = vmatpush.msra.mxu0 0.0
      %3027 = vmatpush.msra.mxu0 0.0
      %3028 = vmatpush.msra.mxu0 0.0
      %3029 = vmatpush.msra.mxu0 0.0
      %3030 = vmatpush.msra.mxu0 0.0
      %3031 = vmatpush.msra.mxu0 0.0
      %3032 = vmatpush.msra.mxu0 0.0
      %3033 = vmatpush.msra.mxu0 0.0
      %3034 = vmatpush.msra.mxu0 0.0
      %3035 = vmatpush.msra.mxu0 0.0
      %3036 = vmatpush.msra.mxu0 0.0
      %3037 = vmatpush.msra.mxu0 0.0
      %3038 = vmatpush.msra.mxu0 %v1993
      %3039 = vmatpush.msra.mxu0 %v1992
      %3040 = vmatmul.f32.gmra.mxu0 %v2722
      %v3041 = vpop.f32.mrf.mxu0
      %v3042 = vadd.f32 %v3022, %v3041
      %3043 = vdwg.mxu0
      %3044 = vrot.lane.b32.xlu0 %v1560, 39
      %v3045 = vpop.permute.xlu0 %3044
      %3046 = vrot.lane.b32.xlu0 %v1568, 39
      %v3047 = vpop.permute.xlu0 %3046
      %3048 = vrot.lane.b32.xlu0 %v1561, 39
      %v3049 = vpop.permute.xlu0 %3048
      %3050 = vrot.lane.b32.xlu0 %v1569, 39
      %v3051 = vpop.permute.xlu0 %3050
      %3052 = vrot.lane.b32.xlu0 %v1562, 39
      %v3053 = vpop.permute.xlu0 %3052
      %3054 = vrot.lane.b32.xlu0 %v1570, 39
      %v3055 = vpop.permute.xlu0 %3054
      %3056 = vrot.lane.b32.xlu0 %v1563, 39
      %v3057 = vpop.permute.xlu0 %3056
      %3058 = vrot.lane.b32.xlu0 %v1571, 39
      %v3059 = vpop.permute.xlu0 %3058
      %3060 = vrot.lane.b32.xlu0 %v1564, 39
      %v3061 = vpop.permute.xlu0 %3060
      %3062 = vrot.lane.b32.xlu0 %v1572, 39
      %v3063 = vpop.permute.xlu0 %3062
      %3064 = vrot.lane.b32.xlu0 %v1565, 39
      %v3065 = vpop.permute.xlu0 %3064
      %3066 = vrot.lane.b32.xlu0 %v1573, 39
      %v3067 = vpop.permute.xlu0 %3066
      %3068 = vrot.lane.b32.xlu0 %v1566, 39
      %v3069 = vpop.permute.xlu0 %3068
      %3070 = vrot.lane.b32.xlu0 %v1574, 39
      %v3071 = vpop.permute.xlu0 %3070
      %3072 = vrot.lane.b32.xlu0 %v1567, 39
      %v3073 = vpop.permute.xlu0 %3072
      %3074 = vrot.lane.b32.xlu0 %v1575, 39
      %v3075 = vpop.permute.xlu0 %3074
      %v3076 = vsel %vm1105, %v3069, %v3073
      %v3077 = vsel %vm1105, %v3071, %v3075
      %v3078 = vsel %vm1105, %v3065, %v3069
      %v3079 = vsel %vm1105, %v3067, %v3071
      %v3080 = vsel %vm1105, %v3061, %v3065
      %v3081 = vsel %vm1105, %v3063, %v3067
      %v3082 = vsel %vm1105, %v3057, %v3061
      %v3083 = vsel %vm1105, %v3059, %v3063
      %v3084 = vsel %vm1105, %v3053, %v3057
      %v3085 = vsel %vm1105, %v3055, %v3059
      %v3086 = vsel %vm1105, %v3049, %v3053
      %v3087 = vsel %vm1105, %v3051, %v3055
      %v3088 = vsel %vm1105, %v3045, %v3049
      %v3089 = vsel %vm1105, %v3047, %v3051
      %v3090 = vsel %vm1105, %v3073, %v3045
      %v3091 = vsel %vm1105, %v3075, %v3047
      %3092 = vrot.lane.b32.xlu0 %v1560, 38
      %v3093 = vpop.permute.xlu0 %3092
      %3094 = vrot.lane.b32.xlu0 %v1568, 38
      %v3095 = vpop.permute.xlu0 %3094
      %3096 = vrot.lane.b32.xlu0 %v1561, 38
      %v3097 = vpop.permute.xlu0 %3096
      %3098 = vrot.lane.b32.xlu0 %v1569, 38
      %v3099 = vpop.permute.xlu0 %3098
      %3100 = vrot.lane.b32.xlu0 %v1562, 38
      %v3101 = vpop.permute.xlu0 %3100
      %3102 = vrot.lane.b32.xlu0 %v1570, 38
      %v3103 = vpop.permute.xlu0 %3102
      %3104 = vrot.lane.b32.xlu0 %v1563, 38
      %v3105 = vpop.permute.xlu0 %3104
      %3106 = vrot.lane.b32.xlu0 %v1571, 38
      %v3107 = vpop.permute.xlu0 %3106
      %3108 = vrot.lane.b32.xlu0 %v1564, 38
      %v3109 = vpop.permute.xlu0 %3108
      %3110 = vrot.lane.b32.xlu0 %v1572, 38
      %v3111 = vpop.permute.xlu0 %3110
      %3112 = vrot.lane.b32.xlu0 %v1565, 38
      %v3113 = vpop.permute.xlu0 %3112
      %3114 = vrot.lane.b32.xlu0 %v1573, 38
      %v3115 = vpop.permute.xlu0 %3114
      %3116 = vrot.lane.b32.xlu0 %v1566, 38
      %v3117 = vpop.permute.xlu0 %3116
      %3118 = vrot.lane.b32.xlu0 %v1574, 38
      %v3119 = vpop.permute.xlu0 %3118
      %3120 = vrot.lane.b32.xlu0 %v1567, 38
      %v3121 = vpop.permute.xlu0 %3120
      %3122 = vrot.lane.b32.xlu0 %v1575, 38
      %v3123 = vpop.permute.xlu0 %3122
      %v3124 = vsel %vm1130, %v3117, %v3121
      %v3125 = vsel %vm1130, %v3119, %v3123
      %v3126 = vsel %vm1130, %v3113, %v3117
      %v3127 = vsel %vm1130, %v3115, %v3119
      %v3128 = vsel %vm1130, %v3109, %v3113
      %v3129 = vsel %vm1130, %v3111, %v3115
      %v3130 = vsel %vm1130, %v3105, %v3109
      %v3131 = vsel %vm1130, %v3107, %v3111
      %v3132 = vsel %vm1130, %v3101, %v3105
      %v3133 = vsel %vm1130, %v3103, %v3107
      %v3134 = vsel %vm1130, %v3097, %v3101
      %v3135 = vsel %vm1130, %v3099, %v3103
      %v3136 = vsel %vm1130, %v3093, %v3097
      %v3137 = vsel %vm1130, %v3095, %v3099
      %v3138 = vsel %vm1130, %v3121, %v3093
      %v3139 = vsel %vm1130, %v3123, %v3095
      %3140 = vrot.lane.b32.xlu0 %v1560, 37
      %v3141 = vpop.permute.xlu0 %3140
      %3142 = vrot.lane.b32.xlu0 %v1568, 37
      %v3143 = vpop.permute.xlu0 %3142
      %3144 = vrot.lane.b32.xlu0 %v1561, 37
      %v3145 = vpop.permute.xlu0 %3144
      %3146 = vrot.lane.b32.xlu0 %v1569, 37
      %v3147 = vpop.permute.xlu0 %3146
      %3148 = vrot.lane.b32.xlu0 %v1562, 37
      %v3149 = vpop.permute.xlu0 %3148
      %3150 = vrot.lane.b32.xlu0 %v1570, 37
      %v3151 = vpop.permute.xlu0 %3150
      %3152 = vrot.lane.b32.xlu0 %v1563, 37
      %v3153 = vpop.permute.xlu0 %3152
      %3154 = vrot.lane.b32.xlu0 %v1571, 37
      %v3155 = vpop.permute.xlu0 %3154
      %3156 = vrot.lane.b32.xlu0 %v1564, 37
      %v3157 = vpop.permute.xlu0 %3156
      %3158 = vrot.lane.b32.xlu0 %v1572, 37
      %v3159 = vpop.permute.xlu0 %3158
      %3160 = vrot.lane.b32.xlu0 %v1565, 37
      %v3161 = vpop.permute.xlu0 %3160
      %3162 = vrot.lane.b32.xlu0 %v1573, 37
      %v3163 = vpop.permute.xlu0 %3162
      %3164 = vrot.lane.b32.xlu0 %v1566, 37
      %v3165 = vpop.permute.xlu0 %3164
      %3166 = vrot.lane.b32.xlu0 %v1574, 37
      %v3167 = vpop.permute.xlu0 %3166
      %3168 = vrot.lane.b32.xlu0 %v1567, 37
      %v3169 = vpop.permute.xlu0 %3168
      %3170 = vrot.lane.b32.xlu0 %v1575, 37
      %v3171 = vpop.permute.xlu0 %3170
      %v3172 = vsel %vm1155, %v3165, %v3169
      %v3173 = vsel %vm1155, %v3167, %v3171
      %v3174 = vsel %vm1155, %v3161, %v3165
      %v3175 = vsel %vm1155, %v3163, %v3167
      %v3176 = vsel %vm1155, %v3157, %v3161
      %v3177 = vsel %vm1155, %v3159, %v3163
      %v3178 = vsel %vm1155, %v3153, %v3157
      %v3179 = vsel %vm1155, %v3155, %v3159
      %v3180 = vsel %vm1155, %v3149, %v3153
      %v3181 = vsel %vm1155, %v3151, %v3155
      %v3182 = vsel %vm1155, %v3145, %v3149
      %v3183 = vsel %vm1155, %v3147, %v3151
      %v3184 = vsel %vm1155, %v3141, %v3145
      %v3185 = vsel %vm1155, %v3143, %v3147
      %v3186 = vsel %vm1155, %v3169, %v3141
      %v3187 = vsel %vm1155, %v3171, %v3143
      %3188 = vrot.lane.b32.xlu0 %v1560, 29
      %v3189 = vpop.permute.xlu0 %3188
      %3190 = vrot.lane.b32.xlu0 %v1568, 29
      %v3191 = vpop.permute.xlu0 %3190
      %3192 = vrot.lane.b32.xlu0 %v1561, 29
      %v3193 = vpop.permute.xlu0 %3192
      %3194 = vrot.lane.b32.xlu0 %v1569, 29
      %v3195 = vpop.permute.xlu0 %3194
      %3196 = vrot.lane.b32.xlu0 %v1562, 29
      %v3197 = vpop.permute.xlu0 %3196
      %3198 = vrot.lane.b32.xlu0 %v1570, 29
      %v3199 = vpop.permute.xlu0 %3198
      %3200 = vrot.lane.b32.xlu0 %v1563, 29
      %v3201 = vpop.permute.xlu0 %3200
      %3202 = vrot.lane.b32.xlu0 %v1571, 29
      %v3203 = vpop.permute.xlu0 %3202
      %3204 = vrot.lane.b32.xlu0 %v1564, 29
      %v3205 = vpop.permute.xlu0 %3204
      %3206 = vrot.lane.b32.xlu0 %v1572, 29
      %v3207 = vpop.permute.xlu0 %3206
      %3208 = vrot.lane.b32.xlu0 %v1565, 29
      %v3209 = vpop.permute.xlu0 %3208
      %3210 = vrot.lane.b32.xlu0 %v1573, 29
      %v3211 = vpop.permute.xlu0 %3210
      %3212 = vrot.lane.b32.xlu0 %v1566, 29
      %v3213 = vpop.permute.xlu0 %3212
      %3214 = vrot.lane.b32.xlu0 %v1574, 29
      %v3215 = vpop.permute.xlu0 %3214
      %3216 = vrot.lane.b32.xlu0 %v1567, 29
      %v3217 = vpop.permute.xlu0 %3216
      %3218 = vrot.lane.b32.xlu0 %v1575, 29
      %v3219 = vpop.permute.xlu0 %3218
      %v3220 = vsel %vm1180, %v3213, %v3217
      %v3221 = vsel %vm1180, %v3215, %v3219
      %v3222 = vsel %vm1180, %v3209, %v3213
      %v3223 = vsel %vm1180, %v3211, %v3215
      %v3224 = vsel %vm1180, %v3205, %v3209
      %v3225 = vsel %vm1180, %v3207, %v3211
      %v3226 = vsel %vm1180, %v3201, %v3205
      %v3227 = vsel %vm1180, %v3203, %v3207
      %v3228 = vsel %vm1180, %v3197, %v3201
      %v3229 = vsel %vm1180, %v3199, %v3203
      %v3230 = vsel %vm1180, %v3193, %v3197
      %v3231 = vsel %vm1180, %v3195, %v3199
      %v3232 = vsel %vm1180, %v3189, %v3193
      %v3233 = vsel %vm1180, %v3191, %v3195
      %v3234 = vsel %vm1180, %v3217, %v3189
      %v3235 = vsel %vm1180, %v3219, %v3191
      %3236 = vrot.lane.b32.xlu0 %v1560, 28
      %v3237 = vpop.permute.xlu0 %3236
      %3238 = vrot.lane.b32.xlu0 %v1568, 28
      %v3239 = vpop.permute.xlu0 %3238
      %3240 = vrot.lane.b32.xlu0 %v1561, 28
      %v3241 = vpop.permute.xlu0 %3240
      %3242 = vrot.lane.b32.xlu0 %v1569, 28
      %v3243 = vpop.permute.xlu0 %3242
      %3244 = vrot.lane.b32.xlu0 %v1562, 28
      %v3245 = vpop.permute.xlu0 %3244
      %3246 = vrot.lane.b32.xlu0 %v1570, 28
      %v3247 = vpop.permute.xlu0 %3246
      %3248 = vrot.lane.b32.xlu0 %v1563, 28
      %v3249 = vpop.permute.xlu0 %3248
      %3250 = vrot.lane.b32.xlu0 %v1571, 28
      %v3251 = vpop.permute.xlu0 %3250
      %3252 = vrot.lane.b32.xlu0 %v1564, 28
      %v3253 = vpop.permute.xlu0 %3252
      %3254 = vrot.lane.b32.xlu0 %v1572, 28
      %v3255 = vpop.permute.xlu0 %3254
      %3256 = vrot.lane.b32.xlu0 %v1565, 28
      %v3257 = vpop.permute.xlu0 %3256
      %3258 = vrot.lane.b32.xlu0 %v1573, 28
      %v3259 = vpop.permute.xlu0 %3258
      %3260 = vrot.lane.b32.xlu0 %v1566, 28
      %v3261 = vpop.permute.xlu0 %3260
      %3262 = vrot.lane.b32.xlu0 %v1574, 28
      %v3263 = vpop.permute.xlu0 %3262
      %3264 = vrot.lane.b32.xlu0 %v1567, 28
      %v3265 = vpop.permute.xlu0 %3264
      %3266 = vrot.lane.b32.xlu0 %v1575, 28
      %v3267 = vpop.permute.xlu0 %3266
      %v3268 = vsel %vm1205, %v3261, %v3265
      %v3269 = vsel %vm1205, %v3263, %v3267
      %v3270 = vsel %vm1205, %v3257, %v3261
      %v3271 = vsel %vm1205, %v3259, %v3263
      %v3272 = vsel %vm1205, %v3253, %v3257
      %v3273 = vsel %vm1205, %v3255, %v3259
      %v3274 = vsel %vm1205, %v3249, %v3253
      %v3275 = vsel %vm1205, %v3251, %v3255
      %v3276 = vsel %vm1205, %v3245, %v3249
      %v3277 = vsel %vm1205, %v3247, %v3251
      %v3278 = vsel %vm1205, %v3241, %v3245
      %v3279 = vsel %vm1205, %v3243, %v3247
      %v3280 = vsel %vm1205, %v3237, %v3241
      %v3281 = vsel %vm1205, %v3239, %v3243
      %v3282 = vsel %vm1205, %v3265, %v3237
      %v3283 = vsel %vm1205, %v3267, %v3239
      %3284 = vrot.lane.b32.xlu0 %v1560, 27
      %v3285 = vpop.permute.xlu0 %3284
      %3286 = vrot.lane.b32.xlu0 %v1568, 27
      %v3287 = vpop.permute.xlu0 %3286
      %3288 = vrot.lane.b32.xlu0 %v1561, 27
      %v3289 = vpop.permute.xlu0 %3288
      %3290 = vrot.lane.b32.xlu0 %v1569, 27
      %v3291 = vpop.permute.xlu0 %3290
      %3292 = vrot.lane.b32.xlu0 %v1562, 27
      %v3293 = vpop.permute.xlu0 %3292
      %3294 = vrot.lane.b32.xlu0 %v1570, 27
      %v3295 = vpop.permute.xlu0 %3294
      %3296 = vrot.lane.b32.xlu0 %v1563, 27
      %v3297 = vpop.permute.xlu0 %3296
      %3298 = vrot.lane.b32.xlu0 %v1571, 27
      %v3299 = vpop.permute.xlu0 %3298
      %3300 = vrot.lane.b32.xlu0 %v1564, 27
      %v3301 = vpop.permute.xlu0 %3300
      %3302 = vrot.lane.b32.xlu0 %v1572, 27
      %v3303 = vpop.permute.xlu0 %3302
      %3304 = vrot.lane.b32.xlu0 %v1565, 27
      %v3305 = vpop.permute.xlu0 %3304
      %3306 = vrot.lane.b32.xlu0 %v1573, 27
      %v3307 = vpop.permute.xlu0 %3306
      %3308 = vrot.lane.b32.xlu0 %v1566, 27
      %v3309 = vpop.permute.xlu0 %3308
      %3310 = vrot.lane.b32.xlu0 %v1574, 27
      %v3311 = vpop.permute.xlu0 %3310
      %3312 = vrot.lane.b32.xlu0 %v1567, 27
      %v3313 = vpop.permute.xlu0 %3312
      %3314 = vrot.lane.b32.xlu0 %v1575, 27
      %v3315 = vpop.permute.xlu0 %3314
      %v3316 = vsel %vm1230, %v3309, %v3313
      %v3317 = vsel %vm1230, %v3311, %v3315
      %v3318 = vsel %vm1230, %v3305, %v3309
      %v3319 = vsel %vm1230, %v3307, %v3311
      %v3320 = vsel %vm1230, %v3301, %v3305
      %v3321 = vsel %vm1230, %v3303, %v3307
      %v3322 = vsel %vm1230, %v3297, %v3301
      %v3323 = vsel %vm1230, %v3299, %v3303
      %v3324 = vsel %vm1230, %v3293, %v3297
      %v3325 = vsel %vm1230, %v3295, %v3299
      %v3326 = vsel %vm1230, %v3289, %v3293
      %v3327 = vsel %vm1230, %v3291, %v3295
      %v3328 = vsel %vm1230, %v3285, %v3289
      %v3329 = vsel %vm1230, %v3287, %v3291
      %v3330 = vsel %vm1230, %v3313, %v3285
      %v3331 = vsel %vm1230, %v3315, %v3287
      %3332 = vrot.lane.b32.xlu0 %v1560, 19
      %v3333 = vpop.permute.xlu0 %3332
      %3334 = vrot.lane.b32.xlu0 %v1568, 19
      %v3335 = vpop.permute.xlu0 %3334
      %3336 = vrot.lane.b32.xlu0 %v1561, 19
      %v3337 = vpop.permute.xlu0 %3336
      %3338 = vrot.lane.b32.xlu0 %v1569, 19
      %v3339 = vpop.permute.xlu0 %3338
      %3340 = vrot.lane.b32.xlu0 %v1562, 19
      %v3341 = vpop.permute.xlu0 %3340
      %3342 = vrot.lane.b32.xlu0 %v1570, 19
      %v3343 = vpop.permute.xlu0 %3342
      %3344 = vrot.lane.b32.xlu0 %v1563, 19
      %v3345 = vpop.permute.xlu0 %3344
      %3346 = vrot.lane.b32.xlu0 %v1571, 19
      %v3347 = vpop.permute.xlu0 %3346
      %3348 = vrot.lane.b32.xlu0 %v1564, 19
      %v3349 = vpop.permute.xlu0 %3348
      %3350 = vrot.lane.b32.xlu0 %v1572, 19
      %v3351 = vpop.permute.xlu0 %3350
      %3352 = vrot.lane.b32.xlu0 %v1565, 19
      %v3353 = vpop.permute.xlu0 %3352
      %3354 = vrot.lane.b32.xlu0 %v1573, 19
      %v3355 = vpop.permute.xlu0 %3354
      %3356 = vrot.lane.b32.xlu0 %v1566, 19
      %v3357 = vpop.permute.xlu0 %3356
      %3358 = vrot.lane.b32.xlu0 %v1574, 19
      %v3359 = vpop.permute.xlu0 %3358
      %3360 = vrot.lane.b32.xlu0 %v1567, 19
      %v3361 = vpop.permute.xlu0 %3360
      %3362 = vrot.lane.b32.xlu0 %v1575, 19
      %v3363 = vpop.permute.xlu0 %3362
      %v3364 = vsel %vm1255, %v3357, %v3361
      %v3365 = vsel %vm1255, %v3359, %v3363
      %v3366 = vsel %vm1255, %v3353, %v3357
      %v3367 = vsel %vm1255, %v3355, %v3359
      %v3368 = vsel %vm1255, %v3349, %v3353
      %v3369 = vsel %vm1255, %v3351, %v3355
      %v3370 = vsel %vm1255, %v3345, %v3349
      %v3371 = vsel %vm1255, %v3347, %v3351
      %v3372 = vsel %vm1255, %v3341, %v3345
      %v3373 = vsel %vm1255, %v3343, %v3347
      %v3374 = vsel %vm1255, %v3337, %v3341
      %v3375 = vsel %vm1255, %v3339, %v3343
      %v3376 = vsel %vm1255, %v3333, %v3337
      %v3377 = vsel %vm1255, %v3335, %v3339
      %v3378 = vsel %vm1255, %v3361, %v3333
      %v3379 = vsel %vm1255, %v3363, %v3335
      %3380 = vrot.lane.b32.xlu0 %v1560, 18
      %v3381 = vpop.permute.xlu0 %3380
      %3382 = vrot.lane.b32.xlu0 %v1568, 18
      %v3383 = vpop.permute.xlu0 %3382
      %3384 = vrot.lane.b32.xlu0 %v1561, 18
      %v3385 = vpop.permute.xlu0 %3384
      %3386 = vrot.lane.b32.xlu0 %v1569, 18
      %v3387 = vpop.permute.xlu0 %3386
      %3388 = vrot.lane.b32.xlu0 %v1562, 18
      %v3389 = vpop.permute.xlu0 %3388
      %3390 = vrot.lane.b32.xlu0 %v1570, 18
      %v3391 = vpop.permute.xlu0 %3390
      %3392 = vrot.lane.b32.xlu0 %v1563, 18
      %v3393 = vpop.permute.xlu0 %3392
      %3394 = vrot.lane.b32.xlu0 %v1571, 18
      %v3395 = vpop.permute.xlu0 %3394
      %3396 = vrot.lane.b32.xlu0 %v1564, 18
      %v3397 = vpop.permute.xlu0 %3396
      %3398 = vrot.lane.b32.xlu0 %v1572, 18
      %v3399 = vpop.permute.xlu0 %3398
      %3400 = vrot.lane.b32.xlu0 %v1565, 18
      %v3401 = vpop.permute.xlu0 %3400
      %3402 = vrot.lane.b32.xlu0 %v1573, 18
      %v3403 = vpop.permute.xlu0 %3402
      %3404 = vrot.lane.b32.xlu0 %v1566, 18
      %v3405 = vpop.permute.xlu0 %3404
      %3406 = vrot.lane.b32.xlu0 %v1574, 18
      %v3407 = vpop.permute.xlu0 %3406
      %3408 = vrot.lane.b32.xlu0 %v1567, 18
      %v3409 = vpop.permute.xlu0 %3408
      %3410 = vrot.lane.b32.xlu0 %v1575, 18
      %v3411 = vpop.permute.xlu0 %3410
      %v3412 = vsel %vm1280, %v3405, %v3409
      %v3413 = vsel %vm1280, %v3407, %v3411
      %v3414 = vsel %vm1280, %v3401, %v3405
      %v3415 = vsel %vm1280, %v3403, %v3407
      %v3416 = vsel %vm1280, %v3397, %v3401
      %v3417 = vsel %vm1280, %v3399, %v3403
      %v3418 = vsel %vm1280, %v3393, %v3397
      %v3419 = vsel %vm1280, %v3395, %v3399
      %v3420 = vsel %vm1280, %v3389, %v3393
      %v3421 = vsel %vm1280, %v3391, %v3395
      %v3422 = vsel %vm1280, %v3385, %v3389
      %v3423 = vsel %vm1280, %v3387, %v3391
      %v3424 = vsel %vm1280, %v3381, %v3385
      %v3425 = vsel %vm1280, %v3383, %v3387
      %v3426 = vsel %vm1280, %v3409, %v3381
      %v3427 = vsel %vm1280, %v3411, %v3383
      %3428 = vrot.lane.b32.xlu0 %v1560, 17
      %v3429 = vpop.permute.xlu0 %3428
      %3430 = vrot.lane.b32.xlu0 %v1568, 17
      %v3431 = vpop.permute.xlu0 %3430
      %3432 = vrot.lane.b32.xlu0 %v1561, 17
      %v3433 = vpop.permute.xlu0 %3432
      %3434 = vrot.lane.b32.xlu0 %v1569, 17
      %v3435 = vpop.permute.xlu0 %3434
      %3436 = vrot.lane.b32.xlu0 %v1562, 17
      %v3437 = vpop.permute.xlu0 %3436
      %3438 = vrot.lane.b32.xlu0 %v1570, 17
      %v3439 = vpop.permute.xlu0 %3438
      %3440 = vrot.lane.b32.xlu0 %v1563, 17
      %v3441 = vpop.permute.xlu0 %3440
      %3442 = vrot.lane.b32.xlu0 %v1571, 17
      %v3443 = vpop.permute.xlu0 %3442
      %3444 = vrot.lane.b32.xlu0 %v1564, 17
      %v3445 = vpop.permute.xlu0 %3444
      %3446 = vrot.lane.b32.xlu0 %v1572, 17
      %v3447 = vpop.permute.xlu0 %3446
      %3448 = vrot.lane.b32.xlu0 %v1565, 17
      %v3449 = vpop.permute.xlu0 %3448
      %3450 = vrot.lane.b32.xlu0 %v1573, 17
      %v3451 = vpop.permute.xlu0 %3450
      %3452 = vrot.lane.b32.xlu0 %v1566, 17
      %v3453 = vpop.permute.xlu0 %3452
      %3454 = vrot.lane.b32.xlu0 %v1574, 17
      %v3455 = vpop.permute.xlu0 %3454
      %3456 = vrot.lane.b32.xlu0 %v1567, 17
      %v3457 = vpop.permute.xlu0 %3456
      %3458 = vrot.lane.b32.xlu0 %v1575, 17
      %v3459 = vpop.permute.xlu0 %3458
      %v3460 = vsel %vm1305, %v3453, %v3457
      %v3461 = vsel %vm1305, %v3455, %v3459
      %v3462 = vsel %vm1305, %v3449, %v3453
      %v3463 = vsel %vm1305, %v3451, %v3455
      %v3464 = vsel %vm1305, %v3445, %v3449
      %v3465 = vsel %vm1305, %v3447, %v3451
      %v3466 = vsel %vm1305, %v3441, %v3445
      %v3467 = vsel %vm1305, %v3443, %v3447
      %v3468 = vsel %vm1305, %v3437, %v3441
      %v3469 = vsel %vm1305, %v3439, %v3443
      %v3470 = vsel %vm1305, %v3433, %v3437
      %v3471 = vsel %vm1305, %v3435, %v3439
      %v3472 = vsel %vm1305, %v3429, %v3433
      %v3473 = vsel %vm1305, %v3431, %v3435
      %v3474 = vsel %vm1305, %v3457, %v3429
      %v3475 = vsel %vm1305, %v3459, %v3431
      %s3476 = scalar_lea.vmem %s3, 32
      %v3477 = vld [vmem:[%s3476] sm:$0xff]
      %v3478 = vld [vmem:[%s3476 + $0x8] sm:$0xff]
      %v3480 = vsel %vm2397, %v3478, 0
      %3482 = vmatpush.msra.mxu0 %v3425
      %3483 = vmatpush.msra.mxu0 %v3424
      %3484 = vmatpush.msra.mxu0 %v3377
      %3485 = vmatpush.msra.mxu0 %v3376
      %3486 = vmatpush.msra.mxu0 %v3329
      %3487 = vmatpush.msra.mxu0 %v3328
      %3488 = vmatpush.msra.mxu0 %v3281
      %3489 = vmatpush.msra.mxu0 %v3280
      %3490 = vmatpush.msra.mxu0 %v3233
      %3491 = vmatpush.msra.mxu0 %v3232
      %3492 = vmatpush.msra.mxu0 %v3185
      %3493 = vmatpush.msra.mxu0 %v3184
      %3494 = vmatpush.msra.mxu0 %v3137
      %3495 = vmatpush.msra.mxu0 %v3136
      %3496 = vmatpush.msra.mxu0 %v3089
      %3497 = vmatpush.msra.mxu0 %v3088
      %3498 = vmatmul.f32.gmra.mxu0 %v3477
      %v3499 = vpop.f32.mrf.mxu0
      %v3500 = vadd.f32 0.0, %v3499
      %3501 = vdwg.mxu0
      %3502 = vmatpush.msra.mxu0 0.0
      %3503 = vmatpush.msra.mxu0 0.0
      %3504 = vmatpush.msra.mxu0 0.0
      %3505 = vmatpush.msra.mxu0 0.0
      %3506 = vmatpush.msra.mxu0 0.0
      %3507 = vmatpush.msra.mxu0 0.0
      %3508 = vmatpush.msra.mxu0 0.0
      %3509 = vmatpush.msra.mxu0 0.0
      %3510 = vmatpush.msra.mxu0 0.0
      %3511 = vmatpush.msra.mxu0 0.0
      %3512 = vmatpush.msra.mxu0 0.0
      %3513 = vmatpush.msra.mxu0 0.0
      %3514 = vmatpush.msra.mxu0 0.0
      %3515 = vmatpush.msra.mxu0 0.0
      %3516 = vmatpush.msra.mxu0 %v3473
      %3517 = vmatpush.msra.mxu0 %v3472
      %3518 = vmatmul.f32.gmra.mxu0 %v3480
      %v3519 = vpop.f32.mrf.mxu0
      %v3520 = vadd.f32 %v3500, %v3519
      %3521 = vdwg.mxu0
      %3522 = vmatpush.msra.mxu0 %v3423
      %3523 = vmatpush.msra.mxu0 %v3422
      %3524 = vmatpush.msra.mxu0 %v3375
      %3525 = vmatpush.msra.mxu0 %v3374
      %3526 = vmatpush.msra.mxu0 %v3327
      %3527 = vmatpush.msra.mxu0 %v3326
      %3528 = vmatpush.msra.mxu0 %v3279
      %3529 = vmatpush.msra.mxu0 %v3278
      %3530 = vmatpush.msra.mxu0 %v3231
      %3531 = vmatpush.msra.mxu0 %v3230
      %3532 = vmatpush.msra.mxu0 %v3183
      %3533 = vmatpush.msra.mxu0 %v3182
      %3534 = vmatpush.msra.mxu0 %v3135
      %3535 = vmatpush.msra.mxu0 %v3134
      %3536 = vmatpush.msra.mxu0 %v3087
      %3537 = vmatpush.msra.mxu0 %v3086
      %3538 = vmatmul.f32.gmra.mxu0 %v3477
      %v3539 = vpop.f32.mrf.mxu0
      %v3540 = vadd.f32 0.0, %v3539
      %3541 = vdwg.mxu0
      %3542 = vmatpush.msra.mxu0 0.0
      %3543 = vmatpush.msra.mxu0 0.0
      %3544 = vmatpush.msra.mxu0 0.0
      %3545 = vmatpush.msra.mxu0 0.0
      %3546 = vmatpush.msra.mxu0 0.0
      %3547 = vmatpush.msra.mxu0 0.0
      %3548 = vmatpush.msra.mxu0 0.0
      %3549 = vmatpush.msra.mxu0 0.0
      %3550 = vmatpush.msra.mxu0 0.0
      %3551 = vmatpush.msra.mxu0 0.0
      %3552 = vmatpush.msra.mxu0 0.0
      %3553 = vmatpush.msra.mxu0 0.0
      %3554 = vmatpush.msra.mxu0 0.0
      %3555 = vmatpush.msra.mxu0 0.0
      %3556 = vmatpush.msra.mxu0 %v3471
      %3557 = vmatpush.msra.mxu0 %v3470
      %3558 = vmatmul.f32.gmra.mxu0 %v3480
      %v3559 = vpop.f32.mrf.mxu0
      %v3560 = vadd.f32 %v3540, %v3559
      %3561 = vdwg.mxu0
      %3562 = vmatpush.msra.mxu0 %v3421
      %3563 = vmatpush.msra.mxu0 %v3420
      %3564 = vmatpush.msra.mxu0 %v3373
      %3565 = vmatpush.msra.mxu0 %v3372
      %3566 = vmatpush.msra.mxu0 %v3325
      %3567 = vmatpush.msra.mxu0 %v3324
      %3568 = vmatpush.msra.mxu0 %v3277
      %3569 = vmatpush.msra.mxu0 %v3276
      %3570 = vmatpush.msra.mxu0 %v3229
      %3571 = vmatpush.msra.mxu0 %v3228
      %3572 = vmatpush.msra.mxu0 %v3181
      %3573 = vmatpush.msra.mxu0 %v3180
      %3574 = vmatpush.msra.mxu0 %v3133
      %3575 = vmatpush.msra.mxu0 %v3132
      %3576 = vmatpush.msra.mxu0 %v3085
      %3577 = vmatpush.msra.mxu0 %v3084
      %3578 = vmatmul.f32.gmra.mxu0 %v3477
      %v3579 = vpop.f32.mrf.mxu0
      %v3580 = vadd.f32 0.0, %v3579
      %3581 = vdwg.mxu0
      %3582 = vmatpush.msra.mxu0 0.0
      %3583 = vmatpush.msra.mxu0 0.0
      %3584 = vmatpush.msra.mxu0 0.0
      %3585 = vmatpush.msra.mxu0 0.0
      %3586 = vmatpush.msra.mxu0 0.0
      %3587 = vmatpush.msra.mxu0 0.0
      %3588 = vmatpush.msra.mxu0 0.0
      %3589 = vmatpush.msra.mxu0 0.0
      %3590 = vmatpush.msra.mxu0 0.0
      %3591 = vmatpush.msra.mxu0 0.0
      %3592 = vmatpush.msra.mxu0 0.0
      %3593 = vmatpush.msra.mxu0 0.0
      %3594 = vmatpush.msra.mxu0 0.0
      %3595 = vmatpush.msra.mxu0 0.0
      %3596 = vmatpush.msra.mxu0 %v3469
      %3597 = vmatpush.msra.mxu0 %v3468
      %3598 = vmatmul.f32.gmra.mxu0 %v3480
      %v3599 = vpop.f32.mrf.mxu0
      %v3600 = vadd.f32 %v3580, %v3599
      %3601 = vdwg.mxu0
      %3602 = vmatpush.msra.mxu0 %v3419
      %3603 = vmatpush.msra.mxu0 %v3418
      %3604 = vmatpush.msra.mxu0 %v3371
      %3605 = vmatpush.msra.mxu0 %v3370
      %3606 = vmatpush.msra.mxu0 %v3323
      %3607 = vmatpush.msra.mxu0 %v3322
      %3608 = vmatpush.msra.mxu0 %v3275
      %3609 = vmatpush.msra.mxu0 %v3274
      %3610 = vmatpush.msra.mxu0 %v3227
      %3611 = vmatpush.msra.mxu0 %v3226
      %3612 = vmatpush.msra.mxu0 %v3179
      %3613 = vmatpush.msra.mxu0 %v3178
      %3614 = vmatpush.msra.mxu0 %v3131
      %3615 = vmatpush.msra.mxu0 %v3130
      %3616 = vmatpush.msra.mxu0 %v3083
      %3617 = vmatpush.msra.mxu0 %v3082
      %3618 = vmatmul.f32.gmra.mxu0 %v3477
      %v3619 = vpop.f32.mrf.mxu0
      %v3620 = vadd.f32 0.0, %v3619
      %3621 = vdwg.mxu0
      %3622 = vmatpush.msra.mxu0 0.0
      %3623 = vmatpush.msra.mxu0 0.0
      %3624 = vmatpush.msra.mxu0 0.0
      %3625 = vmatpush.msra.mxu0 0.0
      %3626 = vmatpush.msra.mxu0 0.0
      %3627 = vmatpush.msra.mxu0 0.0
      %3628 = vmatpush.msra.mxu0 0.0
      %3629 = vmatpush.msra.mxu0 0.0
      %3630 = vmatpush.msra.mxu0 0.0
      %3631 = vmatpush.msra.mxu0 0.0
      %3632 = vmatpush.msra.mxu0 0.0
      %3633 = vmatpush.msra.mxu0 0.0
      %3634 = vmatpush.msra.mxu0 0.0
      %3635 = vmatpush.msra.mxu0 0.0
      %3636 = vmatpush.msra.mxu0 %v3467
      %3637 = vmatpush.msra.mxu0 %v3466
      %3638 = vmatmul.f32.gmra.mxu0 %v3480
      %v3639 = vpop.f32.mrf.mxu0
      %v3640 = vadd.f32 %v3620, %v3639
      %3641 = vdwg.mxu0
      %3642 = vmatpush.msra.mxu0 %v3417
      %3643 = vmatpush.msra.mxu0 %v3416
      %3644 = vmatpush.msra.mxu0 %v3369
      %3645 = vmatpush.msra.mxu0 %v3368
      %3646 = vmatpush.msra.mxu0 %v3321
      %3647 = vmatpush.msra.mxu0 %v3320
      %3648 = vmatpush.msra.mxu0 %v3273
      %3649 = vmatpush.msra.mxu0 %v3272
      %3650 = vmatpush.msra.mxu0 %v3225
      %3651 = vmatpush.msra.mxu0 %v3224
      %3652 = vmatpush.msra.mxu0 %v3177
      %3653 = vmatpush.msra.mxu0 %v3176
      %3654 = vmatpush.msra.mxu0 %v3129
      %3655 = vmatpush.msra.mxu0 %v3128
      %3656 = vmatpush.msra.mxu0 %v3081
      %3657 = vmatpush.msra.mxu0 %v3080
      %3658 = vmatmul.f32.gmra.mxu0 %v3477
      %v3659 = vpop.f32.mrf.mxu0
      %v3660 = vadd.f32 0.0, %v3659
      %3661 = vdwg.mxu0
      %3662 = vmatpush.msra.mxu0 0.0
      %3663 = vmatpush.msra.mxu0 0.0
      %3664 = vmatpush.msra.mxu0 0.0
      %3665 = vmatpush.msra.mxu0 0.0
      %3666 = vmatpush.msra.mxu0 0.0
      %3667 = vmatpush.msra.mxu0 0.0
      %3668 = vmatpush.msra.mxu0 0.0
      %3669 = vmatpush.msra.mxu0 0.0
      %3670 = vmatpush.msra.mxu0 0.0
      %3671 = vmatpush.msra.mxu0 0.0
      %3672 = vmatpush.msra.mxu0 0.0
      %3673 = vmatpush.msra.mxu0 0.0
      %3674 = vmatpush.msra.mxu0 0.0
      %3675 = vmatpush.msra.mxu0 0.0
      %3676 = vmatpush.msra.mxu0 %v3465
      %3677 = vmatpush.msra.mxu0 %v3464
      %3678 = vmatmul.f32.gmra.mxu0 %v3480
      %v3679 = vpop.f32.mrf.mxu0
      %v3680 = vadd.f32 %v3660, %v3679
      %3681 = vdwg.mxu0
      %3682 = vmatpush.msra.mxu0 %v3415
      %3683 = vmatpush.msra.mxu0 %v3414
      %3684 = vmatpush.msra.mxu0 %v3367
      %3685 = vmatpush.msra.mxu0 %v3366
      %3686 = vmatpush.msra.mxu0 %v3319
      %3687 = vmatpush.msra.mxu0 %v3318
      %3688 = vmatpush.msra.mxu0 %v3271
      %3689 = vmatpush.msra.mxu0 %v3270
      %3690 = vmatpush.msra.mxu0 %v3223
      %3691 = vmatpush.msra.mxu0 %v3222
      %3692 = vmatpush.msra.mxu0 %v3175
      %3693 = vmatpush.msra.mxu0 %v3174
      %3694 = vmatpush.msra.mxu0 %v3127
      %3695 = vmatpush.msra.mxu0 %v3126
      %3696 = vmatpush.msra.mxu0 %v3079
      %3697 = vmatpush.msra.mxu0 %v3078
      %3698 = vmatmul.f32.gmra.mxu0 %v3477
      %v3699 = vpop.f32.mrf.mxu0
      %v3700 = vadd.f32 0.0, %v3699
      %3701 = vdwg.mxu0
      %3702 = vmatpush.msra.mxu0 0.0
      %3703 = vmatpush.msra.mxu0 0.0
      %3704 = vmatpush.msra.mxu0 0.0
      %3705 = vmatpush.msra.mxu0 0.0
      %3706 = vmatpush.msra.mxu0 0.0
      %3707 = vmatpush.msra.mxu0 0.0
      %3708 = vmatpush.msra.mxu0 0.0
      %3709 = vmatpush.msra.mxu0 0.0
      %3710 = vmatpush.msra.mxu0 0.0
      %3711 = vmatpush.msra.mxu0 0.0
      %3712 = vmatpush.msra.mxu0 0.0
      %3713 = vmatpush.msra.mxu0 0.0
      %3714 = vmatpush.msra.mxu0 0.0
      %3715 = vmatpush.msra.mxu0 0.0
      %3716 = vmatpush.msra.mxu0 %v3463
      %3717 = vmatpush.msra.mxu0 %v3462
      %3718 = vmatmul.f32.gmra.mxu0 %v3480
      %v3719 = vpop.f32.mrf.mxu0
      %v3720 = vadd.f32 %v3700, %v3719
      %3721 = vdwg.mxu0
      %3722 = vmatpush.msra.mxu0 %v3413
      %3723 = vmatpush.msra.mxu0 %v3412
      %3724 = vmatpush.msra.mxu0 %v3365
      %3725 = vmatpush.msra.mxu0 %v3364
      %3726 = vmatpush.msra.mxu0 %v3317
      %3727 = vmatpush.msra.mxu0 %v3316
      %3728 = vmatpush.msra.mxu0 %v3269
      %3729 = vmatpush.msra.mxu0 %v3268
      %3730 = vmatpush.msra.mxu0 %v3221
      %3731 = vmatpush.msra.mxu0 %v3220
      %3732 = vmatpush.msra.mxu0 %v3173
      %3733 = vmatpush.msra.mxu0 %v3172
      %3734 = vmatpush.msra.mxu0 %v3125
      %3735 = vmatpush.msra.mxu0 %v3124
      %3736 = vmatpush.msra.mxu0 %v3077
      %3737 = vmatpush.msra.mxu0 %v3076
      %3738 = vmatmul.f32.gmra.mxu0 %v3477
      %v3739 = vpop.f32.mrf.mxu0
      %v3740 = vadd.f32 0.0, %v3739
      %3741 = vdwg.mxu0
      %3742 = vmatpush.msra.mxu0 0.0
      %3743 = vmatpush.msra.mxu0 0.0
      %3744 = vmatpush.msra.mxu0 0.0
      %3745 = vmatpush.msra.mxu0 0.0
      %3746 = vmatpush.msra.mxu0 0.0
      %3747 = vmatpush.msra.mxu0 0.0
      %3748 = vmatpush.msra.mxu0 0.0
      %3749 = vmatpush.msra.mxu0 0.0
      %3750 = vmatpush.msra.mxu0 0.0
      %3751 = vmatpush.msra.mxu0 0.0
      %3752 = vmatpush.msra.mxu0 0.0
      %3753 = vmatpush.msra.mxu0 0.0
      %3754 = vmatpush.msra.mxu0 0.0
      %3755 = vmatpush.msra.mxu0 0.0
      %3756 = vmatpush.msra.mxu0 %v3461
      %3757 = vmatpush.msra.mxu0 %v3460
      %3758 = vmatmul.f32.gmra.mxu0 %v3480
      %v3759 = vpop.f32.mrf.mxu0
      %v3760 = vadd.f32 %v3740, %v3759
      %3761 = vdwg.mxu0
      %3762 = vmatpush.msra.mxu0 %v3427
      %3763 = vmatpush.msra.mxu0 %v3426
      %3764 = vmatpush.msra.mxu0 %v3379
      %3765 = vmatpush.msra.mxu0 %v3378
      %3766 = vmatpush.msra.mxu0 %v3331
      %3767 = vmatpush.msra.mxu0 %v3330
      %3768 = vmatpush.msra.mxu0 %v3283
      %3769 = vmatpush.msra.mxu0 %v3282
      %3770 = vmatpush.msra.mxu0 %v3235
      %3771 = vmatpush.msra.mxu0 %v3234
      %3772 = vmatpush.msra.mxu0 %v3187
      %3773 = vmatpush.msra.mxu0 %v3186
      %3774 = vmatpush.msra.mxu0 %v3139
      %3775 = vmatpush.msra.mxu0 %v3138
      %3776 = vmatpush.msra.mxu0 %v3091
      %3777 = vmatpush.msra.mxu0 %v3090
      %3778 = vmatmul.f32.gmra.mxu0 %v3477
      %v3779 = vpop.f32.mrf.mxu0
      %v3780 = vadd.f32 0.0, %v3779
      %3781 = vdwg.mxu0
      %3782 = vmatpush.msra.mxu0 0.0
      %3783 = vmatpush.msra.mxu0 0.0
      %3784 = vmatpush.msra.mxu0 0.0
      %3785 = vmatpush.msra.mxu0 0.0
      %3786 = vmatpush.msra.mxu0 0.0
      %3787 = vmatpush.msra.mxu0 0.0
      %3788 = vmatpush.msra.mxu0 0.0
      %3789 = vmatpush.msra.mxu0 0.0
      %3790 = vmatpush.msra.mxu0 0.0
      %3791 = vmatpush.msra.mxu0 0.0
      %3792 = vmatpush.msra.mxu0 0.0
      %3793 = vmatpush.msra.mxu0 0.0
      %3794 = vmatpush.msra.mxu0 0.0
      %3795 = vmatpush.msra.mxu0 0.0
      %3796 = vmatpush.msra.mxu0 %v3475
      %3797 = vmatpush.msra.mxu0 %v3474
      %3798 = vmatmul.f32.gmra.mxu0 %v3480
      %v3799 = vpop.f32.mrf.mxu0
      %v3800 = vadd.f32 %v3780, %v3799
      %3801 = vdwg.mxu0
      %v3802 = vadd.f32 %v2762, %v3520
      %v3803 = vadd.f32 %v2802, %v3560
      %v3804 = vadd.f32 %v2842, %v3600
      %v3805 = vadd.f32 %v2882, %v3640
      %v3806 = vadd.f32 %v2922, %v3680
      %v3807 = vadd.f32 %v2962, %v3720
      %v3808 = vadd.f32 %v3002, %v3760
      %v3809 = vadd.f32 %v3042, %v3800
      %v3810 = vmax.f32 %v3802, 0.0
      %v3811 = vmax.f32 %v3803, 0.0
      %v3812 = vmax.f32 %v3804, 0.0
      %v3813 = vmax.f32 %v3805, 0.0
      %v3814 = vmax.f32 %v3806, 0.0
      %v3815 = vmax.f32 %v3807, 0.0
      %v3816 = vmax.f32 %v3808, 0.0
      %v3817 = vmax.f32 %v3809, 0.0
      %v3818 = vmul.f32 %v3810, %v1496
      %v3819 = vmul.f32 %v3811, %v1497
      %v3820 = vmul.f32 %v3812, %v1498
      %v3821 = vmul.f32 %v3813, %v1499
      %v3822 = vmul.f32 %v3814, %v1500
      %v3823 = vmul.f32 %v3815, %v1501
      %v3824 = vmul.f32 %v3816, %v1502
      %v3825 = vmul.f32 %v3817, %v1503
      %v3834 = vrot.slane %v3818, 4
      %v3835 = vrot.slane %v3819, 4
      %v3836 = vrot.slane %v3820, 4
      %v3837 = vrot.slane %v3821, 4
      %v3838 = vrot.slane %v3822, 4
      %v3839 = vrot.slane %v3823, 4
      %v3840 = vrot.slane %v3824, 4
      %v3841 = vrot.slane %v3825, 4
      %3850 = vst [vmem:[#allocation2 + $0x40] sm:$0xf0] %v3834
      %3851 = vst [vmem:[#allocation2 + $0x48] sm:$0xf0] %v3835
      %3852 = vst [vmem:[#allocation2 + $0x50] sm:$0xf0] %v3836
      %3853 = vst [vmem:[#allocation2 + $0x58] sm:$0xf0] %v3837
      %3854 = vst [vmem:[#allocation2 + $0x60] sm:$0xf0] %v3838
      %3855 = vst [vmem:[#allocation2 + $0x68] sm:$0xf0] %v3839
      %3856 = vst [vmem:[#allocation2 + $0x70] sm:$0xf0] %v3840
      %3857 = vst [vmem:[#allocation2 + $0x78] sm:$0xf0] %v3841
      %3858 = vst [vmem:[#allocation2 + $0x80] sm:$0xf] %v3834
      %3859 = vst [vmem:[#allocation2 + $0x88] sm:$0xf] %v3835
      %3860 = vst [vmem:[#allocation2 + $0x90] sm:$0xf] %v3836
      %3861 = vst [vmem:[#allocation2 + $0x98] sm:$0xf] %v3837
      %3862 = vst [vmem:[#allocation2 + $0xa0] sm:$0xf] %v3838
      %3863 = vst [vmem:[#allocation2 + $0xa8] sm:$0xf] %v3839
      %3864 = vst [vmem:[#allocation2 + $0xb0] sm:$0xf] %v3840
      %3865 = vst [vmem:[#allocation2 + $0xb8] sm:$0xf] %v3841
      %v3866 = vld [vmem:[#allocation2] sm:$0xff]
      %v3867 = vld [vmem:[#allocation2 + $0x8] sm:$0xff]
      %v3868 = vld [vmem:[#allocation2 + $0x10] sm:$0xff]
      %v3869 = vld [vmem:[#allocation2 + $0x18] sm:$0xff]
      %v3870 = vld [vmem:[#allocation2 + $0x20] sm:$0xff]
      %v3871 = vld [vmem:[#allocation2 + $0x28] sm:$0xff]
      %v3872 = vld [vmem:[#allocation2 + $0x30] sm:$0xff]
      %v3873 = vld [vmem:[#allocation2 + $0x38] sm:$0xff]
      %v3874 = vld [vmem:[#allocation2 + $0x40] sm:$0xff]
      %v3875 = vld [vmem:[#allocation2 + $0x48] sm:$0xff]
      %v3876 = vld [vmem:[#allocation2 + $0x50] sm:$0xff]
      %v3877 = vld [vmem:[#allocation2 + $0x58] sm:$0xff]
      %v3878 = vld [vmem:[#allocation2 + $0x60] sm:$0xff]
      %v3879 = vld [vmem:[#allocation2 + $0x68] sm:$0xff]
      %v3880 = vld [vmem:[#allocation2 + $0x70] sm:$0xff]
      %v3881 = vld [vmem:[#allocation2 + $0x78] sm:$0xff]
      %v3882 = vld [vmem:[#allocation2 + $0x80] sm:$0xff]
      %v3883 = vld [vmem:[#allocation2 + $0x88] sm:$0xff]
      %v3884 = vld [vmem:[#allocation2 + $0x90] sm:$0xff]
      %v3885 = vld [vmem:[#allocation2 + $0x98] sm:$0xff]
      %v3886 = vld [vmem:[#allocation2 + $0xa0] sm:$0xff]
      %v3887 = vld [vmem:[#allocation2 + $0xa8] sm:$0xff]
      %v3888 = vld [vmem:[#allocation2 + $0xb0] sm:$0xff]
      %v3889 = vld [vmem:[#allocation2 + $0xb8] sm:$0xff]
      %3890 = vrot.lane.b32.xlu0 %v3866, 111
      %v3891 = vpop.permute.xlu0 %3890
      %3892 = vrot.lane.b32.xlu0 %v3874, 111
      %v3893 = vpop.permute.xlu0 %3892
      %3894 = vrot.lane.b32.xlu0 %v3882, 111
      %v3895 = vpop.permute.xlu0 %3894
      %3896 = vrot.lane.b32.xlu0 %v3867, 111
      %v3897 = vpop.permute.xlu0 %3896
      %3898 = vrot.lane.b32.xlu0 %v3875, 111
      %v3899 = vpop.permute.xlu0 %3898
      %3900 = vrot.lane.b32.xlu0 %v3883, 111
      %v3901 = vpop.permute.xlu0 %3900
      %3902 = vrot.lane.b32.xlu0 %v3868, 111
      %v3903 = vpop.permute.xlu0 %3902
      %3904 = vrot.lane.b32.xlu0 %v3876, 111
      %v3905 = vpop.permute.xlu0 %3904
      %3906 = vrot.lane.b32.xlu0 %v3884, 111
      %v3907 = vpop.permute.xlu0 %3906
      %3908 = vrot.lane.b32.xlu0 %v3869, 111
      %v3909 = vpop.permute.xlu0 %3908
      %3910 = vrot.lane.b32.xlu0 %v3877, 111
      %v3911 = vpop.permute.xlu0 %3910
      %3912 = vrot.lane.b32.xlu0 %v3885, 111
      %v3913 = vpop.permute.xlu0 %3912
      %3914 = vrot.lane.b32.xlu0 %v3870, 111
      %v3915 = vpop.permute.xlu0 %3914
      %3916 = vrot.lane.b32.xlu0 %v3878, 111
      %v3917 = vpop.permute.xlu0 %3916
      %3918 = vrot.lane.b32.xlu0 %v3886, 111
      %v3919 = vpop.permute.xlu0 %3918
      %3920 = vrot.lane.b32.xlu0 %v3871, 111
      %v3921 = vpop.permute.xlu0 %3920
      %3922 = vrot.lane.b32.xlu0 %v3879, 111
      %v3923 = vpop.permute.xlu0 %3922
      %3924 = vrot.lane.b32.xlu0 %v3887, 111
      %v3925 = vpop.permute.xlu0 %3924
      %3926 = vrot.lane.b32.xlu0 %v3872, 111
      %v3927 = vpop.permute.xlu0 %3926
      %3928 = vrot.lane.b32.xlu0 %v3880, 111
      %v3929 = vpop.permute.xlu0 %3928
      %3930 = vrot.lane.b32.xlu0 %v3888, 111
      %v3931 = vpop.permute.xlu0 %3930
      %3932 = vrot.lane.b32.xlu0 %v3873, 111
      %v3933 = vpop.permute.xlu0 %3932
      %3934 = vrot.lane.b32.xlu0 %v3881, 111
      %v3935 = vpop.permute.xlu0 %3934
      %3936 = vrot.lane.b32.xlu0 %v3889, 111
      %v3937 = vpop.permute.xlu0 %3936
      %v3938 = vsel %vm350, %v3927, %v3933
      %v3939 = vsel %vm350, %v3929, %v3935
      %v3940 = vsel %vm350, %v3931, %v3937
      %v3941 = vsel %vm350, %v3921, %v3927
      %v3942 = vsel %vm350, %v3923, %v3929
      %v3943 = vsel %vm350, %v3925, %v3931
      %v3944 = vsel %vm350, %v3915, %v3921
      %v3945 = vsel %vm350, %v3917, %v3923
      %v3946 = vsel %vm350, %v3919, %v3925
      %v3947 = vsel %vm350, %v3909, %v3915
      %v3948 = vsel %vm350, %v3911, %v3917
      %v3949 = vsel %vm350, %v3913, %v3919
      %v3950 = vsel %vm350, %v3903, %v3909
      %v3951 = vsel %vm350, %v3905, %v3911
      %v3952 = vsel %vm350, %v3907, %v3913
      %v3953 = vsel %vm350, %v3897, %v3903
      %v3954 = vsel %vm350, %v3899, %v3905
      %v3955 = vsel %vm350, %v3901, %v3907
      %v3956 = vsel %vm350, %v3891, %v3897
      %v3957 = vsel %vm350, %v3893, %v3899
      %v3958 = vsel %vm350, %v3895, %v3901
      %v3959 = vsel %vm350, %v3933, %v3891
      %v3960 = vsel %vm350, %v3935, %v3893
      %v3961 = vsel %vm350, %v3937, %v3895
      %3962 = vrot.lane.b32.xlu0 %v3866, 110
      %v3963 = vpop.permute.xlu0 %3962
      %3964 = vrot.lane.b32.xlu0 %v3874, 110
      %v3965 = vpop.permute.xlu0 %3964
      %3966 = vrot.lane.b32.xlu0 %v3882, 110
      %v3967 = vpop.permute.xlu0 %3966
      %3968 = vrot.lane.b32.xlu0 %v3867, 110
      %v3969 = vpop.permute.xlu0 %3968
      %3970 = vrot.lane.b32.xlu0 %v3875, 110
      %v3971 = vpop.permute.xlu0 %3970
      %3972 = vrot.lane.b32.xlu0 %v3883, 110
      %v3973 = vpop.permute.xlu0 %3972
      %3974 = vrot.lane.b32.xlu0 %v3868, 110
      %v3975 = vpop.permute.xlu0 %3974
      %3976 = vrot.lane.b32.xlu0 %v3876, 110
      %v3977 = vpop.permute.xlu0 %3976
      %3978 = vrot.lane.b32.xlu0 %v3884, 110
      %v3979 = vpop.permute.xlu0 %3978
      %3980 = vrot.lane.b32.xlu0 %v3869, 110
      %v3981 = vpop.permute.xlu0 %3980
      %3982 = vrot.lane.b32.xlu0 %v3877, 110
      %v3983 = vpop.permute.xlu0 %3982
      %3984 = vrot.lane.b32.xlu0 %v3885, 110
      %v3985 = vpop.permute.xlu0 %3984
      %3986 = vrot.lane.b32.xlu0 %v3870, 110
      %v3987 = vpop.permute.xlu0 %3986
      %3988 = vrot.lane.b32.xlu0 %v3878, 110
      %v3989 = vpop.permute.xlu0 %3988
      %3990 = vrot.lane.b32.xlu0 %v3886, 110
      %v3991 = vpop.permute.xlu0 %3990
      %3992 = vrot.lane.b32.xlu0 %v3871, 110
      %v3993 = vpop.permute.xlu0 %3992
      %3994 = vrot.lane.b32.xlu0 %v3879, 110
      %v3995 = vpop.permute.xlu0 %3994
      %3996 = vrot.lane.b32.xlu0 %v3887, 110
      %v3997 = vpop.permute.xlu0 %3996
      %3998 = vrot.lane.b32.xlu0 %v3872, 110
      %v3999 = vpop.permute.xlu0 %3998
      %4000 = vrot.lane.b32.xlu0 %v3880, 110
      %v4001 = vpop.permute.xlu0 %4000
      %4002 = vrot.lane.b32.xlu0 %v3888, 110
      %v4003 = vpop.permute.xlu0 %4002
      %4004 = vrot.lane.b32.xlu0 %v3873, 110
      %v4005 = vpop.permute.xlu0 %4004
      %4006 = vrot.lane.b32.xlu0 %v3881, 110
      %v4007 = vpop.permute.xlu0 %4006
      %4008 = vrot.lane.b32.xlu0 %v3889, 110
      %v4009 = vpop.permute.xlu0 %4008
      %v4010 = vsel %vm375, %v3999, %v4005
      %v4011 = vsel %vm375, %v4001, %v4007
      %v4012 = vsel %vm375, %v4003, %v4009
      %v4013 = vsel %vm375, %v3993, %v3999
      %v4014 = vsel %vm375, %v3995, %v4001
      %v4015 = vsel %vm375, %v3997, %v4003
      %v4016 = vsel %vm375, %v3987, %v3993
      %v4017 = vsel %vm375, %v3989, %v3995
      %v4018 = vsel %vm375, %v3991, %v3997
      %v4019 = vsel %vm375, %v3981, %v3987
      %v4020 = vsel %vm375, %v3983, %v3989
      %v4021 = vsel %vm375, %v3985, %v3991
      %v4022 = vsel %vm375, %v3975, %v3981
      %v4023 = vsel %vm375, %v3977, %v3983
      %v4024 = vsel %vm375, %v3979, %v3985
      %v4025 = vsel %vm375, %v3969, %v3975
      %v4026 = vsel %vm375, %v3971, %v3977
      %v4027 = vsel %vm375, %v3973, %v3979
      %v4028 = vsel %vm375, %v3963, %v3969
      %v4029 = vsel %vm375, %v3965, %v3971
      %v4030 = vsel %vm375, %v3967, %v3973
      %v4031 = vsel %vm375, %v4005, %v3963
      %v4032 = vsel %vm375, %v4007, %v3965
      %v4033 = vsel %vm375, %v4009, %v3967
      %4034 = vrot.lane.b32.xlu0 %v3866, 109
      %v4035 = vpop.permute.xlu0 %4034
      %4036 = vrot.lane.b32.xlu0 %v3874, 109
      %v4037 = vpop.permute.xlu0 %4036
      %4038 = vrot.lane.b32.xlu0 %v3882, 109
      %v4039 = vpop.permute.xlu0 %4038
      %4040 = vrot.lane.b32.xlu0 %v3867, 109
      %v4041 = vpop.permute.xlu0 %4040
      %4042 = vrot.lane.b32.xlu0 %v3875, 109
      %v4043 = vpop.permute.xlu0 %4042
      %4044 = vrot.lane.b32.xlu0 %v3883, 109
      %v4045 = vpop.permute.xlu0 %4044
      %4046 = vrot.lane.b32.xlu0 %v3868, 109
      %v4047 = vpop.permute.xlu0 %4046
      %4048 = vrot.lane.b32.xlu0 %v3876, 109
      %v4049 = vpop.permute.xlu0 %4048
      %4050 = vrot.lane.b32.xlu0 %v3884, 109
      %v4051 = vpop.permute.xlu0 %4050
      %4052 = vrot.lane.b32.xlu0 %v3869, 109
      %v4053 = vpop.permute.xlu0 %4052
      %4054 = vrot.lane.b32.xlu0 %v3877, 109
      %v4055 = vpop.permute.xlu0 %4054
      %4056 = vrot.lane.b32.xlu0 %v3885, 109
      %v4057 = vpop.permute.xlu0 %4056
      %4058 = vrot.lane.b32.xlu0 %v3870, 109
      %v4059 = vpop.permute.xlu0 %4058
      %4060 = vrot.lane.b32.xlu0 %v3878, 109
      %v4061 = vpop.permute.xlu0 %4060
      %4062 = vrot.lane.b32.xlu0 %v3886, 109
      %v4063 = vpop.permute.xlu0 %4062
      %4064 = vrot.lane.b32.xlu0 %v3871, 109
      %v4065 = vpop.permute.xlu0 %4064
      %4066 = vrot.lane.b32.xlu0 %v3879, 109
      %v4067 = vpop.permute.xlu0 %4066
      %4068 = vrot.lane.b32.xlu0 %v3887, 109
      %v4069 = vpop.permute.xlu0 %4068
      %4070 = vrot.lane.b32.xlu0 %v3872, 109
      %v4071 = vpop.permute.xlu0 %4070
      %4072 = vrot.lane.b32.xlu0 %v3880, 109
      %v4073 = vpop.permute.xlu0 %4072
      %4074 = vrot.lane.b32.xlu0 %v3888, 109
      %v4075 = vpop.permute.xlu0 %4074
      %4076 = vrot.lane.b32.xlu0 %v3873, 109
      %v4077 = vpop.permute.xlu0 %4076
      %4078 = vrot.lane.b32.xlu0 %v3881, 109
      %v4079 = vpop.permute.xlu0 %4078
      %4080 = vrot.lane.b32.xlu0 %v3889, 109
      %v4081 = vpop.permute.xlu0 %4080
      %v4082 = vsel %vm400, %v4071, %v4077
      %v4083 = vsel %vm400, %v4073, %v4079
      %v4084 = vsel %vm400, %v4075, %v4081
      %v4085 = vsel %vm400, %v4065, %v4071
      %v4086 = vsel %vm400, %v4067, %v4073
      %v4087 = vsel %vm400, %v4069, %v4075
      %v4088 = vsel %vm400, %v4059, %v4065
      %v4089 = vsel %vm400, %v4061, %v4067
      %v4090 = vsel %vm400, %v4063, %v4069
      %v4091 = vsel %vm400, %v4053, %v4059
      %v4092 = vsel %vm400, %v4055, %v4061
      %v4093 = vsel %vm400, %v4057, %v4063
      %v4094 = vsel %vm400, %v4047, %v4053
      %v4095 = vsel %vm400, %v4049, %v4055
      %v4096 = vsel %vm400, %v4051, %v4057
      %v4097 = vsel %vm400, %v4041, %v4047
      %v4098 = vsel %vm400, %v4043, %v4049
      %v4099 = vsel %vm400, %v4045, %v4051
      %v4100 = vsel %vm400, %v4035, %v4041
      %v4101 = vsel %vm400, %v4037, %v4043
      %v4102 = vsel %vm400, %v4039, %v4045
      %v4103 = vsel %vm400, %v4077, %v4035
      %v4104 = vsel %vm400, %v4079, %v4037
      %v4105 = vsel %vm400, %v4081, %v4039
      %4106 = vrot.lane.b32.xlu0 %v3866, 101
      %v4107 = vpop.permute.xlu0 %4106
      %4108 = vrot.lane.b32.xlu0 %v3874, 101
      %v4109 = vpop.permute.xlu0 %4108
      %4110 = vrot.lane.b32.xlu0 %v3882, 101
      %v4111 = vpop.permute.xlu0 %4110
      %4112 = vrot.lane.b32.xlu0 %v3867, 101
      %v4113 = vpop.permute.xlu0 %4112
      %4114 = vrot.lane.b32.xlu0 %v3875, 101
      %v4115 = vpop.permute.xlu0 %4114
      %4116 = vrot.lane.b32.xlu0 %v3883, 101
      %v4117 = vpop.permute.xlu0 %4116
      %4118 = vrot.lane.b32.xlu0 %v3868, 101
      %v4119 = vpop.permute.xlu0 %4118
      %4120 = vrot.lane.b32.xlu0 %v3876, 101
      %v4121 = vpop.permute.xlu0 %4120
      %4122 = vrot.lane.b32.xlu0 %v3884, 101
      %v4123 = vpop.permute.xlu0 %4122
      %4124 = vrot.lane.b32.xlu0 %v3869, 101
      %v4125 = vpop.permute.xlu0 %4124
      %4126 = vrot.lane.b32.xlu0 %v3877, 101
      %v4127 = vpop.permute.xlu0 %4126
      %4128 = vrot.lane.b32.xlu0 %v3885, 101
      %v4129 = vpop.permute.xlu0 %4128
      %4130 = vrot.lane.b32.xlu0 %v3870, 101
      %v4131 = vpop.permute.xlu0 %4130
      %4132 = vrot.lane.b32.xlu0 %v3878, 101
      %v4133 = vpop.permute.xlu0 %4132
      %4134 = vrot.lane.b32.xlu0 %v3886, 101
      %v4135 = vpop.permute.xlu0 %4134
      %4136 = vrot.lane.b32.xlu0 %v3871, 101
      %v4137 = vpop.permute.xlu0 %4136
      %4138 = vrot.lane.b32.xlu0 %v3879, 101
      %v4139 = vpop.permute.xlu0 %4138
      %4140 = vrot.lane.b32.xlu0 %v3887, 101
      %v4141 = vpop.permute.xlu0 %4140
      %4142 = vrot.lane.b32.xlu0 %v3872, 101
      %v4143 = vpop.permute.xlu0 %4142
      %4144 = vrot.lane.b32.xlu0 %v3880, 101
      %v4145 = vpop.permute.xlu0 %4144
      %4146 = vrot.lane.b32.xlu0 %v3888, 101
      %v4147 = vpop.permute.xlu0 %4146
      %4148 = vrot.lane.b32.xlu0 %v3873, 101
      %v4149 = vpop.permute.xlu0 %4148
      %4150 = vrot.lane.b32.xlu0 %v3881, 101
      %v4151 = vpop.permute.xlu0 %4150
      %4152 = vrot.lane.b32.xlu0 %v3889, 101
      %v4153 = vpop.permute.xlu0 %4152
      %v4154 = vsel %vm425, %v4143, %v4149
      %v4155 = vsel %vm425, %v4145, %v4151
      %v4156 = vsel %vm425, %v4147, %v4153
      %v4157 = vsel %vm425, %v4137, %v4143
      %v4158 = vsel %vm425, %v4139, %v4145
      %v4159 = vsel %vm425, %v4141, %v4147
      %v4160 = vsel %vm425, %v4131, %v4137
      %v4161 = vsel %vm425, %v4133, %v4139
      %v4162 = vsel %vm425, %v4135, %v4141
      %v4163 = vsel %vm425, %v4125, %v4131
      %v4164 = vsel %vm425, %v4127, %v4133
      %v4165 = vsel %vm425, %v4129, %v4135
      %v4166 = vsel %vm425, %v4119, %v4125
      %v4167 = vsel %vm425, %v4121, %v4127
      %v4168 = vsel %vm425, %v4123, %v4129
      %v4169 = vsel %vm425, %v4113, %v4119
      %v4170 = vsel %vm425, %v4115, %v4121
      %v4171 = vsel %vm425, %v4117, %v4123
      %v4172 = vsel %vm425, %v4107, %v4113
      %v4173 = vsel %vm425, %v4109, %v4115
      %v4174 = vsel %vm425, %v4111, %v4117
      %v4175 = vsel %vm425, %v4149, %v4107
      %v4176 = vsel %vm425, %v4151, %v4109
      %v4177 = vsel %vm425, %v4153, %v4111
      %4178 = vrot.lane.b32.xlu0 %v3866, 100
      %v4179 = vpop.permute.xlu0 %4178
      %4180 = vrot.lane.b32.xlu0 %v3874, 100
      %v4181 = vpop.permute.xlu0 %4180
      %4182 = vrot.lane.b32.xlu0 %v3882, 100
      %v4183 = vpop.permute.xlu0 %4182
      %4184 = vrot.lane.b32.xlu0 %v3867, 100
      %v4185 = vpop.permute.xlu0 %4184
      %4186 = vrot.lane.b32.xlu0 %v3875, 100
      %v4187 = vpop.permute.xlu0 %4186
      %4188 = vrot.lane.b32.xlu0 %v3883, 100
      %v4189 = vpop.permute.xlu0 %4188
      %4190 = vrot.lane.b32.xlu0 %v3868, 100
      %v4191 = vpop.permute.xlu0 %4190
      %4192 = vrot.lane.b32.xlu0 %v3876, 100
      %v4193 = vpop.permute.xlu0 %4192
      %4194 = vrot.lane.b32.xlu0 %v3884, 100
      %v4195 = vpop.permute.xlu0 %4194
      %4196 = vrot.lane.b32.xlu0 %v3869, 100
      %v4197 = vpop.permute.xlu0 %4196
      %4198 = vrot.lane.b32.xlu0 %v3877, 100
      %v4199 = vpop.permute.xlu0 %4198
      %4200 = vrot.lane.b32.xlu0 %v3885, 100
      %v4201 = vpop.permute.xlu0 %4200
      %4202 = vrot.lane.b32.xlu0 %v3870, 100
      %v4203 = vpop.permute.xlu0 %4202
      %4204 = vrot.lane.b32.xlu0 %v3878, 100
      %v4205 = vpop.permute.xlu0 %4204
      %4206 = vrot.lane.b32.xlu0 %v3886, 100
      %v4207 = vpop.permute.xlu0 %4206
      %4208 = vrot.lane.b32.xlu0 %v3871, 100
      %v4209 = vpop.permute.xlu0 %4208
      %4210 = vrot.lane.b32.xlu0 %v3879, 100
      %v4211 = vpop.permute.xlu0 %4210
      %4212 = vrot.lane.b32.xlu0 %v3887, 100
      %v4213 = vpop.permute.xlu0 %4212
      %4214 = vrot.lane.b32.xlu0 %v3872, 100
      %v4215 = vpop.permute.xlu0 %4214
      %4216 = vrot.lane.b32.xlu0 %v3880, 100
      %v4217 = vpop.permute.xlu0 %4216
      %4218 = vrot.lane.b32.xlu0 %v3888, 100
      %v4219 = vpop.permute.xlu0 %4218
      %4220 = vrot.lane.b32.xlu0 %v3873, 100
      %v4221 = vpop.permute.xlu0 %4220
      %4222 = vrot.lane.b32.xlu0 %v3881, 100
      %v4223 = vpop.permute.xlu0 %4222
      %4224 = vrot.lane.b32.xlu0 %v3889, 100
      %v4225 = vpop.permute.xlu0 %4224
      %v4226 = vsel %vm450, %v4215, %v4221
      %v4227 = vsel %vm450, %v4217, %v4223
      %v4228 = vsel %vm450, %v4219, %v4225
      %v4229 = vsel %vm450, %v4209, %v4215
      %v4230 = vsel %vm450, %v4211, %v4217
      %v4231 = vsel %vm450, %v4213, %v4219
      %v4232 = vsel %vm450, %v4203, %v4209
      %v4233 = vsel %vm450, %v4205, %v4211
      %v4234 = vsel %vm450, %v4207, %v4213
      %v4235 = vsel %vm450, %v4197, %v4203
      %v4236 = vsel %vm450, %v4199, %v4205
      %v4237 = vsel %vm450, %v4201, %v4207
      %v4238 = vsel %vm450, %v4191, %v4197
      %v4239 = vsel %vm450, %v4193, %v4199
      %v4240 = vsel %vm450, %v4195, %v4201
      %v4241 = vsel %vm450, %v4185, %v4191
      %v4242 = vsel %vm450, %v4187, %v4193
      %v4243 = vsel %vm450, %v4189, %v4195
      %v4244 = vsel %vm450, %v4179, %v4185
      %v4245 = vsel %vm450, %v4181, %v4187
      %v4246 = vsel %vm450, %v4183, %v4189
      %v4247 = vsel %vm450, %v4221, %v4179
      %v4248 = vsel %vm450, %v4223, %v4181
      %v4249 = vsel %vm450, %v4225, %v4183
      %4250 = vrot.lane.b32.xlu0 %v3866, 99
      %v4251 = vpop.permute.xlu0 %4250
      %4252 = vrot.lane.b32.xlu0 %v3874, 99
      %v4253 = vpop.permute.xlu0 %4252
      %4254 = vrot.lane.b32.xlu0 %v3882, 99
      %v4255 = vpop.permute.xlu0 %4254
      %4256 = vrot.lane.b32.xlu0 %v3867, 99
      %v4257 = vpop.permute.xlu0 %4256
      %4258 = vrot.lane.b32.xlu0 %v3875, 99
      %v4259 = vpop.permute.xlu0 %4258
      %4260 = vrot.lane.b32.xlu0 %v3883, 99
      %v4261 = vpop.permute.xlu0 %4260
      %4262 = vrot.lane.b32.xlu0 %v3868, 99
      %v4263 = vpop.permute.xlu0 %4262
      %4264 = vrot.lane.b32.xlu0 %v3876, 99
      %v4265 = vpop.permute.xlu0 %4264
      %4266 = vrot.lane.b32.xlu0 %v3884, 99
      %v4267 = vpop.permute.xlu0 %4266
      %4268 = vrot.lane.b32.xlu0 %v3869, 99
      %v4269 = vpop.permute.xlu0 %4268
      %4270 = vrot.lane.b32.xlu0 %v3877, 99
      %v4271 = vpop.permute.xlu0 %4270
      %4272 = vrot.lane.b32.xlu0 %v3885, 99
      %v4273 = vpop.permute.xlu0 %4272
      %4274 = vrot.lane.b32.xlu0 %v3870, 99
      %v4275 = vpop.permute.xlu0 %4274
      %4276 = vrot.lane.b32.xlu0 %v3878, 99
      %v4277 = vpop.permute.xlu0 %4276
      %4278 = vrot.lane.b32.xlu0 %v3886, 99
      %v4279 = vpop.permute.xlu0 %4278
      %4280 = vrot.lane.b32.xlu0 %v3871, 99
      %v4281 = vpop.permute.xlu0 %4280
      %4282 = vrot.lane.b32.xlu0 %v3879, 99
      %v4283 = vpop.permute.xlu0 %4282
      %4284 = vrot.lane.b32.xlu0 %v3887, 99
      %v4285 = vpop.permute.xlu0 %4284
      %4286 = vrot.lane.b32.xlu0 %v3872, 99
      %v4287 = vpop.permute.xlu0 %4286
      %4288 = vrot.lane.b32.xlu0 %v3880, 99
      %v4289 = vpop.permute.xlu0 %4288
      %4290 = vrot.lane.b32.xlu0 %v3888, 99
      %v4291 = vpop.permute.xlu0 %4290
      %4292 = vrot.lane.b32.xlu0 %v3873, 99
      %v4293 = vpop.permute.xlu0 %4292
      %4294 = vrot.lane.b32.xlu0 %v3881, 99
      %v4295 = vpop.permute.xlu0 %4294
      %4296 = vrot.lane.b32.xlu0 %v3889, 99
      %v4297 = vpop.permute.xlu0 %4296
      %v4298 = vsel %vm475, %v4287, %v4293
      %v4299 = vsel %vm475, %v4289, %v4295
      %v4300 = vsel %vm475, %v4291, %v4297
      %v4301 = vsel %vm475, %v4281, %v4287
      %v4302 = vsel %vm475, %v4283, %v4289
      %v4303 = vsel %vm475, %v4285, %v4291
      %v4304 = vsel %vm475, %v4275, %v4281
      %v4305 = vsel %vm475, %v4277, %v4283
      %v4306 = vsel %vm475, %v4279, %v4285
      %v4307 = vsel %vm475, %v4269, %v4275
      %v4308 = vsel %vm475, %v4271, %v4277
      %v4309 = vsel %vm475, %v4273, %v4279
      %v4310 = vsel %vm475, %v4263, %v4269
      %v4311 = vsel %vm475, %v4265, %v4271
      %v4312 = vsel %vm475, %v4267, %v4273
      %v4313 = vsel %vm475, %v4257, %v4263
      %v4314 = vsel %vm475, %v4259, %v4265
      %v4315 = vsel %vm475, %v4261, %v4267
      %v4316 = vsel %vm475, %v4251, %v4257
      %v4317 = vsel %vm475, %v4253, %v4259
      %v4318 = vsel %vm475, %v4255, %v4261
      %v4319 = vsel %vm475, %v4293, %v4251
      %v4320 = vsel %vm475, %v4295, %v4253
      %v4321 = vsel %vm475, %v4297, %v4255
      %4322 = vrot.lane.b32.xlu0 %v3866, 91
      %v4323 = vpop.permute.xlu0 %4322
      %4324 = vrot.lane.b32.xlu0 %v3874, 91
      %v4325 = vpop.permute.xlu0 %4324
      %4326 = vrot.lane.b32.xlu0 %v3882, 91
      %v4327 = vpop.permute.xlu0 %4326
      %4328 = vrot.lane.b32.xlu0 %v3867, 91
      %v4329 = vpop.permute.xlu0 %4328
      %4330 = vrot.lane.b32.xlu0 %v3875, 91
      %v4331 = vpop.permute.xlu0 %4330
      %4332 = vrot.lane.b32.xlu0 %v3883, 91
      %v4333 = vpop.permute.xlu0 %4332
      %4334 = vrot.lane.b32.xlu0 %v3868, 91
      %v4335 = vpop.permute.xlu0 %4334
      %4336 = vrot.lane.b32.xlu0 %v3876, 91
      %v4337 = vpop.permute.xlu0 %4336
      %4338 = vrot.lane.b32.xlu0 %v3884, 91
      %v4339 = vpop.permute.xlu0 %4338
      %4340 = vrot.lane.b32.xlu0 %v3869, 91
      %v4341 = vpop.permute.xlu0 %4340
      %4342 = vrot.lane.b32.xlu0 %v3877, 91
      %v4343 = vpop.permute.xlu0 %4342
      %4344 = vrot.lane.b32.xlu0 %v3885, 91
      %v4345 = vpop.permute.xlu0 %4344
      %4346 = vrot.lane.b32.xlu0 %v3870, 91
      %v4347 = vpop.permute.xlu0 %4346
      %4348 = vrot.lane.b32.xlu0 %v3878, 91
      %v4349 = vpop.permute.xlu0 %4348
      %4350 = vrot.lane.b32.xlu0 %v3886, 91
      %v4351 = vpop.permute.xlu0 %4350
      %4352 = vrot.lane.b32.xlu0 %v3871, 91
      %v4353 = vpop.permute.xlu0 %4352
      %4354 = vrot.lane.b32.xlu0 %v3879, 91
      %v4355 = vpop.permute.xlu0 %4354
      %4356 = vrot.lane.b32.xlu0 %v3887, 91
      %v4357 = vpop.permute.xlu0 %4356
      %4358 = vrot.lane.b32.xlu0 %v3872, 91
      %v4359 = vpop.permute.xlu0 %4358
      %4360 = vrot.lane.b32.xlu0 %v3880, 91
      %v4361 = vpop.permute.xlu0 %4360
      %4362 = vrot.lane.b32.xlu0 %v3888, 91
      %v4363 = vpop.permute.xlu0 %4362
      %4364 = vrot.lane.b32.xlu0 %v3873, 91
      %v4365 = vpop.permute.xlu0 %4364
      %4366 = vrot.lane.b32.xlu0 %v3881, 91
      %v4367 = vpop.permute.xlu0 %4366
      %4368 = vrot.lane.b32.xlu0 %v3889, 91
      %v4369 = vpop.permute.xlu0 %4368
      %v4370 = vsel %vm500, %v4359, %v4365
      %v4371 = vsel %vm500, %v4361, %v4367
      %v4372 = vsel %vm500, %v4363, %v4369
      %v4373 = vsel %vm500, %v4353, %v4359
      %v4374 = vsel %vm500, %v4355, %v4361
      %v4375 = vsel %vm500, %v4357, %v4363
      %v4376 = vsel %vm500, %v4347, %v4353
      %v4377 = vsel %vm500, %v4349, %v4355
      %v4378 = vsel %vm500, %v4351, %v4357
      %v4379 = vsel %vm500, %v4341, %v4347
      %v4380 = vsel %vm500, %v4343, %v4349
      %v4381 = vsel %vm500, %v4345, %v4351
      %v4382 = vsel %vm500, %v4335, %v4341
      %v4383 = vsel %vm500, %v4337, %v4343
      %v4384 = vsel %vm500, %v4339, %v4345
      %v4385 = vsel %vm500, %v4329, %v4335
      %v4386 = vsel %vm500, %v4331, %v4337
      %v4387 = vsel %vm500, %v4333, %v4339
      %v4388 = vsel %vm500, %v4323, %v4329
      %v4389 = vsel %vm500, %v4325, %v4331
      %v4390 = vsel %vm500, %v4327, %v4333
      %v4391 = vsel %vm500, %v4365, %v4323
      %v4392 = vsel %vm500, %v4367, %v4325
      %v4393 = vsel %vm500, %v4369, %v4327
      %4394 = vrot.lane.b32.xlu0 %v3866, 90
      %v4395 = vpop.permute.xlu0 %4394
      %4396 = vrot.lane.b32.xlu0 %v3874, 90
      %v4397 = vpop.permute.xlu0 %4396
      %4398 = vrot.lane.b32.xlu0 %v3882, 90
      %v4399 = vpop.permute.xlu0 %4398
      %4400 = vrot.lane.b32.xlu0 %v3867, 90
      %v4401 = vpop.permute.xlu0 %4400
      %4402 = vrot.lane.b32.xlu0 %v3875, 90
      %v4403 = vpop.permute.xlu0 %4402
      %4404 = vrot.lane.b32.xlu0 %v3883, 90
      %v4405 = vpop.permute.xlu0 %4404
      %4406 = vrot.lane.b32.xlu0 %v3868, 90
      %v4407 = vpop.permute.xlu0 %4406
      %4408 = vrot.lane.b32.xlu0 %v3876, 90
      %v4409 = vpop.permute.xlu0 %4408
      %4410 = vrot.lane.b32.xlu0 %v3884, 90
      %v4411 = vpop.permute.xlu0 %4410
      %4412 = vrot.lane.b32.xlu0 %v3869, 90
      %v4413 = vpop.permute.xlu0 %4412
      %4414 = vrot.lane.b32.xlu0 %v3877, 90
      %v4415 = vpop.permute.xlu0 %4414
      %4416 = vrot.lane.b32.xlu0 %v3885, 90
      %v4417 = vpop.permute.xlu0 %4416
      %4418 = vrot.lane.b32.xlu0 %v3870, 90
      %v4419 = vpop.permute.xlu0 %4418
      %4420 = vrot.lane.b32.xlu0 %v3878, 90
      %v4421 = vpop.permute.xlu0 %4420
      %4422 = vrot.lane.b32.xlu0 %v3886, 90
      %v4423 = vpop.permute.xlu0 %4422
      %4424 = vrot.lane.b32.xlu0 %v3871, 90
      %v4425 = vpop.permute.xlu0 %4424
      %4426 = vrot.lane.b32.xlu0 %v3879, 90
      %v4427 = vpop.permute.xlu0 %4426
      %4428 = vrot.lane.b32.xlu0 %v3887, 90
      %v4429 = vpop.permute.xlu0 %4428
      %4430 = vrot.lane.b32.xlu0 %v3872, 90
      %v4431 = vpop.permute.xlu0 %4430
      %4432 = vrot.lane.b32.xlu0 %v3880, 90
      %v4433 = vpop.permute.xlu0 %4432
      %4434 = vrot.lane.b32.xlu0 %v3888, 90
      %v4435 = vpop.permute.xlu0 %4434
      %4436 = vrot.lane.b32.xlu0 %v3873, 90
      %v4437 = vpop.permute.xlu0 %4436
      %4438 = vrot.lane.b32.xlu0 %v3881, 90
      %v4439 = vpop.permute.xlu0 %4438
      %4440 = vrot.lane.b32.xlu0 %v3889, 90
      %v4441 = vpop.permute.xlu0 %4440
      %v4442 = vsel %vm525, %v4431, %v4437
      %v4443 = vsel %vm525, %v4433, %v4439
      %v4444 = vsel %vm525, %v4435, %v4441
      %v4445 = vsel %vm525, %v4425, %v4431
      %v4446 = vsel %vm525, %v4427, %v4433
      %v4447 = vsel %vm525, %v4429, %v4435
      %v4448 = vsel %vm525, %v4419, %v4425
      %v4449 = vsel %vm525, %v4421, %v4427
      %v4450 = vsel %vm525, %v4423, %v4429
      %v4451 = vsel %vm525, %v4413, %v4419
      %v4452 = vsel %vm525, %v4415, %v4421
      %v4453 = vsel %vm525, %v4417, %v4423
      %v4454 = vsel %vm525, %v4407, %v4413
      %v4455 = vsel %vm525, %v4409, %v4415
      %v4456 = vsel %vm525, %v4411, %v4417
      %v4457 = vsel %vm525, %v4401, %v4407
      %v4458 = vsel %vm525, %v4403, %v4409
      %v4459 = vsel %vm525, %v4405, %v4411
      %v4460 = vsel %vm525, %v4395, %v4401
      %v4461 = vsel %vm525, %v4397, %v4403
      %v4462 = vsel %vm525, %v4399, %v4405
      %v4463 = vsel %vm525, %v4437, %v4395
      %v4464 = vsel %vm525, %v4439, %v4397
      %v4465 = vsel %vm525, %v4441, %v4399
      %4466 = vrot.lane.b32.xlu0 %v3866, 89
      %v4467 = vpop.permute.xlu0 %4466
      %4468 = vrot.lane.b32.xlu0 %v3874, 89
      %v4469 = vpop.permute.xlu0 %4468
      %4470 = vrot.lane.b32.xlu0 %v3882, 89
      %v4471 = vpop.permute.xlu0 %4470
      %4472 = vrot.lane.b32.xlu0 %v3867, 89
      %v4473 = vpop.permute.xlu0 %4472
      %4474 = vrot.lane.b32.xlu0 %v3875, 89
      %v4475 = vpop.permute.xlu0 %4474
      %4476 = vrot.lane.b32.xlu0 %v3883, 89
      %v4477 = vpop.permute.xlu0 %4476
      %4478 = vrot.lane.b32.xlu0 %v3868, 89
      %v4479 = vpop.permute.xlu0 %4478
      %4480 = vrot.lane.b32.xlu0 %v3876, 89
      %v4481 = vpop.permute.xlu0 %4480
      %4482 = vrot.lane.b32.xlu0 %v3884, 89
      %v4483 = vpop.permute.xlu0 %4482
      %4484 = vrot.lane.b32.xlu0 %v3869, 89
      %v4485 = vpop.permute.xlu0 %4484
      %4486 = vrot.lane.b32.xlu0 %v3877, 89
      %v4487 = vpop.permute.xlu0 %4486
      %4488 = vrot.lane.b32.xlu0 %v3885, 89
      %v4489 = vpop.permute.xlu0 %4488
      %4490 = vrot.lane.b32.xlu0 %v3870, 89
      %v4491 = vpop.permute.xlu0 %4490
      %4492 = vrot.lane.b32.xlu0 %v3878, 89
      %v4493 = vpop.permute.xlu0 %4492
      %4494 = vrot.lane.b32.xlu0 %v3886, 89
      %v4495 = vpop.permute.xlu0 %4494
      %4496 = vrot.lane.b32.xlu0 %v3871, 89
      %v4497 = vpop.permute.xlu0 %4496
      %4498 = vrot.lane.b32.xlu0 %v3879, 89
      %v4499 = vpop.permute.xlu0 %4498
      %4500 = vrot.lane.b32.xlu0 %v3887, 89
      %v4501 = vpop.permute.xlu0 %4500
      %4502 = vrot.lane.b32.xlu0 %v3872, 89
      %v4503 = vpop.permute.xlu0 %4502
      %4504 = vrot.lane.b32.xlu0 %v3880, 89
      %v4505 = vpop.permute.xlu0 %4504
      %4506 = vrot.lane.b32.xlu0 %v3888, 89
      %v4507 = vpop.permute.xlu0 %4506
      %4508 = vrot.lane.b32.xlu0 %v3873, 89
      %v4509 = vpop.permute.xlu0 %4508
      %4510 = vrot.lane.b32.xlu0 %v3881, 89
      %v4511 = vpop.permute.xlu0 %4510
      %4512 = vrot.lane.b32.xlu0 %v3889, 89
      %v4513 = vpop.permute.xlu0 %4512
      %v4514 = vsel %vm550, %v4503, %v4509
      %v4515 = vsel %vm550, %v4505, %v4511
      %v4516 = vsel %vm550, %v4507, %v4513
      %v4517 = vsel %vm550, %v4497, %v4503
      %v4518 = vsel %vm550, %v4499, %v4505
      %v4519 = vsel %vm550, %v4501, %v4507
      %v4520 = vsel %vm550, %v4491, %v4497
      %v4521 = vsel %vm550, %v4493, %v4499
      %v4522 = vsel %vm550, %v4495, %v4501
      %v4523 = vsel %vm550, %v4485, %v4491
      %v4524 = vsel %vm550, %v4487, %v4493
      %v4525 = vsel %vm550, %v4489, %v4495
      %v4526 = vsel %vm550, %v4479, %v4485
      %v4527 = vsel %vm550, %v4481, %v4487
      %v4528 = vsel %vm550, %v4483, %v4489
      %v4529 = vsel %vm550, %v4473, %v4479
      %v4530 = vsel %vm550, %v4475, %v4481
      %v4531 = vsel %vm550, %v4477, %v4483
      %v4532 = vsel %vm550, %v4467, %v4473
      %v4533 = vsel %vm550, %v4469, %v4475
      %v4534 = vsel %vm550, %v4471, %v4477
      %v4535 = vsel %vm550, %v4509, %v4467
      %v4536 = vsel %vm550, %v4511, %v4469
      %v4537 = vsel %vm550, %v4513, %v4471
      %v4538 = vld [vmem:[%s4] sm:$0xff]
      %v4539 = vld [vmem:[%s4 + $0x8] sm:$0xff]
      %4540 = vrot.lane.b32.xlu0 %v3866, 11
      %v4541 = vpop.permute.xlu0 %4540
      %4542 = vrot.lane.b32.xlu0 %v3874, 11
      %v4543 = vpop.permute.xlu0 %4542
      %4544 = vrot.lane.b32.xlu0 %v3882, 11
      %v4545 = vpop.permute.xlu0 %4544
      %4546 = vrot.lane.b32.xlu0 %v3867, 11
      %v4547 = vpop.permute.xlu0 %4546
      %4548 = vrot.lane.b32.xlu0 %v3875, 11
      %v4549 = vpop.permute.xlu0 %4548
      %4550 = vrot.lane.b32.xlu0 %v3883, 11
      %v4551 = vpop.permute.xlu0 %4550
      %4552 = vrot.lane.b32.xlu0 %v3868, 11
      %v4553 = vpop.permute.xlu0 %4552
      %4554 = vrot.lane.b32.xlu0 %v3876, 11
      %v4555 = vpop.permute.xlu0 %4554
      %4556 = vrot.lane.b32.xlu0 %v3884, 11
      %v4557 = vpop.permute.xlu0 %4556
      %4558 = vrot.lane.b32.xlu0 %v3869, 11
      %v4559 = vpop.permute.xlu0 %4558
      %4560 = vrot.lane.b32.xlu0 %v3877, 11
      %v4561 = vpop.permute.xlu0 %4560
      %4562 = vrot.lane.b32.xlu0 %v3885, 11
      %v4563 = vpop.permute.xlu0 %4562
      %4564 = vrot.lane.b32.xlu0 %v3870, 11
      %v4565 = vpop.permute.xlu0 %4564
      %4566 = vrot.lane.b32.xlu0 %v3878, 11
      %v4567 = vpop.permute.xlu0 %4566
      %4568 = vrot.lane.b32.xlu0 %v3886, 11
      %v4569 = vpop.permute.xlu0 %4568
      %4570 = vrot.lane.b32.xlu0 %v3871, 11
      %v4571 = vpop.permute.xlu0 %4570
      %4572 = vrot.lane.b32.xlu0 %v3879, 11
      %v4573 = vpop.permute.xlu0 %4572
      %4574 = vrot.lane.b32.xlu0 %v3887, 11
      %v4575 = vpop.permute.xlu0 %4574
      %4576 = vrot.lane.b32.xlu0 %v3872, 11
      %v4577 = vpop.permute.xlu0 %4576
      %4578 = vrot.lane.b32.xlu0 %v3880, 11
      %v4579 = vpop.permute.xlu0 %4578
      %4580 = vrot.lane.b32.xlu0 %v3888, 11
      %v4581 = vpop.permute.xlu0 %4580
      %4582 = vrot.lane.b32.xlu0 %v3873, 11
      %v4583 = vpop.permute.xlu0 %4582
      %4584 = vrot.lane.b32.xlu0 %v3881, 11
      %v4585 = vpop.permute.xlu0 %4584
      %4586 = vrot.lane.b32.xlu0 %v3889, 11
      %v4587 = vpop.permute.xlu0 %4586
      %v4588 = vsel %vm576, %v4577, %v4583
      %v4589 = vsel %vm576, %v4579, %v4585
      %v4590 = vsel %vm576, %v4581, %v4587
      %v4591 = vsel %vm576, %v4571, %v4577
      %v4592 = vsel %vm576, %v4573, %v4579
      %v4593 = vsel %vm576, %v4575, %v4581
      %v4594 = vsel %vm576, %v4565, %v4571
      %v4595 = vsel %vm576, %v4567, %v4573
      %v4596 = vsel %vm576, %v4569, %v4575
      %v4597 = vsel %vm576, %v4559, %v4565
      %v4598 = vsel %vm576, %v4561, %v4567
      %v4599 = vsel %vm576, %v4563, %v4569
      %v4600 = vsel %vm576, %v4553, %v4559
      %v4601 = vsel %vm576, %v4555, %v4561
      %v4602 = vsel %vm576, %v4557, %v4563
      %v4603 = vsel %vm576, %v4547, %v4553
      %v4604 = vsel %vm576, %v4549, %v4555
      %v4605 = vsel %vm576, %v4551, %v4557
      %v4606 = vsel %vm576, %v4541, %v4547
      %v4607 = vsel %vm576, %v4543, %v4549
      %v4608 = vsel %vm576, %v4545, %v4551
      %v4609 = vsel %vm576, %v4583, %v4541
      %v4610 = vsel %vm576, %v4585, %v4543
      %v4611 = vsel %vm576, %v4587, %v4545
      %4612 = vrot.lane.b32.xlu0 %v3866, 10
      %v4613 = vpop.permute.xlu0 %4612
      %4614 = vrot.lane.b32.xlu0 %v3874, 10
      %v4615 = vpop.permute.xlu0 %4614
      %4616 = vrot.lane.b32.xlu0 %v3882, 10
      %v4617 = vpop.permute.xlu0 %4616
      %4618 = vrot.lane.b32.xlu0 %v3867, 10
      %v4619 = vpop.permute.xlu0 %4618
      %4620 = vrot.lane.b32.xlu0 %v3875, 10
      %v4621 = vpop.permute.xlu0 %4620
      %4622 = vrot.lane.b32.xlu0 %v3883, 10
      %v4623 = vpop.permute.xlu0 %4622
      %4624 = vrot.lane.b32.xlu0 %v3868, 10
      %v4625 = vpop.permute.xlu0 %4624
      %4626 = vrot.lane.b32.xlu0 %v3876, 10
      %v4627 = vpop.permute.xlu0 %4626
      %4628 = vrot.lane.b32.xlu0 %v3884, 10
      %v4629 = vpop.permute.xlu0 %4628
      %4630 = vrot.lane.b32.xlu0 %v3869, 10
      %v4631 = vpop.permute.xlu0 %4630
      %4632 = vrot.lane.b32.xlu0 %v3877, 10
      %v4633 = vpop.permute.xlu0 %4632
      %4634 = vrot.lane.b32.xlu0 %v3885, 10
      %v4635 = vpop.permute.xlu0 %4634
      %4636 = vrot.lane.b32.xlu0 %v3870, 10
      %v4637 = vpop.permute.xlu0 %4636
      %4638 = vrot.lane.b32.xlu0 %v3878, 10
      %v4639 = vpop.permute.xlu0 %4638
      %4640 = vrot.lane.b32.xlu0 %v3886, 10
      %v4641 = vpop.permute.xlu0 %4640
      %4642 = vrot.lane.b32.xlu0 %v3871, 10
      %v4643 = vpop.permute.xlu0 %4642
      %4644 = vrot.lane.b32.xlu0 %v3879, 10
      %v4645 = vpop.permute.xlu0 %4644
      %4646 = vrot.lane.b32.xlu0 %v3887, 10
      %v4647 = vpop.permute.xlu0 %4646
      %4648 = vrot.lane.b32.xlu0 %v3872, 10
      %v4649 = vpop.permute.xlu0 %4648
      %4650 = vrot.lane.b32.xlu0 %v3880, 10
      %v4651 = vpop.permute.xlu0 %4650
      %4652 = vrot.lane.b32.xlu0 %v3888, 10
      %v4653 = vpop.permute.xlu0 %4652
      %4654 = vrot.lane.b32.xlu0 %v3873, 10
      %v4655 = vpop.permute.xlu0 %4654
      %4656 = vrot.lane.b32.xlu0 %v3881, 10
      %v4657 = vpop.permute.xlu0 %4656
      %4658 = vrot.lane.b32.xlu0 %v3889, 10
      %v4659 = vpop.permute.xlu0 %4658
      %v4660 = vsel %vm601, %v4649, %v4655
      %v4661 = vsel %vm601, %v4651, %v4657
      %v4662 = vsel %vm601, %v4653, %v4659
      %v4663 = vsel %vm601, %v4643, %v4649
      %v4664 = vsel %vm601, %v4645, %v4651
      %v4665 = vsel %vm601, %v4647, %v4653
      %v4666 = vsel %vm601, %v4637, %v4643
      %v4667 = vsel %vm601, %v4639, %v4645
      %v4668 = vsel %vm601, %v4641, %v4647
      %v4669 = vsel %vm601, %v4631, %v4637
      %v4670 = vsel %vm601, %v4633, %v4639
      %v4671 = vsel %vm601, %v4635, %v4641
      %v4672 = vsel %vm601, %v4625, %v4631
      %v4673 = vsel %vm601, %v4627, %v4633
      %v4674 = vsel %vm601, %v4629, %v4635
      %v4675 = vsel %vm601, %v4619, %v4625
      %v4676 = vsel %vm601, %v4621, %v4627
      %v4677 = vsel %vm601, %v4623, %v4629
      %v4678 = vsel %vm601, %v4613, %v4619
      %v4679 = vsel %vm601, %v4615, %v4621
      %v4680 = vsel %vm601, %v4617, %v4623
      %v4681 = vsel %vm601, %v4655, %v4613
      %v4682 = vsel %vm601, %v4657, %v4615
      %v4683 = vsel %vm601, %v4659, %v4617
      %4684 = vrot.lane.b32.xlu0 %v3866, 9
      %v4685 = vpop.permute.xlu0 %4684
      %4686 = vrot.lane.b32.xlu0 %v3874, 9
      %v4687 = vpop.permute.xlu0 %4686
      %4688 = vrot.lane.b32.xlu0 %v3882, 9
      %v4689 = vpop.permute.xlu0 %4688
      %4690 = vrot.lane.b32.xlu0 %v3867, 9
      %v4691 = vpop.permute.xlu0 %4690
      %4692 = vrot.lane.b32.xlu0 %v3875, 9
      %v4693 = vpop.permute.xlu0 %4692
      %4694 = vrot.lane.b32.xlu0 %v3883, 9
      %v4695 = vpop.permute.xlu0 %4694
      %4696 = vrot.lane.b32.xlu0 %v3868, 9
      %v4697 = vpop.permute.xlu0 %4696
      %4698 = vrot.lane.b32.xlu0 %v3876, 9
      %v4699 = vpop.permute.xlu0 %4698
      %4700 = vrot.lane.b32.xlu0 %v3884, 9
      %v4701 = vpop.permute.xlu0 %4700
      %4702 = vrot.lane.b32.xlu0 %v3869, 9
      %v4703 = vpop.permute.xlu0 %4702
      %4704 = vrot.lane.b32.xlu0 %v3877, 9
      %v4705 = vpop.permute.xlu0 %4704
      %4706 = vrot.lane.b32.xlu0 %v3885, 9
      %v4707 = vpop.permute.xlu0 %4706
      %4708 = vrot.lane.b32.xlu0 %v3870, 9
      %v4709 = vpop.permute.xlu0 %4708
      %4710 = vrot.lane.b32.xlu0 %v3878, 9
      %v4711 = vpop.permute.xlu0 %4710
      %4712 = vrot.lane.b32.xlu0 %v3886, 9
      %v4713 = vpop.permute.xlu0 %4712
      %4714 = vrot.lane.b32.xlu0 %v3871, 9
      %v4715 = vpop.permute.xlu0 %4714
      %4716 = vrot.lane.b32.xlu0 %v3879, 9
      %v4717 = vpop.permute.xlu0 %4716
      %4718 = vrot.lane.b32.xlu0 %v3887, 9
      %v4719 = vpop.permute.xlu0 %4718
      %4720 = vrot.lane.b32.xlu0 %v3872, 9
      %v4721 = vpop.permute.xlu0 %4720
      %4722 = vrot.lane.b32.xlu0 %v3880, 9
      %v4723 = vpop.permute.xlu0 %4722
      %4724 = vrot.lane.b32.xlu0 %v3888, 9
      %v4725 = vpop.permute.xlu0 %4724
      %4726 = vrot.lane.b32.xlu0 %v3873, 9
      %v4727 = vpop.permute.xlu0 %4726
      %4728 = vrot.lane.b32.xlu0 %v3881, 9
      %v4729 = vpop.permute.xlu0 %4728
      %4730 = vrot.lane.b32.xlu0 %v3889, 9
      %v4731 = vpop.permute.xlu0 %4730
      %v4732 = vsel %vm626, %v4721, %v4727
      %v4733 = vsel %vm626, %v4723, %v4729
      %v4734 = vsel %vm626, %v4725, %v4731
      %v4735 = vsel %vm626, %v4715, %v4721
      %v4736 = vsel %vm626, %v4717, %v4723
      %v4737 = vsel %vm626, %v4719, %v4725
      %v4738 = vsel %vm626, %v4709, %v4715
      %v4739 = vsel %vm626, %v4711, %v4717
      %v4740 = vsel %vm626, %v4713, %v4719
      %v4741 = vsel %vm626, %v4703, %v4709
      %v4742 = vsel %vm626, %v4705, %v4711
      %v4743 = vsel %vm626, %v4707, %v4713
      %v4744 = vsel %vm626, %v4697, %v4703
      %v4745 = vsel %vm626, %v4699, %v4705
      %v4746 = vsel %vm626, %v4701, %v4707
      %v4747 = vsel %vm626, %v4691, %v4697
      %v4748 = vsel %vm626, %v4693, %v4699
      %v4749 = vsel %vm626, %v4695, %v4701
      %v4750 = vsel %vm626, %v4685, %v4691
      %v4751 = vsel %vm626, %v4687, %v4693
      %v4752 = vsel %vm626, %v4689, %v4695
      %v4753 = vsel %vm626, %v4727, %v4685
      %v4754 = vsel %vm626, %v4729, %v4687
      %v4755 = vsel %vm626, %v4731, %v4689
      %4756 = vrot.lane.b32.xlu0 %v3866, 1
      %v4757 = vpop.permute.xlu0 %4756
      %4758 = vrot.lane.b32.xlu0 %v3874, 1
      %v4759 = vpop.permute.xlu0 %4758
      %4760 = vrot.lane.b32.xlu0 %v3882, 1
      %v4761 = vpop.permute.xlu0 %4760
      %4762 = vrot.lane.b32.xlu0 %v3867, 1
      %v4763 = vpop.permute.xlu0 %4762
      %4764 = vrot.lane.b32.xlu0 %v3875, 1
      %v4765 = vpop.permute.xlu0 %4764
      %4766 = vrot.lane.b32.xlu0 %v3883, 1
      %v4767 = vpop.permute.xlu0 %4766
      %4768 = vrot.lane.b32.xlu0 %v3868, 1
      %v4769 = vpop.permute.xlu0 %4768
      %4770 = vrot.lane.b32.xlu0 %v3876, 1
      %v4771 = vpop.permute.xlu0 %4770
      %4772 = vrot.lane.b32.xlu0 %v3884, 1
      %v4773 = vpop.permute.xlu0 %4772
      %4774 = vrot.lane.b32.xlu0 %v3869, 1
      %v4775 = vpop.permute.xlu0 %4774
      %4776 = vrot.lane.b32.xlu0 %v3877, 1
      %v4777 = vpop.permute.xlu0 %4776
      %4778 = vrot.lane.b32.xlu0 %v3885, 1
      %v4779 = vpop.permute.xlu0 %4778
      %4780 = vrot.lane.b32.xlu0 %v3870, 1
      %v4781 = vpop.permute.xlu0 %4780
      %4782 = vrot.lane.b32.xlu0 %v3878, 1
      %v4783 = vpop.permute.xlu0 %4782
      %4784 = vrot.lane.b32.xlu0 %v3886, 1
      %v4785 = vpop.permute.xlu0 %4784
      %4786 = vrot.lane.b32.xlu0 %v3871, 1
      %v4787 = vpop.permute.xlu0 %4786
      %4788 = vrot.lane.b32.xlu0 %v3879, 1
      %v4789 = vpop.permute.xlu0 %4788
      %4790 = vrot.lane.b32.xlu0 %v3887, 1
      %v4791 = vpop.permute.xlu0 %4790
      %4792 = vrot.lane.b32.xlu0 %v3872, 1
      %v4793 = vpop.permute.xlu0 %4792
      %4794 = vrot.lane.b32.xlu0 %v3880, 1
      %v4795 = vpop.permute.xlu0 %4794
      %4796 = vrot.lane.b32.xlu0 %v3888, 1
      %v4797 = vpop.permute.xlu0 %4796
      %4798 = vrot.lane.b32.xlu0 %v3873, 1
      %v4799 = vpop.permute.xlu0 %4798
      %4800 = vrot.lane.b32.xlu0 %v3881, 1
      %v4801 = vpop.permute.xlu0 %4800
      %4802 = vrot.lane.b32.xlu0 %v3889, 1
      %v4803 = vpop.permute.xlu0 %4802
      %v4804 = vsel %vm651, %v4793, %v4799
      %v4805 = vsel %vm651, %v4795, %v4801
      %v4806 = vsel %vm651, %v4797, %v4803
      %v4807 = vsel %vm651, %v4787, %v4793
      %v4808 = vsel %vm651, %v4789, %v4795
      %v4809 = vsel %vm651, %v4791, %v4797
      %v4810 = vsel %vm651, %v4781, %v4787
      %v4811 = vsel %vm651, %v4783, %v4789
      %v4812 = vsel %vm651, %v4785, %v4791
      %v4813 = vsel %vm651, %v4775, %v4781
      %v4814 = vsel %vm651, %v4777, %v4783
      %v4815 = vsel %vm651, %v4779, %v4785
      %v4816 = vsel %vm651, %v4769, %v4775
      %v4817 = vsel %vm651, %v4771, %v4777
      %v4818 = vsel %vm651, %v4773, %v4779
      %v4819 = vsel %vm651, %v4763, %v4769
      %v4820 = vsel %vm651, %v4765, %v4771
      %v4821 = vsel %vm651, %v4767, %v4773
      %v4822 = vsel %vm651, %v4757, %v4763
      %v4823 = vsel %vm651, %v4759, %v4765
      %v4824 = vsel %vm651, %v4761, %v4767
      %v4825 = vsel %vm651, %v4799, %v4757
      %v4826 = vsel %vm651, %v4801, %v4759
      %v4827 = vsel %vm651, %v4803, %v4761
      %4828 = vrot.lane.b32.xlu0 %v3866, 127
      %v4829 = vpop.permute.xlu0 %4828
      %4830 = vrot.lane.b32.xlu0 %v3874, 127
      %v4831 = vpop.permute.xlu0 %4830
      %4832 = vrot.lane.b32.xlu0 %v3882, 127
      %v4833 = vpop.permute.xlu0 %4832
      %4834 = vrot.lane.b32.xlu0 %v3867, 127
      %v4835 = vpop.permute.xlu0 %4834
      %4836 = vrot.lane.b32.xlu0 %v3875, 127
      %v4837 = vpop.permute.xlu0 %4836
      %4838 = vrot.lane.b32.xlu0 %v3883, 127
      %v4839 = vpop.permute.xlu0 %4838
      %4840 = vrot.lane.b32.xlu0 %v3868, 127
      %v4841 = vpop.permute.xlu0 %4840
      %4842 = vrot.lane.b32.xlu0 %v3876, 127
      %v4843 = vpop.permute.xlu0 %4842
      %4844 = vrot.lane.b32.xlu0 %v3884, 127
      %v4845 = vpop.permute.xlu0 %4844
      %4846 = vrot.lane.b32.xlu0 %v3869, 127
      %v4847 = vpop.permute.xlu0 %4846
      %4848 = vrot.lane.b32.xlu0 %v3877, 127
      %v4849 = vpop.permute.xlu0 %4848
      %4850 = vrot.lane.b32.xlu0 %v3885, 127
      %v4851 = vpop.permute.xlu0 %4850
      %4852 = vrot.lane.b32.xlu0 %v3870, 127
      %v4853 = vpop.permute.xlu0 %4852
      %4854 = vrot.lane.b32.xlu0 %v3878, 127
      %v4855 = vpop.permute.xlu0 %4854
      %4856 = vrot.lane.b32.xlu0 %v3886, 127
      %v4857 = vpop.permute.xlu0 %4856
      %4858 = vrot.lane.b32.xlu0 %v3871, 127
      %v4859 = vpop.permute.xlu0 %4858
      %4860 = vrot.lane.b32.xlu0 %v3879, 127
      %v4861 = vpop.permute.xlu0 %4860
      %4862 = vrot.lane.b32.xlu0 %v3887, 127
      %v4863 = vpop.permute.xlu0 %4862
      %4864 = vrot.lane.b32.xlu0 %v3872, 127
      %v4865 = vpop.permute.xlu0 %4864
      %4866 = vrot.lane.b32.xlu0 %v3880, 127
      %v4867 = vpop.permute.xlu0 %4866
      %4868 = vrot.lane.b32.xlu0 %v3888, 127
      %v4869 = vpop.permute.xlu0 %4868
      %4870 = vrot.lane.b32.xlu0 %v3873, 127
      %v4871 = vpop.permute.xlu0 %4870
      %4872 = vrot.lane.b32.xlu0 %v3881, 127
      %v4873 = vpop.permute.xlu0 %4872
      %4874 = vrot.lane.b32.xlu0 %v3889, 127
      %v4875 = vpop.permute.xlu0 %4874
      %v4876 = vsel %vm676, %v4865, %v4871
      %v4877 = vsel %vm676, %v4867, %v4873
      %v4878 = vsel %vm676, %v4869, %v4875
      %v4879 = vsel %vm676, %v4859, %v4865
      %v4880 = vsel %vm676, %v4861, %v4867
      %v4881 = vsel %vm676, %v4863, %v4869
      %v4882 = vsel %vm676, %v4853, %v4859
      %v4883 = vsel %vm676, %v4855, %v4861
      %v4884 = vsel %vm676, %v4857, %v4863
      %v4885 = vsel %vm676, %v4847, %v4853
      %v4886 = vsel %vm676, %v4849, %v4855
      %v4887 = vsel %vm676, %v4851, %v4857
      %v4888 = vsel %vm676, %v4841, %v4847
      %v4889 = vsel %vm676, %v4843, %v4849
      %v4890 = vsel %vm676, %v4845, %v4851
      %v4891 = vsel %vm676, %v4835, %v4841
      %v4892 = vsel %vm676, %v4837, %v4843
      %v4893 = vsel %vm676, %v4839, %v4845
      %v4894 = vsel %vm676, %v4829, %v4835
      %v4895 = vsel %vm676, %v4831, %v4837
      %v4896 = vsel %vm676, %v4833, %v4839
      %v4897 = vsel %vm676, %v4871, %v4829
      %v4898 = vsel %vm676, %v4873, %v4831
      %v4899 = vsel %vm676, %v4875, %v4833
      %4900 = vrot.lane.b32.xlu0 %v3866, 119
      %v4901 = vpop.permute.xlu0 %4900
      %4902 = vrot.lane.b32.xlu0 %v3874, 119
      %v4903 = vpop.permute.xlu0 %4902
      %4904 = vrot.lane.b32.xlu0 %v3882, 119
      %v4905 = vpop.permute.xlu0 %4904
      %4906 = vrot.lane.b32.xlu0 %v3867, 119
      %v4907 = vpop.permute.xlu0 %4906
      %4908 = vrot.lane.b32.xlu0 %v3875, 119
      %v4909 = vpop.permute.xlu0 %4908
      %4910 = vrot.lane.b32.xlu0 %v3883, 119
      %v4911 = vpop.permute.xlu0 %4910
      %4912 = vrot.lane.b32.xlu0 %v3868, 119
      %v4913 = vpop.permute.xlu0 %4912
      %4914 = vrot.lane.b32.xlu0 %v3876, 119
      %v4915 = vpop.permute.xlu0 %4914
      %4916 = vrot.lane.b32.xlu0 %v3884, 119
      %v4917 = vpop.permute.xlu0 %4916
      %4918 = vrot.lane.b32.xlu0 %v3869, 119
      %v4919 = vpop.permute.xlu0 %4918
      %4920 = vrot.lane.b32.xlu0 %v3877, 119
      %v4921 = vpop.permute.xlu0 %4920
      %4922 = vrot.lane.b32.xlu0 %v3885, 119
      %v4923 = vpop.permute.xlu0 %4922
      %4924 = vrot.lane.b32.xlu0 %v3870, 119
      %v4925 = vpop.permute.xlu0 %4924
      %4926 = vrot.lane.b32.xlu0 %v3878, 119
      %v4927 = vpop.permute.xlu0 %4926
      %4928 = vrot.lane.b32.xlu0 %v3886, 119
      %v4929 = vpop.permute.xlu0 %4928
      %4930 = vrot.lane.b32.xlu0 %v3871, 119
      %v4931 = vpop.permute.xlu0 %4930
      %4932 = vrot.lane.b32.xlu0 %v3879, 119
      %v4933 = vpop.permute.xlu0 %4932
      %4934 = vrot.lane.b32.xlu0 %v3887, 119
      %v4935 = vpop.permute.xlu0 %4934
      %4936 = vrot.lane.b32.xlu0 %v3872, 119
      %v4937 = vpop.permute.xlu0 %4936
      %4938 = vrot.lane.b32.xlu0 %v3880, 119
      %v4939 = vpop.permute.xlu0 %4938
      %4940 = vrot.lane.b32.xlu0 %v3888, 119
      %v4941 = vpop.permute.xlu0 %4940
      %4942 = vrot.lane.b32.xlu0 %v3873, 119
      %v4943 = vpop.permute.xlu0 %4942
      %4944 = vrot.lane.b32.xlu0 %v3881, 119
      %v4945 = vpop.permute.xlu0 %4944
      %4946 = vrot.lane.b32.xlu0 %v3889, 119
      %v4947 = vpop.permute.xlu0 %4946
      %v4948 = vsel %vm701, %v4937, %v4943
      %v4949 = vsel %vm701, %v4939, %v4945
      %v4950 = vsel %vm701, %v4941, %v4947
      %v4951 = vsel %vm701, %v4931, %v4937
      %v4952 = vsel %vm701, %v4933, %v4939
      %v4953 = vsel %vm701, %v4935, %v4941
      %v4954 = vsel %vm701, %v4925, %v4931
      %v4955 = vsel %vm701, %v4927, %v4933
      %v4956 = vsel %vm701, %v4929, %v4935
      %v4957 = vsel %vm701, %v4919, %v4925
      %v4958 = vsel %vm701, %v4921, %v4927
      %v4959 = vsel %vm701, %v4923, %v4929
      %v4960 = vsel %vm701, %v4913, %v4919
      %v4961 = vsel %vm701, %v4915, %v4921
      %v4962 = vsel %vm701, %v4917, %v4923
      %v4963 = vsel %vm701, %v4907, %v4913
      %v4964 = vsel %vm701, %v4909, %v4915
      %v4965 = vsel %vm701, %v4911, %v4917
      %v4966 = vsel %vm701, %v4901, %v4907
      %v4967 = vsel %vm701, %v4903, %v4909
      %v4968 = vsel %vm701, %v4905, %v4911
      %v4969 = vsel %vm701, %v4943, %v4901
      %v4970 = vsel %vm701, %v4945, %v4903
      %v4971 = vsel %vm701, %v4947, %v4905
      %4972 = vrot.lane.b32.xlu0 %v3866, 118
      %v4973 = vpop.permute.xlu0 %4972
      %4974 = vrot.lane.b32.xlu0 %v3874, 118
      %v4975 = vpop.permute.xlu0 %4974
      %4976 = vrot.lane.b32.xlu0 %v3882, 118
      %v4977 = vpop.permute.xlu0 %4976
      %4978 = vrot.lane.b32.xlu0 %v3867, 118
      %v4979 = vpop.permute.xlu0 %4978
      %4980 = vrot.lane.b32.xlu0 %v3875, 118
      %v4981 = vpop.permute.xlu0 %4980
      %4982 = vrot.lane.b32.xlu0 %v3883, 118
      %v4983 = vpop.permute.xlu0 %4982
      %4984 = vrot.lane.b32.xlu0 %v3868, 118
      %v4985 = vpop.permute.xlu0 %4984
      %4986 = vrot.lane.b32.xlu0 %v3876, 118
      %v4987 = vpop.permute.xlu0 %4986
      %4988 = vrot.lane.b32.xlu0 %v3884, 118
      %v4989 = vpop.permute.xlu0 %4988
      %4990 = vrot.lane.b32.xlu0 %v3869, 118
      %v4991 = vpop.permute.xlu0 %4990
      %4992 = vrot.lane.b32.xlu0 %v3877, 118
      %v4993 = vpop.permute.xlu0 %4992
      %4994 = vrot.lane.b32.xlu0 %v3885, 118
      %v4995 = vpop.permute.xlu0 %4994
      %4996 = vrot.lane.b32.xlu0 %v3870, 118
      %v4997 = vpop.permute.xlu0 %4996
      %4998 = vrot.lane.b32.xlu0 %v3878, 118
      %v4999 = vpop.permute.xlu0 %4998
      %5000 = vrot.lane.b32.xlu0 %v3886, 118
      %v5001 = vpop.permute.xlu0 %5000
      %5002 = vrot.lane.b32.xlu0 %v3871, 118
      %v5003 = vpop.permute.xlu0 %5002
      %5004 = vrot.lane.b32.xlu0 %v3879, 118
      %v5005 = vpop.permute.xlu0 %5004
      %5006 = vrot.lane.b32.xlu0 %v3887, 118
      %v5007 = vpop.permute.xlu0 %5006
      %5008 = vrot.lane.b32.xlu0 %v3872, 118
      %v5009 = vpop.permute.xlu0 %5008
      %5010 = vrot.lane.b32.xlu0 %v3880, 118
      %v5011 = vpop.permute.xlu0 %5010
      %5012 = vrot.lane.b32.xlu0 %v3888, 118
      %v5013 = vpop.permute.xlu0 %5012
      %5014 = vrot.lane.b32.xlu0 %v3873, 118
      %v5015 = vpop.permute.xlu0 %5014
      %5016 = vrot.lane.b32.xlu0 %v3881, 118
      %v5017 = vpop.permute.xlu0 %5016
      %5018 = vrot.lane.b32.xlu0 %v3889, 118
      %v5019 = vpop.permute.xlu0 %5018
      %v5020 = vsel %vm726, %v5009, %v5015
      %v5021 = vsel %vm726, %v5011, %v5017
      %v5022 = vsel %vm726, %v5013, %v5019
      %v5023 = vsel %vm726, %v5003, %v5009
      %v5024 = vsel %vm726, %v5005, %v5011
      %v5025 = vsel %vm726, %v5007, %v5013
      %v5026 = vsel %vm726, %v4997, %v5003
      %v5027 = vsel %vm726, %v4999, %v5005
      %v5028 = vsel %vm726, %v5001, %v5007
      %v5029 = vsel %vm726, %v4991, %v4997
      %v5030 = vsel %vm726, %v4993, %v4999
      %v5031 = vsel %vm726, %v4995, %v5001
      %v5032 = vsel %vm726, %v4985, %v4991
      %v5033 = vsel %vm726, %v4987, %v4993
      %v5034 = vsel %vm726, %v4989, %v4995
      %v5035 = vsel %vm726, %v4979, %v4985
      %v5036 = vsel %vm726, %v4981, %v4987
      %v5037 = vsel %vm726, %v4983, %v4989
      %v5038 = vsel %vm726, %v4973, %v4979
      %v5039 = vsel %vm726, %v4975, %v4981
      %v5040 = vsel %vm726, %v4977, %v4983
      %v5041 = vsel %vm726, %v5015, %v4973
      %v5042 = vsel %vm726, %v5017, %v4975
      %v5043 = vsel %vm726, %v5019, %v4977
      %5044 = vrot.lane.b32.xlu0 %v3866, 117
      %v5045 = vpop.permute.xlu0 %5044
      %5046 = vrot.lane.b32.xlu0 %v3874, 117
      %v5047 = vpop.permute.xlu0 %5046
      %5048 = vrot.lane.b32.xlu0 %v3882, 117
      %v5049 = vpop.permute.xlu0 %5048
      %5050 = vrot.lane.b32.xlu0 %v3867, 117
      %v5051 = vpop.permute.xlu0 %5050
      %5052 = vrot.lane.b32.xlu0 %v3875, 117
      %v5053 = vpop.permute.xlu0 %5052
      %5054 = vrot.lane.b32.xlu0 %v3883, 117
      %v5055 = vpop.permute.xlu0 %5054
      %5056 = vrot.lane.b32.xlu0 %v3868, 117
      %v5057 = vpop.permute.xlu0 %5056
      %5058 = vrot.lane.b32.xlu0 %v3876, 117
      %v5059 = vpop.permute.xlu0 %5058
      %5060 = vrot.lane.b32.xlu0 %v3884, 117
      %v5061 = vpop.permute.xlu0 %5060
      %5062 = vrot.lane.b32.xlu0 %v3869, 117
      %v5063 = vpop.permute.xlu0 %5062
      %5064 = vrot.lane.b32.xlu0 %v3877, 117
      %v5065 = vpop.permute.xlu0 %5064
      %5066 = vrot.lane.b32.xlu0 %v3885, 117
      %v5067 = vpop.permute.xlu0 %5066
      %5068 = vrot.lane.b32.xlu0 %v3870, 117
      %v5069 = vpop.permute.xlu0 %5068
      %5070 = vrot.lane.b32.xlu0 %v3878, 117
      %v5071 = vpop.permute.xlu0 %5070
      %5072 = vrot.lane.b32.xlu0 %v3886, 117
      %v5073 = vpop.permute.xlu0 %5072
      %5074 = vrot.lane.b32.xlu0 %v3871, 117
      %v5075 = vpop.permute.xlu0 %5074
      %5076 = vrot.lane.b32.xlu0 %v3879, 117
      %v5077 = vpop.permute.xlu0 %5076
      %5078 = vrot.lane.b32.xlu0 %v3887, 117
      %v5079 = vpop.permute.xlu0 %5078
      %5080 = vrot.lane.b32.xlu0 %v3872, 117
      %v5081 = vpop.permute.xlu0 %5080
      %5082 = vrot.lane.b32.xlu0 %v3880, 117
      %v5083 = vpop.permute.xlu0 %5082
      %5084 = vrot.lane.b32.xlu0 %v3888, 117
      %v5085 = vpop.permute.xlu0 %5084
      %5086 = vrot.lane.b32.xlu0 %v3873, 117
      %v5087 = vpop.permute.xlu0 %5086
      %5088 = vrot.lane.b32.xlu0 %v3881, 117
      %v5089 = vpop.permute.xlu0 %5088
      %5090 = vrot.lane.b32.xlu0 %v3889, 117
      %v5091 = vpop.permute.xlu0 %5090
      %v5092 = vsel %vm751, %v5081, %v5087
      %v5093 = vsel %vm751, %v5083, %v5089
      %v5094 = vsel %vm751, %v5085, %v5091
      %v5095 = vsel %vm751, %v5075, %v5081
      %v5096 = vsel %vm751, %v5077, %v5083
      %v5097 = vsel %vm751, %v5079, %v5085
      %v5098 = vsel %vm751, %v5069, %v5075
      %v5099 = vsel %vm751, %v5071, %v5077
      %v5100 = vsel %vm751, %v5073, %v5079
      %v5101 = vsel %vm751, %v5063, %v5069
      %v5102 = vsel %vm751, %v5065, %v5071
      %v5103 = vsel %vm751, %v5067, %v5073
      %v5104 = vsel %vm751, %v5057, %v5063
      %v5105 = vsel %vm751, %v5059, %v5065
      %v5106 = vsel %vm751, %v5061, %v5067
      %v5107 = vsel %vm751, %v5051, %v5057
      %v5108 = vsel %vm751, %v5053, %v5059
      %v5109 = vsel %vm751, %v5055, %v5061
      %v5110 = vsel %vm751, %v5045, %v5051
      %v5111 = vsel %vm751, %v5047, %v5053
      %v5112 = vsel %vm751, %v5049, %v5055
      %v5113 = vsel %vm751, %v5087, %v5045
      %v5114 = vsel %vm751, %v5089, %v5047
      %v5115 = vsel %vm751, %v5091, %v5049
      %s5116 = scalar_lea.vmem %s4, 16
      %v5117 = vld [vmem:[%s5116] sm:$0xff]
      %v5118 = vld [vmem:[%s5116 + $0x8] sm:$0xff]
      %vm5119 = vcmask 719872
      %v5121 = vsel %vm5119, %v5118, 0
      %5123 = vmatpush.msra.mxu0 %v4894
      %5124 = vmatpush.msra.mxu0 %v3882
      %5125 = vmatpush.msra.mxu0 %v3874
      %5126 = vmatpush.msra.mxu0 %v3866
      %5127 = vmatpush.msra.mxu0 %v4827
      %5128 = vmatpush.msra.mxu0 %v4826
      %5129 = vmatpush.msra.mxu0 %v4825
      %5130 = vmatpush.msra.mxu0 %v4755
      %5131 = vmatpush.msra.mxu0 %v4754
      %5132 = vmatpush.msra.mxu0 %v4753
      %5133 = vmatpush.msra.mxu0 %v4683
      %5134 = vmatpush.msra.mxu0 %v4682
      %5135 = vmatpush.msra.mxu0 %v4681
      %5136 = vmatpush.msra.mxu0 %v4611
      %5137 = vmatpush.msra.mxu0 %v4610
      %5138 = vmatpush.msra.mxu0 %v4609
      %5139 = vmatmul.f32.gmra.mxu0 %v5117
      %v5140 = vpop.f32.mrf.mxu0
      %v5141 = vadd.f32 0.0, %v5140
      %5142 = vdwg.mxu0
      %5143 = vmatpush.msra.mxu0 0.0
      %5144 = vmatpush.msra.mxu0 0.0
      %5145 = vmatpush.msra.mxu0 0.0
      %5146 = vmatpush.msra.mxu0 0.0
      %5147 = vmatpush.msra.mxu0 0.0
      %5148 = vmatpush.msra.mxu0 %v5112
      %5149 = vmatpush.msra.mxu0 %v5111
      %5150 = vmatpush.msra.mxu0 %v5110
      %5151 = vmatpush.msra.mxu0 %v5040
      %5152 = vmatpush.msra.mxu0 %v5039
      %5153 = vmatpush.msra.mxu0 %v5038
      %5154 = vmatpush.msra.mxu0 %v4968
      %5155 = vmatpush.msra.mxu0 %v4967
      %5156 = vmatpush.msra.mxu0 %v4966
      %5157 = vmatpush.msra.mxu0 %v4896
      %5158 = vmatpush.msra.mxu0 %v4895
      %5159 = vmatmul.f32.gmra.mxu0 %v5121
      %v5160 = vpop.f32.mrf.mxu0
      %v5161 = vadd.f32 %v5141, %v5160
      %5162 = vdwg.mxu0
      %5163 = vmatpush.msra.mxu0 %v4891
      %5164 = vmatpush.msra.mxu0 %v3883
      %5165 = vmatpush.msra.mxu0 %v3875
      %5166 = vmatpush.msra.mxu0 %v3867
      %5167 = vmatpush.msra.mxu0 %v4824
      %5168 = vmatpush.msra.mxu0 %v4823
      %5169 = vmatpush.msra.mxu0 %v4822
      %5170 = vmatpush.msra.mxu0 %v4752
      %5171 = vmatpush.msra.mxu0 %v4751
      %5172 = vmatpush.msra.mxu0 %v4750
      %5173 = vmatpush.msra.mxu0 %v4680
      %5174 = vmatpush.msra.mxu0 %v4679
      %5175 = vmatpush.msra.mxu0 %v4678
      %5176 = vmatpush.msra.mxu0 %v4608
      %5177 = vmatpush.msra.mxu0 %v4607
      %5178 = vmatpush.msra.mxu0 %v4606
      %5179 = vmatmul.f32.gmra.mxu0 %v5117
      %v5180 = vpop.f32.mrf.mxu0
      %v5181 = vadd.f32 0.0, %v5180
      %5182 = vdwg.mxu0
      %5183 = vmatpush.msra.mxu0 0.0
      %5184 = vmatpush.msra.mxu0 0.0
      %5185 = vmatpush.msra.mxu0 0.0
      %5186 = vmatpush.msra.mxu0 0.0
      %5187 = vmatpush.msra.mxu0 0.0
      %5188 = vmatpush.msra.mxu0 %v5109
      %5189 = vmatpush.msra.mxu0 %v5108
      %5190 = vmatpush.msra.mxu0 %v5107
      %5191 = vmatpush.msra.mxu0 %v5037
      %5192 = vmatpush.msra.mxu0 %v5036
      %5193 = vmatpush.msra.mxu0 %v5035
      %5194 = vmatpush.msra.mxu0 %v4965
      %5195 = vmatpush.msra.mxu0 %v4964
      %5196 = vmatpush.msra.mxu0 %v4963
      %5197 = vmatpush.msra.mxu0 %v4893
      %5198 = vmatpush.msra.mxu0 %v4892
      %5199 = vmatmul.f32.gmra.mxu0 %v5121
      %v5200 = vpop.f32.mrf.mxu0
      %v5201 = vadd.f32 %v5181, %v5200
      %5202 = vdwg.mxu0
      %5203 = vmatpush.msra.mxu0 %v4888
      %5204 = vmatpush.msra.mxu0 %v3884
      %5205 = vmatpush.msra.mxu0 %v3876
      %5206 = vmatpush.msra.mxu0 %v3868
      %5207 = vmatpush.msra.mxu0 %v4821
      %5208 = vmatpush.msra.mxu0 %v4820
      %5209 = vmatpush.msra.mxu0 %v4819
      %5210 = vmatpush.msra.mxu0 %v4749
      %5211 = vmatpush.msra.mxu0 %v4748
      %5212 = vmatpush.msra.mxu0 %v4747
      %5213 = vmatpush.msra.mxu0 %v4677
      %5214 = vmatpush.msra.mxu0 %v4676
      %5215 = vmatpush.msra.mxu0 %v4675
      %5216 = vmatpush.msra.mxu0 %v4605
      %5217 = vmatpush.msra.mxu0 %v4604
      %5218 = vmatpush.msra.mxu0 %v4603
      %5219 = vmatmul.f32.gmra.mxu0 %v5117
      %v5220 = vpop.f32.mrf.mxu0
      %v5221 = vadd.f32 0.0, %v5220
      %5222 = vdwg.mxu0
      %5223 = vmatpush.msra.mxu0 0.0
      %5224 = vmatpush.msra.mxu0 0.0
      %5225 = vmatpush.msra.mxu0 0.0
      %5226 = vmatpush.msra.mxu0 0.0
      %5227 = vmatpush.msra.mxu0 0.0
      %5228 = vmatpush.msra.mxu0 %v5106
      %5229 = vmatpush.msra.mxu0 %v5105
      %5230 = vmatpush.msra.mxu0 %v5104
      %5231 = vmatpush.msra.mxu0 %v5034
      %5232 = vmatpush.msra.mxu0 %v5033
      %5233 = vmatpush.msra.mxu0 %v5032
      %5234 = vmatpush.msra.mxu0 %v4962
      %5235 = vmatpush.msra.mxu0 %v4961
      %5236 = vmatpush.msra.mxu0 %v4960
      %5237 = vmatpush.msra.mxu0 %v4890
      %5238 = vmatpush.msra.mxu0 %v4889
      %5239 = vmatmul.f32.gmra.mxu0 %v5121
      %v5240 = vpop.f32.mrf.mxu0
      %v5241 = vadd.f32 %v5221, %v5240
      %5242 = vdwg.mxu0
      %5243 = vmatpush.msra.mxu0 %v4885
      %5244 = vmatpush.msra.mxu0 %v3885
      %5245 = vmatpush.msra.mxu0 %v3877
      %5246 = vmatpush.msra.mxu0 %v3869
      %5247 = vmatpush.msra.mxu0 %v4818
      %5248 = vmatpush.msra.mxu0 %v4817
      %5249 = vmatpush.msra.mxu0 %v4816
      %5250 = vmatpush.msra.mxu0 %v4746
      %5251 = vmatpush.msra.mxu0 %v4745
      %5252 = vmatpush.msra.mxu0 %v4744
      %5253 = vmatpush.msra.mxu0 %v4674
      %5254 = vmatpush.msra.mxu0 %v4673
      %5255 = vmatpush.msra.mxu0 %v4672
      %5256 = vmatpush.msra.mxu0 %v4602
      %5257 = vmatpush.msra.mxu0 %v4601
      %5258 = vmatpush.msra.mxu0 %v4600
      %5259 = vmatmul.f32.gmra.mxu0 %v5117
      %v5260 = vpop.f32.mrf.mxu0
      %v5261 = vadd.f32 0.0, %v5260
      %5262 = vdwg.mxu0
      %5263 = vmatpush.msra.mxu0 0.0
      %5264 = vmatpush.msra.mxu0 0.0
      %5265 = vmatpush.msra.mxu0 0.0
      %5266 = vmatpush.msra.mxu0 0.0
      %5267 = vmatpush.msra.mxu0 0.0
      %5268 = vmatpush.msra.mxu0 %v5103
      %5269 = vmatpush.msra.mxu0 %v5102
      %5270 = vmatpush.msra.mxu0 %v5101
      %5271 = vmatpush.msra.mxu0 %v5031
      %5272 = vmatpush.msra.mxu0 %v5030
      %5273 = vmatpush.msra.mxu0 %v5029
      %5274 = vmatpush.msra.mxu0 %v4959
      %5275 = vmatpush.msra.mxu0 %v4958
      %5276 = vmatpush.msra.mxu0 %v4957
      %5277 = vmatpush.msra.mxu0 %v4887
      %5278 = vmatpush.msra.mxu0 %v4886
      %5279 = vmatmul.f32.gmra.mxu0 %v5121
      %v5280 = vpop.f32.mrf.mxu0
      %v5281 = vadd.f32 %v5261, %v5280
      %5282 = vdwg.mxu0
      %5283 = vmatpush.msra.mxu0 %v4882
      %5284 = vmatpush.msra.mxu0 %v3886
      %5285 = vmatpush.msra.mxu0 %v3878
      %5286 = vmatpush.msra.mxu0 %v3870
      %5287 = vmatpush.msra.mxu0 %v4815
      %5288 = vmatpush.msra.mxu0 %v4814
      %5289 = vmatpush.msra.mxu0 %v4813
      %5290 = vmatpush.msra.mxu0 %v4743
      %5291 = vmatpush.msra.mxu0 %v4742
      %5292 = vmatpush.msra.mxu0 %v4741
      %5293 = vmatpush.msra.mxu0 %v4671
      %5294 = vmatpush.msra.mxu0 %v4670
      %5295 = vmatpush.msra.mxu0 %v4669
      %5296 = vmatpush.msra.mxu0 %v4599
      %5297 = vmatpush.msra.mxu0 %v4598
      %5298 = vmatpush.msra.mxu0 %v4597
      %5299 = vmatmul.f32.gmra.mxu0 %v5117
      %v5300 = vpop.f32.mrf.mxu0
      %v5301 = vadd.f32 0.0, %v5300
      %5302 = vdwg.mxu0
      %5303 = vmatpush.msra.mxu0 0.0
      %5304 = vmatpush.msra.mxu0 0.0
      %5305 = vmatpush.msra.mxu0 0.0
      %5306 = vmatpush.msra.mxu0 0.0
      %5307 = vmatpush.msra.mxu0 0.0
      %5308 = vmatpush.msra.mxu0 %v5100
      %5309 = vmatpush.msra.mxu0 %v5099
      %5310 = vmatpush.msra.mxu0 %v5098
      %5311 = vmatpush.msra.mxu0 %v5028
      %5312 = vmatpush.msra.mxu0 %v5027
      %5313 = vmatpush.msra.mxu0 %v5026
      %5314 = vmatpush.msra.mxu0 %v4956
      %5315 = vmatpush.msra.mxu0 %v4955
      %5316 = vmatpush.msra.mxu0 %v4954
      %5317 = vmatpush.msra.mxu0 %v4884
      %5318 = vmatpush.msra.mxu0 %v4883
      %5319 = vmatmul.f32.gmra.mxu0 %v5121
      %v5320 = vpop.f32.mrf.mxu0
      %v5321 = vadd.f32 %v5301, %v5320
      %5322 = vdwg.mxu0
      %5323 = vmatpush.msra.mxu0 %v4879
      %5324 = vmatpush.msra.mxu0 %v3887
      %5325 = vmatpush.msra.mxu0 %v3879
      %5326 = vmatpush.msra.mxu0 %v3871
      %5327 = vmatpush.msra.mxu0 %v4812
      %5328 = vmatpush.msra.mxu0 %v4811
      %5329 = vmatpush.msra.mxu0 %v4810
      %5330 = vmatpush.msra.mxu0 %v4740
      %5331 = vmatpush.msra.mxu0 %v4739
      %5332 = vmatpush.msra.mxu0 %v4738
      %5333 = vmatpush.msra.mxu0 %v4668
      %5334 = vmatpush.msra.mxu0 %v4667
      %5335 = vmatpush.msra.mxu0 %v4666
      %5336 = vmatpush.msra.mxu0 %v4596
      %5337 = vmatpush.msra.mxu0 %v4595
      %5338 = vmatpush.msra.mxu0 %v4594
      %5339 = vmatmul.f32.gmra.mxu0 %v5117
      %v5340 = vpop.f32.mrf.mxu0
      %v5341 = vadd.f32 0.0, %v5340
      %5342 = vdwg.mxu0
      %5343 = vmatpush.msra.mxu0 0.0
      %5344 = vmatpush.msra.mxu0 0.0
      %5345 = vmatpush.msra.mxu0 0.0
      %5346 = vmatpush.msra.mxu0 0.0
      %5347 = vmatpush.msra.mxu0 0.0
      %5348 = vmatpush.msra.mxu0 %v5097
      %5349 = vmatpush.msra.mxu0 %v5096
      %5350 = vmatpush.msra.mxu0 %v5095
      %5351 = vmatpush.msra.mxu0 %v5025
      %5352 = vmatpush.msra.mxu0 %v5024
      %5353 = vmatpush.msra.mxu0 %v5023
      %5354 = vmatpush.msra.mxu0 %v4953
      %5355 = vmatpush.msra.mxu0 %v4952
      %5356 = vmatpush.msra.mxu0 %v4951
      %5357 = vmatpush.msra.mxu0 %v4881
      %5358 = vmatpush.msra.mxu0 %v4880
      %5359 = vmatmul.f32.gmra.mxu0 %v5121
      %v5360 = vpop.f32.mrf.mxu0
      %v5361 = vadd.f32 %v5341, %v5360
      %5362 = vdwg.mxu0
      %5363 = vmatpush.msra.mxu0 %v4876
      %5364 = vmatpush.msra.mxu0 %v3888
      %5365 = vmatpush.msra.mxu0 %v3880
      %5366 = vmatpush.msra.mxu0 %v3872
      %5367 = vmatpush.msra.mxu0 %v4809
      %5368 = vmatpush.msra.mxu0 %v4808
      %5369 = vmatpush.msra.mxu0 %v4807
      %5370 = vmatpush.msra.mxu0 %v4737
      %5371 = vmatpush.msra.mxu0 %v4736
      %5372 = vmatpush.msra.mxu0 %v4735
      %5373 = vmatpush.msra.mxu0 %v4665
      %5374 = vmatpush.msra.mxu0 %v4664
      %5375 = vmatpush.msra.mxu0 %v4663
      %5376 = vmatpush.msra.mxu0 %v4593
      %5377 = vmatpush.msra.mxu0 %v4592
      %5378 = vmatpush.msra.mxu0 %v4591
      %5379 = vmatmul.f32.gmra.mxu0 %v5117
      %v5380 = vpop.f32.mrf.mxu0
      %v5381 = vadd.f32 0.0, %v5380
      %5382 = vdwg.mxu0
      %5383 = vmatpush.msra.mxu0 0.0
      %5384 = vmatpush.msra.mxu0 0.0
      %5385 = vmatpush.msra.mxu0 0.0
      %5386 = vmatpush.msra.mxu0 0.0
      %5387 = vmatpush.msra.mxu0 0.0
      %5388 = vmatpush.msra.mxu0 %v5094
      %5389 = vmatpush.msra.mxu0 %v5093
      %5390 = vmatpush.msra.mxu0 %v5092
      %5391 = vmatpush.msra.mxu0 %v5022
      %5392 = vmatpush.msra.mxu0 %v5021
      %5393 = vmatpush.msra.mxu0 %v5020
      %5394 = vmatpush.msra.mxu0 %v4950
      %5395 = vmatpush.msra.mxu0 %v4949
      %5396 = vmatpush.msra.mxu0 %v4948
      %5397 = vmatpush.msra.mxu0 %v4878
      %5398 = vmatpush.msra.mxu0 %v4877
      %5399 = vmatmul.f32.gmra.mxu0 %v5121
      %v5400 = vpop.f32.mrf.mxu0
      %v5401 = vadd.f32 %v5381, %v5400
      %5402 = vdwg.mxu0
      %5403 = vmatpush.msra.mxu0 %v4897
      %5404 = vmatpush.msra.mxu0 %v3889
      %5405 = vmatpush.msra.mxu0 %v3881
      %5406 = vmatpush.msra.mxu0 %v3873
      %5407 = vmatpush.msra.mxu0 %v4806
      %5408 = vmatpush.msra.mxu0 %v4805
      %5409 = vmatpush.msra.mxu0 %v4804
      %5410 = vmatpush.msra.mxu0 %v4734
      %5411 = vmatpush.msra.mxu0 %v4733
      %5412 = vmatpush.msra.mxu0 %v4732
      %5413 = vmatpush.msra.mxu0 %v4662
      %5414 = vmatpush.msra.mxu0 %v4661
      %5415 = vmatpush.msra.mxu0 %v4660
      %5416 = vmatpush.msra.mxu0 %v4590
      %5417 = vmatpush.msra.mxu0 %v4589
      %5418 = vmatpush.msra.mxu0 %v4588
      %5419 = vmatmul.f32.gmra.mxu0 %v5117
      %v5420 = vpop.f32.mrf.mxu0
      %v5421 = vadd.f32 0.0, %v5420
      %5422 = vdwg.mxu0
      %5423 = vmatpush.msra.mxu0 0.0
      %5424 = vmatpush.msra.mxu0 0.0
      %5425 = vmatpush.msra.mxu0 0.0
      %5426 = vmatpush.msra.mxu0 0.0
      %5427 = vmatpush.msra.mxu0 0.0
      %5428 = vmatpush.msra.mxu0 %v5115
      %5429 = vmatpush.msra.mxu0 %v5114
      %5430 = vmatpush.msra.mxu0 %v5113
      %5431 = vmatpush.msra.mxu0 %v5043
      %5432 = vmatpush.msra.mxu0 %v5042
      %5433 = vmatpush.msra.mxu0 %v5041
      %5434 = vmatpush.msra.mxu0 %v4971
      %5435 = vmatpush.msra.mxu0 %v4970
      %5436 = vmatpush.msra.mxu0 %v4969
      %5437 = vmatpush.msra.mxu0 %v4899
      %5438 = vmatpush.msra.mxu0 %v4898
      %5439 = vmatmul.f32.gmra.mxu0 %v5121
      %v5440 = vpop.f32.mrf.mxu0
      %v5441 = vadd.f32 %v5421, %v5440
      %5442 = vdwg.mxu0
      %v5444 = vsel %vm5119, %v4539, 0
      %5446 = vmatpush.msra.mxu0 %v4319
      %5447 = vmatpush.msra.mxu0 %v4249
      %5448 = vmatpush.msra.mxu0 %v4248
      %5449 = vmatpush.msra.mxu0 %v4247
      %5450 = vmatpush.msra.mxu0 %v4177
      %5451 = vmatpush.msra.mxu0 %v4176
      %5452 = vmatpush.msra.mxu0 %v4175
      %5453 = vmatpush.msra.mxu0 %v4105
      %5454 = vmatpush.msra.mxu0 %v4104
      %5455 = vmatpush.msra.mxu0 %v4103
      %5456 = vmatpush.msra.mxu0 %v4033
      %5457 = vmatpush.msra.mxu0 %v4032
      %5458 = vmatpush.msra.mxu0 %v4031
      %5459 = vmatpush.msra.mxu0 %v3961
      %5460 = vmatpush.msra.mxu0 %v3960
      %5461 = vmatpush.msra.mxu0 %v3959
      %5462 = vmatmul.f32.gmra.mxu0 %v4538
      %v5463 = vpop.f32.mrf.mxu0
      %v5464 = vadd.f32 %v5161, %v5463
      %5465 = vdwg.mxu0
      %5466 = vmatpush.msra.mxu0 0.0
      %5467 = vmatpush.msra.mxu0 0.0
      %5468 = vmatpush.msra.mxu0 0.0
      %5469 = vmatpush.msra.mxu0 0.0
      %5470 = vmatpush.msra.mxu0 0.0
      %5471 = vmatpush.msra.mxu0 %v4537
      %5472 = vmatpush.msra.mxu0 %v4536
      %5473 = vmatpush.msra.mxu0 %v4535
      %5474 = vmatpush.msra.mxu0 %v4465
      %5475 = vmatpush.msra.mxu0 %v4464
      %5476 = vmatpush.msra.mxu0 %v4463
      %5477 = vmatpush.msra.mxu0 %v4393
      %5478 = vmatpush.msra.mxu0 %v4392
      %5479 = vmatpush.msra.mxu0 %v4391
      %5480 = vmatpush.msra.mxu0 %v4321
      %5481 = vmatpush.msra.mxu0 %v4320
      %5482 = vmatmul.f32.gmra.mxu0 %v5444
      %v5483 = vpop.f32.mrf.mxu0
      %v5484 = vadd.f32 %v5464, %v5483
      %5485 = vdwg.mxu0
      %5486 = vmatpush.msra.mxu0 %v4316
      %5487 = vmatpush.msra.mxu0 %v4246
      %5488 = vmatpush.msra.mxu0 %v4245
      %5489 = vmatpush.msra.mxu0 %v4244
      %5490 = vmatpush.msra.mxu0 %v4174
      %5491 = vmatpush.msra.mxu0 %v4173
      %5492 = vmatpush.msra.mxu0 %v4172
      %5493 = vmatpush.msra.mxu0 %v4102
      %5494 = vmatpush.msra.mxu0 %v4101
      %5495 = vmatpush.msra.mxu0 %v4100
      %5496 = vmatpush.msra.mxu0 %v4030
      %5497 = vmatpush.msra.mxu0 %v4029
      %5498 = vmatpush.msra.mxu0 %v4028
      %5499 = vmatpush.msra.mxu0 %v3958
      %5500 = vmatpush.msra.mxu0 %v3957
      %5501 = vmatpush.msra.mxu0 %v3956
      %5502 = vmatmul.f32.gmra.mxu0 %v4538
      %v5503 = vpop.f32.mrf.mxu0
      %v5504 = vadd.f32 %v5201, %v5503
      %5505 = vdwg.mxu0
      %5506 = vmatpush.msra.mxu0 0.0
      %5507 = vmatpush.msra.mxu0 0.0
      %5508 = vmatpush.msra.mxu0 0.0
      %5509 = vmatpush.msra.mxu0 0.0
      %5510 = vmatpush.msra.mxu0 0.0
      %5511 = vmatpush.msra.mxu0 %v4534
      %5512 = vmatpush.msra.mxu0 %v4533
      %5513 = vmatpush.msra.mxu0 %v4532
      %5514 = vmatpush.msra.mxu0 %v4462
      %5515 = vmatpush.msra.mxu0 %v4461
      %5516 = vmatpush.msra.mxu0 %v4460
      %5517 = vmatpush.msra.mxu0 %v4390
      %5518 = vmatpush.msra.mxu0 %v4389
      %5519 = vmatpush.msra.mxu0 %v4388
      %5520 = vmatpush.msra.mxu0 %v4318
      %5521 = vmatpush.msra.mxu0 %v4317
      %5522 = vmatmul.f32.gmra.mxu0 %v5444
      %v5523 = vpop.f32.mrf.mxu0
      %v5524 = vadd.f32 %v5504, %v5523
      %5525 = vdwg.mxu0
      %5526 = vmatpush.msra.mxu0 %v4313
      %5527 = vmatpush.msra.mxu0 %v4243
      %5528 = vmatpush.msra.mxu0 %v4242
      %5529 = vmatpush.msra.mxu0 %v4241
      %5530 = vmatpush.msra.mxu0 %v4171
      %5531 = vmatpush.msra.mxu0 %v4170
      %5532 = vmatpush.msra.mxu0 %v4169
      %5533 = vmatpush.msra.mxu0 %v4099
      %5534 = vmatpush.msra.mxu0 %v4098
      %5535 = vmatpush.msra.mxu0 %v4097
      %5536 = vmatpush.msra.mxu0 %v4027
      %5537 = vmatpush.msra.mxu0 %v4026
      %5538 = vmatpush.msra.mxu0 %v4025
      %5539 = vmatpush.msra.mxu0 %v3955
      %5540 = vmatpush.msra.mxu0 %v3954
      %5541 = vmatpush.msra.mxu0 %v3953
      %5542 = vmatmul.f32.gmra.mxu0 %v4538
      %v5543 = vpop.f32.mrf.mxu0
      %v5544 = vadd.f32 %v5241, %v5543
      %5545 = vdwg.mxu0
      %5546 = vmatpush.msra.mxu0 0.0
      %5547 = vmatpush.msra.mxu0 0.0
      %5548 = vmatpush.msra.mxu0 0.0
      %5549 = vmatpush.msra.mxu0 0.0
      %5550 = vmatpush.msra.mxu0 0.0
      %5551 = vmatpush.msra.mxu0 %v4531
      %5552 = vmatpush.msra.mxu0 %v4530
      %5553 = vmatpush.msra.mxu0 %v4529
      %5554 = vmatpush.msra.mxu0 %v4459
      %5555 = vmatpush.msra.mxu0 %v4458
      %5556 = vmatpush.msra.mxu0 %v4457
      %5557 = vmatpush.msra.mxu0 %v4387
      %5558 = vmatpush.msra.mxu0 %v4386
      %5559 = vmatpush.msra.mxu0 %v4385
      %5560 = vmatpush.msra.mxu0 %v4315
      %5561 = vmatpush.msra.mxu0 %v4314
      %5562 = vmatmul.f32.gmra.mxu0 %v5444
      %v5563 = vpop.f32.mrf.mxu0
      %v5564 = vadd.f32 %v5544, %v5563
      %5565 = vdwg.mxu0
      %5566 = vmatpush.msra.mxu0 %v4310
      %5567 = vmatpush.msra.mxu0 %v4240
      %5568 = vmatpush.msra.mxu0 %v4239
      %5569 = vmatpush.msra.mxu0 %v4238
      %5570 = vmatpush.msra.mxu0 %v4168
      %5571 = vmatpush.msra.mxu0 %v4167
      %5572 = vmatpush.msra.mxu0 %v4166
      %5573 = vmatpush.msra.mxu0 %v4096
      %5574 = vmatpush.msra.mxu0 %v4095
      %5575 = vmatpush.msra.mxu0 %v4094
      %5576 = vmatpush.msra.mxu0 %v4024
      %5577 = vmatpush.msra.mxu0 %v4023
      %5578 = vmatpush.msra.mxu0 %v4022
      %5579 = vmatpush.msra.mxu0 %v3952
      %5580 = vmatpush.msra.mxu0 %v3951
      %5581 = vmatpush.msra.mxu0 %v3950
      %5582 = vmatmul.f32.gmra.mxu0 %v4538
      %v5583 = vpop.f32.mrf.mxu0
      %v5584 = vadd.f32 %v5281, %v5583
      %5585 = vdwg.mxu0
      %5586 = vmatpush.msra.mxu0 0.0
      %5587 = vmatpush.msra.mxu0 0.0
      %5588 = vmatpush.msra.mxu0 0.0
      %5589 = vmatpush.msra.mxu0 0.0
      %5590 = vmatpush.msra.mxu0 0.0
      %5591 = vmatpush.msra.mxu0 %v4528
      %5592 = vmatpush.msra.mxu0 %v4527
      %5593 = vmatpush.msra.mxu0 %v4526
      %5594 = vmatpush.msra.mxu0 %v4456
      %5595 = vmatpush.msra.mxu0 %v4455
      %5596 = vmatpush.msra.mxu0 %v4454
      %5597 = vmatpush.msra.mxu0 %v4384
      %5598 = vmatpush.msra.mxu0 %v4383
      %5599 = vmatpush.msra.mxu0 %v4382
      %5600 = vmatpush.msra.mxu0 %v4312
      %5601 = vmatpush.msra.mxu0 %v4311
      %5602 = vmatmul.f32.gmra.mxu0 %v5444
      %v5603 = vpop.f32.mrf.mxu0
      %v5604 = vadd.f32 %v5584, %v5603
      %5605 = vdwg.mxu0
      %5606 = vmatpush.msra.mxu0 %v4307
      %5607 = vmatpush.msra.mxu0 %v4237
      %5608 = vmatpush.msra.mxu0 %v4236
      %5609 = vmatpush.msra.mxu0 %v4235
      %5610 = vmatpush.msra.mxu0 %v4165
      %5611 = vmatpush.msra.mxu0 %v4164
      %5612 = vmatpush.msra.mxu0 %v4163
      %5613 = vmatpush.msra.mxu0 %v4093
      %5614 = vmatpush.msra.mxu0 %v4092
      %5615 = vmatpush.msra.mxu0 %v4091
      %5616 = vmatpush.msra.mxu0 %v4021
      %5617 = vmatpush.msra.mxu0 %v4020
      %5618 = vmatpush.msra.mxu0 %v4019
      %5619 = vmatpush.msra.mxu0 %v3949
      %5620 = vmatpush.msra.mxu0 %v3948
      %5621 = vmatpush.msra.mxu0 %v3947
      %5622 = vmatmul.f32.gmra.mxu0 %v4538
      %v5623 = vpop.f32.mrf.mxu0
      %v5624 = vadd.f32 %v5321, %v5623
      %5625 = vdwg.mxu0
      %5626 = vmatpush.msra.mxu0 0.0
      %5627 = vmatpush.msra.mxu0 0.0
      %5628 = vmatpush.msra.mxu0 0.0
      %5629 = vmatpush.msra.mxu0 0.0
      %5630 = vmatpush.msra.mxu0 0.0
      %5631 = vmatpush.msra.mxu0 %v4525
      %5632 = vmatpush.msra.mxu0 %v4524
      %5633 = vmatpush.msra.mxu0 %v4523
      %5634 = vmatpush.msra.mxu0 %v4453
      %5635 = vmatpush.msra.mxu0 %v4452
      %5636 = vmatpush.msra.mxu0 %v4451
      %5637 = vmatpush.msra.mxu0 %v4381
      %5638 = vmatpush.msra.mxu0 %v4380
      %5639 = vmatpush.msra.mxu0 %v4379
      %5640 = vmatpush.msra.mxu0 %v4309
      %5641 = vmatpush.msra.mxu0 %v4308
      %5642 = vmatmul.f32.gmra.mxu0 %v5444
      %v5643 = vpop.f32.mrf.mxu0
      %v5644 = vadd.f32 %v5624, %v5643
      %5645 = vdwg.mxu0
      %5646 = vmatpush.msra.mxu0 %v4304
      %5647 = vmatpush.msra.mxu0 %v4234
      %5648 = vmatpush.msra.mxu0 %v4233
      %5649 = vmatpush.msra.mxu0 %v4232
      %5650 = vmatpush.msra.mxu0 %v4162
      %5651 = vmatpush.msra.mxu0 %v4161
      %5652 = vmatpush.msra.mxu0 %v4160
      %5653 = vmatpush.msra.mxu0 %v4090
      %5654 = vmatpush.msra.mxu0 %v4089
      %5655 = vmatpush.msra.mxu0 %v4088
      %5656 = vmatpush.msra.mxu0 %v4018
      %5657 = vmatpush.msra.mxu0 %v4017
      %5658 = vmatpush.msra.mxu0 %v4016
      %5659 = vmatpush.msra.mxu0 %v3946
      %5660 = vmatpush.msra.mxu0 %v3945
      %5661 = vmatpush.msra.mxu0 %v3944
      %5662 = vmatmul.f32.gmra.mxu0 %v4538
      %v5663 = vpop.f32.mrf.mxu0
      %v5664 = vadd.f32 %v5361, %v5663
      %5665 = vdwg.mxu0
      %5666 = vmatpush.msra.mxu0 0.0
      %5667 = vmatpush.msra.mxu0 0.0
      %5668 = vmatpush.msra.mxu0 0.0
      %5669 = vmatpush.msra.mxu0 0.0
      %5670 = vmatpush.msra.mxu0 0.0
      %5671 = vmatpush.msra.mxu0 %v4522
      %5672 = vmatpush.msra.mxu0 %v4521
      %5673 = vmatpush.msra.mxu0 %v4520
      %5674 = vmatpush.msra.mxu0 %v4450
      %5675 = vmatpush.msra.mxu0 %v4449
      %5676 = vmatpush.msra.mxu0 %v4448
      %5677 = vmatpush.msra.mxu0 %v4378
      %5678 = vmatpush.msra.mxu0 %v4377
      %5679 = vmatpush.msra.mxu0 %v4376
      %5680 = vmatpush.msra.mxu0 %v4306
      %5681 = vmatpush.msra.mxu0 %v4305
      %5682 = vmatmul.f32.gmra.mxu0 %v5444
      %v5683 = vpop.f32.mrf.mxu0
      %v5684 = vadd.f32 %v5664, %v5683
      %5685 = vdwg.mxu0
      %5686 = vmatpush.msra.mxu0 %v4301
      %5687 = vmatpush.msra.mxu0 %v4231
      %5688 = vmatpush.msra.mxu0 %v4230
      %5689 = vmatpush.msra.mxu0 %v4229
      %5690 = vmatpush.msra.mxu0 %v4159
      %5691 = vmatpush.msra.mxu0 %v4158
      %5692 = vmatpush.msra.mxu0 %v4157
      %5693 = vmatpush.msra.mxu0 %v4087
      %5694 = vmatpush.msra.mxu0 %v4086
      %5695 = vmatpush.msra.mxu0 %v4085
      %5696 = vmatpush.msra.mxu0 %v4015
      %5697 = vmatpush.msra.mxu0 %v4014
      %5698 = vmatpush.msra.mxu0 %v4013
      %5699 = vmatpush.msra.mxu0 %v3943
      %5700 = vmatpush.msra.mxu0 %v3942
      %5701 = vmatpush.msra.mxu0 %v3941
      %5702 = vmatmul.f32.gmra.mxu0 %v4538
      %v5703 = vpop.f32.mrf.mxu0
      %v5704 = vadd.f32 %v5401, %v5703
      %5705 = vdwg.mxu0
      %5706 = vmatpush.msra.mxu0 0.0
      %5707 = vmatpush.msra.mxu0 0.0
      %5708 = vmatpush.msra.mxu0 0.0
      %5709 = vmatpush.msra.mxu0 0.0
      %5710 = vmatpush.msra.mxu0 0.0
      %5711 = vmatpush.msra.mxu0 %v4519
      %5712 = vmatpush.msra.mxu0 %v4518
      %5713 = vmatpush.msra.mxu0 %v4517
      %5714 = vmatpush.msra.mxu0 %v4447
      %5715 = vmatpush.msra.mxu0 %v4446
      %5716 = vmatpush.msra.mxu0 %v4445
      %5717 = vmatpush.msra.mxu0 %v4375
      %5718 = vmatpush.msra.mxu0 %v4374
      %5719 = vmatpush.msra.mxu0 %v4373
      %5720 = vmatpush.msra.mxu0 %v4303
      %5721 = vmatpush.msra.mxu0 %v4302
      %5722 = vmatmul.f32.gmra.mxu0 %v5444
      %v5723 = vpop.f32.mrf.mxu0
      %v5724 = vadd.f32 %v5704, %v5723
      %5725 = vdwg.mxu0
      %5726 = vmatpush.msra.mxu0 %v4298
      %5727 = vmatpush.msra.mxu0 %v4228
      %5728 = vmatpush.msra.mxu0 %v4227
      %5729 = vmatpush.msra.mxu0 %v4226
      %5730 = vmatpush.msra.mxu0 %v4156
      %5731 = vmatpush.msra.mxu0 %v4155
      %5732 = vmatpush.msra.mxu0 %v4154
      %5733 = vmatpush.msra.mxu0 %v4084
      %5734 = vmatpush.msra.mxu0 %v4083
      %5735 = vmatpush.msra.mxu0 %v4082
      %5736 = vmatpush.msra.mxu0 %v4012
      %5737 = vmatpush.msra.mxu0 %v4011
      %5738 = vmatpush.msra.mxu0 %v4010
      %5739 = vmatpush.msra.mxu0 %v3940
      %5740 = vmatpush.msra.mxu0 %v3939
      %5741 = vmatpush.msra.mxu0 %v3938
      %5742 = vmatmul.f32.gmra.mxu0 %v4538
      %v5743 = vpop.f32.mrf.mxu0
      %v5744 = vadd.f32 %v5441, %v5743
      %5745 = vdwg.mxu0
      %5746 = vmatpush.msra.mxu0 0.0
      %5747 = vmatpush.msra.mxu0 0.0
      %5748 = vmatpush.msra.mxu0 0.0
      %5749 = vmatpush.msra.mxu0 0.0
      %5750 = vmatpush.msra.mxu0 0.0
      %5751 = vmatpush.msra.mxu0 %v4516
      %5752 = vmatpush.msra.mxu0 %v4515
      %5753 = vmatpush.msra.mxu0 %v4514
      %5754 = vmatpush.msra.mxu0 %v4444
      %5755 = vmatpush.msra.mxu0 %v4443
      %5756 = vmatpush.msra.mxu0 %v4442
      %5757 = vmatpush.msra.mxu0 %v4372
      %5758 = vmatpush.msra.mxu0 %v4371
      %5759 = vmatpush.msra.mxu0 %v4370
      %5760 = vmatpush.msra.mxu0 %v4300
      %5761 = vmatpush.msra.mxu0 %v4299
      %5762 = vmatmul.f32.gmra.mxu0 %v5444
      %v5763 = vpop.f32.mrf.mxu0
      %v5764 = vadd.f32 %v5744, %v5763
      %5765 = vdwg.mxu0
      %5766 = vrot.lane.b32.xlu0 %v3866, 39
      %v5767 = vpop.permute.xlu0 %5766
      %5768 = vrot.lane.b32.xlu0 %v3874, 39
      %v5769 = vpop.permute.xlu0 %5768
      %5770 = vrot.lane.b32.xlu0 %v3882, 39
      %v5771 = vpop.permute.xlu0 %5770
      %5772 = vrot.lane.b32.xlu0 %v3867, 39
      %v5773 = vpop.permute.xlu0 %5772
      %5774 = vrot.lane.b32.xlu0 %v3875, 39
      %v5775 = vpop.permute.xlu0 %5774
      %5776 = vrot.lane.b32.xlu0 %v3883, 39
      %v5777 = vpop.permute.xlu0 %5776
      %5778 = vrot.lane.b32.xlu0 %v3868, 39
      %v5779 = vpop.permute.xlu0 %5778
      %5780 = vrot.lane.b32.xlu0 %v3876, 39
      %v5781 = vpop.permute.xlu0 %5780
      %5782 = vrot.lane.b32.xlu0 %v3884, 39
      %v5783 = vpop.permute.xlu0 %5782
      %5784 = vrot.lane.b32.xlu0 %v3869, 39
      %v5785 = vpop.permute.xlu0 %5784
      %5786 = vrot.lane.b32.xlu0 %v3877, 39
      %v5787 = vpop.permute.xlu0 %5786
      %5788 = vrot.lane.b32.xlu0 %v3885, 39
      %v5789 = vpop.permute.xlu0 %5788
      %5790 = vrot.lane.b32.xlu0 %v3870, 39
      %v5791 = vpop.permute.xlu0 %5790
      %5792 = vrot.lane.b32.xlu0 %v3878, 39
      %v5793 = vpop.permute.xlu0 %5792
      %5794 = vrot.lane.b32.xlu0 %v3886, 39
      %v5795 = vpop.permute.xlu0 %5794
      %5796 = vrot.lane.b32.xlu0 %v3871, 39
      %v5797 = vpop.permute.xlu0 %5796
      %5798 = vrot.lane.b32.xlu0 %v3879, 39
      %v5799 = vpop.permute.xlu0 %5798
      %5800 = vrot.lane.b32.xlu0 %v3887, 39
      %v5801 = vpop.permute.xlu0 %5800
      %5802 = vrot.lane.b32.xlu0 %v3872, 39
      %v5803 = vpop.permute.xlu0 %5802
      %5804 = vrot.lane.b32.xlu0 %v3880, 39
      %v5805 = vpop.permute.xlu0 %5804
      %5806 = vrot.lane.b32.xlu0 %v3888, 39
      %v5807 = vpop.permute.xlu0 %5806
      %5808 = vrot.lane.b32.xlu0 %v3873, 39
      %v5809 = vpop.permute.xlu0 %5808
      %5810 = vrot.lane.b32.xlu0 %v3881, 39
      %v5811 = vpop.permute.xlu0 %5810
      %5812 = vrot.lane.b32.xlu0 %v3889, 39
      %v5813 = vpop.permute.xlu0 %5812
      %v5814 = vsel %vm1105, %v5803, %v5809
      %v5815 = vsel %vm1105, %v5805, %v5811
      %v5816 = vsel %vm1105, %v5807, %v5813
      %v5817 = vsel %vm1105, %v5797, %v5803
      %v5818 = vsel %vm1105, %v5799, %v5805
      %v5819 = vsel %vm1105, %v5801, %v5807
      %v5820 = vsel %vm1105, %v5791, %v5797
      %v5821 = vsel %vm1105, %v5793, %v5799
      %v5822 = vsel %vm1105, %v5795, %v5801
      %v5823 = vsel %vm1105, %v5785, %v5791
      %v5824 = vsel %vm1105, %v5787, %v5793
      %v5825 = vsel %vm1105, %v5789, %v5795
      %v5826 = vsel %vm1105, %v5779, %v5785
      %v5827 = vsel %vm1105, %v5781, %v5787
      %v5828 = vsel %vm1105, %v5783, %v5789
      %v5829 = vsel %vm1105, %v5773, %v5779
      %v5830 = vsel %vm1105, %v5775, %v5781
      %v5831 = vsel %vm1105, %v5777, %v5783
      %v5832 = vsel %vm1105, %v5767, %v5773
      %v5833 = vsel %vm1105, %v5769, %v5775
      %v5834 = vsel %vm1105, %v5771, %v5777
      %v5835 = vsel %vm1105, %v5809, %v5767
      %v5836 = vsel %vm1105, %v5811, %v5769
      %v5837 = vsel %vm1105, %v5813, %v5771
      %5838 = vrot.lane.b32.xlu0 %v3866, 38
      %v5839 = vpop.permute.xlu0 %5838
      %5840 = vrot.lane.b32.xlu0 %v3874, 38
      %v5841 = vpop.permute.xlu0 %5840
      %5842 = vrot.lane.b32.xlu0 %v3882, 38
      %v5843 = vpop.permute.xlu0 %5842
      %5844 = vrot.lane.b32.xlu0 %v3867, 38
      %v5845 = vpop.permute.xlu0 %5844
      %5846 = vrot.lane.b32.xlu0 %v3875, 38
      %v5847 = vpop.permute.xlu0 %5846
      %5848 = vrot.lane.b32.xlu0 %v3883, 38
      %v5849 = vpop.permute.xlu0 %5848
      %5850 = vrot.lane.b32.xlu0 %v3868, 38
      %v5851 = vpop.permute.xlu0 %5850
      %5852 = vrot.lane.b32.xlu0 %v3876, 38
      %v5853 = vpop.permute.xlu0 %5852
      %5854 = vrot.lane.b32.xlu0 %v3884, 38
      %v5855 = vpop.permute.xlu0 %5854
      %5856 = vrot.lane.b32.xlu0 %v3869, 38
      %v5857 = vpop.permute.xlu0 %5856
      %5858 = vrot.lane.b32.xlu0 %v3877, 38
      %v5859 = vpop.permute.xlu0 %5858
      %5860 = vrot.lane.b32.xlu0 %v3885, 38
      %v5861 = vpop.permute.xlu0 %5860
      %5862 = vrot.lane.b32.xlu0 %v3870, 38
      %v5863 = vpop.permute.xlu0 %5862
      %5864 = vrot.lane.b32.xlu0 %v3878, 38
      %v5865 = vpop.permute.xlu0 %5864
      %5866 = vrot.lane.b32.xlu0 %v3886, 38
      %v5867 = vpop.permute.xlu0 %5866
      %5868 = vrot.lane.b32.xlu0 %v3871, 38
      %v5869 = vpop.permute.xlu0 %5868
      %5870 = vrot.lane.b32.xlu0 %v3879, 38
      %v5871 = vpop.permute.xlu0 %5870
      %5872 = vrot.lane.b32.xlu0 %v3887, 38
      %v5873 = vpop.permute.xlu0 %5872
      %5874 = vrot.lane.b32.xlu0 %v3872, 38
      %v5875 = vpop.permute.xlu0 %5874
      %5876 = vrot.lane.b32.xlu0 %v3880, 38
      %v5877 = vpop.permute.xlu0 %5876
      %5878 = vrot.lane.b32.xlu0 %v3888, 38
      %v5879 = vpop.permute.xlu0 %5878
      %5880 = vrot.lane.b32.xlu0 %v3873, 38
      %v5881 = vpop.permute.xlu0 %5880
      %5882 = vrot.lane.b32.xlu0 %v3881, 38
      %v5883 = vpop.permute.xlu0 %5882
      %5884 = vrot.lane.b32.xlu0 %v3889, 38
      %v5885 = vpop.permute.xlu0 %5884
      %v5886 = vsel %vm1130, %v5875, %v5881
      %v5887 = vsel %vm1130, %v5877, %v5883
      %v5888 = vsel %vm1130, %v5879, %v5885
      %v5889 = vsel %vm1130, %v5869, %v5875
      %v5890 = vsel %vm1130, %v5871, %v5877
      %v5891 = vsel %vm1130, %v5873, %v5879
      %v5892 = vsel %vm1130, %v5863, %v5869
      %v5893 = vsel %vm1130, %v5865, %v5871
      %v5894 = vsel %vm1130, %v5867, %v5873
      %v5895 = vsel %vm1130, %v5857, %v5863
      %v5896 = vsel %vm1130, %v5859, %v5865
      %v5897 = vsel %vm1130, %v5861, %v5867
      %v5898 = vsel %vm1130, %v5851, %v5857
      %v5899 = vsel %vm1130, %v5853, %v5859
      %v5900 = vsel %vm1130, %v5855, %v5861
      %v5901 = vsel %vm1130, %v5845, %v5851
      %v5902 = vsel %vm1130, %v5847, %v5853
      %v5903 = vsel %vm1130, %v5849, %v5855
      %v5904 = vsel %vm1130, %v5839, %v5845
      %v5905 = vsel %vm1130, %v5841, %v5847
      %v5906 = vsel %vm1130, %v5843, %v5849
      %v5907 = vsel %vm1130, %v5881, %v5839
      %v5908 = vsel %vm1130, %v5883, %v5841
      %v5909 = vsel %vm1130, %v5885, %v5843
      %5910 = vrot.lane.b32.xlu0 %v3866, 37
      %v5911 = vpop.permute.xlu0 %5910
      %5912 = vrot.lane.b32.xlu0 %v3874, 37
      %v5913 = vpop.permute.xlu0 %5912
      %5914 = vrot.lane.b32.xlu0 %v3882, 37
      %v5915 = vpop.permute.xlu0 %5914
      %5916 = vrot.lane.b32.xlu0 %v3867, 37
      %v5917 = vpop.permute.xlu0 %5916
      %5918 = vrot.lane.b32.xlu0 %v3875, 37
      %v5919 = vpop.permute.xlu0 %5918
      %5920 = vrot.lane.b32.xlu0 %v3883, 37
      %v5921 = vpop.permute.xlu0 %5920
      %5922 = vrot.lane.b32.xlu0 %v3868, 37
      %v5923 = vpop.permute.xlu0 %5922
      %5924 = vrot.lane.b32.xlu0 %v3876, 37
      %v5925 = vpop.permute.xlu0 %5924
      %5926 = vrot.lane.b32.xlu0 %v3884, 37
      %v5927 = vpop.permute.xlu0 %5926
      %5928 = vrot.lane.b32.xlu0 %v3869, 37
      %v5929 = vpop.permute.xlu0 %5928
      %5930 = vrot.lane.b32.xlu0 %v3877, 37
      %v5931 = vpop.permute.xlu0 %5930
      %5932 = vrot.lane.b32.xlu0 %v3885, 37
      %v5933 = vpop.permute.xlu0 %5932
      %5934 = vrot.lane.b32.xlu0 %v3870, 37
      %v5935 = vpop.permute.xlu0 %5934
      %5936 = vrot.lane.b32.xlu0 %v3878, 37
      %v5937 = vpop.permute.xlu0 %5936
      %5938 = vrot.lane.b32.xlu0 %v3886, 37
      %v5939 = vpop.permute.xlu0 %5938
      %5940 = vrot.lane.b32.xlu0 %v3871, 37
      %v5941 = vpop.permute.xlu0 %5940
      %5942 = vrot.lane.b32.xlu0 %v3879, 37
      %v5943 = vpop.permute.xlu0 %5942
      %5944 = vrot.lane.b32.xlu0 %v3887, 37
      %v5945 = vpop.permute.xlu0 %5944
      %5946 = vrot.lane.b32.xlu0 %v3872, 37
      %v5947 = vpop.permute.xlu0 %5946
      %5948 = vrot.lane.b32.xlu0 %v3880, 37
      %v5949 = vpop.permute.xlu0 %5948
      %5950 = vrot.lane.b32.xlu0 %v3888, 37
      %v5951 = vpop.permute.xlu0 %5950
      %5952 = vrot.lane.b32.xlu0 %v3873, 37
      %v5953 = vpop.permute.xlu0 %5952
      %5954 = vrot.lane.b32.xlu0 %v3881, 37
      %v5955 = vpop.permute.xlu0 %5954
      %5956 = vrot.lane.b32.xlu0 %v3889, 37
      %v5957 = vpop.permute.xlu0 %5956
      %v5958 = vsel %vm1155, %v5947, %v5953
      %v5959 = vsel %vm1155, %v5949, %v5955
      %v5960 = vsel %vm1155, %v5951, %v5957
      %v5961 = vsel %vm1155, %v5941, %v5947
      %v5962 = vsel %vm1155, %v5943, %v5949
      %v5963 = vsel %vm1155, %v5945, %v5951
      %v5964 = vsel %vm1155, %v5935, %v5941
      %v5965 = vsel %vm1155, %v5937, %v5943
      %v5966 = vsel %vm1155, %v5939, %v5945
      %v5967 = vsel %vm1155, %v5929, %v5935
      %v5968 = vsel %vm1155, %v5931, %v5937
      %v5969 = vsel %vm1155, %v5933, %v5939
      %v5970 = vsel %vm1155, %v5923, %v5929
      %v5971 = vsel %vm1155, %v5925, %v5931
      %v5972 = vsel %vm1155, %v5927, %v5933
      %v5973 = vsel %vm1155, %v5917, %v5923
      %v5974 = vsel %vm1155, %v5919, %v5925
      %v5975 = vsel %vm1155, %v5921, %v5927
      %v5976 = vsel %vm1155, %v5911, %v5917
      %v5977 = vsel %vm1155, %v5913, %v5919
      %v5978 = vsel %vm1155, %v5915, %v5921
      %v5979 = vsel %vm1155, %v5953, %v5911
      %v5980 = vsel %vm1155, %v5955, %v5913
      %v5981 = vsel %vm1155, %v5957, %v5915
      %5982 = vrot.lane.b32.xlu0 %v3866, 29
      %v5983 = vpop.permute.xlu0 %5982
      %5984 = vrot.lane.b32.xlu0 %v3874, 29
      %v5985 = vpop.permute.xlu0 %5984
      %5986 = vrot.lane.b32.xlu0 %v3882, 29
      %v5987 = vpop.permute.xlu0 %5986
      %5988 = vrot.lane.b32.xlu0 %v3867, 29
      %v5989 = vpop.permute.xlu0 %5988
      %5990 = vrot.lane.b32.xlu0 %v3875, 29
      %v5991 = vpop.permute.xlu0 %5990
      %5992 = vrot.lane.b32.xlu0 %v3883, 29
      %v5993 = vpop.permute.xlu0 %5992
      %5994 = vrot.lane.b32.xlu0 %v3868, 29
      %v5995 = vpop.permute.xlu0 %5994
      %5996 = vrot.lane.b32.xlu0 %v3876, 29
      %v5997 = vpop.permute.xlu0 %5996
      %5998 = vrot.lane.b32.xlu0 %v3884, 29
      %v5999 = vpop.permute.xlu0 %5998
      %6000 = vrot.lane.b32.xlu0 %v3869, 29
      %v6001 = vpop.permute.xlu0 %6000
      %6002 = vrot.lane.b32.xlu0 %v3877, 29
      %v6003 = vpop.permute.xlu0 %6002
      %6004 = vrot.lane.b32.xlu0 %v3885, 29
      %v6005 = vpop.permute.xlu0 %6004
      %6006 = vrot.lane.b32.xlu0 %v3870, 29
      %v6007 = vpop.permute.xlu0 %6006
      %6008 = vrot.lane.b32.xlu0 %v3878, 29
      %v6009 = vpop.permute.xlu0 %6008
      %6010 = vrot.lane.b32.xlu0 %v3886, 29
      %v6011 = vpop.permute.xlu0 %6010
      %6012 = vrot.lane.b32.xlu0 %v3871, 29
      %v6013 = vpop.permute.xlu0 %6012
      %6014 = vrot.lane.b32.xlu0 %v3879, 29
      %v6015 = vpop.permute.xlu0 %6014
      %6016 = vrot.lane.b32.xlu0 %v3887, 29
      %v6017 = vpop.permute.xlu0 %6016
      %6018 = vrot.lane.b32.xlu0 %v3872, 29
      %v6019 = vpop.permute.xlu0 %6018
      %6020 = vrot.lane.b32.xlu0 %v3880, 29
      %v6021 = vpop.permute.xlu0 %6020
      %6022 = vrot.lane.b32.xlu0 %v3888, 29
      %v6023 = vpop.permute.xlu0 %6022
      %6024 = vrot.lane.b32.xlu0 %v3873, 29
      %v6025 = vpop.permute.xlu0 %6024
      %6026 = vrot.lane.b32.xlu0 %v3881, 29
      %v6027 = vpop.permute.xlu0 %6026
      %6028 = vrot.lane.b32.xlu0 %v3889, 29
      %v6029 = vpop.permute.xlu0 %6028
      %v6030 = vsel %vm1180, %v6019, %v6025
      %v6031 = vsel %vm1180, %v6021, %v6027
      %v6032 = vsel %vm1180, %v6023, %v6029
      %v6033 = vsel %vm1180, %v6013, %v6019
      %v6034 = vsel %vm1180, %v6015, %v6021
      %v6035 = vsel %vm1180, %v6017, %v6023
      %v6036 = vsel %vm1180, %v6007, %v6013
      %v6037 = vsel %vm1180, %v6009, %v6015
      %v6038 = vsel %vm1180, %v6011, %v6017
      %v6039 = vsel %vm1180, %v6001, %v6007
      %v6040 = vsel %vm1180, %v6003, %v6009
      %v6041 = vsel %vm1180, %v6005, %v6011
      %v6042 = vsel %vm1180, %v5995, %v6001
      %v6043 = vsel %vm1180, %v5997, %v6003
      %v6044 = vsel %vm1180, %v5999, %v6005
      %v6045 = vsel %vm1180, %v5989, %v5995
      %v6046 = vsel %vm1180, %v5991, %v5997
      %v6047 = vsel %vm1180, %v5993, %v5999
      %v6048 = vsel %vm1180, %v5983, %v5989
      %v6049 = vsel %vm1180, %v5985, %v5991
      %v6050 = vsel %vm1180, %v5987, %v5993
      %v6051 = vsel %vm1180, %v6025, %v5983
      %v6052 = vsel %vm1180, %v6027, %v5985
      %v6053 = vsel %vm1180, %v6029, %v5987
      %6054 = vrot.lane.b32.xlu0 %v3866, 28
      %v6055 = vpop.permute.xlu0 %6054
      %6056 = vrot.lane.b32.xlu0 %v3874, 28
      %v6057 = vpop.permute.xlu0 %6056
      %6058 = vrot.lane.b32.xlu0 %v3882, 28
      %v6059 = vpop.permute.xlu0 %6058
      %6060 = vrot.lane.b32.xlu0 %v3867, 28
      %v6061 = vpop.permute.xlu0 %6060
      %6062 = vrot.lane.b32.xlu0 %v3875, 28
      %v6063 = vpop.permute.xlu0 %6062
      %6064 = vrot.lane.b32.xlu0 %v3883, 28
      %v6065 = vpop.permute.xlu0 %6064
      %6066 = vrot.lane.b32.xlu0 %v3868, 28
      %v6067 = vpop.permute.xlu0 %6066
      %6068 = vrot.lane.b32.xlu0 %v3876, 28
      %v6069 = vpop.permute.xlu0 %6068
      %6070 = vrot.lane.b32.xlu0 %v3884, 28
      %v6071 = vpop.permute.xlu0 %6070
      %6072 = vrot.lane.b32.xlu0 %v3869, 28
      %v6073 = vpop.permute.xlu0 %6072
      %6074 = vrot.lane.b32.xlu0 %v3877, 28
      %v6075 = vpop.permute.xlu0 %6074
      %6076 = vrot.lane.b32.xlu0 %v3885, 28
      %v6077 = vpop.permute.xlu0 %6076
      %6078 = vrot.lane.b32.xlu0 %v3870, 28
      %v6079 = vpop.permute.xlu0 %6078
      %6080 = vrot.lane.b32.xlu0 %v3878, 28
      %v6081 = vpop.permute.xlu0 %6080
      %6082 = vrot.lane.b32.xlu0 %v3886, 28
      %v6083 = vpop.permute.xlu0 %6082
      %6084 = vrot.lane.b32.xlu0 %v3871, 28
      %v6085 = vpop.permute.xlu0 %6084
      %6086 = vrot.lane.b32.xlu0 %v3879, 28
      %v6087 = vpop.permute.xlu0 %6086
      %6088 = vrot.lane.b32.xlu0 %v3887, 28
      %v6089 = vpop.permute.xlu0 %6088
      %6090 = vrot.lane.b32.xlu0 %v3872, 28
      %v6091 = vpop.permute.xlu0 %6090
      %6092 = vrot.lane.b32.xlu0 %v3880, 28
      %v6093 = vpop.permute.xlu0 %6092
      %6094 = vrot.lane.b32.xlu0 %v3888, 28
      %v6095 = vpop.permute.xlu0 %6094
      %6096 = vrot.lane.b32.xlu0 %v3873, 28
      %v6097 = vpop.permute.xlu0 %6096
      %6098 = vrot.lane.b32.xlu0 %v3881, 28
      %v6099 = vpop.permute.xlu0 %6098
      %6100 = vrot.lane.b32.xlu0 %v3889, 28
      %v6101 = vpop.permute.xlu0 %6100
      %v6102 = vsel %vm1205, %v6091, %v6097
      %v6103 = vsel %vm1205, %v6093, %v6099
      %v6104 = vsel %vm1205, %v6095, %v6101
      %v6105 = vsel %vm1205, %v6085, %v6091
      %v6106 = vsel %vm1205, %v6087, %v6093
      %v6107 = vsel %vm1205, %v6089, %v6095
      %v6108 = vsel %vm1205, %v6079, %v6085
      %v6109 = vsel %vm1205, %v6081, %v6087
      %v6110 = vsel %vm1205, %v6083, %v6089
      %v6111 = vsel %vm1205, %v6073, %v6079
      %v6112 = vsel %vm1205, %v6075, %v6081
      %v6113 = vsel %vm1205, %v6077, %v6083
      %v6114 = vsel %vm1205, %v6067, %v6073
      %v6115 = vsel %vm1205, %v6069, %v6075
      %v6116 = vsel %vm1205, %v6071, %v6077
      %v6117 = vsel %vm1205, %v6061, %v6067
      %v6118 = vsel %vm1205, %v6063, %v6069
      %v6119 = vsel %vm1205, %v6065, %v6071
      %v6120 = vsel %vm1205, %v6055, %v6061
      %v6121 = vsel %vm1205, %v6057, %v6063
      %v6122 = vsel %vm1205, %v6059, %v6065
      %v6123 = vsel %vm1205, %v6097, %v6055
      %v6124 = vsel %vm1205, %v6099, %v6057
      %v6125 = vsel %vm1205, %v6101, %v6059
      %6126 = vrot.lane.b32.xlu0 %v3866, 27
      %v6127 = vpop.permute.xlu0 %6126
      %6128 = vrot.lane.b32.xlu0 %v3874, 27
      %v6129 = vpop.permute.xlu0 %6128
      %6130 = vrot.lane.b32.xlu0 %v3882, 27
      %v6131 = vpop.permute.xlu0 %6130
      %6132 = vrot.lane.b32.xlu0 %v3867, 27
      %v6133 = vpop.permute.xlu0 %6132
      %6134 = vrot.lane.b32.xlu0 %v3875, 27
      %v6135 = vpop.permute.xlu0 %6134
      %6136 = vrot.lane.b32.xlu0 %v3883, 27
      %v6137 = vpop.permute.xlu0 %6136
      %6138 = vrot.lane.b32.xlu0 %v3868, 27
      %v6139 = vpop.permute.xlu0 %6138
      %6140 = vrot.lane.b32.xlu0 %v3876, 27
      %v6141 = vpop.permute.xlu0 %6140
      %6142 = vrot.lane.b32.xlu0 %v3884, 27
      %v6143 = vpop.permute.xlu0 %6142
      %6144 = vrot.lane.b32.xlu0 %v3869, 27
      %v6145 = vpop.permute.xlu0 %6144
      %6146 = vrot.lane.b32.xlu0 %v3877, 27
      %v6147 = vpop.permute.xlu0 %6146
      %6148 = vrot.lane.b32.xlu0 %v3885, 27
      %v6149 = vpop.permute.xlu0 %6148
      %6150 = vrot.lane.b32.xlu0 %v3870, 27
      %v6151 = vpop.permute.xlu0 %6150
      %6152 = vrot.lane.b32.xlu0 %v3878, 27
      %v6153 = vpop.permute.xlu0 %6152
      %6154 = vrot.lane.b32.xlu0 %v3886, 27
      %v6155 = vpop.permute.xlu0 %6154
      %6156 = vrot.lane.b32.xlu0 %v3871, 27
      %v6157 = vpop.permute.xlu0 %6156
      %6158 = vrot.lane.b32.xlu0 %v3879, 27
      %v6159 = vpop.permute.xlu0 %6158
      %6160 = vrot.lane.b32.xlu0 %v3887, 27
      %v6161 = vpop.permute.xlu0 %6160
      %6162 = vrot.lane.b32.xlu0 %v3872, 27
      %v6163 = vpop.permute.xlu0 %6162
      %6164 = vrot.lane.b32.xlu0 %v3880, 27
      %v6165 = vpop.permute.xlu0 %6164
      %6166 = vrot.lane.b32.xlu0 %v3888, 27
      %v6167 = vpop.permute.xlu0 %6166
      %6168 = vrot.lane.b32.xlu0 %v3873, 27
      %v6169 = vpop.permute.xlu0 %6168
      %6170 = vrot.lane.b32.xlu0 %v3881, 27
      %v6171 = vpop.permute.xlu0 %6170
      %6172 = vrot.lane.b32.xlu0 %v3889, 27
      %v6173 = vpop.permute.xlu0 %6172
      %v6174 = vsel %vm1230, %v6163, %v6169
      %v6175 = vsel %vm1230, %v6165, %v6171
      %v6176 = vsel %vm1230, %v6167, %v6173
      %v6177 = vsel %vm1230, %v6157, %v6163
      %v6178 = vsel %vm1230, %v6159, %v6165
      %v6179 = vsel %vm1230, %v6161, %v6167
      %v6180 = vsel %vm1230, %v6151, %v6157
      %v6181 = vsel %vm1230, %v6153, %v6159
      %v6182 = vsel %vm1230, %v6155, %v6161
      %v6183 = vsel %vm1230, %v6145, %v6151
      %v6184 = vsel %vm1230, %v6147, %v6153
      %v6185 = vsel %vm1230, %v6149, %v6155
      %v6186 = vsel %vm1230, %v6139, %v6145
      %v6187 = vsel %vm1230, %v6141, %v6147
      %v6188 = vsel %vm1230, %v6143, %v6149
      %v6189 = vsel %vm1230, %v6133, %v6139
      %v6190 = vsel %vm1230, %v6135, %v6141
      %v6191 = vsel %vm1230, %v6137, %v6143
      %v6192 = vsel %vm1230, %v6127, %v6133
      %v6193 = vsel %vm1230, %v6129, %v6135
      %v6194 = vsel %vm1230, %v6131, %v6137
      %v6195 = vsel %vm1230, %v6169, %v6127
      %v6196 = vsel %vm1230, %v6171, %v6129
      %v6197 = vsel %vm1230, %v6173, %v6131
      %6198 = vrot.lane.b32.xlu0 %v3866, 19
      %v6199 = vpop.permute.xlu0 %6198
      %6200 = vrot.lane.b32.xlu0 %v3874, 19
      %v6201 = vpop.permute.xlu0 %6200
      %6202 = vrot.lane.b32.xlu0 %v3882, 19
      %v6203 = vpop.permute.xlu0 %6202
      %6204 = vrot.lane.b32.xlu0 %v3867, 19
      %v6205 = vpop.permute.xlu0 %6204
      %6206 = vrot.lane.b32.xlu0 %v3875, 19
      %v6207 = vpop.permute.xlu0 %6206
      %6208 = vrot.lane.b32.xlu0 %v3883, 19
      %v6209 = vpop.permute.xlu0 %6208
      %6210 = vrot.lane.b32.xlu0 %v3868, 19
      %v6211 = vpop.permute.xlu0 %6210
      %6212 = vrot.lane.b32.xlu0 %v3876, 19
      %v6213 = vpop.permute.xlu0 %6212
      %6214 = vrot.lane.b32.xlu0 %v3884, 19
      %v6215 = vpop.permute.xlu0 %6214
      %6216 = vrot.lane.b32.xlu0 %v3869, 19
      %v6217 = vpop.permute.xlu0 %6216
      %6218 = vrot.lane.b32.xlu0 %v3877, 19
      %v6219 = vpop.permute.xlu0 %6218
      %6220 = vrot.lane.b32.xlu0 %v3885, 19
      %v6221 = vpop.permute.xlu0 %6220
      %6222 = vrot.lane.b32.xlu0 %v3870, 19
      %v6223 = vpop.permute.xlu0 %6222
      %6224 = vrot.lane.b32.xlu0 %v3878, 19
      %v6225 = vpop.permute.xlu0 %6224
      %6226 = vrot.lane.b32.xlu0 %v3886, 19
      %v6227 = vpop.permute.xlu0 %6226
      %6228 = vrot.lane.b32.xlu0 %v3871, 19
      %v6229 = vpop.permute.xlu0 %6228
      %6230 = vrot.lane.b32.xlu0 %v3879, 19
      %v6231 = vpop.permute.xlu0 %6230
      %6232 = vrot.lane.b32.xlu0 %v3887, 19
      %v6233 = vpop.permute.xlu0 %6232
      %6234 = vrot.lane.b32.xlu0 %v3872, 19
      %v6235 = vpop.permute.xlu0 %6234
      %6236 = vrot.lane.b32.xlu0 %v3880, 19
      %v6237 = vpop.permute.xlu0 %6236
      %6238 = vrot.lane.b32.xlu0 %v3888, 19
      %v6239 = vpop.permute.xlu0 %6238
      %6240 = vrot.lane.b32.xlu0 %v3873, 19
      %v6241 = vpop.permute.xlu0 %6240
      %6242 = vrot.lane.b32.xlu0 %v3881, 19
      %v6243 = vpop.permute.xlu0 %6242
      %6244 = vrot.lane.b32.xlu0 %v3889, 19
      %v6245 = vpop.permute.xlu0 %6244
      %v6246 = vsel %vm1255, %v6235, %v6241
      %v6247 = vsel %vm1255, %v6237, %v6243
      %v6248 = vsel %vm1255, %v6239, %v6245
      %v6249 = vsel %vm1255, %v6229, %v6235
      %v6250 = vsel %vm1255, %v6231, %v6237
      %v6251 = vsel %vm1255, %v6233, %v6239
      %v6252 = vsel %vm1255, %v6223, %v6229
      %v6253 = vsel %vm1255, %v6225, %v6231
      %v6254 = vsel %vm1255, %v6227, %v6233
      %v6255 = vsel %vm1255, %v6217, %v6223
      %v6256 = vsel %vm1255, %v6219, %v6225
      %v6257 = vsel %vm1255, %v6221, %v6227
      %v6258 = vsel %vm1255, %v6211, %v6217
      %v6259 = vsel %vm1255, %v6213, %v6219
      %v6260 = vsel %vm1255, %v6215, %v6221
      %v6261 = vsel %vm1255, %v6205, %v6211
      %v6262 = vsel %vm1255, %v6207, %v6213
      %v6263 = vsel %vm1255, %v6209, %v6215
      %v6264 = vsel %vm1255, %v6199, %v6205
      %v6265 = vsel %vm1255, %v6201, %v6207
      %v6266 = vsel %vm1255, %v6203, %v6209
      %v6267 = vsel %vm1255, %v6241, %v6199
      %v6268 = vsel %vm1255, %v6243, %v6201
      %v6269 = vsel %vm1255, %v6245, %v6203
      %6270 = vrot.lane.b32.xlu0 %v3866, 18
      %v6271 = vpop.permute.xlu0 %6270
      %6272 = vrot.lane.b32.xlu0 %v3874, 18
      %v6273 = vpop.permute.xlu0 %6272
      %6274 = vrot.lane.b32.xlu0 %v3882, 18
      %v6275 = vpop.permute.xlu0 %6274
      %6276 = vrot.lane.b32.xlu0 %v3867, 18
      %v6277 = vpop.permute.xlu0 %6276
      %6278 = vrot.lane.b32.xlu0 %v3875, 18
      %v6279 = vpop.permute.xlu0 %6278
      %6280 = vrot.lane.b32.xlu0 %v3883, 18
      %v6281 = vpop.permute.xlu0 %6280
      %6282 = vrot.lane.b32.xlu0 %v3868, 18
      %v6283 = vpop.permute.xlu0 %6282
      %6284 = vrot.lane.b32.xlu0 %v3876, 18
      %v6285 = vpop.permute.xlu0 %6284
      %6286 = vrot.lane.b32.xlu0 %v3884, 18
      %v6287 = vpop.permute.xlu0 %6286
      %6288 = vrot.lane.b32.xlu0 %v3869, 18
      %v6289 = vpop.permute.xlu0 %6288
      %6290 = vrot.lane.b32.xlu0 %v3877, 18
      %v6291 = vpop.permute.xlu0 %6290
      %6292 = vrot.lane.b32.xlu0 %v3885, 18
      %v6293 = vpop.permute.xlu0 %6292
      %6294 = vrot.lane.b32.xlu0 %v3870, 18
      %v6295 = vpop.permute.xlu0 %6294
      %6296 = vrot.lane.b32.xlu0 %v3878, 18
      %v6297 = vpop.permute.xlu0 %6296
      %6298 = vrot.lane.b32.xlu0 %v3886, 18
      %v6299 = vpop.permute.xlu0 %6298
      %6300 = vrot.lane.b32.xlu0 %v3871, 18
      %v6301 = vpop.permute.xlu0 %6300
      %6302 = vrot.lane.b32.xlu0 %v3879, 18
      %v6303 = vpop.permute.xlu0 %6302
      %6304 = vrot.lane.b32.xlu0 %v3887, 18
      %v6305 = vpop.permute.xlu0 %6304
      %6306 = vrot.lane.b32.xlu0 %v3872, 18
      %v6307 = vpop.permute.xlu0 %6306
      %6308 = vrot.lane.b32.xlu0 %v3880, 18
      %v6309 = vpop.permute.xlu0 %6308
      %6310 = vrot.lane.b32.xlu0 %v3888, 18
      %v6311 = vpop.permute.xlu0 %6310
      %6312 = vrot.lane.b32.xlu0 %v3873, 18
      %v6313 = vpop.permute.xlu0 %6312
      %6314 = vrot.lane.b32.xlu0 %v3881, 18
      %v6315 = vpop.permute.xlu0 %6314
      %6316 = vrot.lane.b32.xlu0 %v3889, 18
      %v6317 = vpop.permute.xlu0 %6316
      %v6318 = vsel %vm1280, %v6307, %v6313
      %v6319 = vsel %vm1280, %v6309, %v6315
      %v6320 = vsel %vm1280, %v6311, %v6317
      %v6321 = vsel %vm1280, %v6301, %v6307
      %v6322 = vsel %vm1280, %v6303, %v6309
      %v6323 = vsel %vm1280, %v6305, %v6311
      %v6324 = vsel %vm1280, %v6295, %v6301
      %v6325 = vsel %vm1280, %v6297, %v6303
      %v6326 = vsel %vm1280, %v6299, %v6305
      %v6327 = vsel %vm1280, %v6289, %v6295
      %v6328 = vsel %vm1280, %v6291, %v6297
      %v6329 = vsel %vm1280, %v6293, %v6299
      %v6330 = vsel %vm1280, %v6283, %v6289
      %v6331 = vsel %vm1280, %v6285, %v6291
      %v6332 = vsel %vm1280, %v6287, %v6293
      %v6333 = vsel %vm1280, %v6277, %v6283
      %v6334 = vsel %vm1280, %v6279, %v6285
      %v6335 = vsel %vm1280, %v6281, %v6287
      %v6336 = vsel %vm1280, %v6271, %v6277
      %v6337 = vsel %vm1280, %v6273, %v6279
      %v6338 = vsel %vm1280, %v6275, %v6281
      %v6339 = vsel %vm1280, %v6313, %v6271
      %v6340 = vsel %vm1280, %v6315, %v6273
      %v6341 = vsel %vm1280, %v6317, %v6275
      %6342 = vrot.lane.b32.xlu0 %v3866, 17
      %v6343 = vpop.permute.xlu0 %6342
      %6344 = vrot.lane.b32.xlu0 %v3874, 17
      %v6345 = vpop.permute.xlu0 %6344
      %6346 = vrot.lane.b32.xlu0 %v3882, 17
      %v6347 = vpop.permute.xlu0 %6346
      %6348 = vrot.lane.b32.xlu0 %v3867, 17
      %v6349 = vpop.permute.xlu0 %6348
      %6350 = vrot.lane.b32.xlu0 %v3875, 17
      %v6351 = vpop.permute.xlu0 %6350
      %6352 = vrot.lane.b32.xlu0 %v3883, 17
      %v6353 = vpop.permute.xlu0 %6352
      %6354 = vrot.lane.b32.xlu0 %v3868, 17
      %v6355 = vpop.permute.xlu0 %6354
      %6356 = vrot.lane.b32.xlu0 %v3876, 17
      %v6357 = vpop.permute.xlu0 %6356
      %6358 = vrot.lane.b32.xlu0 %v3884, 17
      %v6359 = vpop.permute.xlu0 %6358
      %6360 = vrot.lane.b32.xlu0 %v3869, 17
      %v6361 = vpop.permute.xlu0 %6360
      %6362 = vrot.lane.b32.xlu0 %v3877, 17
      %v6363 = vpop.permute.xlu0 %6362
      %6364 = vrot.lane.b32.xlu0 %v3885, 17
      %v6365 = vpop.permute.xlu0 %6364
      %6366 = vrot.lane.b32.xlu0 %v3870, 17
      %v6367 = vpop.permute.xlu0 %6366
      %6368 = vrot.lane.b32.xlu0 %v3878, 17
      %v6369 = vpop.permute.xlu0 %6368
      %6370 = vrot.lane.b32.xlu0 %v3886, 17
      %v6371 = vpop.permute.xlu0 %6370
      %6372 = vrot.lane.b32.xlu0 %v3871, 17
      %v6373 = vpop.permute.xlu0 %6372
      %6374 = vrot.lane.b32.xlu0 %v3879, 17
      %v6375 = vpop.permute.xlu0 %6374
      %6376 = vrot.lane.b32.xlu0 %v3887, 17
      %v6377 = vpop.permute.xlu0 %6376
      %6378 = vrot.lane.b32.xlu0 %v3872, 17
      %v6379 = vpop.permute.xlu0 %6378
      %6380 = vrot.lane.b32.xlu0 %v3880, 17
      %v6381 = vpop.permute.xlu0 %6380
      %6382 = vrot.lane.b32.xlu0 %v3888, 17
      %v6383 = vpop.permute.xlu0 %6382
      %6384 = vrot.lane.b32.xlu0 %v3873, 17
      %v6385 = vpop.permute.xlu0 %6384
      %6386 = vrot.lane.b32.xlu0 %v3881, 17
      %v6387 = vpop.permute.xlu0 %6386
      %6388 = vrot.lane.b32.xlu0 %v3889, 17
      %v6389 = vpop.permute.xlu0 %6388
      %v6390 = vsel %vm1305, %v6379, %v6385
      %v6391 = vsel %vm1305, %v6381, %v6387
      %v6392 = vsel %vm1305, %v6383, %v6389
      %v6393 = vsel %vm1305, %v6373, %v6379
      %v6394 = vsel %vm1305, %v6375, %v6381
      %v6395 = vsel %vm1305, %v6377, %v6383
      %v6396 = vsel %vm1305, %v6367, %v6373
      %v6397 = vsel %vm1305, %v6369, %v6375
      %v6398 = vsel %vm1305, %v6371, %v6377
      %v6399 = vsel %vm1305, %v6361, %v6367
      %v6400 = vsel %vm1305, %v6363, %v6369
      %v6401 = vsel %vm1305, %v6365, %v6371
      %v6402 = vsel %vm1305, %v6355, %v6361
      %v6403 = vsel %vm1305, %v6357, %v6363
      %v6404 = vsel %vm1305, %v6359, %v6365
      %v6405 = vsel %vm1305, %v6349, %v6355
      %v6406 = vsel %vm1305, %v6351, %v6357
      %v6407 = vsel %vm1305, %v6353, %v6359
      %v6408 = vsel %vm1305, %v6343, %v6349
      %v6409 = vsel %vm1305, %v6345, %v6351
      %v6410 = vsel %vm1305, %v6347, %v6353
      %v6411 = vsel %vm1305, %v6385, %v6343
      %v6412 = vsel %vm1305, %v6387, %v6345
      %v6413 = vsel %vm1305, %v6389, %v6347
      %s6414 = scalar_lea.vmem %s4, 32
      %v6415 = vld [vmem:[%s6414] sm:$0xff]
      %v6416 = vld [vmem:[%s6414 + $0x8] sm:$0xff]
      %v6418 = vsel %vm5119, %v6416, 0
      %6420 = vmatpush.msra.mxu0 %v6192
      %6421 = vmatpush.msra.mxu0 %v6122
      %6422 = vmatpush.msra.mxu0 %v6121
      %6423 = vmatpush.msra.mxu0 %v6120
      %6424 = vmatpush.msra.mxu0 %v6050
      %6425 = vmatpush.msra.mxu0 %v6049
      %6426 = vmatpush.msra.mxu0 %v6048
      %6427 = vmatpush.msra.mxu0 %v5978
      %6428 = vmatpush.msra.mxu0 %v5977
      %6429 = vmatpush.msra.mxu0 %v5976
      %6430 = vmatpush.msra.mxu0 %v5906
      %6431 = vmatpush.msra.mxu0 %v5905
      %6432 = vmatpush.msra.mxu0 %v5904
      %6433 = vmatpush.msra.mxu0 %v5834
      %6434 = vmatpush.msra.mxu0 %v5833
      %6435 = vmatpush.msra.mxu0 %v5832
      %6436 = vmatmul.f32.gmra.mxu0 %v6415
      %v6437 = vpop.f32.mrf.mxu0
      %v6438 = vadd.f32 0.0, %v6437
      %6439 = vdwg.mxu0
      %6440 = vmatpush.msra.mxu0 0.0
      %6441 = vmatpush.msra.mxu0 0.0
      %6442 = vmatpush.msra.mxu0 0.0
      %6443 = vmatpush.msra.mxu0 0.0
      %6444 = vmatpush.msra.mxu0 0.0
      %6445 = vmatpush.msra.mxu0 %v6410
      %6446 = vmatpush.msra.mxu0 %v6409
      %6447 = vmatpush.msra.mxu0 %v6408
      %6448 = vmatpush.msra.mxu0 %v6338
      %6449 = vmatpush.msra.mxu0 %v6337
      %6450 = vmatpush.msra.mxu0 %v6336
      %6451 = vmatpush.msra.mxu0 %v6266
      %6452 = vmatpush.msra.mxu0 %v6265
      %6453 = vmatpush.msra.mxu0 %v6264
      %6454 = vmatpush.msra.mxu0 %v6194
      %6455 = vmatpush.msra.mxu0 %v6193
      %6456 = vmatmul.f32.gmra.mxu0 %v6418
      %v6457 = vpop.f32.mrf.mxu0
      %v6458 = vadd.f32 %v6438, %v6457
      %6459 = vdwg.mxu0
      %6460 = vmatpush.msra.mxu0 %v6189
      %6461 = vmatpush.msra.mxu0 %v6119
      %6462 = vmatpush.msra.mxu0 %v6118
      %6463 = vmatpush.msra.mxu0 %v6117
      %6464 = vmatpush.msra.mxu0 %v6047
      %6465 = vmatpush.msra.mxu0 %v6046
      %6466 = vmatpush.msra.mxu0 %v6045
      %6467 = vmatpush.msra.mxu0 %v5975
      %6468 = vmatpush.msra.mxu0 %v5974
      %6469 = vmatpush.msra.mxu0 %v5973
      %6470 = vmatpush.msra.mxu0 %v5903
      %6471 = vmatpush.msra.mxu0 %v5902
      %6472 = vmatpush.msra.mxu0 %v5901
      %6473 = vmatpush.msra.mxu0 %v5831
      %6474 = vmatpush.msra.mxu0 %v5830
      %6475 = vmatpush.msra.mxu0 %v5829
      %6476 = vmatmul.f32.gmra.mxu0 %v6415
      %v6477 = vpop.f32.mrf.mxu0
      %v6478 = vadd.f32 0.0, %v6477
      %6479 = vdwg.mxu0
      %6480 = vmatpush.msra.mxu0 0.0
      %6481 = vmatpush.msra.mxu0 0.0
      %6482 = vmatpush.msra.mxu0 0.0
      %6483 = vmatpush.msra.mxu0 0.0
      %6484 = vmatpush.msra.mxu0 0.0
      %6485 = vmatpush.msra.mxu0 %v6407
      %6486 = vmatpush.msra.mxu0 %v6406
      %6487 = vmatpush.msra.mxu0 %v6405
      %6488 = vmatpush.msra.mxu0 %v6335
      %6489 = vmatpush.msra.mxu0 %v6334
      %6490 = vmatpush.msra.mxu0 %v6333
      %6491 = vmatpush.msra.mxu0 %v6263
      %6492 = vmatpush.msra.mxu0 %v6262
      %6493 = vmatpush.msra.mxu0 %v6261
      %6494 = vmatpush.msra.mxu0 %v6191
      %6495 = vmatpush.msra.mxu0 %v6190
      %6496 = vmatmul.f32.gmra.mxu0 %v6418
      %v6497 = vpop.f32.mrf.mxu0
      %v6498 = vadd.f32 %v6478, %v6497
      %6499 = vdwg.mxu0
      %6500 = vmatpush.msra.mxu0 %v6186
      %6501 = vmatpush.msra.mxu0 %v6116
      %6502 = vmatpush.msra.mxu0 %v6115
      %6503 = vmatpush.msra.mxu0 %v6114
      %6504 = vmatpush.msra.mxu0 %v6044
      %6505 = vmatpush.msra.mxu0 %v6043
      %6506 = vmatpush.msra.mxu0 %v6042
      %6507 = vmatpush.msra.mxu0 %v5972
      %6508 = vmatpush.msra.mxu0 %v5971
      %6509 = vmatpush.msra.mxu0 %v5970
      %6510 = vmatpush.msra.mxu0 %v5900
      %6511 = vmatpush.msra.mxu0 %v5899
      %6512 = vmatpush.msra.mxu0 %v5898
      %6513 = vmatpush.msra.mxu0 %v5828
      %6514 = vmatpush.msra.mxu0 %v5827
      %6515 = vmatpush.msra.mxu0 %v5826
      %6516 = vmatmul.f32.gmra.mxu0 %v6415
      %v6517 = vpop.f32.mrf.mxu0
      %v6518 = vadd.f32 0.0, %v6517
      %6519 = vdwg.mxu0
      %6520 = vmatpush.msra.mxu0 0.0
      %6521 = vmatpush.msra.mxu0 0.0
      %6522 = vmatpush.msra.mxu0 0.0
      %6523 = vmatpush.msra.mxu0 0.0
      %6524 = vmatpush.msra.mxu0 0.0
      %6525 = vmatpush.msra.mxu0 %v6404
      %6526 = vmatpush.msra.mxu0 %v6403
      %6527 = vmatpush.msra.mxu0 %v6402
      %6528 = vmatpush.msra.mxu0 %v6332
      %6529 = vmatpush.msra.mxu0 %v6331
      %6530 = vmatpush.msra.mxu0 %v6330
      %6531 = vmatpush.msra.mxu0 %v6260
      %6532 = vmatpush.msra.mxu0 %v6259
      %6533 = vmatpush.msra.mxu0 %v6258
      %6534 = vmatpush.msra.mxu0 %v6188
      %6535 = vmatpush.msra.mxu0 %v6187
      %6536 = vmatmul.f32.gmra.mxu0 %v6418
      %v6537 = vpop.f32.mrf.mxu0
      %v6538 = vadd.f32 %v6518, %v6537
      %6539 = vdwg.mxu0
      %6540 = vmatpush.msra.mxu0 %v6183
      %6541 = vmatpush.msra.mxu0 %v6113
      %6542 = vmatpush.msra.mxu0 %v6112
      %6543 = vmatpush.msra.mxu0 %v6111
      %6544 = vmatpush.msra.mxu0 %v6041
      %6545 = vmatpush.msra.mxu0 %v6040
      %6546 = vmatpush.msra.mxu0 %v6039
      %6547 = vmatpush.msra.mxu0 %v5969
      %6548 = vmatpush.msra.mxu0 %v5968
      %6549 = vmatpush.msra.mxu0 %v5967
      %6550 = vmatpush.msra.mxu0 %v5897
      %6551 = vmatpush.msra.mxu0 %v5896
      %6552 = vmatpush.msra.mxu0 %v5895
      %6553 = vmatpush.msra.mxu0 %v5825
      %6554 = vmatpush.msra.mxu0 %v5824
      %6555 = vmatpush.msra.mxu0 %v5823
      %6556 = vmatmul.f32.gmra.mxu0 %v6415
      %v6557 = vpop.f32.mrf.mxu0
      %v6558 = vadd.f32 0.0, %v6557
      %6559 = vdwg.mxu0
      %6560 = vmatpush.msra.mxu0 0.0
      %6561 = vmatpush.msra.mxu0 0.0
      %6562 = vmatpush.msra.mxu0 0.0
      %6563 = vmatpush.msra.mxu0 0.0
      %6564 = vmatpush.msra.mxu0 0.0
      %6565 = vmatpush.msra.mxu0 %v6401
      %6566 = vmatpush.msra.mxu0 %v6400
      %6567 = vmatpush.msra.mxu0 %v6399
      %6568 = vmatpush.msra.mxu0 %v6329
      %6569 = vmatpush.msra.mxu0 %v6328
      %6570 = vmatpush.msra.mxu0 %v6327
      %6571 = vmatpush.msra.mxu0 %v6257
      %6572 = vmatpush.msra.mxu0 %v6256
      %6573 = vmatpush.msra.mxu0 %v6255
      %6574 = vmatpush.msra.mxu0 %v6185
      %6575 = vmatpush.msra.mxu0 %v6184
      %6576 = vmatmul.f32.gmra.mxu0 %v6418
      %v6577 = vpop.f32.mrf.mxu0
      %v6578 = vadd.f32 %v6558, %v6577
      %6579 = vdwg.mxu0
      %6580 = vmatpush.msra.mxu0 %v6180
      %6581 = vmatpush.msra.mxu0 %v6110
      %6582 = vmatpush.msra.mxu0 %v6109
      %6583 = vmatpush.msra.mxu0 %v6108
      %6584 = vmatpush.msra.mxu0 %v6038
      %6585 = vmatpush.msra.mxu0 %v6037
      %6586 = vmatpush.msra.mxu0 %v6036
      %6587 = vmatpush.msra.mxu0 %v5966
      %6588 = vmatpush.msra.mxu0 %v5965
      %6589 = vmatpush.msra.mxu0 %v5964
      %6590 = vmatpush.msra.mxu0 %v5894
      %6591 = vmatpush.msra.mxu0 %v5893
      %6592 = vmatpush.msra.mxu0 %v5892
      %6593 = vmatpush.msra.mxu0 %v5822
      %6594 = vmatpush.msra.mxu0 %v5821
      %6595 = vmatpush.msra.mxu0 %v5820
      %6596 = vmatmul.f32.gmra.mxu0 %v6415
      %v6597 = vpop.f32.mrf.mxu0
      %v6598 = vadd.f32 0.0, %v6597
      %6599 = vdwg.mxu0
      %6600 = vmatpush.msra.mxu0 0.0
      %6601 = vmatpush.msra.mxu0 0.0
      %6602 = vmatpush.msra.mxu0 0.0
      %6603 = vmatpush.msra.mxu0 0.0
      %6604 = vmatpush.msra.mxu0 0.0
      %6605 = vmatpush.msra.mxu0 %v6398
      %6606 = vmatpush.msra.mxu0 %v6397
      %6607 = vmatpush.msra.mxu0 %v6396
      %6608 = vmatpush.msra.mxu0 %v6326
      %6609 = vmatpush.msra.mxu0 %v6325
      %6610 = vmatpush.msra.mxu0 %v6324
      %6611 = vmatpush.msra.mxu0 %v6254
      %6612 = vmatpush.msra.mxu0 %v6253
      %6613 = vmatpush.msra.mxu0 %v6252
      %6614 = vmatpush.msra.mxu0 %v6182
      %6615 = vmatpush.msra.mxu0 %v6181
      %6616 = vmatmul.f32.gmra.mxu0 %v6418
      %v6617 = vpop.f32.mrf.mxu0
      %v6618 = vadd.f32 %v6598, %v6617
      %6619 = vdwg.mxu0
      %6620 = vmatpush.msra.mxu0 %v6177
      %6621 = vmatpush.msra.mxu0 %v6107
      %6622 = vmatpush.msra.mxu0 %v6106
      %6623 = vmatpush.msra.mxu0 %v6105
      %6624 = vmatpush.msra.mxu0 %v6035
      %6625 = vmatpush.msra.mxu0 %v6034
      %6626 = vmatpush.msra.mxu0 %v6033
      %6627 = vmatpush.msra.mxu0 %v5963
      %6628 = vmatpush.msra.mxu0 %v5962
      %6629 = vmatpush.msra.mxu0 %v5961
      %6630 = vmatpush.msra.mxu0 %v5891
      %6631 = vmatpush.msra.mxu0 %v5890
      %6632 = vmatpush.msra.mxu0 %v5889
      %6633 = vmatpush.msra.mxu0 %v5819
      %6634 = vmatpush.msra.mxu0 %v5818
      %6635 = vmatpush.msra.mxu0 %v5817
      %6636 = vmatmul.f32.gmra.mxu0 %v6415
      %v6637 = vpop.f32.mrf.mxu0
      %v6638 = vadd.f32 0.0, %v6637
      %6639 = vdwg.mxu0
      %6640 = vmatpush.msra.mxu0 0.0
      %6641 = vmatpush.msra.mxu0 0.0
      %6642 = vmatpush.msra.mxu0 0.0
      %6643 = vmatpush.msra.mxu0 0.0
      %6644 = vmatpush.msra.mxu0 0.0
      %6645 = vmatpush.msra.mxu0 %v6395
      %6646 = vmatpush.msra.mxu0 %v6394
      %6647 = vmatpush.msra.mxu0 %v6393
      %6648 = vmatpush.msra.mxu0 %v6323
      %6649 = vmatpush.msra.mxu0 %v6322
      %6650 = vmatpush.msra.mxu0 %v6321
      %6651 = vmatpush.msra.mxu0 %v6251
      %6652 = vmatpush.msra.mxu0 %v6250
      %6653 = vmatpush.msra.mxu0 %v6249
      %6654 = vmatpush.msra.mxu0 %v6179
      %6655 = vmatpush.msra.mxu0 %v6178
      %6656 = vmatmul.f32.gmra.mxu0 %v6418
      %v6657 = vpop.f32.mrf.mxu0
      %v6658 = vadd.f32 %v6638, %v6657
      %6659 = vdwg.mxu0
      %6660 = vmatpush.msra.mxu0 %v6174
      %6661 = vmatpush.msra.mxu0 %v6104
      %6662 = vmatpush.msra.mxu0 %v6103
      %6663 = vmatpush.msra.mxu0 %v6102
      %6664 = vmatpush.msra.mxu0 %v6032
      %6665 = vmatpush.msra.mxu0 %v6031
      %6666 = vmatpush.msra.mxu0 %v6030
      %6667 = vmatpush.msra.mxu0 %v5960
      %6668 = vmatpush.msra.mxu0 %v5959
      %6669 = vmatpush.msra.mxu0 %v5958
      %6670 = vmatpush.msra.mxu0 %v5888
      %6671 = vmatpush.msra.mxu0 %v5887
      %6672 = vmatpush.msra.mxu0 %v5886
      %6673 = vmatpush.msra.mxu0 %v5816
      %6674 = vmatpush.msra.mxu0 %v5815
      %6675 = vmatpush.msra.mxu0 %v5814
      %6676 = vmatmul.f32.gmra.mxu0 %v6415
      %v6677 = vpop.f32.mrf.mxu0
      %v6678 = vadd.f32 0.0, %v6677
      %6679 = vdwg.mxu0
      %6680 = vmatpush.msra.mxu0 0.0
      %6681 = vmatpush.msra.mxu0 0.0
      %6682 = vmatpush.msra.mxu0 0.0
      %6683 = vmatpush.msra.mxu0 0.0
      %6684 = vmatpush.msra.mxu0 0.0
      %6685 = vmatpush.msra.mxu0 %v6392
      %6686 = vmatpush.msra.mxu0 %v6391
      %6687 = vmatpush.msra.mxu0 %v6390
      %6688 = vmatpush.msra.mxu0 %v6320
      %6689 = vmatpush.msra.mxu0 %v6319
      %6690 = vmatpush.msra.mxu0 %v6318
      %6691 = vmatpush.msra.mxu0 %v6248
      %6692 = vmatpush.msra.mxu0 %v6247
      %6693 = vmatpush.msra.mxu0 %v6246
      %6694 = vmatpush.msra.mxu0 %v6176
      %6695 = vmatpush.msra.mxu0 %v6175
      %6696 = vmatmul.f32.gmra.mxu0 %v6418
      %v6697 = vpop.f32.mrf.mxu0
      %v6698 = vadd.f32 %v6678, %v6697
      %6699 = vdwg.mxu0
      %6700 = vmatpush.msra.mxu0 %v6195
      %6701 = vmatpush.msra.mxu0 %v6125
      %6702 = vmatpush.msra.mxu0 %v6124
      %6703 = vmatpush.msra.mxu0 %v6123
      %6704 = vmatpush.msra.mxu0 %v6053
      %6705 = vmatpush.msra.mxu0 %v6052
      %6706 = vmatpush.msra.mxu0 %v6051
      %6707 = vmatpush.msra.mxu0 %v5981
      %6708 = vmatpush.msra.mxu0 %v5980
      %6709 = vmatpush.msra.mxu0 %v5979
      %6710 = vmatpush.msra.mxu0 %v5909
      %6711 = vmatpush.msra.mxu0 %v5908
      %6712 = vmatpush.msra.mxu0 %v5907
      %6713 = vmatpush.msra.mxu0 %v5837
      %6714 = vmatpush.msra.mxu0 %v5836
      %6715 = vmatpush.msra.mxu0 %v5835
      %6716 = vmatmul.f32.gmra.mxu0 %v6415
      %v6717 = vpop.f32.mrf.mxu0
      %v6718 = vadd.f32 0.0, %v6717
      %6719 = vdwg.mxu0
      %6720 = vmatpush.msra.mxu0 0.0
      %6721 = vmatpush.msra.mxu0 0.0
      %6722 = vmatpush.msra.mxu0 0.0
      %6723 = vmatpush.msra.mxu0 0.0
      %6724 = vmatpush.msra.mxu0 0.0
      %6725 = vmatpush.msra.mxu0 %v6413
      %6726 = vmatpush.msra.mxu0 %v6412
      %6727 = vmatpush.msra.mxu0 %v6411
      %6728 = vmatpush.msra.mxu0 %v6341
      %6729 = vmatpush.msra.mxu0 %v6340
      %6730 = vmatpush.msra.mxu0 %v6339
      %6731 = vmatpush.msra.mxu0 %v6269
      %6732 = vmatpush.msra.mxu0 %v6268
      %6733 = vmatpush.msra.mxu0 %v6267
      %6734 = vmatpush.msra.mxu0 %v6197
      %6735 = vmatpush.msra.mxu0 %v6196
      %6736 = vmatmul.f32.gmra.mxu0 %v6418
      %v6737 = vpop.f32.mrf.mxu0
      %v6738 = vadd.f32 %v6718, %v6737
      %6739 = vdwg.mxu0
      %v6740 = vadd.f32 %v5484, %v6458
      %v6741 = vadd.f32 %v5524, %v6498
      %v6742 = vadd.f32 %v5564, %v6538
      %v6743 = vadd.f32 %v5604, %v6578
      %v6744 = vadd.f32 %v5644, %v6618
      %v6745 = vadd.f32 %v5684, %v6658
      %v6746 = vadd.f32 %v5724, %v6698
      %v6747 = vadd.f32 %v5764, %v6738
      %v6748 = vmax.f32 %v6740, 0.0
      %v6749 = vmax.f32 %v6741, 0.0
      %v6750 = vmax.f32 %v6742, 0.0
      %v6751 = vmax.f32 %v6743, 0.0
      %v6752 = vmax.f32 %v6744, 0.0
      %v6753 = vmax.f32 %v6745, 0.0
      %v6754 = vmax.f32 %v6746, 0.0
      %v6755 = vmax.f32 %v6747, 0.0
      %v6756 = vmul.f32 %v6748, %v1496
      %v6757 = vmul.f32 %v6749, %v1497
      %v6758 = vmul.f32 %v6750, %v1498
      %v6759 = vmul.f32 %v6751, %v1499
      %v6760 = vmul.f32 %v6752, %v1500
      %v6761 = vmul.f32 %v6753, %v1501
      %v6762 = vmul.f32 %v6754, %v1502
      %v6763 = vmul.f32 %v6755, %v1503
      %v6772 = vrot.slane %v6756, 4
      %v6773 = vrot.slane %v6757, 4
      %v6774 = vrot.slane %v6758, 4
      %v6775 = vrot.slane %v6759, 4
      %v6776 = vrot.slane %v6760, 4
      %v6777 = vrot.slane %v6761, 4
      %v6778 = vrot.slane %v6762, 4
      %v6779 = vrot.slane %v6763, 4
      %6788 = vst [vmem:[#allocation2 + $0x80] sm:$0xf0] %v6772
      %6789 = vst [vmem:[#allocation2 + $0x88] sm:$0xf0] %v6773
      %6790 = vst [vmem:[#allocation2 + $0x90] sm:$0xf0] %v6774
      %6791 = vst [vmem:[#allocation2 + $0x98] sm:$0xf0] %v6775
      %6792 = vst [vmem:[#allocation2 + $0xa0] sm:$0xf0] %v6776
      %6793 = vst [vmem:[#allocation2 + $0xa8] sm:$0xf0] %v6777
      %6794 = vst [vmem:[#allocation2 + $0xb0] sm:$0xf0] %v6778
      %6795 = vst [vmem:[#allocation2 + $0xb8] sm:$0xf0] %v6779
      %6796 = vst [vmem:[#allocation2 + $0xc0] sm:$0xf] %v6772
      %6797 = vst [vmem:[#allocation2 + $0xc8] sm:$0xf] %v6773
      %6798 = vst [vmem:[#allocation2 + $0xd0] sm:$0xf] %v6774
      %6799 = vst [vmem:[#allocation2 + $0xd8] sm:$0xf] %v6775
      %6800 = vst [vmem:[#allocation2 + $0xe0] sm:$0xf] %v6776
      %6801 = vst [vmem:[#allocation2 + $0xe8] sm:$0xf] %v6777
      %6802 = vst [vmem:[#allocation2 + $0xf0] sm:$0xf] %v6778
      %6803 = vst [vmem:[#allocation2 + $0xf8] sm:$0xf] %v6779
      %v6804 = vld [vmem:[%s5] sm:$0xf]
      %v6805 = vld [vmem:[#allocation2] sm:$0xff]
      %v6806 = vld [vmem:[#allocation2 + $0x8] sm:$0xff]
      %v6807 = vld [vmem:[#allocation2 + $0x10] sm:$0xff]
      %v6808 = vld [vmem:[#allocation2 + $0x18] sm:$0xff]
      %v6809 = vld [vmem:[#allocation2 + $0x20] sm:$0xff]
      %v6810 = vld [vmem:[#allocation2 + $0x28] sm:$0xff]
      %v6811 = vld [vmem:[#allocation2 + $0x30] sm:$0xff]
      %v6812 = vld [vmem:[#allocation2 + $0x38] sm:$0xff]
      %v6813 = vld [vmem:[#allocation2 + $0x40] sm:$0xff]
      %v6814 = vld [vmem:[#allocation2 + $0x48] sm:$0xff]
      %v6815 = vld [vmem:[#allocation2 + $0x50] sm:$0xff]
      %v6816 = vld [vmem:[#allocation2 + $0x58] sm:$0xff]
      %v6817 = vld [vmem:[#allocation2 + $0x60] sm:$0xff]
      %v6818 = vld [vmem:[#allocation2 + $0x68] sm:$0xff]
      %v6819 = vld [vmem:[#allocation2 + $0x70] sm:$0xff]
      %v6820 = vld [vmem:[#allocation2 + $0x78] sm:$0xff]
      %v6821 = vld [vmem:[#allocation2 + $0x80] sm:$0xff]
      %v6822 = vld [vmem:[#allocation2 + $0x88] sm:$0xff]
      %v6823 = vld [vmem:[#allocation2 + $0x90] sm:$0xff]
      %v6824 = vld [vmem:[#allocation2 + $0x98] sm:$0xff]
      %v6825 = vld [vmem:[#allocation2 + $0xa0] sm:$0xff]
      %v6826 = vld [vmem:[#allocation2 + $0xa8] sm:$0xff]
      %v6827 = vld [vmem:[#allocation2 + $0xb0] sm:$0xff]
      %v6828 = vld [vmem:[#allocation2 + $0xb8] sm:$0xff]
      %v6829 = vld [vmem:[#allocation2 + $0xc0] sm:$0xff]
      %v6830 = vld [vmem:[#allocation2 + $0xc8] sm:$0xff]
      %v6831 = vld [vmem:[#allocation2 + $0xd0] sm:$0xff]
      %v6832 = vld [vmem:[#allocation2 + $0xd8] sm:$0xff]
      %v6833 = vld [vmem:[#allocation2 + $0xe0] sm:$0xff]
      %v6834 = vld [vmem:[#allocation2 + $0xe8] sm:$0xff]
      %v6835 = vld [vmem:[#allocation2 + $0xf0] sm:$0xff]
      %v6836 = vld [vmem:[#allocation2 + $0xf8] sm:$0xff]
      %6837 = vst [vmem:[#allocation1] ss:$2 sm:$0xff] %v253
      %s6838 = scalar_lea.vmem [#allocation1], 16
      %6839 = vst [vmem:[%s6838] ss:$2 sm:$0xff] %v254
      %s6840 = scalar_lea.vmem [#allocation1], 32
      %6841 = vst [vmem:[%s6840] ss:$2 sm:$0xff] %v255
      %s6842 = scalar_lea.vmem [#allocation1], 48
      %6843 = vst [vmem:[%s6842] ss:$2 sm:$0xff] %v256
      %v6844 = vld.sshfl [vmem:[#allocation1] sm:$0xff pattern:$0x75316420]
      %v6845 = vld.sshfl [vmem:[#allocation1 + $0x8] sm:$0xff pattern:$0x75316420]
      %v6846 = vld.sshfl [vmem:[#allocation1 + $0x10] sm:$0xff pattern:$0x75316420]
      %v6847 = vld.sshfl [vmem:[#allocation1 + $0x18] sm:$0xff pattern:$0x75316420]
      %v6848 = vld.sshfl [vmem:[#allocation1 + $0x20] sm:$0xff pattern:$0x75316420]
      %v6849 = vld.sshfl [vmem:[#allocation1 + $0x28] sm:$0xff pattern:$0x75316420]
      %v6850 = vld.sshfl [vmem:[#allocation1 + $0x30] sm:$0xff pattern:$0x75316420]
      %v6851 = vld.sshfl [vmem:[#allocation1 + $0x38] sm:$0xff pattern:$0x75316420]
      %vm6860 = vcmask 261120
      %v6862 = vsel %vm6860, %v6804, 0
      %6864 = vmatpush.msra.mxu0 0.0
      %6865 = vmatpush.msra.mxu0 0.0
      %6866 = vmatpush.msra.mxu0 0.0
      %6867 = vmatpush.msra.mxu0 0.0
      %6868 = vmatpush.msra.mxu0 0.0
      %6869 = vmatpush.msra.mxu0 0.0
      %6870 = vmatpush.msra.mxu0 0.0
      %6871 = vmatpush.msra.mxu0 0.0
      %6872 = vmatpush.msra.mxu0 0.0
      %6873 = vmatpush.msra.mxu0 0.0
      %6874 = vmatpush.msra.mxu0 0.0
      %6875 = vmatpush.msra.mxu0 0.0
      %6876 = vmatpush.msra.mxu0 %v6829
      %6877 = vmatpush.msra.mxu0 %v6821
      %6878 = vmatpush.msra.mxu0 %v6813
      %6879 = vmatpush.msra.mxu0 %v6805
      %6880 = vmatmul.f32.gmra.mxu0 %v6862
      %v6881 = vpop.f32.mrf.mxu0
      %v6882 = vadd.f32 %v6844, %v6881
      %6883 = vdwg.mxu0
      %6884 = vmatpush.msra.mxu0 0.0
      %6885 = vmatpush.msra.mxu0 0.0
      %6886 = vmatpush.msra.mxu0 0.0
      %6887 = vmatpush.msra.mxu0 0.0
      %6888 = vmatpush.msra.mxu0 0.0
      %6889 = vmatpush.msra.mxu0 0.0
      %6890 = vmatpush.msra.mxu0 0.0
      %6891 = vmatpush.msra.mxu0 0.0
      %6892 = vmatpush.msra.mxu0 0.0
      %6893 = vmatpush.msra.mxu0 0.0
      %6894 = vmatpush.msra.mxu0 0.0
      %6895 = vmatpush.msra.mxu0 0.0
      %6896 = vmatpush.msra.mxu0 %v6830
      %6897 = vmatpush.msra.mxu0 %v6822
      %6898 = vmatpush.msra.mxu0 %v6814
      %6899 = vmatpush.msra.mxu0 %v6806
      %6900 = vmatmul.f32.gmra.mxu0 %v6862
      %v6901 = vpop.f32.mrf.mxu0
      %v6902 = vadd.f32 %v6845, %v6901
      %6903 = vdwg.mxu0
      %6904 = vmatpush.msra.mxu0 0.0
      %6905 = vmatpush.msra.mxu0 0.0
      %6906 = vmatpush.msra.mxu0 0.0
      %6907 = vmatpush.msra.mxu0 0.0
      %6908 = vmatpush.msra.mxu0 0.0
      %6909 = vmatpush.msra.mxu0 0.0
      %6910 = vmatpush.msra.mxu0 0.0
      %6911 = vmatpush.msra.mxu0 0.0
      %6912 = vmatpush.msra.mxu0 0.0
      %6913 = vmatpush.msra.mxu0 0.0
      %6914 = vmatpush.msra.mxu0 0.0
      %6915 = vmatpush.msra.mxu0 0.0
      %6916 = vmatpush.msra.mxu0 %v6831
      %6917 = vmatpush.msra.mxu0 %v6823
      %6918 = vmatpush.msra.mxu0 %v6815
      %6919 = vmatpush.msra.mxu0 %v6807
      %6920 = vmatmul.f32.gmra.mxu0 %v6862
      %v6921 = vpop.f32.mrf.mxu0
      %v6922 = vadd.f32 %v6846, %v6921
      %6923 = vdwg.mxu0
      %6924 = vmatpush.msra.mxu0 0.0
      %6925 = vmatpush.msra.mxu0 0.0
      %6926 = vmatpush.msra.mxu0 0.0
      %6927 = vmatpush.msra.mxu0 0.0
      %6928 = vmatpush.msra.mxu0 0.0
      %6929 = vmatpush.msra.mxu0 0.0
      %6930 = vmatpush.msra.mxu0 0.0
      %6931 = vmatpush.msra.mxu0 0.0
      %6932 = vmatpush.msra.mxu0 0.0
      %6933 = vmatpush.msra.mxu0 0.0
      %6934 = vmatpush.msra.mxu0 0.0
      %6935 = vmatpush.msra.mxu0 0.0
      %6936 = vmatpush.msra.mxu0 %v6832
      %6937 = vmatpush.msra.mxu0 %v6824
      %6938 = vmatpush.msra.mxu0 %v6816
      %6939 = vmatpush.msra.mxu0 %v6808
      %6940 = vmatmul.f32.gmra.mxu0 %v6862
      %v6941 = vpop.f32.mrf.mxu0
      %v6942 = vadd.f32 %v6847, %v6941
      %6943 = vdwg.mxu0
      %6944 = vmatpush.msra.mxu0 0.0
      %6945 = vmatpush.msra.mxu0 0.0
      %6946 = vmatpush.msra.mxu0 0.0
      %6947 = vmatpush.msra.mxu0 0.0
      %6948 = vmatpush.msra.mxu0 0.0
      %6949 = vmatpush.msra.mxu0 0.0
      %6950 = vmatpush.msra.mxu0 0.0
      %6951 = vmatpush.msra.mxu0 0.0
      %6952 = vmatpush.msra.mxu0 0.0
      %6953 = vmatpush.msra.mxu0 0.0
      %6954 = vmatpush.msra.mxu0 0.0
      %6955 = vmatpush.msra.mxu0 0.0
      %6956 = vmatpush.msra.mxu0 %v6833
      %6957 = vmatpush.msra.mxu0 %v6825
      %6958 = vmatpush.msra.mxu0 %v6817
      %6959 = vmatpush.msra.mxu0 %v6809
      %6960 = vmatmul.f32.gmra.mxu0 %v6862
      %v6961 = vpop.f32.mrf.mxu0
      %v6962 = vadd.f32 %v6848, %v6961
      %6963 = vdwg.mxu0
      %6964 = vmatpush.msra.mxu0 0.0
      %6965 = vmatpush.msra.mxu0 0.0
      %6966 = vmatpush.msra.mxu0 0.0
      %6967 = vmatpush.msra.mxu0 0.0
      %6968 = vmatpush.msra.mxu0 0.0
      %6969 = vmatpush.msra.mxu0 0.0
      %6970 = vmatpush.msra.mxu0 0.0
      %6971 = vmatpush.msra.mxu0 0.0
      %6972 = vmatpush.msra.mxu0 0.0
      %6973 = vmatpush.msra.mxu0 0.0
      %6974 = vmatpush.msra.mxu0 0.0
      %6975 = vmatpush.msra.mxu0 0.0
      %6976 = vmatpush.msra.mxu0 %v6834
      %6977 = vmatpush.msra.mxu0 %v6826
      %6978 = vmatpush.msra.mxu0 %v6818
      %6979 = vmatpush.msra.mxu0 %v6810
      %6980 = vmatmul.f32.gmra.mxu0 %v6862
      %v6981 = vpop.f32.mrf.mxu0
      %v6982 = vadd.f32 %v6849, %v6981
      %6983 = vdwg.mxu0
      %6984 = vmatpush.msra.mxu0 0.0
      %6985 = vmatpush.msra.mxu0 0.0
      %6986 = vmatpush.msra.mxu0 0.0
      %6987 = vmatpush.msra.mxu0 0.0
      %6988 = vmatpush.msra.mxu0 0.0
      %6989 = vmatpush.msra.mxu0 0.0
      %6990 = vmatpush.msra.mxu0 0.0
      %6991 = vmatpush.msra.mxu0 0.0
      %6992 = vmatpush.msra.mxu0 0.0
      %6993 = vmatpush.msra.mxu0 0.0
      %6994 = vmatpush.msra.mxu0 0.0
      %6995 = vmatpush.msra.mxu0 0.0
      %6996 = vmatpush.msra.mxu0 %v6835
      %6997 = vmatpush.msra.mxu0 %v6827
      %6998 = vmatpush.msra.mxu0 %v6819
      %6999 = vmatpush.msra.mxu0 %v6811
      %7000 = vmatmul.f32.gmra.mxu0 %v6862
      %v7001 = vpop.f32.mrf.mxu0
      %v7002 = vadd.f32 %v6850, %v7001
      %7003 = vdwg.mxu0
      %7004 = vmatpush.msra.mxu0 0.0
      %7005 = vmatpush.msra.mxu0 0.0
      %7006 = vmatpush.msra.mxu0 0.0
      %7007 = vmatpush.msra.mxu0 0.0
      %7008 = vmatpush.msra.mxu0 0.0
      %7009 = vmatpush.msra.mxu0 0.0
      %7010 = vmatpush.msra.mxu0 0.0
      %7011 = vmatpush.msra.mxu0 0.0
      %7012 = vmatpush.msra.mxu0 0.0
      %7013 = vmatpush.msra.mxu0 0.0
      %7014 = vmatpush.msra.mxu0 0.0
      %7015 = vmatpush.msra.mxu0 0.0
      %7016 = vmatpush.msra.mxu0 %v6836
      %7017 = vmatpush.msra.mxu0 %v6828
      %7018 = vmatpush.msra.mxu0 %v6820
      %7019 = vmatpush.msra.mxu0 %v6812
      %7020 = vmatmul.f32.gmra.mxu0 %v6862
      %v7021 = vpop.f32.mrf.mxu0
      %v7022 = vadd.f32 %v6851, %v7021
      %7023 = vdwg.mxu0
      %v7032 = vrot.slane %v6902, 4
      %v7033 = vrot.slane %v6942, 4
      %v7034 = vrot.slane %v6982, 4
      %v7035 = vrot.slane %v7022, 4
      %vm7036 = vcmask 1043456
      %v7037 = vsel %vm7036, %v6882, %v7032
      %v7038 = vsel %vm7036, %v6922, %v7033
      %v7039 = vsel %vm7036, %v6962, %v7034
      %v7040 = vsel %vm7036, %v7002, %v7035
      %7045 = vst [vmem:[%s251] sm:$0xff] %v7037
      %7046 = vst [vmem:[%s251 + $0x8] sm:$0xff] %v7038
      %7047 = vst [vmem:[%s251 + $0x10] sm:$0xff] %v7039
      %7048 = vst [vmem:[%s251 + $0x18] sm:$0xff] %v7040
      %p7049 = scmp.lt.s32.totalorder %s17, 1
      %s7050 = scalar_select %p7049, %s17, 1
      %s7051 = smul.addr %s7050, 8
      %s7052 = smul.addr %s7051, 4
      %s7053 = scalar_lea.vmem %s6, %s7052
      // Predicated region
      $region45: #{rdb_forward.1} parent=43 // pred_check
        %p7054 = pneg %p166
      $region46: #{rdb_forward.1} parent=43 // pred_check_branch
        %7056 = sbr.rel (%p7054) target = $region48
      $region47: #{rdb_forward.1} parent=43 // pred_region
        _
      $region48: #{rdb_forward.1} parent=43 // pred_fallthru
        _
    $region44: #{rdb_forward.1} parent=5 // pred_fallthru
      _
    %p7057 = scmp.le.s32.totalorder 2, %s12
    // Predicated region
    $region49: #{rdb_forward.1} parent=5 // pred_check
      %p7058 = pneg %p7057
    $region50: #{rdb_forward.1} parent=5 // pred_check_branch
      %7060 = sbr.rel (%p7058) target = $region52
    $region51: #{rdb_forward.1} parent=5 // pred_region
      %s7061 = ssub.s32 %s12, 2
      // Predicated region
      $region53: #{rdb_forward.1} parent=51 // pred_check
        %p7062 = pneg %p172
      $region54: #{rdb_forward.1} parent=51 // pred_check_branch
        %7064 = sbr.rel (%p7062) target = $region56
      $region55: #{rdb_forward.1} parent=51 // pred_region
        %p7065 = scmp.lt.s32.totalorder %s18, 1
        %s7066 = scalar_select %p7065, %s18, 1
        %s7067 = smul.addr %s7066, 8
        %s7068 = smul.addr %s7067, 4
        %s7069 = scalar_lea.vmem %s6, %s7068
      $region56: #{rdb_forward.1} parent=51 // pred_fallthru
        _
    $region52: #{rdb_forward.1} parent=5 // pred_fallthru
      _
  $region6: #{rdb_forward.1} parent=0 // loop_footer
    %s16 = sadd.s32 1, %s12
  $region7: #{rdb_forward.1} parent=0 // loop_footer_branch
    %11 = sbr.rel target = $region3
  $region8: #{rdb_forward.1} parent=0 // loop_exit
    _

</llo_original>
